<compile_context>
chip_gen: v6e
topology: v6e:2x2x1
jax: 0.10.0
libtpu: 0.0.40
codegen_flags: <defaults>
</compile_context>

<pallas_src>
import functools

import jax
import jax.numpy as jnp
from jax.experimental import pallas as pl
from jax.experimental.pallas import tpu as pltpu

N_POS_CLASSES = 15      # pospred output classes
PACK_WIDTH = 128        # lane-dense packed output width
IDX_LANE = 15           # lane holding the predicted position index
PRICE_LANE = 16         # lane holding exp(worth)


# ----------------------------------------------------------------------------
# Single fused Pallas kernel (one batch tile per grid step)
# ----------------------------------------------------------------------------
def _fused_predictor_kernel(*refs, n_pos, n_worth):
    x_pos_ref = refs[0]          # [TB, 19] f32
    x_worth_ref = refs[1]        # [TB, 7]  f32 (Position column added in-kernel)
    out_ref = refs[-1]           # [TB, 128] f32 packed output
    params = refs[2:-1]
    pos_params = params[: 2 * n_pos]                 # w0,b0,...  (last layer padded to 128)
    worth_params = params[2 * n_pos:]                # w0_feat, w0_pos, b0, w1, b1, ...

    def matmul_bias(h, w_ref, b_ref):
        return jnp.dot(h.astype(jnp.bfloat16), w_ref[...],
                       preferred_element_type=jnp.float32) + b_ref[...]

    # ---- pospred forward (final layer zero-padded to 128 output lanes) ------
    h = x_pos_ref[...]
    for i in range(n_pos):
        h = matmul_bias(h, pos_params[2 * i], pos_params[2 * i + 1])
        if i < n_pos - 1:                            # final layer has no ReLU
            h = jnp.maximum(h, 0.0)
    logits128 = h                                    # [TB, 128]; lanes >= 15 are 0

    # ---- argmax over the 15 real logit lanes (first-max tie-break) ----------
    lane = jax.lax.broadcasted_iota(jnp.int32, logits128.shape, 1)
    masked = jnp.where(lane < N_POS_CLASSES, logits128, -jnp.inf)
    mx = jnp.max(masked, axis=1, keepdims=True)
    idx = jnp.min(jnp.where(masked == mx, lane, PACK_WIDTH),
                  axis=1, keepdims=True)             # [TB, 1] int32
    pos_feat = idx.astype(jnp.float32)               # [TB, 1]

    # ---- worthpred forward; layer 0 spliced as two matmuls -------------------
    # (x7 @ W0[:7] + pos @ W0[7:8] == concat(x7, pos) @ W0, no lane concat needed)
    w0f, w0p, b0 = worth_params[0], worth_params[1], worth_params[2]
    h = (jnp.dot(x_worth_ref[...].astype(jnp.bfloat16), w0f[...],
                 preferred_element_type=jnp.float32)
         + jnp.dot(pos_feat.astype(jnp.bfloat16), w0p[...],
                   preferred_element_type=jnp.float32)
         + b0[...])
    h = jnp.maximum(h, 0.0)
    for i in range(1, n_worth):
        w_ref = worth_params[3 + 2 * (i - 1)]
        b_ref = worth_params[3 + 2 * (i - 1) + 1]
        h = matmul_bias(h, w_ref, b_ref)
        if i < n_worth - 1:
            h = jnp.maximum(h, 0.0)
    price = jnp.exp(h)                               # [TB, 1]  (find_base_price)

    # ---- pack into one lane-dense [TB, 128] slab, single unmasked store -----
    out = jnp.where(lane < N_POS_CLASSES, logits128, 0.0)
    out = jnp.where(lane == IDX_LANE, jnp.broadcast_to(pos_feat, out.shape), out)
    out = jnp.where(lane == PRICE_LANE, jnp.broadcast_to(price, out.shape), out)
    out_ref[...] = out


# ----------------------------------------------------------------------------
# Wrapper: batch grid, VMEM-resident weights, packed output
# ----------------------------------------------------------------------------
def fused_predictor_forward(x_pos, x_worth_feats, pos_w, pos_b, worth_w, worth_b,
                            *, batch_tile=8):
    """pospred -> argmax -> Position splice -> worthpred -> exp, one pallas_call.

    batch_tile: rows per grid step.  Use 128 on v5e / 256 on v6e & v7x for
    serving; 8 here for the tiny demo batch.
    """
    batch = x_pos.shape[0]
    n_pos, n_worth = len(pos_w), len(worth_w)

    # Pad batch up to a multiple of the tile (pad rows are sliced off below).
    nb = pl.cdiv(batch, batch_tile)
    padded = nb * batch_tile
    if padded != batch:
        x_pos = jnp.pad(x_pos, ((0, padded - batch), (0, 0)))
        x_worth_feats = jnp.pad(x_worth_feats, ((0, padded - batch), (0, 0)))

    # One-time weight prep (in real serving do this once at checkpoint load):
    #  * zero-pad pospred last layer to 128 output lanes (lane-dense logits)
    #  * split worthpred layer-0 weight into feature rows and the Position row
    pos_w = list(pos_w)
    pos_b = list(pos_b)
    pos_w[-1] = jnp.pad(pos_w[-1], ((0, 0), (0, PACK_WIDTH - pos_w[-1].shape[1])))
    pos_b[-1] = jnp.pad(pos_b[-1], ((0, 0), (0, PACK_WIDTH - pos_b[-1].shape[1])))
    w0_feat = worth_w[0][:7, :]
    w0_pos = worth_w[0][7:8, :]

    args = [x_pos, x_worth_feats]
    for w, b in zip(pos_w, pos_b):
        args += [w, b]
    args += [w0_feat, w0_pos, worth_b[0]]
    for w, b in zip(worth_w[1:], worth_b[1:]):
        args += [w, b]

    # Activations / output stream batch tiles; every weight/bias uses a
    # constant index_map so it is DMA'd once and stays VMEM-resident.
    x_pos_spec = pl.BlockSpec((batch_tile, x_pos.shape[1]), lambda i: (i, 0))
    x_w_spec = pl.BlockSpec((batch_tile, x_worth_feats.shape[1]), lambda i: (i, 0))
    resident_specs = [pl.BlockSpec(a.shape, lambda i: (0, 0)) for a in args[2:]]
    out_spec = pl.BlockSpec((batch_tile, PACK_WIDTH), lambda i: (i, 0))

    flops = 2 * padded * (sum(int(w.shape[0]) * int(w.shape[1]) for w in pos_w)
                          + sum(int(w.shape[0]) * int(w.shape[1]) for w in worth_w))
    bytes_accessed = sum(int(a.size) * a.dtype.itemsize for a in args)
    bytes_accessed += padded * PACK_WIDTH * 4

    kernel = functools.partial(_fused_predictor_kernel,
                               n_pos=n_pos, n_worth=n_worth)

    packed = pl.pallas_call(
        kernel,
        out_shape=jax.ShapeDtypeStruct((padded, PACK_WIDTH), jnp.float32),
        grid_spec=pltpu.PrefetchScalarGridSpec(
            num_scalar_prefetch=0,
            grid=(nb,),
            in_specs=[x_pos_spec, x_w_spec] + resident_specs,
            out_specs=out_spec),
        compiler_params=pltpu.CompilerParams(
            dimension_semantics=("parallel",)),        # v7x: split tiles over 2 TCs
        cost_estimate=pl.CostEstimate(flops=flops, transcendentals=padded,
                                      bytes_accessed=bytes_accessed),
    )(*args)

    packed = packed[:batch]
    pos_logits = packed[:, :N_POS_CLASSES]
    pos_idx = packed[:, IDX_LANE:IDX_LANE + 1]
    price = packed[:, PRICE_LANE:PRICE_LANE + 1]
    return pos_logits, price, pos_idx


# ----------------------------------------------------------------------------
# Deterministic parameter construction (synthetic weights, no checkpoint load)
# ----------------------------------------------------------------------------
def _init_linear(key, in_f, out_f):
    kw, kb = jax.random.split(key)
    bound = 1.0 / jnp.sqrt(float(in_f))
    w = jax.random.uniform(kw, (in_f, out_f), jnp.float32, -bound, bound)
    b = jax.random.uniform(kb, (out_f,), jnp.float32, -bound, bound)
    return w, b


def _init_bn(key, f):
    k1, k2, k3, k4 = jax.random.split(key, 4)
    gamma = 1.0 + 0.1 * jax.random.normal(k1, (f,), jnp.float32)
    beta = 0.1 * jax.random.normal(k2, (f,), jnp.float32)
    mean = 0.05 * jax.random.normal(k3, (f,), jnp.float32)
    var = 1.0 + 0.1 * jnp.abs(jax.random.normal(k4, (f,), jnp.float32))
    return gamma, beta, mean, var


def build_mlp_params(key, dims, bn_eps=1e-5):
    """dims = [in, h1, ..., out].  Eval-mode BatchNorm1d after every hidden
    Linear is folded into the Linear weight/bias.  Weights returned as bf16
    (halves weight DMA; matmuls accumulate in f32), biases stay f32."""
    num_layers = len(dims) - 1
    weights, biases = [], []
    keys = jax.random.split(key, num_layers * 2)
    for i in range(num_layers):
        w, b = _init_linear(keys[2 * i], dims[i], dims[i + 1])
        if i < num_layers - 1:  # hidden layer -> BatchNorm1d in eval mode
            gamma, beta, mean, var = _init_bn(keys[2 * i + 1], dims[i + 1])
            scale = gamma / jnp.sqrt(var + bn_eps)
            w = w * scale[None, :]
            b = (b - mean) * scale + beta
        weights.append(w.astype(jnp.bfloat16))
        biases.append(b.reshape(1, -1).astype(jnp.float32))
    return weights, biases


# pure-JAX reference with identical numerics (bf16 operands, f32 accumulation)
def mlp_reference(x, weights, biases):
    h = x
    n = len(weights)
    for i, (w, b) in enumerate(zip(weights, biases)):
        h = jnp.dot(h.astype(jnp.bfloat16), w,
                    preferred_element_type=jnp.float32) + b
        if i < n - 1:
            h = jnp.maximum(h, 0.0)
    return h


# ----------------------------------------------------------------------------
# main
# ----------------------------------------------------------------------------
if __name__ == "__main__":
    key = jax.random.PRNGKey(0)
    k_pos_params, k_worth_params, k_pos_x, k_worth_x = jax.random.split(key, 4)

    batch = 16

    # pospred = Classifier(19, 15)
    pos_dims = [19, 128, 1024, 512, 256, 128, 64, 15]
    pos_w, pos_b = build_mlp_params(k_pos_params, pos_dims)

    # worthpred = Model(): 8 -> 1
    worth_dims = [8, 128, 1024, 512, 128, 64, 1]
    worth_w, worth_b = build_mlp_params(k_worth_params, worth_dims)

    # synthetic standardized inputs (stand-in for StandardScaler(csv features))
    x_pos = jax.random.normal(k_pos_x, (batch, 19), jnp.float32)
    x_worth_feats = jax.random.normal(k_worth_x, (batch, 7), jnp.float32)

    # --- single fused Pallas call --------------------------------------------
    pos_logits, predicted_price, pos_idx = fused_predictor_forward(
        x_pos, x_worth_feats, pos_w, pos_b, worth_w, worth_b, batch_tile=8)
    pos_logits = jax.block_until_ready(pos_logits)
    predicted_price = jax.block_until_ready(predicted_price)
    pos_idx = jax.block_until_ready(pos_idx)

    # --- verify against pure-JAX reference ------------------------------------
    pos_ref = mlp_reference(x_pos, pos_w, pos_b)
    # build the worthpred reference input from the kernel-predicted positions
    # (avoids near-tie argmax flips invalidating the price comparison)
    x_worth_ref = jnp.concatenate([x_worth_feats, pos_idx], axis=1)
    price_ref = jnp.exp(mlp_reference(x_worth_ref, worth_w, worth_b))
    idx_ref = jnp.argmax(pos_ref, axis=1).astype(jnp.float32)[:, None]

    assert pos_logits.shape == (batch, 15)
    assert predicted_price.shape == (batch, 1)
    assert pos_idx.shape == (batch, 1)
    assert bool(jnp.all((pos_idx >= 0) & (pos_idx < 15)))
    assert jnp.allclose(pos_logits, pos_ref, rtol=2e-2, atol=2e-2)
    assert jnp.allclose(pos_idx, idx_ref)
    assert jnp.allclose(predicted_price, price_ref, rtol=2e-2, atol=2e-2)
    assert bool(jnp.all(jnp.isfinite(predicted_price)))

    print("KERNEL_OK")
</pallas_src>

<mosaic_0001>
module attributes {stable_mosaic.version = 11 : i64} {
  func.func @_fused_predictor_kernel(%arg0: i32, %arg1: memref<8x19xf32, #tpu.memory_space<vmem>>, %arg2: memref<8x7xf32, #tpu.memory_space<vmem>>, %arg3: memref<19x128xbf16, #tpu.memory_space<vmem>>, %arg4: memref<1x128xf32, #tpu.memory_space<vmem>>, %arg5: memref<128x1024xbf16, #tpu.memory_space<vmem>>, %arg6: memref<1x1024xf32, #tpu.memory_space<vmem>>, %arg7: memref<1024x512xbf16, #tpu.memory_space<vmem>>, %arg8: memref<1x512xf32, #tpu.memory_space<vmem>>, %arg9: memref<512x256xbf16, #tpu.memory_space<vmem>>, %arg10: memref<1x256xf32, #tpu.memory_space<vmem>>, %arg11: memref<256x128xbf16, #tpu.memory_space<vmem>>, %arg12: memref<1x128xf32, #tpu.memory_space<vmem>>, %arg13: memref<128x64xbf16, #tpu.memory_space<vmem>>, %arg14: memref<1x64xf32, #tpu.memory_space<vmem>>, %arg15: memref<64x128xbf16, #tpu.memory_space<vmem>>, %arg16: memref<1x128xf32, #tpu.memory_space<vmem>>, %arg17: memref<7x128xbf16, #tpu.memory_space<vmem>>, %arg18: memref<1x128xbf16, #tpu.memory_space<vmem>>, %arg19: memref<1x128xf32, #tpu.memory_space<vmem>>, %arg20: memref<128x1024xbf16, #tpu.memory_space<vmem>>, %arg21: memref<1x1024xf32, #tpu.memory_space<vmem>>, %arg22: memref<1024x512xbf16, #tpu.memory_space<vmem>>, %arg23: memref<1x512xf32, #tpu.memory_space<vmem>>, %arg24: memref<512x128xbf16, #tpu.memory_space<vmem>>, %arg25: memref<1x128xf32, #tpu.memory_space<vmem>>, %arg26: memref<128x64xbf16, #tpu.memory_space<vmem>>, %arg27: memref<1x64xf32, #tpu.memory_space<vmem>>, %arg28: memref<64x1xbf16, #tpu.memory_space<vmem>>, %arg29: memref<1x1xf32, #tpu.memory_space<vmem>>, %arg30: memref<8x128xf32, #tpu.memory_space<vmem>>) attributes {dimension_semantics = [#tpu.dimension_semantics<parallel>], iteration_bounds = array<i64: 2>, scalar_prefetch = 0 : i64, scratch_operands = 0 : i64, tpu.core_type = #tpu.core_type<tc>, window_params = [{transform_indices = @transform_0, window_bounds = array<i64: 8, 19>}, {transform_indices = @transform_1, window_bounds = array<i64: 8, 7>}, {pipeline_mode = #tpu.pipeline_mode<synchronous>, transform_indices = @transform_2, window_bounds = array<i64: 19, 128>}, {pipeline_mode = #tpu.pipeline_mode<synchronous>, transform_indices = @transform_3, window_bounds = array<i64: 1, 128>}, {pipeline_mode = #tpu.pipeline_mode<synchronous>, transform_indices = @transform_4, window_bounds = array<i64: 128, 1024>}, {pipeline_mode = #tpu.pipeline_mode<synchronous>, transform_indices = @transform_5, window_bounds = array<i64: 1, 1024>}, {pipeline_mode = #tpu.pipeline_mode<synchronous>, transform_indices = @transform_6, window_bounds = array<i64: 1024, 512>}, {pipeline_mode = #tpu.pipeline_mode<synchronous>, transform_indices = @transform_7, window_bounds = array<i64: 1, 512>}, {pipeline_mode = #tpu.pipeline_mode<synchronous>, transform_indices = @transform_8, window_bounds = array<i64: 512, 256>}, {pipeline_mode = #tpu.pipeline_mode<synchronous>, transform_indices = @transform_9, window_bounds = array<i64: 1, 256>}, {pipeline_mode = #tpu.pipeline_mode<synchronous>, transform_indices = @transform_10, window_bounds = array<i64: 256, 128>}, {pipeline_mode = #tpu.pipeline_mode<synchronous>, transform_indices = @transform_11, window_bounds = array<i64: 1, 128>}, {pipeline_mode = #tpu.pipeline_mode<synchronous>, transform_indices = @transform_12, window_bounds = array<i64: 128, 64>}, {pipeline_mode = #tpu.pipeline_mode<synchronous>, transform_indices = @transform_13, window_bounds = array<i64: 1, 64>}, {pipeline_mode = #tpu.pipeline_mode<synchronous>, transform_indices = @transform_14, window_bounds = array<i64: 64, 128>}, {pipeline_mode = #tpu.pipeline_mode<synchronous>, transform_indices = @transform_15, window_bounds = array<i64: 1, 128>}, {pipeline_mode = #tpu.pipeline_mode<synchronous>, transform_indices = @transform_16, window_bounds = array<i64: 7, 128>}, {pipeline_mode = #tpu.pipeline_mode<synchronous>, transform_indices = @transform_17, window_bounds = array<i64: 1, 128>}, {pipeline_mode = #tpu.pipeline_mode<synchronous>, transform_indices = @transform_18, window_bounds = array<i64: 1, 128>}, {pipeline_mode = #tpu.pipeline_mode<synchronous>, transform_indices = @transform_19, window_bounds = array<i64: 128, 1024>}, {pipeline_mode = #tpu.pipeline_mode<synchronous>, transform_indices = @transform_20, window_bounds = array<i64: 1, 1024>}, {pipeline_mode = #tpu.pipeline_mode<synchronous>, transform_indices = @transform_21, window_bounds = array<i64: 1024, 512>}, {pipeline_mode = #tpu.pipeline_mode<synchronous>, transform_indices = @transform_22, window_bounds = array<i64: 1, 512>}, {pipeline_mode = #tpu.pipeline_mode<synchronous>, transform_indices = @transform_23, window_bounds = array<i64: 512, 128>}, {pipeline_mode = #tpu.pipeline_mode<synchronous>, transform_indices = @transform_24, window_bounds = array<i64: 1, 128>}, {pipeline_mode = #tpu.pipeline_mode<synchronous>, transform_indices = @transform_25, window_bounds = array<i64: 128, 64>}, {pipeline_mode = #tpu.pipeline_mode<synchronous>, transform_indices = @transform_26, window_bounds = array<i64: 1, 64>}, {pipeline_mode = #tpu.pipeline_mode<synchronous>, transform_indices = @transform_27, window_bounds = array<i64: 64, 1>}, {pipeline_mode = #tpu.pipeline_mode<synchronous>, transform_indices = @transform_28, window_bounds = array<i64: 1, 1>}, {transform_indices = @transform_29, window_bounds = array<i64: 8, 128>}]} {
    %c0 = arith.constant 0 : index
    %c0_0 = arith.constant 0 : index
    %0 = vector.load %arg1[%c0, %c0_0] : memref<8x19xf32, #tpu.memory_space<vmem>>, vector<8x19xf32>
    %1 = arith.truncf %0 : vector<8x19xf32> to vector<8x19xbf16>
    %c0_1 = arith.constant 0 : index
    %c0_2 = arith.constant 0 : index
    %2 = vector.load %arg3[%c0_1, %c0_2] : memref<19x128xbf16, #tpu.memory_space<vmem>>, vector<19x128xbf16>
    %cst = arith.constant dense<0.000000e+00> : vector<8x128xf32>
    %3 = tpu.matmul %1, %2, %cst {dimension_numbers = #tpu.dot_dimension_numbers<[1], [0], [0], [1], [0, 0, 1, 1], [], []>} : vector<8x19xbf16>, vector<19x128xbf16>, vector<8x128xf32> -> vector<8x128xf32>
    %c0_3 = arith.constant 0 : index
    %c0_4 = arith.constant 0 : index
    %4 = vector.load %arg4[%c0_3, %c0_4] : memref<1x128xf32, #tpu.memory_space<vmem>>, vector<1x128xf32>
    %5 = vector.broadcast %4 : vector<1x128xf32> to vector<8x128xf32>
    %6 = arith.addf %3, %5 : vector<8x128xf32>
    %cst_5 = arith.constant 0.000000e+00 : f32
    %7 = vector.broadcast %cst_5 : f32 to vector<8x128xf32>
    %8 = arith.maximumf %6, %7 : vector<8x128xf32>
    %9 = arith.truncf %8 : vector<8x128xf32> to vector<8x128xbf16>
    %c0_6 = arith.constant 0 : index
    %c0_7 = arith.constant 0 : index
    %10 = vector.load %arg5[%c0_6, %c0_7] : memref<128x1024xbf16, #tpu.memory_space<vmem>>, vector<128x1024xbf16>
    %cst_8 = arith.constant dense<0.000000e+00> : vector<8x1024xf32>
    %11 = tpu.matmul %9, %10, %cst_8 {dimension_numbers = #tpu.dot_dimension_numbers<[1], [0], [0], [1], [0, 0, 1, 1], [], []>} : vector<8x128xbf16>, vector<128x1024xbf16>, vector<8x1024xf32> -> vector<8x1024xf32>
    %c0_9 = arith.constant 0 : index
    %c0_10 = arith.constant 0 : index
    %12 = vector.load %arg6[%c0_9, %c0_10] : memref<1x1024xf32, #tpu.memory_space<vmem>>, vector<1x1024xf32>
    %13 = vector.broadcast %12 : vector<1x1024xf32> to vector<8x1024xf32>
    %14 = arith.addf %11, %13 : vector<8x1024xf32>
    %cst_11 = arith.constant 0.000000e+00 : f32
    %15 = vector.broadcast %cst_11 : f32 to vector<8x1024xf32>
    %16 = arith.maximumf %14, %15 : vector<8x1024xf32>
    %17 = arith.truncf %16 : vector<8x1024xf32> to vector<8x1024xbf16>
    %c0_12 = arith.constant 0 : index
    %c0_13 = arith.constant 0 : index
    %18 = vector.load %arg7[%c0_12, %c0_13] : memref<1024x512xbf16, #tpu.memory_space<vmem>>, vector<1024x512xbf16>
    %cst_14 = arith.constant dense<0.000000e+00> : vector<8x512xf32>
    %19 = tpu.matmul %17, %18, %cst_14 {dimension_numbers = #tpu.dot_dimension_numbers<[1], [0], [0], [1], [0, 0, 1, 1], [], []>} : vector<8x1024xbf16>, vector<1024x512xbf16>, vector<8x512xf32> -> vector<8x512xf32>
    %c0_15 = arith.constant 0 : index
    %c0_16 = arith.constant 0 : index
    %20 = vector.load %arg8[%c0_15, %c0_16] : memref<1x512xf32, #tpu.memory_space<vmem>>, vector<1x512xf32>
    %21 = vector.broadcast %20 : vector<1x512xf32> to vector<8x512xf32>
    %22 = arith.addf %19, %21 : vector<8x512xf32>
    %cst_17 = arith.constant 0.000000e+00 : f32
    %23 = vector.broadcast %cst_17 : f32 to vector<8x512xf32>
    %24 = arith.maximumf %22, %23 : vector<8x512xf32>
    %25 = arith.truncf %24 : vector<8x512xf32> to vector<8x512xbf16>
    %c0_18 = arith.constant 0 : index
    %c0_19 = arith.constant 0 : index
    %26 = vector.load %arg9[%c0_18, %c0_19] : memref<512x256xbf16, #tpu.memory_space<vmem>>, vector<512x256xbf16>
    %cst_20 = arith.constant dense<0.000000e+00> : vector<8x256xf32>
    %27 = tpu.matmul %25, %26, %cst_20 {dimension_numbers = #tpu.dot_dimension_numbers<[1], [0], [0], [1], [0, 0, 1, 1], [], []>} : vector<8x512xbf16>, vector<512x256xbf16>, vector<8x256xf32> -> vector<8x256xf32>
    %c0_21 = arith.constant 0 : index
    %c0_22 = arith.constant 0 : index
    %28 = vector.load %arg10[%c0_21, %c0_22] : memref<1x256xf32, #tpu.memory_space<vmem>>, vector<1x256xf32>
    %29 = vector.broadcast %28 : vector<1x256xf32> to vector<8x256xf32>
    %30 = arith.addf %27, %29 : vector<8x256xf32>
    %cst_23 = arith.constant 0.000000e+00 : f32
    %31 = vector.broadcast %cst_23 : f32 to vector<8x256xf32>
    %32 = arith.maximumf %30, %31 : vector<8x256xf32>
    %33 = arith.truncf %32 : vector<8x256xf32> to vector<8x256xbf16>
    %c0_24 = arith.constant 0 : index
    %c0_25 = arith.constant 0 : index
    %34 = vector.load %arg11[%c0_24, %c0_25] : memref<256x128xbf16, #tpu.memory_space<vmem>>, vector<256x128xbf16>
    %cst_26 = arith.constant dense<0.000000e+00> : vector<8x128xf32>
    %35 = tpu.matmul %33, %34, %cst_26 {dimension_numbers = #tpu.dot_dimension_numbers<[1], [0], [0], [1], [0, 0, 1, 1], [], []>} : vector<8x256xbf16>, vector<256x128xbf16>, vector<8x128xf32> -> vector<8x128xf32>
    %c0_27 = arith.constant 0 : index
    %c0_28 = arith.constant 0 : index
    %36 = vector.load %arg12[%c0_27, %c0_28] : memref<1x128xf32, #tpu.memory_space<vmem>>, vector<1x128xf32>
    %37 = vector.broadcast %36 : vector<1x128xf32> to vector<8x128xf32>
    %38 = arith.addf %35, %37 : vector<8x128xf32>
    %cst_29 = arith.constant 0.000000e+00 : f32
    %39 = vector.broadcast %cst_29 : f32 to vector<8x128xf32>
    %40 = arith.maximumf %38, %39 : vector<8x128xf32>
    %41 = arith.truncf %40 : vector<8x128xf32> to vector<8x128xbf16>
    %c0_30 = arith.constant 0 : index
    %c0_31 = arith.constant 0 : index
    %42 = vector.load %arg13[%c0_30, %c0_31] : memref<128x64xbf16, #tpu.memory_space<vmem>>, vector<128x64xbf16>
    %cst_32 = arith.constant dense<0.000000e+00> : vector<8x64xf32>
    %43 = tpu.matmul %41, %42, %cst_32 {dimension_numbers = #tpu.dot_dimension_numbers<[1], [0], [0], [1], [0, 0, 1, 1], [], []>} : vector<8x128xbf16>, vector<128x64xbf16>, vector<8x64xf32> -> vector<8x64xf32>
    %c0_33 = arith.constant 0 : index
    %c0_34 = arith.constant 0 : index
    %44 = vector.load %arg14[%c0_33, %c0_34] : memref<1x64xf32, #tpu.memory_space<vmem>>, vector<1x64xf32>
    %45 = vector.broadcast %44 : vector<1x64xf32> to vector<8x64xf32>
    %46 = arith.addf %43, %45 : vector<8x64xf32>
    %cst_35 = arith.constant 0.000000e+00 : f32
    %47 = vector.broadcast %cst_35 : f32 to vector<8x64xf32>
    %48 = arith.maximumf %46, %47 : vector<8x64xf32>
    %49 = arith.truncf %48 : vector<8x64xf32> to vector<8x64xbf16>
    %c0_36 = arith.constant 0 : index
    %c0_37 = arith.constant 0 : index
    %50 = vector.load %arg15[%c0_36, %c0_37] : memref<64x128xbf16, #tpu.memory_space<vmem>>, vector<64x128xbf16>
    %cst_38 = arith.constant dense<0.000000e+00> : vector<8x128xf32>
    %51 = tpu.matmul %49, %50, %cst_38 {dimension_numbers = #tpu.dot_dimension_numbers<[1], [0], [0], [1], [0, 0, 1, 1], [], []>} : vector<8x64xbf16>, vector<64x128xbf16>, vector<8x128xf32> -> vector<8x128xf32>
    %c0_39 = arith.constant 0 : index
    %c0_40 = arith.constant 0 : index
    %52 = vector.load %arg16[%c0_39, %c0_40] : memref<1x128xf32, #tpu.memory_space<vmem>>, vector<1x128xf32>
    %53 = vector.broadcast %52 : vector<1x128xf32> to vector<8x128xf32>
    %54 = arith.addf %51, %53 : vector<8x128xf32>
    %55 = tpu.iota {dimensions = array<i32: 1>} : vector<8x128xi32>
    %c15_i32 = arith.constant 15 : i32
    %56 = vector.broadcast %c15_i32 : i32 to vector<8x128xi32>
    %57 = arith.cmpi slt, %55, %56 : vector<8x128xi32>
    %cst_41 = arith.constant 0xFF800000 : f32
    %58 = vector.broadcast %cst_41 : f32 to vector<8x128xf32>
    %59 = arith.select %57, %54, %58 : vector<8x128xi1>, vector<8x128xf32>
    %cst_42 = arith.constant dense<0xFF800000> : vector<8xf32>
    %60 = vector.multi_reduction <maximumf>, %59, %cst_42 [1] : vector<8x128xf32> to vector<8xf32>
    %61 = vector.shape_cast %60 : vector<8xf32> to vector<8x1xf32>
    %62 = vector.broadcast %61 : vector<8x1xf32> to vector<8x128xf32>
    %63 = arith.cmpf oeq, %59, %62 : vector<8x128xf32>
    %c128_i32 = arith.constant 128 : i32
    %64 = vector.broadcast %c128_i32 : i32 to vector<8x128xi32>
    %65 = arith.select %63, %55, %64 : vector<8x128xi1>, vector<8x128xi32>
    %cst_43 = arith.constant dense<2147483647> : vector<8xi32>
    %66 = vector.multi_reduction <minsi>, %65, %cst_43 [1] : vector<8x128xi32> to vector<8xi32>
    %67 = vector.shape_cast %66 : vector<8xi32> to vector<8x1xi32>
    %68 = arith.sitofp %67 : vector<8x1xi32> to vector<8x1xf32>
    %c0_44 = arith.constant 0 : index
    %c0_45 = arith.constant 0 : index
    %69 = vector.load %arg2[%c0_44, %c0_45] : memref<8x7xf32, #tpu.memory_space<vmem>>, vector<8x7xf32>
    %70 = arith.truncf %69 : vector<8x7xf32> to vector<8x7xbf16>
    %c0_46 = arith.constant 0 : index
    %c0_47 = arith.constant 0 : index
    %71 = vector.load %arg17[%c0_46, %c0_47] : memref<7x128xbf16, #tpu.memory_space<vmem>>, vector<7x128xbf16>
    %cst_48 = arith.constant dense<0.000000e+00> : vector<8x128xf32>
    %72 = tpu.matmul %70, %71, %cst_48 {dimension_numbers = #tpu.dot_dimension_numbers<[1], [0], [0], [1], [0, 0, 1, 1], [], []>} : vector<8x7xbf16>, vector<7x128xbf16>, vector<8x128xf32> -> vector<8x128xf32>
    %73 = arith.truncf %68 : vector<8x1xf32> to vector<8x1xbf16>
    %c0_49 = arith.constant 0 : index
    %c0_50 = arith.constant 0 : index
    %74 = vector.load %arg18[%c0_49, %c0_50] : memref<1x128xbf16, #tpu.memory_space<vmem>>, vector<1x128xbf16>
    %cst_51 = arith.constant dense<0.000000e+00> : vector<8x128xf32>
    %75 = tpu.matmul %73, %74, %cst_51 {dimension_numbers = #tpu.dot_dimension_numbers<[1], [0], [0], [1], [0, 0, 1, 1], [], []>} : vector<8x1xbf16>, vector<1x128xbf16>, vector<8x128xf32> -> vector<8x128xf32>
    %76 = arith.addf %72, %75 : vector<8x128xf32>
    %c0_52 = arith.constant 0 : index
    %c0_53 = arith.constant 0 : index
    %77 = vector.load %arg19[%c0_52, %c0_53] : memref<1x128xf32, #tpu.memory_space<vmem>>, vector<1x128xf32>
    %78 = vector.broadcast %77 : vector<1x128xf32> to vector<8x128xf32>
    %79 = arith.addf %76, %78 : vector<8x128xf32>
    %cst_54 = arith.constant 0.000000e+00 : f32
    %80 = vector.broadcast %cst_54 : f32 to vector<8x128xf32>
    %81 = arith.maximumf %79, %80 : vector<8x128xf32>
    %82 = arith.truncf %81 : vector<8x128xf32> to vector<8x128xbf16>
    %c0_55 = arith.constant 0 : index
    %c0_56 = arith.constant 0 : index
    %83 = vector.load %arg20[%c0_55, %c0_56] : memref<128x1024xbf16, #tpu.memory_space<vmem>>, vector<128x1024xbf16>
    %cst_57 = arith.constant dense<0.000000e+00> : vector<8x1024xf32>
    %84 = tpu.matmul %82, %83, %cst_57 {dimension_numbers = #tpu.dot_dimension_numbers<[1], [0], [0], [1], [0, 0, 1, 1], [], []>} : vector<8x128xbf16>, vector<128x1024xbf16>, vector<8x1024xf32> -> vector<8x1024xf32>
    %c0_58 = arith.constant 0 : index
    %c0_59 = arith.constant 0 : index
    %85 = vector.load %arg21[%c0_58, %c0_59] : memref<1x1024xf32, #tpu.memory_space<vmem>>, vector<1x1024xf32>
    %86 = vector.broadcast %85 : vector<1x1024xf32> to vector<8x1024xf32>
    %87 = arith.addf %84, %86 : vector<8x1024xf32>
    %cst_60 = arith.constant 0.000000e+00 : f32
    %88 = vector.broadcast %cst_60 : f32 to vector<8x1024xf32>
    %89 = arith.maximumf %87, %88 : vector<8x1024xf32>
    %90 = arith.truncf %89 : vector<8x1024xf32> to vector<8x1024xbf16>
    %c0_61 = arith.constant 0 : index
    %c0_62 = arith.constant 0 : index
    %91 = vector.load %arg22[%c0_61, %c0_62] : memref<1024x512xbf16, #tpu.memory_space<vmem>>, vector<1024x512xbf16>
    %cst_63 = arith.constant dense<0.000000e+00> : vector<8x512xf32>
    %92 = tpu.matmul %90, %91, %cst_63 {dimension_numbers = #tpu.dot_dimension_numbers<[1], [0], [0], [1], [0, 0, 1, 1], [], []>} : vector<8x1024xbf16>, vector<1024x512xbf16>, vector<8x512xf32> -> vector<8x512xf32>
    %c0_64 = arith.constant 0 : index
    %c0_65 = arith.constant 0 : index
    %93 = vector.load %arg23[%c0_64, %c0_65] : memref<1x512xf32, #tpu.memory_space<vmem>>, vector<1x512xf32>
    %94 = vector.broadcast %93 : vector<1x512xf32> to vector<8x512xf32>
    %95 = arith.addf %92, %94 : vector<8x512xf32>
    %cst_66 = arith.constant 0.000000e+00 : f32
    %96 = vector.broadcast %cst_66 : f32 to vector<8x512xf32>
    %97 = arith.maximumf %95, %96 : vector<8x512xf32>
    %98 = arith.truncf %97 : vector<8x512xf32> to vector<8x512xbf16>
    %c0_67 = arith.constant 0 : index
    %c0_68 = arith.constant 0 : index
    %99 = vector.load %arg24[%c0_67, %c0_68] : memref<512x128xbf16, #tpu.memory_space<vmem>>, vector<512x128xbf16>
    %cst_69 = arith.constant dense<0.000000e+00> : vector<8x128xf32>
    %100 = tpu.matmul %98, %99, %cst_69 {dimension_numbers = #tpu.dot_dimension_numbers<[1], [0], [0], [1], [0, 0, 1, 1], [], []>} : vector<8x512xbf16>, vector<512x128xbf16>, vector<8x128xf32> -> vector<8x128xf32>
    %c0_70 = arith.constant 0 : index
    %c0_71 = arith.constant 0 : index
    %101 = vector.load %arg25[%c0_70, %c0_71] : memref<1x128xf32, #tpu.memory_space<vmem>>, vector<1x128xf32>
    %102 = vector.broadcast %101 : vector<1x128xf32> to vector<8x128xf32>
    %103 = arith.addf %100, %102 : vector<8x128xf32>
    %cst_72 = arith.constant 0.000000e+00 : f32
    %104 = vector.broadcast %cst_72 : f32 to vector<8x128xf32>
    %105 = arith.maximumf %103, %104 : vector<8x128xf32>
    %106 = arith.truncf %105 : vector<8x128xf32> to vector<8x128xbf16>
    %c0_73 = arith.constant 0 : index
    %c0_74 = arith.constant 0 : index
    %107 = vector.load %arg26[%c0_73, %c0_74] : memref<128x64xbf16, #tpu.memory_space<vmem>>, vector<128x64xbf16>
    %cst_75 = arith.constant dense<0.000000e+00> : vector<8x64xf32>
    %108 = tpu.matmul %106, %107, %cst_75 {dimension_numbers = #tpu.dot_dimension_numbers<[1], [0], [0], [1], [0, 0, 1, 1], [], []>} : vector<8x128xbf16>, vector<128x64xbf16>, vector<8x64xf32> -> vector<8x64xf32>
    %c0_76 = arith.constant 0 : index
    %c0_77 = arith.constant 0 : index
    %109 = vector.load %arg27[%c0_76, %c0_77] : memref<1x64xf32, #tpu.memory_space<vmem>>, vector<1x64xf32>
    %110 = vector.broadcast %109 : vector<1x64xf32> to vector<8x64xf32>
    %111 = arith.addf %108, %110 : vector<8x64xf32>
    %cst_78 = arith.constant 0.000000e+00 : f32
    %112 = vector.broadcast %cst_78 : f32 to vector<8x64xf32>
    %113 = arith.maximumf %111, %112 : vector<8x64xf32>
    %114 = arith.truncf %113 : vector<8x64xf32> to vector<8x64xbf16>
    %c0_79 = arith.constant 0 : index
    %c0_80 = arith.constant 0 : index
    %115 = vector.load %arg28[%c0_79, %c0_80] : memref<64x1xbf16, #tpu.memory_space<vmem>>, vector<64x1xbf16>
    %cst_81 = arith.constant dense<0.000000e+00> : vector<8x1xf32>
    %116 = tpu.matmul %114, %115, %cst_81 {dimension_numbers = #tpu.dot_dimension_numbers<[1], [0], [0], [1], [0, 0, 1, 1], [], []>} : vector<8x64xbf16>, vector<64x1xbf16>, vector<8x1xf32> -> vector<8x1xf32>
    %c0_82 = arith.constant 0 : index
    %c0_83 = arith.constant 0 : index
    %117 = vector.load %arg29[%c0_82, %c0_83] : memref<1x1xf32, #tpu.memory_space<vmem>>, vector<1x1xf32>
    %118 = vector.broadcast %117 : vector<1x1xf32> to vector<8x1xf32>
    %119 = arith.addf %116, %118 : vector<8x1xf32>
    %120 = math.exp %119 : vector<8x1xf32>
    %c15_i32_84 = arith.constant 15 : i32
    %121 = vector.broadcast %c15_i32_84 : i32 to vector<8x128xi32>
    %122 = arith.cmpi slt, %55, %121 : vector<8x128xi32>
    %cst_85 = arith.constant 0.000000e+00 : f32
    %123 = vector.broadcast %cst_85 : f32 to vector<8x128xf32>
    %124 = arith.select %122, %54, %123 : vector<8x128xi1>, vector<8x128xf32>
    %c15_i32_86 = arith.constant 15 : i32
    %125 = vector.broadcast %c15_i32_86 : i32 to vector<8x128xi32>
    %126 = arith.cmpi eq, %55, %125 : vector<8x128xi32>
    %127 = vector.shape_cast %68 : vector<8x1xf32> to vector<8x1xf32>
    %128 = vector.broadcast %127 : vector<8x1xf32> to vector<8x128xf32>
    %129 = arith.select %126, %128, %124 : vector<8x128xi1>, vector<8x128xf32>
    %c16_i32 = arith.constant 16 : i32
    %130 = vector.broadcast %c16_i32 : i32 to vector<8x128xi32>
    %131 = arith.cmpi eq, %55, %130 : vector<8x128xi32>
    %132 = vector.shape_cast %120 : vector<8x1xf32> to vector<8x1xf32>
    %133 = vector.broadcast %132 : vector<8x1xf32> to vector<8x128xf32>
    %134 = arith.select %131, %133, %129 : vector<8x128xi1>, vector<8x128xf32>
    %c0_87 = arith.constant 0 : index
    %c0_88 = arith.constant 0 : index
    %135 = vector.load %arg30[%c0_87, %c0_88] : memref<8x128xf32, #tpu.memory_space<vmem>>, vector<8x128xf32>
    tpu.vector_store %arg30[%c0_87, %c0_88], %134 {strides = array<i32>} : memref<8x128xf32, #tpu.memory_space<vmem>>, vector<8x128xf32>,
    return
  }
  func.func @transform_0(%arg0: i32) -> (i32, i32) {
    %c0_i32 = arith.constant 0 : i32
    %c0_i32_0 = arith.constant 0 : i32
    return %arg0, %c0_i32 : i32, i32
  }
  func.func @transform_1(%arg0: i32) -> (i32, i32) {
    %c0_i32 = arith.constant 0 : i32
    %c0_i32_0 = arith.constant 0 : i32
    return %arg0, %c0_i32 : i32, i32
  }
  func.func @transform_2(%arg0: i32) -> (i32, i32) {
    %c0_i32 = arith.constant 0 : i32
    %c0_i32_0 = arith.constant 0 : i32
    %c0_i32_1 = arith.constant 0 : i32
    return %c0_i32, %c0_i32_0 : i32, i32
  }
  func.func @transform_3(%arg0: i32) -> (i32, i32) {
    %c0_i32 = arith.constant 0 : i32
    %c0_i32_0 = arith.constant 0 : i32
    %c0_i32_1 = arith.constant 0 : i32
    return %c0_i32, %c0_i32_0 : i32, i32
  }
  func.func @transform_4(%arg0: i32) -> (i32, i32) {
    %c0_i32 = arith.constant 0 : i32
    %c0_i32_0 = arith.constant 0 : i32
    %c0_i32_1 = arith.constant 0 : i32
    return %c0_i32, %c0_i32_0 : i32, i32
  }
  func.func @transform_5(%arg0: i32) -> (i32, i32) {
    %c0_i32 = arith.constant 0 : i32
    %c0_i32_0 = arith.constant 0 : i32
    %c0_i32_1 = arith.constant 0 : i32
    return %c0_i32, %c0_i32_0 : i32, i32
  }
  func.func @transform_6(%arg0: i32) -> (i32, i32) {
    %c0_i32 = arith.constant 0 : i32
    %c0_i32_0 = arith.constant 0 : i32
    %c0_i32_1 = arith.constant 0 : i32
    return %c0_i32, %c0_i32_0 : i32, i32
  }
  func.func @transform_7(%arg0: i32) -> (i32, i32) {
    %c0_i32 = arith.constant 0 : i32
    %c0_i32_0 = arith.constant 0 : i32
    %c0_i32_1 = arith.constant 0 : i32
    return %c0_i32, %c0_i32_0 : i32, i32
  }
  func.func @transform_8(%arg0: i32) -> (i32, i32) {
    %c0_i32 = arith.constant 0 : i32
    %c0_i32_0 = arith.constant 0 : i32
    %c0_i32_1 = arith.constant 0 : i32
    return %c0_i32, %c0_i32_0 : i32, i32
  }
  func.func @transform_9(%arg0: i32) -> (i32, i32) {
    %c0_i32 = arith.constant 0 : i32
    %c0_i32_0 = arith.constant 0 : i32
    %c0_i32_1 = arith.constant 0 : i32
    return %c0_i32, %c0_i32_0 : i32, i32
  }
  func.func @transform_10(%arg0: i32) -> (i32, i32) {
    %c0_i32 = arith.constant 0 : i32
    %c0_i32_0 = arith.constant 0 : i32
    %c0_i32_1 = arith.constant 0 : i32
    return %c0_i32, %c0_i32_0 : i32, i32
  }
  func.func @transform_11(%arg0: i32) -> (i32, i32) {
    %c0_i32 = arith.constant 0 : i32
    %c0_i32_0 = arith.constant 0 : i32
    %c0_i32_1 = arith.constant 0 : i32
    return %c0_i32, %c0_i32_0 : i32, i32
  }
  func.func @transform_12(%arg0: i32) -> (i32, i32) {
    %c0_i32 = arith.constant 0 : i32
    %c0_i32_0 = arith.constant 0 : i32
    %c0_i32_1 = arith.constant 0 : i32
    return %c0_i32, %c0_i32_0 : i32, i32
  }
  func.func @transform_13(%arg0: i32) -> (i32, i32) {
    %c0_i32 = arith.constant 0 : i32
    %c0_i32_0 = arith.constant 0 : i32
    %c0_i32_1 = arith.constant 0 : i32
    return %c0_i32, %c0_i32_0 : i32, i32
  }
  func.func @transform_14(%arg0: i32) -> (i32, i32) {
    %c0_i32 = arith.constant 0 : i32
    %c0_i32_0 = arith.constant 0 : i32
    %c0_i32_1 = arith.constant 0 : i32
    return %c0_i32, %c0_i32_0 : i32, i32
  }
  func.func @transform_15(%arg0: i32) -> (i32, i32) {
    %c0_i32 = arith.constant 0 : i32
    %c0_i32_0 = arith.constant 0 : i32
    %c0_i32_1 = arith.constant 0 : i32
    return %c0_i32, %c0_i32_0 : i32, i32
  }
  func.func @transform_16(%arg0: i32) -> (i32, i32) {
    %c0_i32 = arith.constant 0 : i32
    %c0_i32_0 = arith.constant 0 : i32
    %c0_i32_1 = arith.constant 0 : i32
    return %c0_i32, %c0_i32_0 : i32, i32
  }
  func.func @transform_17(%arg0: i32) -> (i32, i32) {
    %c0_i32 = arith.constant 0 : i32
    %c0_i32_0 = arith.constant 0 : i32
    %c0_i32_1 = arith.constant 0 : i32
    return %c0_i32, %c0_i32_0 : i32, i32
  }
  func.func @transform_18(%arg0: i32) -> (i32, i32) {
    %c0_i32 = arith.constant 0 : i32
    %c0_i32_0 = arith.constant 0 : i32
    %c0_i32_1 = arith.constant 0 : i32
    return %c0_i32, %c0_i32_0 : i32, i32
  }
  func.func @transform_19(%arg0: i32) -> (i32, i32) {
    %c0_i32 = arith.constant 0 : i32
    %c0_i32_0 = arith.constant 0 : i32
    %c0_i32_1 = arith.constant 0 : i32
    return %c0_i32, %c0_i32_0 : i32, i32
  }
  func.func @transform_20(%arg0: i32) -> (i32, i32) {
    %c0_i32 = arith.constant 0 : i32
    %c0_i32_0 = arith.constant 0 : i32
    %c0_i32_1 = arith.constant 0 : i32
    return %c0_i32, %c0_i32_0 : i32, i32
  }
  func.func @transform_21(%arg0: i32) -> (i32, i32) {
    %c0_i32 = arith.constant 0 : i32
    %c0_i32_0 = arith.constant 0 : i32
    %c0_i32_1 = arith.constant 0 : i32
    return %c0_i32, %c0_i32_0 : i32, i32
  }
  func.func @transform_22(%arg0: i32) -> (i32, i32) {
    %c0_i32 = arith.constant 0 : i32
    %c0_i32_0 = arith.constant 0 : i32
    %c0_i32_1 = arith.constant 0 : i32
    return %c0_i32, %c0_i32_0 : i32, i32
  }
  func.func @transform_23(%arg0: i32) -> (i32, i32) {
    %c0_i32 = arith.constant 0 : i32
    %c0_i32_0 = arith.constant 0 : i32
    %c0_i32_1 = arith.constant 0 : i32
    return %c0_i32, %c0_i32_0 : i32, i32
  }
  func.func @transform_24(%arg0: i32) -> (i32, i32) {
    %c0_i32 = arith.constant 0 : i32
    %c0_i32_0 = arith.constant 0 : i32
    %c0_i32_1 = arith.constant 0 : i32
    return %c0_i32, %c0_i32_0 : i32, i32
  }
  func.func @transform_25(%arg0: i32) -> (i32, i32) {
    %c0_i32 = arith.constant 0 : i32
    %c0_i32_0 = arith.constant 0 : i32
    %c0_i32_1 = arith.constant 0 : i32
    return %c0_i32, %c0_i32_0 : i32, i32
  }
  func.func @transform_26(%arg0: i32) -> (i32, i32) {
    %c0_i32 = arith.constant 0 : i32
    %c0_i32_0 = arith.constant 0 : i32
    %c0_i32_1 = arith.constant 0 : i32
    return %c0_i32, %c0_i32_0 : i32, i32
  }
  func.func @transform_27(%arg0: i32) -> (i32, i32) {
    %c0_i32 = arith.constant 0 : i32
    %c0_i32_0 = arith.constant 0 : i32
    %c0_i32_1 = arith.constant 0 : i32
    return %c0_i32, %c0_i32_0 : i32, i32
  }
  func.func @transform_28(%arg0: i32) -> (i32, i32) {
    %c0_i32 = arith.constant 0 : i32
    %c0_i32_0 = arith.constant 0 : i32
    %c0_i32_1 = arith.constant 0 : i32
    return %c0_i32, %c0_i32_0 : i32, i32
  }
  func.func @transform_29(%arg0: i32) -> (i32, i32) {
    %c0_i32 = arith.constant 0 : i32
    %c0_i32_0 = arith.constant 0 : i32
    return %arg0, %c0_i32 : i32, i32
  }
}

</mosaic_0001>

<llo_original>
// kernel: tpu_custom_call.1
$region0: #{tpu_custom_call.1}
  #allocation0 [shape = 'u32[]', space=smem, size = 0x4, offset = 0x4, fixed_abs, tag = 'smem constant byte address 0x4 - core index']
  #allocation1 [shape = 'u32[144,128]{1,0:T(1,128)}', space=vmem, size = 0x12000, scoped, tag = 'internal scratch']
  #allocation2 [shape = 'f32[1,1]{1,0:T(1,128)S(1)}', space=vmem, size = 0x200, scoped, tag = 'scoped memory for tpu_custom_call.1']
  %s0 = inlined_call_operand.smem [shape: u32[30], index: -1, kind: input, shape index: {}]
  %s1 = sld [smem:[%s0]]
  %s2 = scalar_lea.smem %s0, 1
  %s3 = sld [smem:[%s2]]
  %s4 = scalar_lea.smem %s0, 2
  %s5 = sld [smem:[%s4]]
  %s6 = scalar_lea.smem %s0, 3
  %s7 = sld [smem:[%s6]]
  %s8 = scalar_lea.smem %s0, 4
  %s9 = sld [smem:[%s8]]
  %s10 = scalar_lea.smem %s0, 5
  %s11 = sld [smem:[%s10]]
  %s12 = scalar_lea.smem %s0, 6
  %s13 = sld [smem:[%s12]]
  %s14 = scalar_lea.smem %s0, 7
  %s15 = sld [smem:[%s14]]
  %s16 = scalar_lea.smem %s0, 8
  %s17 = sld [smem:[%s16]]
  %s18 = scalar_lea.smem %s0, 9
  %s19 = sld [smem:[%s18]]
  %s20 = scalar_lea.smem %s0, 10
  %s21 = sld [smem:[%s20]]
  %s22 = scalar_lea.smem %s0, 11
  %s23 = sld [smem:[%s22]]
  %s24 = scalar_lea.smem %s0, 12
  %s25 = sld [smem:[%s24]]
  %s26 = scalar_lea.smem %s0, 13
  %s27 = sld [smem:[%s26]]
  %s28 = scalar_lea.smem %s0, 14
  %s29 = sld [smem:[%s28]]
  %s30 = scalar_lea.smem %s0, 15
  %s31 = sld [smem:[%s30]]
  %s32 = scalar_lea.smem %s0, 16
  %s33 = sld [smem:[%s32]]
  %s34 = scalar_lea.smem %s0, 17
  %s35 = sld [smem:[%s34]]
  %s36 = scalar_lea.smem %s0, 18
  %s37 = sld [smem:[%s36]]
  %s38 = scalar_lea.smem %s0, 19
  %s39 = sld [smem:[%s38]]
  %s40 = scalar_lea.smem %s0, 20
  %s41 = sld [smem:[%s40]]
  %s42 = scalar_lea.smem %s0, 21
  %s43 = sld [smem:[%s42]]
  %s44 = scalar_lea.smem %s0, 22
  %s45 = sld [smem:[%s44]]
  %s46 = scalar_lea.smem %s0, 23
  %s47 = sld [smem:[%s46]]
  %s48 = scalar_lea.smem %s0, 24
  %s49 = sld [smem:[%s48]]
  %s50 = scalar_lea.smem %s0, 25
  %s51 = sld [smem:[%s50]]
  %s52 = scalar_lea.smem %s0, 26
  %s53 = sld [smem:[%s52]]
  %s54 = scalar_lea.smem %s0, 27
  %s55 = sld [smem:[%s54]]
  %s56 = scalar_lea.smem %s0, 28
  %s57 = sld [smem:[%s56]]
  %s58 = scalar_lea.smem %s0, 29
  %s59 = sld [smem:[%s58]]
  %s60 = sld [smem:[#allocation0]]
  $region225: #{tpu_custom_call.1} parent=0
    _
  %s62 = ssub.s32 1, %s60
  %s63 = scalar_select 0, %s62, %s60
  %v64 = vstv %s57
  %65 = vst [vmem:[#allocation2] sm:$0x1] %v64
  $region1: #{tpu_custom_call.1} parent=0
    #allocation3 [shape = 'u8[8192]{0}', space=vmem, size = 0x2000, scoped, tag = 'input window, operand 0']
    #allocation4 [shape = 's32[2]{0}', space=sflag, size = 0x8, scoped, tag = 'scoped memory for tpu_custom_call.1']
    #allocation5 [shape = 's32[2]{0}', space=sflag, size = 0x8, scoped, tag = 'scoped memory for tpu_custom_call.1']
    #allocation6 [shape = 'u8[6144]{0}', space=vmem, size = 0x1800, scoped, tag = 'input window, operand 2, single buffered']
    #allocation7 [shape = 's32[1]{0}', space=sflag, size = 0x4, scoped, tag = 'scoped memory for tpu_custom_call.1']
    #allocation8 [shape = 'u8[262144]{0}', space=vmem, size = 0x40000, scoped, tag = 'input window, operand 4, single buffered']
    #allocation9 [shape = 'u8[4096]{0}', space=vmem, size = 0x1000, scoped, tag = 'input window, operand 5, single buffered']
    #allocation10 [shape = 's32[1]{0}', space=sflag, size = 0x4, scoped, tag = 'scoped memory for tpu_custom_call.1']
    #allocation11 [shape = 'u8[1048576]{0}', space=vmem, size = 0x100000, scoped, tag = 'input window, operand 6, single buffered']
    #allocation12 [shape = 'u8[262144]{0}', space=vmem, size = 0x40000, scoped, tag = 'input window, operand 8, single buffered']
    #allocation13 [shape = 's32[1]{0}', space=sflag, size = 0x4, scoped, tag = 'scoped memory for tpu_custom_call.1']
    #allocation14 [shape = 'u8[1024]{0}', space=vmem, size = 0x400, scoped, tag = 'input window, operand 9, single buffered']
    #allocation15 [shape = 'u8[65536]{0}', space=vmem, size = 0x10000, scoped, tag = 'input window, operand 10, single buffered']
    #allocation16 [shape = 's32[1]{0}', space=sflag, size = 0x4, scoped, tag = 'scoped memory for tpu_custom_call.1']
    #allocation17 [shape = 'u8[512]{0}', space=vmem, size = 0x400, scoped, tag = 'input window, operand 11, single buffered']
    #allocation18 [shape = 'u8[512]{0}', space=vmem, size = 0x400, scoped, tag = 'input window, operand 13, single buffered']
    #allocation19 [shape = 's32[1]{0}', space=sflag, size = 0x4, scoped, tag = 'scoped memory for tpu_custom_call.1']
    #allocation20 [shape = 'u8[512]{0}', space=vmem, size = 0x400, scoped, tag = 'input window, operand 15, single buffered']
    #allocation21 [shape = 'u8[2048]{0}', space=vmem, size = 0x800, scoped, tag = 'input window, operand 16, single buffered']
    #allocation22 [shape = 's32[1]{0}', space=sflag, size = 0x4, scoped, tag = 'scoped memory for tpu_custom_call.1']
    #allocation23 [shape = 'u8[512]{0}', space=vmem, size = 0x400, scoped, tag = 'input window, operand 17, single buffered']
    #allocation24 [shape = 'u8[512]{0}', space=vmem, size = 0x400, scoped, tag = 'input window, operand 18, single buffered']
    #allocation25 [shape = 's32[1]{0}', space=sflag, size = 0x4, scoped, tag = 'scoped memory for tpu_custom_call.1']
    #allocation26 [shape = 'u8[262144]{0}', space=vmem, size = 0x40000, scoped, tag = 'input window, operand 19, single buffered']
    #allocation27 [shape = 'u8[4096]{0}', space=vmem, size = 0x1000, scoped, tag = 'input window, operand 20, single buffered']
    #allocation28 [shape = 's32[1]{0}', space=sflag, size = 0x4, scoped, tag = 'scoped memory for tpu_custom_call.1']
    #allocation29 [shape = 'u8[1048576]{0}', space=vmem, size = 0x100000, scoped, tag = 'input window, operand 21, single buffered']
    #allocation30 [shape = 'u8[2048]{0}', space=vmem, size = 0x800, scoped, tag = 'input window, operand 22, single buffered']
    #allocation31 [shape = 's32[1]{0}', space=sflag, size = 0x4, scoped, tag = 'scoped memory for tpu_custom_call.1']
    #allocation32 [shape = 'u8[512]{0}', space=vmem, size = 0x400, scoped, tag = 'input window, operand 24, single buffered']
    #allocation33 [shape = 'u8[8192]{0}', space=vmem, size = 0x2000, scoped, tag = 'output window, operand 0']
    %66 = vsyncpa [#allocation4], 0
    %s67 = scalar_lea.sflag [#allocation4], 1
    %68 = vsyncpa %s67, 0
    %69 = vsyncpa [#allocation7], 0
    %70 = vsyncpa [#allocation10], 0
    %71 = vsyncpa [#allocation13], 0
    %72 = vsyncpa [#allocation16], 0
    %73 = vsyncpa [#allocation19], 0
    %74 = vsyncpa [#allocation22], 0
    %75 = vsyncpa [#allocation25], 0
    %76 = vsyncpa [#allocation28], 0
    %77 = vsyncpa [#allocation31], 0
    %78 = vsyncpa [#allocation5], 0
    %s79 = scalar_lea.sflag [#allocation5], 1
    %80 = vsyncpa %s79, 0
    loop: start=0, step=1, limit=4
    $region2: #{tpu_custom_call.1} parent=1 // loop_pre_header
      _
    $region3: #{tpu_custom_call.1} parent=1 // loop_header
      %s82 = sphi 0, %s86
      %p83 = scmp.ge.s32.totalorder %s82, 4
      %s92 = sphi 0, %s94
      %s95 = sphi 0, %s92
      %s96 = sphi 0, %s95
      %s112 = sphi 0, %s96
      %s118 = sphi 0, %s120
      %s121 = sphi 0, %s118
      %s122 = sphi 0, %s121
      %s138 = sphi 0, %s122
      %s142 = sphi 0, %s142
      %s144 = sphi 0, %s142
      %s145 = sphi 0, %s144
      %s159 = sphi 0, %s145
      %s163 = sphi 0, %s163
      %s165 = sphi 0, %s163
      %s166 = sphi 0, %s165
      %s180 = sphi 0, %s166
      %s184 = sphi 0, %s184
      %s186 = sphi 0, %s184
      %s187 = sphi 0, %s186
      %s201 = sphi 0, %s187
      %s205 = sphi 0, %s205
      %s207 = sphi 0, %s205
      %s208 = sphi 0, %s207
      %s222 = sphi 0, %s208
      %s226 = sphi 0, %s226
      %s228 = sphi 0, %s226
      %s229 = sphi 0, %s228
      %s243 = sphi 0, %s229
      %s247 = sphi 0, %s247
      %s249 = sphi 0, %s247
      %s250 = sphi 0, %s249
      %s264 = sphi 0, %s250
      %s268 = sphi 0, %s268
      %s270 = sphi 0, %s268
      %s271 = sphi 0, %s270
      %s285 = sphi 0, %s271
      %s289 = sphi 0, %s289
      %s291 = sphi 0, %s289
      %s292 = sphi 0, %s291
      %s306 = sphi 0, %s292
      %s310 = sphi 0, %s310
      %s312 = sphi 0, %s310
      %s313 = sphi 0, %s312
      %s327 = sphi 0, %s313
      %s331 = sphi 0, %s331
      %s333 = sphi 0, %s331
      %s334 = sphi 0, %s333
      %s348 = sphi 0, %s334
      %s352 = sphi 0, %s352
      %s354 = sphi 0, %s352
      %s355 = sphi 0, %s354
      %s369 = sphi 0, %s355
      %s373 = sphi 0, %s373
      %s375 = sphi 0, %s373
      %s376 = sphi 0, %s375
      %s390 = sphi 0, %s376
      %s394 = sphi 0, %s394
      %s396 = sphi 0, %s394
      %s397 = sphi 0, %s396
      %s411 = sphi 0, %s397
      %s415 = sphi 0, %s415
      %s417 = sphi 0, %s415
      %s418 = sphi 0, %s417
      %s432 = sphi 0, %s418
      %s436 = sphi 0, %s436
      %s438 = sphi 0, %s436
      %s439 = sphi 0, %s438
      %s453 = sphi 0, %s439
      %s457 = sphi 0, %s457
      %s459 = sphi 0, %s457
      %s460 = sphi 0, %s459
      %s474 = sphi 0, %s460
      %s478 = sphi 0, %s478
      %s480 = sphi 0, %s478
      %s481 = sphi 0, %s480
      %s495 = sphi 0, %s481
      %s499 = sphi 0, %s499
      %s501 = sphi 0, %s499
      %s502 = sphi 0, %s501
      %s516 = sphi 0, %s502
      %s520 = sphi 0, %s520
      %s522 = sphi 0, %s520
      %s523 = sphi 0, %s522
      %s537 = sphi 0, %s523
      %s541 = sphi 0, %s541
      %s543 = sphi 0, %s541
      %s544 = sphi 0, %s543
      %s558 = sphi 0, %s544
      %s562 = sphi 0, %s562
      %s564 = sphi 0, %s562
      %s565 = sphi 0, %s564
      %s579 = sphi 0, %s565
      %s583 = sphi 0, %s583
      %s585 = sphi 0, %s583
      %s586 = sphi 0, %s585
      %s600 = sphi 0, %s586
      %s604 = sphi 0, %s604
      %s606 = sphi 0, %s604
      %s607 = sphi 0, %s606
      %s621 = sphi 0, %s607
      %s625 = sphi 0, %s625
      %s627 = sphi 0, %s625
      %s628 = sphi 0, %s627
      %s642 = sphi 0, %s628
      %s646 = sphi 0, %s646
      %s648 = sphi 0, %s646
      %s649 = sphi 0, %s648
      %s663 = sphi 0, %s649
      %s667 = sphi 0, %s667
      %s669 = sphi 0, %s667
      %s670 = sphi 0, %s669
      %s684 = sphi 0, %s670
      %s688 = sphi 0, %s688
      %s690 = sphi 0, %s688
      %s691 = sphi 0, %s690
      %s705 = sphi 0, %s691
      %s711 = sphi 0, %s713
      %s714 = sphi 0, %s711
      %s715 = sphi 0, %s714
      %s731 = sphi 0, %s715
    $region4: #{tpu_custom_call.1} parent=1 // loop_header_branch
      %85 = sbr.rel (%p83) target = $region8
    $region5: #{tpu_custom_call.1} parent=1 // loop_body
      %s87 = ssub.s32 %s82, 1
      %s88 = ssub.s32 %s82, 2
      %s89 = sadd.s32 %s82, 1
      %s90 = ssub.s32 %s82, %s89
      %p91 = scmp.eq.s32.totalorder %s90, 0
      %s93 = sadd.s32 %s92, 1
      %s94 = scalar_select %p91, %s92, %s93
      %p97 = pneg %p91
      %p98 = scmp.eq.s32.totalorder %s82, 1
      %p99 = por %p97, %p98
      %p100 = scmp.ne.s32.totalorder %s92, %s95
      %p101 = scmp.eq.s32.totalorder %s82, 0
      %p102 = por %p100, %p101
      %p103 = scmp.ne.s32.totalorder %s92, %s95
      %p104 = scmp.eq.s32.totalorder %s87, 1
      %p105 = por %p103, %p104
      %p106 = scmp.ne.s32.totalorder %s95, %s96
      %p107 = scmp.eq.s32.totalorder %s87, 0
      %p108 = por %p106, %p107
      %p109 = scmp.ne.s32.totalorder %s95, %s96
      %p110 = scmp.eq.s32.totalorder %s88, 1
      %p111 = por %p109, %p110
      %p113 = scmp.ne.s32.totalorder %s96, %s112
      %p114 = scmp.eq.s32.totalorder %s88, 0
      %p115 = por %p113, %p114
      %s116 = ssub.s32 %s82, %s89
      %p117 = scmp.eq.s32.totalorder %s116, 0
      %s119 = sadd.s32 %s118, 1
      %s120 = scalar_select %p117, %s118, %s119
      %p123 = pneg %p117
      %p124 = scmp.eq.s32.totalorder %s82, 1
      %p125 = por %p123, %p124
      %p126 = scmp.ne.s32.totalorder %s118, %s121
      %p127 = scmp.eq.s32.totalorder %s82, 0
      %p128 = por %p126, %p127
      %p129 = scmp.ne.s32.totalorder %s118, %s121
      %p130 = scmp.eq.s32.totalorder %s87, 1
      %p131 = por %p129, %p130
      %p132 = scmp.ne.s32.totalorder %s121, %s122
      %p133 = scmp.eq.s32.totalorder %s87, 0
      %p134 = por %p132, %p133
      %p135 = scmp.ne.s32.totalorder %s121, %s122
      %p136 = scmp.eq.s32.totalorder %s88, 1
      %p137 = por %p135, %p136
      %p139 = scmp.ne.s32.totalorder %s122, %s138
      %p140 = scmp.eq.s32.totalorder %s88, 0
      %p141 = por %p139, %p140
      %s143 = sadd.s32 %s142, 1
      %p146 = scmp.eq.s32.totalorder %s82, 1
      %p147 = scmp.ne.s32.totalorder %s142, %s144
      %p148 = scmp.eq.s32.totalorder %s82, 0
      %p149 = por %p147, %p148
      %p150 = scmp.ne.s32.totalorder %s142, %s144
      %p151 = scmp.eq.s32.totalorder %s87, 1
      %p152 = por %p150, %p151
      %p153 = scmp.ne.s32.totalorder %s144, %s145
      %p154 = scmp.eq.s32.totalorder %s87, 0
      %p155 = por %p153, %p154
      %p156 = scmp.ne.s32.totalorder %s144, %s145
      %p157 = scmp.eq.s32.totalorder %s88, 1
      %p158 = por %p156, %p157
      %p160 = scmp.ne.s32.totalorder %s145, %s159
      %p161 = scmp.eq.s32.totalorder %s88, 0
      %p162 = por %p160, %p161
      %s164 = sadd.s32 %s163, 1
      %p167 = scmp.eq.s32.totalorder %s82, 1
      %p168 = scmp.ne.s32.totalorder %s163, %s165
      %p169 = scmp.eq.s32.totalorder %s82, 0
      %p170 = por %p168, %p169
      %p171 = scmp.ne.s32.totalorder %s163, %s165
      %p172 = scmp.eq.s32.totalorder %s87, 1
      %p173 = por %p171, %p172
      %p174 = scmp.ne.s32.totalorder %s165, %s166
      %p175 = scmp.eq.s32.totalorder %s87, 0
      %p176 = por %p174, %p175
      %p177 = scmp.ne.s32.totalorder %s165, %s166
      %p178 = scmp.eq.s32.totalorder %s88, 1
      %p179 = por %p177, %p178
      %p181 = scmp.ne.s32.totalorder %s166, %s180
      %p182 = scmp.eq.s32.totalorder %s88, 0
      %p183 = por %p181, %p182
      %s185 = sadd.s32 %s184, 1
      %p188 = scmp.eq.s32.totalorder %s82, 1
      %p189 = scmp.ne.s32.totalorder %s184, %s186
      %p190 = scmp.eq.s32.totalorder %s82, 0
      %p191 = por %p189, %p190
      %p192 = scmp.ne.s32.totalorder %s184, %s186
      %p193 = scmp.eq.s32.totalorder %s87, 1
      %p194 = por %p192, %p193
      %p195 = scmp.ne.s32.totalorder %s186, %s187
      %p196 = scmp.eq.s32.totalorder %s87, 0
      %p197 = por %p195, %p196
      %p198 = scmp.ne.s32.totalorder %s186, %s187
      %p199 = scmp.eq.s32.totalorder %s88, 1
      %p200 = por %p198, %p199
      %p202 = scmp.ne.s32.totalorder %s187, %s201
      %p203 = scmp.eq.s32.totalorder %s88, 0
      %p204 = por %p202, %p203
      %s206 = sadd.s32 %s205, 1
      %p209 = scmp.eq.s32.totalorder %s82, 1
      %p210 = scmp.ne.s32.totalorder %s205, %s207
      %p211 = scmp.eq.s32.totalorder %s82, 0
      %p212 = por %p210, %p211
      %p213 = scmp.ne.s32.totalorder %s205, %s207
      %p214 = scmp.eq.s32.totalorder %s87, 1
      %p215 = por %p213, %p214
      %p216 = scmp.ne.s32.totalorder %s207, %s208
      %p217 = scmp.eq.s32.totalorder %s87, 0
      %p218 = por %p216, %p217
      %p219 = scmp.ne.s32.totalorder %s207, %s208
      %p220 = scmp.eq.s32.totalorder %s88, 1
      %p221 = por %p219, %p220
      %p223 = scmp.ne.s32.totalorder %s208, %s222
      %p224 = scmp.eq.s32.totalorder %s88, 0
      %p225 = por %p223, %p224
      %s227 = sadd.s32 %s226, 1
      %p230 = scmp.eq.s32.totalorder %s82, 1
      %p231 = scmp.ne.s32.totalorder %s226, %s228
      %p232 = scmp.eq.s32.totalorder %s82, 0
      %p233 = por %p231, %p232
      %p234 = scmp.ne.s32.totalorder %s226, %s228
      %p235 = scmp.eq.s32.totalorder %s87, 1
      %p236 = por %p234, %p235
      %p237 = scmp.ne.s32.totalorder %s228, %s229
      %p238 = scmp.eq.s32.totalorder %s87, 0
      %p239 = por %p237, %p238
      %p240 = scmp.ne.s32.totalorder %s228, %s229
      %p241 = scmp.eq.s32.totalorder %s88, 1
      %p242 = por %p240, %p241
      %p244 = scmp.ne.s32.totalorder %s229, %s243
      %p245 = scmp.eq.s32.totalorder %s88, 0
      %p246 = por %p244, %p245
      %s248 = sadd.s32 %s247, 1
      %p251 = scmp.eq.s32.totalorder %s82, 1
      %p252 = scmp.ne.s32.totalorder %s247, %s249
      %p253 = scmp.eq.s32.totalorder %s82, 0
      %p254 = por %p252, %p253
      %p255 = scmp.ne.s32.totalorder %s247, %s249
      %p256 = scmp.eq.s32.totalorder %s87, 1
      %p257 = por %p255, %p256
      %p258 = scmp.ne.s32.totalorder %s249, %s250
      %p259 = scmp.eq.s32.totalorder %s87, 0
      %p260 = por %p258, %p259
      %p261 = scmp.ne.s32.totalorder %s249, %s250
      %p262 = scmp.eq.s32.totalorder %s88, 1
      %p263 = por %p261, %p262
      %p265 = scmp.ne.s32.totalorder %s250, %s264
      %p266 = scmp.eq.s32.totalorder %s88, 0
      %p267 = por %p265, %p266
      %s269 = sadd.s32 %s268, 1
      %p272 = scmp.eq.s32.totalorder %s82, 1
      %p273 = scmp.ne.s32.totalorder %s268, %s270
      %p274 = scmp.eq.s32.totalorder %s82, 0
      %p275 = por %p273, %p274
      %p276 = scmp.ne.s32.totalorder %s268, %s270
      %p277 = scmp.eq.s32.totalorder %s87, 1
      %p278 = por %p276, %p277
      %p279 = scmp.ne.s32.totalorder %s270, %s271
      %p280 = scmp.eq.s32.totalorder %s87, 0
      %p281 = por %p279, %p280
      %p282 = scmp.ne.s32.totalorder %s270, %s271
      %p283 = scmp.eq.s32.totalorder %s88, 1
      %p284 = por %p282, %p283
      %p286 = scmp.ne.s32.totalorder %s271, %s285
      %p287 = scmp.eq.s32.totalorder %s88, 0
      %p288 = por %p286, %p287
      %s290 = sadd.s32 %s289, 1
      %p293 = scmp.eq.s32.totalorder %s82, 1
      %p294 = scmp.ne.s32.totalorder %s289, %s291
      %p295 = scmp.eq.s32.totalorder %s82, 0
      %p296 = por %p294, %p295
      %p297 = scmp.ne.s32.totalorder %s289, %s291
      %p298 = scmp.eq.s32.totalorder %s87, 1
      %p299 = por %p297, %p298
      %p300 = scmp.ne.s32.totalorder %s291, %s292
      %p301 = scmp.eq.s32.totalorder %s87, 0
      %p302 = por %p300, %p301
      %p303 = scmp.ne.s32.totalorder %s291, %s292
      %p304 = scmp.eq.s32.totalorder %s88, 1
      %p305 = por %p303, %p304
      %p307 = scmp.ne.s32.totalorder %s292, %s306
      %p308 = scmp.eq.s32.totalorder %s88, 0
      %p309 = por %p307, %p308
      %s311 = sadd.s32 %s310, 1
      %p314 = scmp.eq.s32.totalorder %s82, 1
      %p315 = scmp.ne.s32.totalorder %s310, %s312
      %p316 = scmp.eq.s32.totalorder %s82, 0
      %p317 = por %p315, %p316
      %p318 = scmp.ne.s32.totalorder %s310, %s312
      %p319 = scmp.eq.s32.totalorder %s87, 1
      %p320 = por %p318, %p319
      %p321 = scmp.ne.s32.totalorder %s312, %s313
      %p322 = scmp.eq.s32.totalorder %s87, 0
      %p323 = por %p321, %p322
      %p324 = scmp.ne.s32.totalorder %s312, %s313
      %p325 = scmp.eq.s32.totalorder %s88, 1
      %p326 = por %p324, %p325
      %p328 = scmp.ne.s32.totalorder %s313, %s327
      %p329 = scmp.eq.s32.totalorder %s88, 0
      %p330 = por %p328, %p329
      %s332 = sadd.s32 %s331, 1
      %p335 = scmp.eq.s32.totalorder %s82, 1
      %p336 = scmp.ne.s32.totalorder %s331, %s333
      %p337 = scmp.eq.s32.totalorder %s82, 0
      %p338 = por %p336, %p337
      %p339 = scmp.ne.s32.totalorder %s331, %s333
      %p340 = scmp.eq.s32.totalorder %s87, 1
      %p341 = por %p339, %p340
      %p342 = scmp.ne.s32.totalorder %s333, %s334
      %p343 = scmp.eq.s32.totalorder %s87, 0
      %p344 = por %p342, %p343
      %p345 = scmp.ne.s32.totalorder %s333, %s334
      %p346 = scmp.eq.s32.totalorder %s88, 1
      %p347 = por %p345, %p346
      %p349 = scmp.ne.s32.totalorder %s334, %s348
      %p350 = scmp.eq.s32.totalorder %s88, 0
      %p351 = por %p349, %p350
      %s353 = sadd.s32 %s352, 1
      %p356 = scmp.eq.s32.totalorder %s82, 1
      %p357 = scmp.ne.s32.totalorder %s352, %s354
      %p358 = scmp.eq.s32.totalorder %s82, 0
      %p359 = por %p357, %p358
      %p360 = scmp.ne.s32.totalorder %s352, %s354
      %p361 = scmp.eq.s32.totalorder %s87, 1
      %p362 = por %p360, %p361
      %p363 = scmp.ne.s32.totalorder %s354, %s355
      %p364 = scmp.eq.s32.totalorder %s87, 0
      %p365 = por %p363, %p364
      %p366 = scmp.ne.s32.totalorder %s354, %s355
      %p367 = scmp.eq.s32.totalorder %s88, 1
      %p368 = por %p366, %p367
      %p370 = scmp.ne.s32.totalorder %s355, %s369
      %p371 = scmp.eq.s32.totalorder %s88, 0
      %p372 = por %p370, %p371
      %s374 = sadd.s32 %s373, 1
      %p377 = scmp.eq.s32.totalorder %s82, 1
      %p378 = scmp.ne.s32.totalorder %s373, %s375
      %p379 = scmp.eq.s32.totalorder %s82, 0
      %p380 = por %p378, %p379
      %p381 = scmp.ne.s32.totalorder %s373, %s375
      %p382 = scmp.eq.s32.totalorder %s87, 1
      %p383 = por %p381, %p382
      %p384 = scmp.ne.s32.totalorder %s375, %s376
      %p385 = scmp.eq.s32.totalorder %s87, 0
      %p386 = por %p384, %p385
      %p387 = scmp.ne.s32.totalorder %s375, %s376
      %p388 = scmp.eq.s32.totalorder %s88, 1
      %p389 = por %p387, %p388
      %p391 = scmp.ne.s32.totalorder %s376, %s390
      %p392 = scmp.eq.s32.totalorder %s88, 0
      %p393 = por %p391, %p392
      %s395 = sadd.s32 %s394, 1
      %p398 = scmp.eq.s32.totalorder %s82, 1
      %p399 = scmp.ne.s32.totalorder %s394, %s396
      %p400 = scmp.eq.s32.totalorder %s82, 0
      %p401 = por %p399, %p400
      %p402 = scmp.ne.s32.totalorder %s394, %s396
      %p403 = scmp.eq.s32.totalorder %s87, 1
      %p404 = por %p402, %p403
      %p405 = scmp.ne.s32.totalorder %s396, %s397
      %p406 = scmp.eq.s32.totalorder %s87, 0
      %p407 = por %p405, %p406
      %p408 = scmp.ne.s32.totalorder %s396, %s397
      %p409 = scmp.eq.s32.totalorder %s88, 1
      %p410 = por %p408, %p409
      %p412 = scmp.ne.s32.totalorder %s397, %s411
      %p413 = scmp.eq.s32.totalorder %s88, 0
      %p414 = por %p412, %p413
      %s416 = sadd.s32 %s415, 1
      %p419 = scmp.eq.s32.totalorder %s82, 1
      %p420 = scmp.ne.s32.totalorder %s415, %s417
      %p421 = scmp.eq.s32.totalorder %s82, 0
      %p422 = por %p420, %p421
      %p423 = scmp.ne.s32.totalorder %s415, %s417
      %p424 = scmp.eq.s32.totalorder %s87, 1
      %p425 = por %p423, %p424
      %p426 = scmp.ne.s32.totalorder %s417, %s418
      %p427 = scmp.eq.s32.totalorder %s87, 0
      %p428 = por %p426, %p427
      %p429 = scmp.ne.s32.totalorder %s417, %s418
      %p430 = scmp.eq.s32.totalorder %s88, 1
      %p431 = por %p429, %p430
      %p433 = scmp.ne.s32.totalorder %s418, %s432
      %p434 = scmp.eq.s32.totalorder %s88, 0
      %p435 = por %p433, %p434
      %s437 = sadd.s32 %s436, 1
      %p440 = scmp.eq.s32.totalorder %s82, 1
      %p441 = scmp.ne.s32.totalorder %s436, %s438
      %p442 = scmp.eq.s32.totalorder %s82, 0
      %p443 = por %p441, %p442
      %p444 = scmp.ne.s32.totalorder %s436, %s438
      %p445 = scmp.eq.s32.totalorder %s87, 1
      %p446 = por %p444, %p445
      %p447 = scmp.ne.s32.totalorder %s438, %s439
      %p448 = scmp.eq.s32.totalorder %s87, 0
      %p449 = por %p447, %p448
      %p450 = scmp.ne.s32.totalorder %s438, %s439
      %p451 = scmp.eq.s32.totalorder %s88, 1
      %p452 = por %p450, %p451
      %p454 = scmp.ne.s32.totalorder %s439, %s453
      %p455 = scmp.eq.s32.totalorder %s88, 0
      %p456 = por %p454, %p455
      %s458 = sadd.s32 %s457, 1
      %p461 = scmp.eq.s32.totalorder %s82, 1
      %p462 = scmp.ne.s32.totalorder %s457, %s459
      %p463 = scmp.eq.s32.totalorder %s82, 0
      %p464 = por %p462, %p463
      %p465 = scmp.ne.s32.totalorder %s457, %s459
      %p466 = scmp.eq.s32.totalorder %s87, 1
      %p467 = por %p465, %p466
      %p468 = scmp.ne.s32.totalorder %s459, %s460
      %p469 = scmp.eq.s32.totalorder %s87, 0
      %p470 = por %p468, %p469
      %p471 = scmp.ne.s32.totalorder %s459, %s460
      %p472 = scmp.eq.s32.totalorder %s88, 1
      %p473 = por %p471, %p472
      %p475 = scmp.ne.s32.totalorder %s460, %s474
      %p476 = scmp.eq.s32.totalorder %s88, 0
      %p477 = por %p475, %p476
      %s479 = sadd.s32 %s478, 1
      %p482 = scmp.eq.s32.totalorder %s82, 1
      %p483 = scmp.ne.s32.totalorder %s478, %s480
      %p484 = scmp.eq.s32.totalorder %s82, 0
      %p485 = por %p483, %p484
      %p486 = scmp.ne.s32.totalorder %s478, %s480
      %p487 = scmp.eq.s32.totalorder %s87, 1
      %p488 = por %p486, %p487
      %p489 = scmp.ne.s32.totalorder %s480, %s481
      %p490 = scmp.eq.s32.totalorder %s87, 0
      %p491 = por %p489, %p490
      %p492 = scmp.ne.s32.totalorder %s480, %s481
      %p493 = scmp.eq.s32.totalorder %s88, 1
      %p494 = por %p492, %p493
      %p496 = scmp.ne.s32.totalorder %s481, %s495
      %p497 = scmp.eq.s32.totalorder %s88, 0
      %p498 = por %p496, %p497
      %s500 = sadd.s32 %s499, 1
      %p503 = scmp.eq.s32.totalorder %s82, 1
      %p504 = scmp.ne.s32.totalorder %s499, %s501
      %p505 = scmp.eq.s32.totalorder %s82, 0
      %p506 = por %p504, %p505
      %p507 = scmp.ne.s32.totalorder %s499, %s501
      %p508 = scmp.eq.s32.totalorder %s87, 1
      %p509 = por %p507, %p508
      %p510 = scmp.ne.s32.totalorder %s501, %s502
      %p511 = scmp.eq.s32.totalorder %s87, 0
      %p512 = por %p510, %p511
      %p513 = scmp.ne.s32.totalorder %s501, %s502
      %p514 = scmp.eq.s32.totalorder %s88, 1
      %p515 = por %p513, %p514
      %p517 = scmp.ne.s32.totalorder %s502, %s516
      %p518 = scmp.eq.s32.totalorder %s88, 0
      %p519 = por %p517, %p518
      %s521 = sadd.s32 %s520, 1
      %p524 = scmp.eq.s32.totalorder %s82, 1
      %p525 = scmp.ne.s32.totalorder %s520, %s522
      %p526 = scmp.eq.s32.totalorder %s82, 0
      %p527 = por %p525, %p526
      %p528 = scmp.ne.s32.totalorder %s520, %s522
      %p529 = scmp.eq.s32.totalorder %s87, 1
      %p530 = por %p528, %p529
      %p531 = scmp.ne.s32.totalorder %s522, %s523
      %p532 = scmp.eq.s32.totalorder %s87, 0
      %p533 = por %p531, %p532
      %p534 = scmp.ne.s32.totalorder %s522, %s523
      %p535 = scmp.eq.s32.totalorder %s88, 1
      %p536 = por %p534, %p535
      %p538 = scmp.ne.s32.totalorder %s523, %s537
      %p539 = scmp.eq.s32.totalorder %s88, 0
      %p540 = por %p538, %p539
      %s542 = sadd.s32 %s541, 1
      %p545 = scmp.eq.s32.totalorder %s82, 1
      %p546 = scmp.ne.s32.totalorder %s541, %s543
      %p547 = scmp.eq.s32.totalorder %s82, 0
      %p548 = por %p546, %p547
      %p549 = scmp.ne.s32.totalorder %s541, %s543
      %p550 = scmp.eq.s32.totalorder %s87, 1
      %p551 = por %p549, %p550
      %p552 = scmp.ne.s32.totalorder %s543, %s544
      %p553 = scmp.eq.s32.totalorder %s87, 0
      %p554 = por %p552, %p553
      %p555 = scmp.ne.s32.totalorder %s543, %s544
      %p556 = scmp.eq.s32.totalorder %s88, 1
      %p557 = por %p555, %p556
      %p559 = scmp.ne.s32.totalorder %s544, %s558
      %p560 = scmp.eq.s32.totalorder %s88, 0
      %p561 = por %p559, %p560
      %s563 = sadd.s32 %s562, 1
      %p566 = scmp.eq.s32.totalorder %s82, 1
      %p567 = scmp.ne.s32.totalorder %s562, %s564
      %p568 = scmp.eq.s32.totalorder %s82, 0
      %p569 = por %p567, %p568
      %p570 = scmp.ne.s32.totalorder %s562, %s564
      %p571 = scmp.eq.s32.totalorder %s87, 1
      %p572 = por %p570, %p571
      %p573 = scmp.ne.s32.totalorder %s564, %s565
      %p574 = scmp.eq.s32.totalorder %s87, 0
      %p575 = por %p573, %p574
      %p576 = scmp.ne.s32.totalorder %s564, %s565
      %p577 = scmp.eq.s32.totalorder %s88, 1
      %p578 = por %p576, %p577
      %p580 = scmp.ne.s32.totalorder %s565, %s579
      %p581 = scmp.eq.s32.totalorder %s88, 0
      %p582 = por %p580, %p581
      %s584 = sadd.s32 %s583, 1
      %p587 = scmp.eq.s32.totalorder %s82, 1
      %p588 = scmp.ne.s32.totalorder %s583, %s585
      %p589 = scmp.eq.s32.totalorder %s82, 0
      %p590 = por %p588, %p589
      %p591 = scmp.ne.s32.totalorder %s583, %s585
      %p592 = scmp.eq.s32.totalorder %s87, 1
      %p593 = por %p591, %p592
      %p594 = scmp.ne.s32.totalorder %s585, %s586
      %p595 = scmp.eq.s32.totalorder %s87, 0
      %p596 = por %p594, %p595
      %p597 = scmp.ne.s32.totalorder %s585, %s586
      %p598 = scmp.eq.s32.totalorder %s88, 1
      %p599 = por %p597, %p598
      %p601 = scmp.ne.s32.totalorder %s586, %s600
      %p602 = scmp.eq.s32.totalorder %s88, 0
      %p603 = por %p601, %p602
      %s605 = sadd.s32 %s604, 1
      %p608 = scmp.eq.s32.totalorder %s82, 1
      %p609 = scmp.ne.s32.totalorder %s604, %s606
      %p610 = scmp.eq.s32.totalorder %s82, 0
      %p611 = por %p609, %p610
      %p612 = scmp.ne.s32.totalorder %s604, %s606
      %p613 = scmp.eq.s32.totalorder %s87, 1
      %p614 = por %p612, %p613
      %p615 = scmp.ne.s32.totalorder %s606, %s607
      %p616 = scmp.eq.s32.totalorder %s87, 0
      %p617 = por %p615, %p616
      %p618 = scmp.ne.s32.totalorder %s606, %s607
      %p619 = scmp.eq.s32.totalorder %s88, 1
      %p620 = por %p618, %p619
      %p622 = scmp.ne.s32.totalorder %s607, %s621
      %p623 = scmp.eq.s32.totalorder %s88, 0
      %p624 = por %p622, %p623
      %s626 = sadd.s32 %s625, 1
      %p629 = scmp.eq.s32.totalorder %s82, 1
      %p630 = scmp.ne.s32.totalorder %s625, %s627
      %p631 = scmp.eq.s32.totalorder %s82, 0
      %p632 = por %p630, %p631
      %p633 = scmp.ne.s32.totalorder %s625, %s627
      %p634 = scmp.eq.s32.totalorder %s87, 1
      %p635 = por %p633, %p634
      %p636 = scmp.ne.s32.totalorder %s627, %s628
      %p637 = scmp.eq.s32.totalorder %s87, 0
      %p638 = por %p636, %p637
      %p639 = scmp.ne.s32.totalorder %s627, %s628
      %p640 = scmp.eq.s32.totalorder %s88, 1
      %p641 = por %p639, %p640
      %p643 = scmp.ne.s32.totalorder %s628, %s642
      %p644 = scmp.eq.s32.totalorder %s88, 0
      %p645 = por %p643, %p644
      %s647 = sadd.s32 %s646, 1
      %p650 = scmp.eq.s32.totalorder %s82, 1
      %p651 = scmp.ne.s32.totalorder %s646, %s648
      %p652 = scmp.eq.s32.totalorder %s82, 0
      %p653 = por %p651, %p652
      %p654 = scmp.ne.s32.totalorder %s646, %s648
      %p655 = scmp.eq.s32.totalorder %s87, 1
      %p656 = por %p654, %p655
      %p657 = scmp.ne.s32.totalorder %s648, %s649
      %p658 = scmp.eq.s32.totalorder %s87, 0
      %p659 = por %p657, %p658
      %p660 = scmp.ne.s32.totalorder %s648, %s649
      %p661 = scmp.eq.s32.totalorder %s88, 1
      %p662 = por %p660, %p661
      %p664 = scmp.ne.s32.totalorder %s649, %s663
      %p665 = scmp.eq.s32.totalorder %s88, 0
      %p666 = por %p664, %p665
      %s668 = sadd.s32 %s667, 1
      %p671 = scmp.eq.s32.totalorder %s82, 1
      %p672 = scmp.ne.s32.totalorder %s667, %s669
      %p673 = scmp.eq.s32.totalorder %s82, 0
      %p674 = por %p672, %p673
      %p675 = scmp.ne.s32.totalorder %s667, %s669
      %p676 = scmp.eq.s32.totalorder %s87, 1
      %p677 = por %p675, %p676
      %p678 = scmp.ne.s32.totalorder %s669, %s670
      %p679 = scmp.eq.s32.totalorder %s87, 0
      %p680 = por %p678, %p679
      %p681 = scmp.ne.s32.totalorder %s669, %s670
      %p682 = scmp.eq.s32.totalorder %s88, 1
      %p683 = por %p681, %p682
      %p685 = scmp.ne.s32.totalorder %s670, %s684
      %p686 = scmp.eq.s32.totalorder %s88, 0
      %p687 = por %p685, %p686
      %s689 = sadd.s32 %s688, 1
      %p692 = scmp.eq.s32.totalorder %s82, 1
      %p693 = scmp.ne.s32.totalorder %s688, %s690
      %p694 = scmp.eq.s32.totalorder %s82, 0
      %p695 = por %p693, %p694
      %p696 = scmp.ne.s32.totalorder %s688, %s690
      %p697 = scmp.eq.s32.totalorder %s87, 1
      %p698 = por %p696, %p697
      %p699 = scmp.ne.s32.totalorder %s690, %s691
      %p700 = scmp.eq.s32.totalorder %s87, 0
      %p701 = por %p699, %p700
      %p702 = scmp.ne.s32.totalorder %s690, %s691
      %p703 = scmp.eq.s32.totalorder %s88, 1
      %p704 = por %p702, %p703
      %p706 = scmp.ne.s32.totalorder %s691, %s705
      %p707 = scmp.eq.s32.totalorder %s88, 0
      %p708 = por %p706, %p707
      %s709 = ssub.s32 %s82, %s89
      %p710 = scmp.eq.s32.totalorder %s709, 0
      %s712 = sadd.s32 %s711, 1
      %s713 = scalar_select %p710, %s711, %s712
      %p716 = pneg %p710
      %p717 = scmp.eq.s32.totalorder %s82, 1
      %p718 = por %p716, %p717
      %p719 = scmp.ne.s32.totalorder %s711, %s714
      %p720 = scmp.eq.s32.totalorder %s82, 0
      %p721 = por %p719, %p720
      %p722 = scmp.ne.s32.totalorder %s711, %s714
      %p723 = scmp.eq.s32.totalorder %s87, 1
      %p724 = por %p722, %p723
      %p725 = scmp.ne.s32.totalorder %s714, %s715
      %p726 = scmp.eq.s32.totalorder %s87, 0
      %p727 = por %p725, %p726
      %p728 = scmp.ne.s32.totalorder %s714, %s715
      %p729 = scmp.eq.s32.totalorder %s88, 1
      %p730 = por %p728, %p729
      %p732 = scmp.ne.s32.totalorder %s715, %s731
      %p733 = scmp.eq.s32.totalorder %s88, 0
      %p734 = por %p732, %p733
      %p735 = scmp.le.s32.totalorder 1, %s82
      %p736 = scmp.lt.s32.totalorder %s82, 3
      %p737 = pnand %p735, %p736
      %p738 = pneg %p737
      // Predicated region
      $region9: #{tpu_custom_call.1} parent=5 // pred_check
        _
      $region10: #{tpu_custom_call.1} parent=5 // pred_check_branch
        %740 = sbr.rel (%p737) target = $region12
      $region11: #{tpu_custom_call.1} parent=5 // pred_region
        %s741 = ssub.s32 %s82, 1
        // Predicated region
        $region13: #{tpu_custom_call.1} parent=11 // pred_check
          %p742 = pneg %p155
        $region14: #{tpu_custom_call.1} parent=11 // pred_check_branch
          %744 = sbr.rel (%p742) target = $region16
        $region15: #{tpu_custom_call.1} parent=11 // pred_region
          %s746 = ssub.s32 192, 192
          %747 = vsyncadd [#allocation7], %s746
          %s748 = sshll.u32 [#allocation6], 4
          %s749 = int_to_ptr.vmem [resolvable:$true] %s748
          %754 = dma.hbm_to_vmem [thread:$0]  %s5, 192, %s749, [#allocation7], 64, 64, 4
        $region16: #{tpu_custom_call.1} parent=11 // pred_fallthru
          _
        // Predicated region
        $region17: #{tpu_custom_call.1} parent=11 // pred_check
          %p755 = pneg %p176
        $region18: #{tpu_custom_call.1} parent=11 // pred_check_branch
          %757 = sbr.rel (%p755) target = $region20
        $region19: #{tpu_custom_call.1} parent=11 // pred_region
          _
        $region20: #{tpu_custom_call.1} parent=11 // pred_fallthru
          _
        // Predicated region
        $region21: #{tpu_custom_call.1} parent=11 // pred_check
          %p758 = pneg %p197
        $region22: #{tpu_custom_call.1} parent=11 // pred_check_branch
          %760 = sbr.rel (%p758) target = $region24
        $region23: #{tpu_custom_call.1} parent=11 // pred_region
          %s762 = ssub.s32 8192, 8192
          %763 = vsyncadd [#allocation7], %s762
          %s764 = sshll.u32 [#allocation8], 4
          %s765 = int_to_ptr.vmem [resolvable:$true] %s764
          %770 = dma.hbm_to_vmem [thread:$0]  %s9, 8192, %s765, [#allocation7], 512, 512, 32
        $region24: #{tpu_custom_call.1} parent=11 // pred_fallthru
          _
        // Predicated region
        $region25: #{tpu_custom_call.1} parent=11 // pred_check
          %p771 = pneg %p218
        $region26: #{tpu_custom_call.1} parent=11 // pred_check_branch
          %773 = sbr.rel (%p771) target = $region28
        $region27: #{tpu_custom_call.1} parent=11 // pred_region
          %s775 = ssub.s32 128, 128
          %776 = vsyncadd [#allocation10], %s775
          %s778 = sshll.u32 [#allocation9], 4
          %s779 = int_to_ptr.vmem [resolvable:$true] %s778
          %781 = dma.hbm_to_vmem [thread:$0]  %s11, 128, %s779, [#allocation10]
        $region28: #{tpu_custom_call.1} parent=11 // pred_fallthru
          _
        // Predicated region
        $region29: #{tpu_custom_call.1} parent=11 // pred_check
          %p782 = pneg %p239
        $region30: #{tpu_custom_call.1} parent=11 // pred_check_branch
          %784 = sbr.rel (%p782) target = $region32
        $region31: #{tpu_custom_call.1} parent=11 // pred_region
          %s786 = ssub.s32 32768, 32768
          %787 = vsyncadd [#allocation10], %s786
          %s788 = sshll.u32 [#allocation11], 4
          %s789 = int_to_ptr.vmem [resolvable:$true] %s788
          %794 = dma.hbm_to_vmem [thread:$0]  %s13, 32768, %s789, [#allocation10], 256, 256, 16
        $region32: #{tpu_custom_call.1} parent=11 // pred_fallthru
          _
        // Predicated region
        $region33: #{tpu_custom_call.1} parent=11 // pred_check
          %p795 = pneg %p260
        $region34: #{tpu_custom_call.1} parent=11 // pred_check_branch
          %797 = sbr.rel (%p795) target = $region36
        $region35: #{tpu_custom_call.1} parent=11 // pred_region
          _
        $region36: #{tpu_custom_call.1} parent=11 // pred_fallthru
          _
        // Predicated region
        $region37: #{tpu_custom_call.1} parent=11 // pred_check
          %p798 = pneg %p281
        $region38: #{tpu_custom_call.1} parent=11 // pred_check_branch
          %800 = sbr.rel (%p798) target = $region40
        $region39: #{tpu_custom_call.1} parent=11 // pred_region
          %s802 = ssub.s32 8192, 8192
          %803 = vsyncadd [#allocation13], %s802
          %s804 = sshll.u32 [#allocation12], 4
          %s805 = int_to_ptr.vmem [resolvable:$true] %s804
          %810 = dma.hbm_to_vmem [thread:$0]  %s17, 8192, %s805, [#allocation13], 128, 128, 8
        $region40: #{tpu_custom_call.1} parent=11 // pred_fallthru
          _
        // Predicated region
        $region41: #{tpu_custom_call.1} parent=11 // pred_check
          %p811 = pneg %p302
        $region42: #{tpu_custom_call.1} parent=11 // pred_check_branch
          %813 = sbr.rel (%p811) target = $region44
        $region43: #{tpu_custom_call.1} parent=11 // pred_region
          %s815 = ssub.s32 32, 32
          %816 = vsyncadd [#allocation13], %s815
          %s818 = sshll.u32 [#allocation14], 4
          %s819 = int_to_ptr.vmem [resolvable:$true] %s818
          %821 = dma.hbm_to_vmem [thread:$0]  %s19, 32, %s819, [#allocation13]
        $region44: #{tpu_custom_call.1} parent=11 // pred_fallthru
          _
        // Predicated region
        $region45: #{tpu_custom_call.1} parent=11 // pred_check
          %p822 = pneg %p323
        $region46: #{tpu_custom_call.1} parent=11 // pred_check_branch
          %824 = sbr.rel (%p822) target = $region48
        $region47: #{tpu_custom_call.1} parent=11 // pred_region
          %s826 = ssub.s32 2048, 2048
          %827 = vsyncadd [#allocation16], %s826
          %s828 = sshll.u32 [#allocation15], 4
          %s829 = int_to_ptr.vmem [resolvable:$true] %s828
          %834 = dma.hbm_to_vmem [thread:$0]  %s21, 2048, %s829, [#allocation16], 64, 64, 4
        $region48: #{tpu_custom_call.1} parent=11 // pred_fallthru
          _
        // Predicated region
        $region49: #{tpu_custom_call.1} parent=11 // pred_check
          %p835 = pneg %p344
        $region50: #{tpu_custom_call.1} parent=11 // pred_check_branch
          %837 = sbr.rel (%p835) target = $region52
        $region51: #{tpu_custom_call.1} parent=11 // pred_region
          %s839 = ssub.s32 16, 16
          %840 = vsyncadd [#allocation16], %s839
          %s842 = sshll.u32 [#allocation17], 4
          %s843 = int_to_ptr.vmem [resolvable:$true] %s842
          %845 = dma.hbm_to_vmem [thread:$0]  %s23, 16, %s843, [#allocation16]
        $region52: #{tpu_custom_call.1} parent=11 // pred_fallthru
          _
        // Predicated region
        $region53: #{tpu_custom_call.1} parent=11 // pred_check
          %p846 = pneg %p365
        $region54: #{tpu_custom_call.1} parent=11 // pred_check_branch
          %848 = sbr.rel (%p846) target = $region56
        $region55: #{tpu_custom_call.1} parent=11 // pred_region
          _
        $region56: #{tpu_custom_call.1} parent=11 // pred_fallthru
          _
        // Predicated region
        $region57: #{tpu_custom_call.1} parent=11 // pred_check
          %p849 = pneg %p386
        $region58: #{tpu_custom_call.1} parent=11 // pred_check_branch
          %851 = sbr.rel (%p849) target = $region60
        $region59: #{tpu_custom_call.1} parent=11 // pred_region
          %s853 = ssub.s32 16, 16
          %854 = vsyncadd [#allocation19], %s853
          %s856 = sshll.u32 [#allocation18], 4
          %s857 = int_to_ptr.vmem [resolvable:$true] %s856
          %859 = dma.hbm_to_vmem [thread:$0]  %s27, 16, %s857, [#allocation19]
        $region60: #{tpu_custom_call.1} parent=11 // pred_fallthru
          _
        // Predicated region
        $region61: #{tpu_custom_call.1} parent=11 // pred_check
          %p860 = pneg %p407
        $region62: #{tpu_custom_call.1} parent=11 // pred_check_branch
          %862 = sbr.rel (%p860) target = $region64
        $region63: #{tpu_custom_call.1} parent=11 // pred_region
          _
        $region64: #{tpu_custom_call.1} parent=11 // pred_fallthru
          _
        // Predicated region
        $region65: #{tpu_custom_call.1} parent=11 // pred_check
          %p863 = pneg %p428
        $region66: #{tpu_custom_call.1} parent=11 // pred_check_branch
          %865 = sbr.rel (%p863) target = $region68
        $region67: #{tpu_custom_call.1} parent=11 // pred_region
          %s867 = ssub.s32 16, 16
          %868 = vsyncadd [#allocation19], %s867
          %s870 = sshll.u32 [#allocation20], 4
          %s871 = int_to_ptr.vmem [resolvable:$true] %s870
          %873 = dma.hbm_to_vmem [thread:$0]  %s31, 16, %s871, [#allocation19]
        $region68: #{tpu_custom_call.1} parent=11 // pred_fallthru
          _
        // Predicated region
        $region69: #{tpu_custom_call.1} parent=11 // pred_check
          %p874 = pneg %p449
        $region70: #{tpu_custom_call.1} parent=11 // pred_check_branch
          %876 = sbr.rel (%p874) target = $region72
        $region71: #{tpu_custom_call.1} parent=11 // pred_region
          %s878 = ssub.s32 64, 64
          %879 = vsyncadd [#allocation22], %s878
          %s881 = sshll.u32 [#allocation21], 4
          %s882 = int_to_ptr.vmem [resolvable:$true] %s881
          %884 = dma.hbm_to_vmem [thread:$0]  %s33, 64, %s882, [#allocation22]
        $region72: #{tpu_custom_call.1} parent=11 // pred_fallthru
          _
        // Predicated region
        $region73: #{tpu_custom_call.1} parent=11 // pred_check
          %p885 = pneg %p470
        $region74: #{tpu_custom_call.1} parent=11 // pred_check_branch
          %887 = sbr.rel (%p885) target = $region76
        $region75: #{tpu_custom_call.1} parent=11 // pred_region
          %s889 = ssub.s32 16, 16
          %890 = vsyncadd [#allocation22], %s889
          %s892 = sshll.u32 [#allocation23], 4
          %s893 = int_to_ptr.vmem [resolvable:$true] %s892
          %895 = dma.hbm_to_vmem [thread:$0]  %s35, 16, %s893, [#allocation22]
        $region76: #{tpu_custom_call.1} parent=11 // pred_fallthru
          _
        // Predicated region
        $region77: #{tpu_custom_call.1} parent=11 // pred_check
          %p896 = pneg %p491
        $region78: #{tpu_custom_call.1} parent=11 // pred_check_branch
          %898 = sbr.rel (%p896) target = $region80
        $region79: #{tpu_custom_call.1} parent=11 // pred_region
          %s900 = ssub.s32 16, 16
          %901 = vsyncadd [#allocation25], %s900
          %s903 = sshll.u32 [#allocation24], 4
          %s904 = int_to_ptr.vmem [resolvable:$true] %s903
          %906 = dma.hbm_to_vmem [thread:$0]  %s37, 16, %s904, [#allocation25]
        $region80: #{tpu_custom_call.1} parent=11 // pred_fallthru
          _
        // Predicated region
        $region81: #{tpu_custom_call.1} parent=11 // pred_check
          %p907 = pneg %p512
        $region82: #{tpu_custom_call.1} parent=11 // pred_check_branch
          %909 = sbr.rel (%p907) target = $region84
        $region83: #{tpu_custom_call.1} parent=11 // pred_region
          %s911 = ssub.s32 8192, 8192
          %912 = vsyncadd [#allocation25], %s911
          %s913 = sshll.u32 [#allocation26], 4
          %s914 = int_to_ptr.vmem [resolvable:$true] %s913
          %919 = dma.hbm_to_vmem [thread:$0]  %s39, 8192, %s914, [#allocation25], 512, 512, 32
        $region84: #{tpu_custom_call.1} parent=11 // pred_fallthru
          _
        // Predicated region
        $region85: #{tpu_custom_call.1} parent=11 // pred_check
          %p920 = pneg %p533
        $region86: #{tpu_custom_call.1} parent=11 // pred_check_branch
          %922 = sbr.rel (%p920) target = $region88
        $region87: #{tpu_custom_call.1} parent=11 // pred_region
          %s924 = ssub.s32 128, 128
          %925 = vsyncadd [#allocation28], %s924
          %s927 = sshll.u32 [#allocation27], 4
          %s928 = int_to_ptr.vmem [resolvable:$true] %s927
          %930 = dma.hbm_to_vmem [thread:$0]  %s41, 128, %s928, [#allocation28]
        $region88: #{tpu_custom_call.1} parent=11 // pred_fallthru
          _
        // Predicated region
        $region89: #{tpu_custom_call.1} parent=11 // pred_check
          %p931 = pneg %p554
        $region90: #{tpu_custom_call.1} parent=11 // pred_check_branch
          %933 = sbr.rel (%p931) target = $region92
        $region91: #{tpu_custom_call.1} parent=11 // pred_region
          %s935 = ssub.s32 32768, 32768
          %936 = vsyncadd [#allocation28], %s935
          %s937 = sshll.u32 [#allocation29], 4
          %s938 = int_to_ptr.vmem [resolvable:$true] %s937
          %943 = dma.hbm_to_vmem [thread:$0]  %s43, 32768, %s938, [#allocation28], 256, 256, 16
        $region92: #{tpu_custom_call.1} parent=11 // pred_fallthru
          _
        // Predicated region
        $region93: #{tpu_custom_call.1} parent=11 // pred_check
          %p944 = pneg %p575
        $region94: #{tpu_custom_call.1} parent=11 // pred_check_branch
          %946 = sbr.rel (%p944) target = $region96
        $region95: #{tpu_custom_call.1} parent=11 // pred_region
          %s948 = ssub.s32 64, 64
          %949 = vsyncadd [#allocation31], %s948
          %s951 = sshll.u32 [#allocation30], 4
          %s952 = int_to_ptr.vmem [resolvable:$true] %s951
          %954 = dma.hbm_to_vmem [thread:$0]  %s45, 64, %s952, [#allocation31]
        $region96: #{tpu_custom_call.1} parent=11 // pred_fallthru
          _
        // Predicated region
        $region97: #{tpu_custom_call.1} parent=11 // pred_check
          %p955 = pneg %p596
        $region98: #{tpu_custom_call.1} parent=11 // pred_check_branch
          %957 = sbr.rel (%p955) target = $region100
        $region99: #{tpu_custom_call.1} parent=11 // pred_region
          _
        $region100: #{tpu_custom_call.1} parent=11 // pred_fallthru
          _
        // Predicated region
        $region101: #{tpu_custom_call.1} parent=11 // pred_check
          %p958 = pneg %p617
        $region102: #{tpu_custom_call.1} parent=11 // pred_check_branch
          %960 = sbr.rel (%p958) target = $region104
        $region103: #{tpu_custom_call.1} parent=11 // pred_region
          %s962 = ssub.s32 16, 16
          %963 = vsyncadd [#allocation31], %s962
          %s965 = sshll.u32 [#allocation32], 4
          %s966 = int_to_ptr.vmem [resolvable:$true] %s965
          %968 = dma.hbm_to_vmem [thread:$0]  %s49, 16, %s966, [#allocation31]
        $region104: #{tpu_custom_call.1} parent=11 // pred_fallthru
          _
        // Predicated region
        $region105: #{tpu_custom_call.1} parent=11 // pred_check
          %p969 = pneg %p638
        $region106: #{tpu_custom_call.1} parent=11 // pred_check_branch
          %971 = sbr.rel (%p969) target = $region108
        $region107: #{tpu_custom_call.1} parent=11 // pred_region
          _
        $region108: #{tpu_custom_call.1} parent=11 // pred_fallthru
          _
        // Predicated region
        $region109: #{tpu_custom_call.1} parent=11 // pred_check
          %p972 = pneg %p659
        $region110: #{tpu_custom_call.1} parent=11 // pred_check_branch
          %974 = sbr.rel (%p972) target = $region112
        $region111: #{tpu_custom_call.1} parent=11 // pred_region
          _
        $region112: #{tpu_custom_call.1} parent=11 // pred_fallthru
          _
        // Predicated region
        $region113: #{tpu_custom_call.1} parent=11 // pred_check
          %p975 = pneg %p680
        $region114: #{tpu_custom_call.1} parent=11 // pred_check_branch
          %977 = sbr.rel (%p975) target = $region116
        $region115: #{tpu_custom_call.1} parent=11 // pred_region
          _
        $region116: #{tpu_custom_call.1} parent=11 // pred_fallthru
          _
        // Predicated region
        $region117: #{tpu_custom_call.1} parent=11 // pred_check
          %p978 = pneg %p701
        $region118: #{tpu_custom_call.1} parent=11 // pred_check_branch
          %980 = sbr.rel (%p978) target = $region120
        $region119: #{tpu_custom_call.1} parent=11 // pred_region
          _
        $region120: #{tpu_custom_call.1} parent=11 // pred_fallthru
          _
      $region12: #{tpu_custom_call.1} parent=5 // pred_fallthru
        _
      %p981 = scmp.lt.s32.totalorder %s82, 2
      // Predicated region
      $region121: #{tpu_custom_call.1} parent=5 // pred_check
        %p982 = pneg %p981
      $region122: #{tpu_custom_call.1} parent=5 // pred_check_branch
        %984 = sbr.rel (%p982) target = $region124
      $region123: #{tpu_custom_call.1} parent=5 // pred_region
        // Predicated region
        $region125: #{tpu_custom_call.1} parent=123 // pred_check
          %p985 = pneg %p102
        $region126: #{tpu_custom_call.1} parent=123 // pred_check_branch
          %987 = sbr.rel (%p985) target = $region128
        $region127: #{tpu_custom_call.1} parent=123 // pred_region
          %s988 = sand.u32 %s92, 1
          %s989 = scalar_lea.sflag [#allocation4], %s988
          %s990 = sand.u32 %s92, 1
          %s991 = smul.addr %s990, 8
          %s992 = scalar_lea.vmem [#allocation3], %s991
          %s994 = ssub.s32 128, 128
          %995 = vsyncadd %s989, %s994
          %s996 = smul.addr %s82, 128
          %s997 = scalar_lea.hbm %s1, %s996
          %s999 = sshll.u32 %s992, 4
          %s1000 = int_to_ptr.vmem [resolvable:$true] %s999
          %1002 = dma.hbm_to_vmem [thread:$0]  %s997, 128, %s1000, %s989
        $region128: #{tpu_custom_call.1} parent=123 // pred_fallthru
          _
        // Predicated region
        $region129: #{tpu_custom_call.1} parent=123 // pred_check
          %p1003 = pneg %p128
        $region130: #{tpu_custom_call.1} parent=123 // pred_check_branch
          %1005 = sbr.rel (%p1003) target = $region132
        $region131: #{tpu_custom_call.1} parent=123 // pred_region
          %p1006 = scmp.lt.s32.totalorder %s82, 1
          %s1007 = scalar_select %p1006, %s82, 1
          %s1008 = smul.addr %s1007, 8
          %s1009 = scalar_lea.vmem %s3, %s1008
        $region132: #{tpu_custom_call.1} parent=123 // pred_fallthru
          _
      $region124: #{tpu_custom_call.1} parent=5 // pred_fallthru
        _
      %p1010 = scmp.le.s32.totalorder 1, %s82
      %p1011 = scmp.lt.s32.totalorder %s82, 3
      %p1012 = pnand %p1010, %p1011
      %p1013 = pneg %p1012
      // Predicated region
      $region133: #{tpu_custom_call.1} parent=5 // pred_check
        _
      $region134: #{tpu_custom_call.1} parent=5 // pred_check_branch
        %1015 = sbr.rel (%p1012) target = $region136
      $region135: #{tpu_custom_call.1} parent=5 // pred_region
        %s1016 = ssub.s32 %s82, 1
        %s1017 = sand.u32 %s95, 1
        %s1018 = scalar_lea.sflag [#allocation4], %s1017
        %s1019 = sand.u32 %s95, 1
        %s1020 = smul.addr %s1019, 8
        %s1021 = scalar_lea.vmem [#allocation3], %s1020
        // Predicated region
        $region137: #{tpu_custom_call.1} parent=135 // pred_check
          %p1022 = pneg %p108
        $region138: #{tpu_custom_call.1} parent=135 // pred_check_branch
          %1024 = sbr.rel (%p1022) target = $region140
        $region139: #{tpu_custom_call.1} parent=135 // pred_region
          %1025 = dma.done %s1018, 128
        $region140: #{tpu_custom_call.1} parent=135 // pred_fallthru
          _
        // Predicated region
        $region141: #{tpu_custom_call.1} parent=135 // pred_check
          %p1026 = pneg %p155
        $region142: #{tpu_custom_call.1} parent=135 // pred_check_branch
          %1028 = sbr.rel (%p1026) target = $region144
        $region143: #{tpu_custom_call.1} parent=135 // pred_region
          %1029 = dma.done [#allocation7], 192
        $region144: #{tpu_custom_call.1} parent=135 // pred_fallthru
          _
        // Predicated region
        $region145: #{tpu_custom_call.1} parent=135 // pred_check
          %p1030 = pneg %p197
        $region146: #{tpu_custom_call.1} parent=135 // pred_check_branch
          %1032 = sbr.rel (%p1030) target = $region148
        $region147: #{tpu_custom_call.1} parent=135 // pred_region
          %1033 = dma.done [#allocation7], 8192
        $region148: #{tpu_custom_call.1} parent=135 // pred_fallthru
          _
        // Predicated region
        $region149: #{tpu_custom_call.1} parent=135 // pred_check
          %p1034 = pneg %p218
        $region150: #{tpu_custom_call.1} parent=135 // pred_check_branch
          %1036 = sbr.rel (%p1034) target = $region152
        $region151: #{tpu_custom_call.1} parent=135 // pred_region
          %1037 = dma.done [#allocation10], 128
        $region152: #{tpu_custom_call.1} parent=135 // pred_fallthru
          _
        // Predicated region
        $region153: #{tpu_custom_call.1} parent=135 // pred_check
          %p1038 = pneg %p239
        $region154: #{tpu_custom_call.1} parent=135 // pred_check_branch
          %1040 = sbr.rel (%p1038) target = $region156
        $region155: #{tpu_custom_call.1} parent=135 // pred_region
          %1041 = dma.done [#allocation10], 32768
        $region156: #{tpu_custom_call.1} parent=135 // pred_fallthru
          _
        // Predicated region
        $region157: #{tpu_custom_call.1} parent=135 // pred_check
          %p1042 = pneg %p281
        $region158: #{tpu_custom_call.1} parent=135 // pred_check_branch
          %1044 = sbr.rel (%p1042) target = $region160
        $region159: #{tpu_custom_call.1} parent=135 // pred_region
          %1045 = dma.done [#allocation13], 8192
        $region160: #{tpu_custom_call.1} parent=135 // pred_fallthru
          _
        // Predicated region
        $region161: #{tpu_custom_call.1} parent=135 // pred_check
          %p1046 = pneg %p302
        $region162: #{tpu_custom_call.1} parent=135 // pred_check_branch
          %1048 = sbr.rel (%p1046) target = $region164
        $region163: #{tpu_custom_call.1} parent=135 // pred_region
          %1049 = dma.done [#allocation13], 32
        $region164: #{tpu_custom_call.1} parent=135 // pred_fallthru
          _
        // Predicated region
        $region165: #{tpu_custom_call.1} parent=135 // pred_check
          %p1050 = pneg %p323
        $region166: #{tpu_custom_call.1} parent=135 // pred_check_branch
          %1052 = sbr.rel (%p1050) target = $region168
        $region167: #{tpu_custom_call.1} parent=135 // pred_region
          %1053 = dma.done [#allocation16], 2048
        $region168: #{tpu_custom_call.1} parent=135 // pred_fallthru
          _
        // Predicated region
        $region169: #{tpu_custom_call.1} parent=135 // pred_check
          %p1054 = pneg %p344
        $region170: #{tpu_custom_call.1} parent=135 // pred_check_branch
          %1056 = sbr.rel (%p1054) target = $region172
        $region171: #{tpu_custom_call.1} parent=135 // pred_region
          %1057 = dma.done [#allocation16], 16
        $region172: #{tpu_custom_call.1} parent=135 // pred_fallthru
          _
        // Predicated region
        $region173: #{tpu_custom_call.1} parent=135 // pred_check
          %p1058 = pneg %p386
        $region174: #{tpu_custom_call.1} parent=135 // pred_check_branch
          %1060 = sbr.rel (%p1058) target = $region176
        $region175: #{tpu_custom_call.1} parent=135 // pred_region
          %1061 = dma.done [#allocation19], 16
        $region176: #{tpu_custom_call.1} parent=135 // pred_fallthru
          _
        // Predicated region
        $region177: #{tpu_custom_call.1} parent=135 // pred_check
          %p1062 = pneg %p428
        $region178: #{tpu_custom_call.1} parent=135 // pred_check_branch
          %1064 = sbr.rel (%p1062) target = $region180
        $region179: #{tpu_custom_call.1} parent=135 // pred_region
          %1065 = dma.done [#allocation19], 16
        $region180: #{tpu_custom_call.1} parent=135 // pred_fallthru
          _
        // Predicated region
        $region181: #{tpu_custom_call.1} parent=135 // pred_check
          %p1066 = pneg %p449
        $region182: #{tpu_custom_call.1} parent=135 // pred_check_branch
          %1068 = sbr.rel (%p1066) target = $region184
        $region183: #{tpu_custom_call.1} parent=135 // pred_region
          %1069 = dma.done [#allocation22], 64
        $region184: #{tpu_custom_call.1} parent=135 // pred_fallthru
          _
        // Predicated region
        $region185: #{tpu_custom_call.1} parent=135 // pred_check
          %p1070 = pneg %p470
        $region186: #{tpu_custom_call.1} parent=135 // pred_check_branch
          %1072 = sbr.rel (%p1070) target = $region188
        $region187: #{tpu_custom_call.1} parent=135 // pred_region
          %1073 = dma.done [#allocation22], 16
        $region188: #{tpu_custom_call.1} parent=135 // pred_fallthru
          _
        // Predicated region
        $region189: #{tpu_custom_call.1} parent=135 // pred_check
          %p1074 = pneg %p491
        $region190: #{tpu_custom_call.1} parent=135 // pred_check_branch
          %1076 = sbr.rel (%p1074) target = $region192
        $region191: #{tpu_custom_call.1} parent=135 // pred_region
          %1077 = dma.done [#allocation25], 16
        $region192: #{tpu_custom_call.1} parent=135 // pred_fallthru
          _
        // Predicated region
        $region193: #{tpu_custom_call.1} parent=135 // pred_check
          %p1078 = pneg %p512
        $region194: #{tpu_custom_call.1} parent=135 // pred_check_branch
          %1080 = sbr.rel (%p1078) target = $region196
        $region195: #{tpu_custom_call.1} parent=135 // pred_region
          %1081 = dma.done [#allocation25], 8192
        $region196: #{tpu_custom_call.1} parent=135 // pred_fallthru
          _
        // Predicated region
        $region197: #{tpu_custom_call.1} parent=135 // pred_check
          %p1082 = pneg %p533
        $region198: #{tpu_custom_call.1} parent=135 // pred_check_branch
          %1084 = sbr.rel (%p1082) target = $region200
        $region199: #{tpu_custom_call.1} parent=135 // pred_region
          %1085 = dma.done [#allocation28], 128
        $region200: #{tpu_custom_call.1} parent=135 // pred_fallthru
          _
        // Predicated region
        $region201: #{tpu_custom_call.1} parent=135 // pred_check
          %p1086 = pneg %p554
        $region202: #{tpu_custom_call.1} parent=135 // pred_check_branch
          %1088 = sbr.rel (%p1086) target = $region204
        $region203: #{tpu_custom_call.1} parent=135 // pred_region
          %1089 = dma.done [#allocation28], 32768
        $region204: #{tpu_custom_call.1} parent=135 // pred_fallthru
          _
        // Predicated region
        $region205: #{tpu_custom_call.1} parent=135 // pred_check
          %p1090 = pneg %p575
        $region206: #{tpu_custom_call.1} parent=135 // pred_check_branch
          %1092 = sbr.rel (%p1090) target = $region208
        $region207: #{tpu_custom_call.1} parent=135 // pred_region
          %1093 = dma.done [#allocation31], 64
        $region208: #{tpu_custom_call.1} parent=135 // pred_fallthru
          _
        // Predicated region
        $region209: #{tpu_custom_call.1} parent=135 // pred_check
          %p1094 = pneg %p617
        $region210: #{tpu_custom_call.1} parent=135 // pred_check_branch
          %1096 = sbr.rel (%p1094) target = $region212
        $region211: #{tpu_custom_call.1} parent=135 // pred_region
          %1097 = dma.done [#allocation31], 16
        $region212: #{tpu_custom_call.1} parent=135 // pred_fallthru
          _
        %s1098 = sand.u32 %s95, 1
        %s1099 = scalar_lea.sflag [#allocation4], %s1098
        %s1100 = sand.u32 %s95, 1
        %s1101 = smul.addr %s1100, 8
        %s1102 = scalar_lea.vmem [#allocation3], %s1101
        %p1103 = pneg %p108
        %p1104 = pneg %p105
        %p1105 = scmp.lt.s32.totalorder %s87, 1
        %s1106 = scalar_select %p1105, %s87, 1
        %s1107 = smul.addr %s1106, 8
        %s1108 = scalar_lea.vmem %s3, %s1107
        %p1109 = pneg %p134
        %p1110 = pneg %p131
        %p1111 = pneg %p155
        %p1112 = pneg %p152
        %p1113 = pneg %p176
        %p1114 = pneg %p173
        %p1115 = pneg %p197
        %p1116 = pneg %p194
        %p1117 = pneg %p218
        %p1118 = pneg %p215
        %p1119 = pneg %p239
        %p1120 = pneg %p236
        %p1121 = pneg %p260
        %p1122 = pneg %p257
        %p1123 = pneg %p281
        %p1124 = pneg %p278
        %p1125 = pneg %p302
        %p1126 = pneg %p299
        %p1127 = pneg %p323
        %p1128 = pneg %p320
        %p1129 = pneg %p344
        %p1130 = pneg %p341
        %p1131 = pneg %p365
        %p1132 = pneg %p362
        %p1133 = pneg %p386
        %p1134 = pneg %p383
        %p1135 = pneg %p407
        %p1136 = pneg %p404
        %p1137 = pneg %p428
        %p1138 = pneg %p425
        %p1139 = pneg %p449
        %p1140 = pneg %p446
        %p1141 = pneg %p470
        %p1142 = pneg %p467
        %p1143 = pneg %p491
        %p1144 = pneg %p488
        %p1145 = pneg %p512
        %p1146 = pneg %p509
        %p1147 = pneg %p533
        %p1148 = pneg %p530
        %p1149 = pneg %p554
        %p1150 = pneg %p551
        %p1151 = pneg %p575
        %p1152 = pneg %p572
        %p1153 = pneg %p596
        %p1154 = pneg %p593
        %p1155 = pneg %p617
        %p1156 = pneg %p614
        %p1157 = pneg %p638
        %p1158 = pneg %p635
        %p1159 = pneg %p659
        %p1160 = pneg %p656
        %p1161 = pneg %p680
        %p1162 = pneg %p677
        %p1163 = pneg %p701
        %p1164 = pneg %p698
        %p1165 = pneg %p727
        %p1166 = pneg %p724
        %s1167 = sand.u32 %s714, 1
        %s1168 = scalar_lea.sflag [#allocation5], %s1167
        %s1169 = sand.u32 %s714, 1
        %s1170 = smul.addr %s1169, 8
        %s1171 = scalar_lea.vmem [#allocation33], %s1170
        %p1172 = scmp.lt.s32.totalorder %s87, 1
        %s1173 = scalar_select %p1172, %s87, 1
        %s1174 = smul.addr %s1173, 8
        %s1175 = scalar_lea.vmem %s3, %s1174
        %v1177 = vld [vmem:[%s1021] sm:$0xff]
        %v1178 = vpack.c.bf16 %v1177, %v1177
        %v1179 = vld [vmem:[#allocation6] sm:$0xf]
        %v1180 = vld [vmem:[#allocation6 + $0x4] sm:$0xf]
        %v1181 = vld [vmem:[#allocation6 + $0x8] sm:$0x3]
        %v1182 = vld [vmem:[%s7] sm:$0x1]
        %v1184 = vlaneseq
        %v1185 = vshrl.u32 %v1184, 7
        %v1186 = vsub.s32 0, %v1185
        %v1187 = vrot.slane %v1182, %v1186
        %v1192 = vunpack.c.l.b16 %v1179
        %v1193 = vunpack.c.l.b16 %v1180
        %v1194 = vunpack.c.l.b16 %v1181
        %v1195 = vpack.c.b16 %v1193, %v1192
        %v1196 = vpack.c.b16 %v1194, %v1194
        %vm1198 = vcmask 154624
        %v1200 = vsel %vm1198, %v1178, 0
        %vm1202 = vcmask 1040384
        %vm1203 = vcmask 1041408
        %v1204 = vsel %vm1202, 4294967295, 65535
        %v1205 = vsel %vm1203, %v1204, 0
        %v1207 = vand.u32 %v1196, %v1205
        %1209 = vmatprep.subr.bf16.mxu0 0
        %1210 = vmatpush1.bf16.msra.mxu0 0
        %1211 = vmatprep.subr.bf16.mxu0 0
        %1212 = vmatpush1.bf16.msra.mxu0 0
        %1213 = vmatprep.subr.bf16.mxu0 0
        %1214 = vmatpush1.bf16.msra.mxu0 0
        %1215 = vmatprep.subr.bf16.mxu0 0
        %1216 = vmatpush1.bf16.msra.mxu0 0
        %1217 = vmatprep.subr.bf16.mxu0 0
        %1218 = vmatpush1.bf16.msra.mxu0 0
        %1219 = vmatprep.subr.bf16.mxu0 0
        %1220 = vmatpush1.bf16.msra.mxu0 0
        %1221 = vmatprep.subr.bf16.mxu0 0
        %1222 = vmatpush1.bf16.msra.mxu0 %v1207
        %1223 = vmatprep.subr.bf16.mxu0 0
        %1224 = vmatpush1.bf16.msra.mxu0 %v1195
        %1225 = vmatprep.subr.bf16.mxu0 0
        %1226 = vmatpush2.bf16.msra.mxu0 0
        %1227 = vmatprep.subr.bf16.mxu0 0
        %1228 = vmatpush2.bf16.msra.mxu0 0
        %1229 = vmatprep.subr.bf16.mxu0 0
        %1230 = vmatpush2.bf16.msra.mxu0 0
        %1231 = vmatprep.subr.bf16.mxu0 0
        %1232 = vmatpush2.bf16.msra.mxu0 0
        %1233 = vmatprep.subr.bf16.mxu0 0
        %1234 = vmatpush2.bf16.msra.mxu0 0
        %1235 = vmatprep.subr.bf16.mxu0 0
        %1236 = vmatpush2.bf16.msra.mxu0 0
        %1237 = vmatprep.subr.bf16.mxu0 0
        %1238 = vmatpush2.bf16.msra.mxu0 0
        %1239 = vmatprep.subr.bf16.mxu0 0
        %1240 = vmatpush2.bf16.msra.mxu0 0
        %1241 = vmatprep.mubr.bf16.mxu0 0
        %1242 = vmatmul.mubr.bf16.gmra.mxu0 %v1200
        %v1243 = vpop.f32.mrf.mxu0
        %v1244 = vadd.f32 %v1187, %v1243
        %v1245 = vpop.f32.mrf.mxu0
        %v1246 = vpop.f32.mrf.mxu0
        %v1247 = vpop.f32.mrf.mxu0
        %1248 = vdwg.mxu0
        %v1249 = vmax.f32 %v1244, 0.0
        %v1250 = vpack.c.bf16 %v1249, %v1249
        %v1251 = vld [vmem:[#allocation8] sm:$0xff]
        %v1252 = vld [vmem:[#allocation8 + $0x8] sm:$0xff]
        %v1253 = vld [vmem:[#allocation8 + $0x10] sm:$0xff]
        %v1254 = vld [vmem:[#allocation8 + $0x18] sm:$0xff]
        %v1255 = vld [vmem:[#allocation8 + $0x20] sm:$0xff]
        %v1256 = vld [vmem:[#allocation8 + $0x28] sm:$0xff]
        %v1257 = vld [vmem:[#allocation8 + $0x30] sm:$0xff]
        %v1258 = vld [vmem:[#allocation8 + $0x38] sm:$0xff]
        %v1259 = vld [vmem:[#allocation8 + $0x40] sm:$0xff]
        %v1260 = vld [vmem:[#allocation8 + $0x48] sm:$0xff]
        %v1261 = vld [vmem:[#allocation8 + $0x50] sm:$0xff]
        %v1262 = vld [vmem:[#allocation8 + $0x58] sm:$0xff]
        %v1263 = vld [vmem:[#allocation8 + $0x60] sm:$0xff]
        %v1264 = vld [vmem:[#allocation8 + $0x68] sm:$0xff]
        %v1265 = vld [vmem:[#allocation8 + $0x70] sm:$0xff]
        %v1266 = vld [vmem:[#allocation8 + $0x78] sm:$0xff]
        %v1267 = vld [vmem:[#allocation8 + $0x80] sm:$0xff]
        %v1268 = vld [vmem:[#allocation8 + $0x88] sm:$0xff]
        %v1269 = vld [vmem:[#allocation8 + $0x90] sm:$0xff]
        %v1270 = vld [vmem:[#allocation8 + $0x98] sm:$0xff]
        %v1271 = vld [vmem:[#allocation8 + $0xa0] sm:$0xff]
        %v1272 = vld [vmem:[#allocation8 + $0xa8] sm:$0xff]
        %v1273 = vld [vmem:[#allocation8 + $0xb0] sm:$0xff]
        %v1274 = vld [vmem:[#allocation8 + $0xb8] sm:$0xff]
        %v1275 = vld [vmem:[#allocation8 + $0xc0] sm:$0xff]
        %v1276 = vld [vmem:[#allocation8 + $0xc8] sm:$0xff]
        %v1277 = vld [vmem:[#allocation8 + $0xd0] sm:$0xff]
        %v1278 = vld [vmem:[#allocation8 + $0xd8] sm:$0xff]
        %v1279 = vld [vmem:[#allocation8 + $0xe0] sm:$0xff]
        %v1280 = vld [vmem:[#allocation8 + $0xe8] sm:$0xff]
        %v1281 = vld [vmem:[#allocation8 + $0xf0] sm:$0xff]
        %v1282 = vld [vmem:[#allocation8 + $0xf8] sm:$0xff]
        %v1283 = vld [vmem:[#allocation8 + $0x100] sm:$0xff]
        %v1284 = vld [vmem:[#allocation8 + $0x108] sm:$0xff]
        %v1285 = vld [vmem:[#allocation8 + $0x110] sm:$0xff]
        %v1286 = vld [vmem:[#allocation8 + $0x118] sm:$0xff]
        %v1287 = vld [vmem:[#allocation8 + $0x120] sm:$0xff]
        %v1288 = vld [vmem:[#allocation8 + $0x128] sm:$0xff]
        %v1289 = vld [vmem:[#allocation8 + $0x130] sm:$0xff]
        %v1290 = vld [vmem:[#allocation8 + $0x138] sm:$0xff]
        %v1291 = vld [vmem:[#allocation8 + $0x140] sm:$0xff]
        %v1292 = vld [vmem:[#allocation8 + $0x148] sm:$0xff]
        %v1293 = vld [vmem:[#allocation8 + $0x150] sm:$0xff]
        %v1294 = vld [vmem:[#allocation8 + $0x158] sm:$0xff]
        %v1295 = vld [vmem:[#allocation8 + $0x160] sm:$0xff]
        %v1296 = vld [vmem:[#allocation8 + $0x168] sm:$0xff]
        %v1297 = vld [vmem:[#allocation8 + $0x170] sm:$0xff]
        %v1298 = vld [vmem:[#allocation8 + $0x178] sm:$0xff]
        %v1299 = vld [vmem:[#allocation8 + $0x180] sm:$0xff]
        %v1300 = vld [vmem:[#allocation8 + $0x188] sm:$0xff]
        %v1301 = vld [vmem:[#allocation8 + $0x190] sm:$0xff]
        %v1302 = vld [vmem:[#allocation8 + $0x198] sm:$0xff]
        %v1303 = vld [vmem:[#allocation8 + $0x1a0] sm:$0xff]
        %v1304 = vld [vmem:[#allocation8 + $0x1a8] sm:$0xff]
        %v1305 = vld [vmem:[#allocation8 + $0x1b0] sm:$0xff]
        %v1306 = vld [vmem:[#allocation8 + $0x1b8] sm:$0xff]
        %v1307 = vld [vmem:[#allocation8 + $0x1c0] sm:$0xff]
        %v1308 = vld [vmem:[#allocation8 + $0x1c8] sm:$0xff]
        %v1309 = vld [vmem:[#allocation8 + $0x1d0] sm:$0xff]
        %v1310 = vld [vmem:[#allocation8 + $0x1d8] sm:$0xff]
        %v1311 = vld [vmem:[#allocation8 + $0x1e0] sm:$0xff]
        %v1312 = vld [vmem:[#allocation8 + $0x1e8] sm:$0xff]
        %v1313 = vld [vmem:[#allocation8 + $0x1f0] sm:$0xff]
        %v1314 = vld [vmem:[#allocation8 + $0x1f8] sm:$0xff]
        %v1315 = vld [vmem:[#allocation9] sm:$0xff]
        %v1317 = vlaneseq
        %v1318 = vshrl.u32 %v1317, 7
        %v1319 = vsub.s32 0, %v1318
        %v1320 = vrot.slane %v1315, %v1319
        %v1321 = vlaneseq
        %v1322 = vshrl.u32 %v1321, 7
        %v1323 = vsub.s32 1, %v1322
        %v1324 = vrot.slane %v1315, %v1323
        %v1325 = vlaneseq
        %v1326 = vshrl.u32 %v1325, 7
        %v1327 = vsub.s32 2, %v1326
        %v1328 = vrot.slane %v1315, %v1327
        %v1329 = vlaneseq
        %v1330 = vshrl.u32 %v1329, 7
        %v1331 = vsub.s32 3, %v1330
        %v1332 = vrot.slane %v1315, %v1331
        %v1333 = vlaneseq
        %v1334 = vshrl.u32 %v1333, 7
        %v1335 = vsub.s32 4, %v1334
        %v1336 = vrot.slane %v1315, %v1335
        %v1337 = vlaneseq
        %v1338 = vshrl.u32 %v1337, 7
        %v1339 = vsub.s32 5, %v1338
        %v1340 = vrot.slane %v1315, %v1339
        %v1341 = vlaneseq
        %v1342 = vshrl.u32 %v1341, 7
        %v1343 = vsub.s32 6, %v1342
        %v1344 = vrot.slane %v1315, %v1343
        %v1345 = vlaneseq
        %v1346 = vshrl.u32 %v1345, 7
        %v1347 = vsub.s32 7, %v1346
        %v1348 = vrot.slane %v1315, %v1347
        %v1421 = vunpack.c.l.b16 %v1251
        %v1422 = vunpack.c.h.b16 %v1251
        %v1423 = vunpack.c.l.b16 %v1252
        %v1424 = vunpack.c.h.b16 %v1252
        %v1425 = vunpack.c.l.b16 %v1253
        %v1426 = vunpack.c.h.b16 %v1253
        %v1427 = vunpack.c.l.b16 %v1254
        %v1428 = vunpack.c.h.b16 %v1254
        %v1429 = vunpack.c.l.b16 %v1255
        %v1430 = vunpack.c.h.b16 %v1255
        %v1431 = vunpack.c.l.b16 %v1256
        %v1432 = vunpack.c.h.b16 %v1256
        %v1433 = vunpack.c.l.b16 %v1257
        %v1434 = vunpack.c.h.b16 %v1257
        %v1435 = vunpack.c.l.b16 %v1258
        %v1436 = vunpack.c.h.b16 %v1258
        %v1437 = vunpack.c.l.b16 %v1259
        %v1438 = vunpack.c.h.b16 %v1259
        %v1439 = vunpack.c.l.b16 %v1260
        %v1440 = vunpack.c.h.b16 %v1260
        %v1441 = vunpack.c.l.b16 %v1261
        %v1442 = vunpack.c.h.b16 %v1261
        %v1443 = vunpack.c.l.b16 %v1262
        %v1444 = vunpack.c.h.b16 %v1262
        %v1445 = vunpack.c.l.b16 %v1263
        %v1446 = vunpack.c.h.b16 %v1263
        %v1447 = vunpack.c.l.b16 %v1264
        %v1448 = vunpack.c.h.b16 %v1264
        %v1449 = vunpack.c.l.b16 %v1265
        %v1450 = vunpack.c.h.b16 %v1265
        %v1451 = vunpack.c.l.b16 %v1266
        %v1452 = vunpack.c.h.b16 %v1266
        %v1453 = vunpack.c.l.b16 %v1267
        %v1454 = vunpack.c.h.b16 %v1267
        %v1455 = vunpack.c.l.b16 %v1268
        %v1456 = vunpack.c.h.b16 %v1268
        %v1457 = vunpack.c.l.b16 %v1269
        %v1458 = vunpack.c.h.b16 %v1269
        %v1459 = vunpack.c.l.b16 %v1270
        %v1460 = vunpack.c.h.b16 %v1270
        %v1461 = vunpack.c.l.b16 %v1271
        %v1462 = vunpack.c.h.b16 %v1271
        %v1463 = vunpack.c.l.b16 %v1272
        %v1464 = vunpack.c.h.b16 %v1272
        %v1465 = vunpack.c.l.b16 %v1273
        %v1466 = vunpack.c.h.b16 %v1273
        %v1467 = vunpack.c.l.b16 %v1274
        %v1468 = vunpack.c.h.b16 %v1274
        %v1469 = vunpack.c.l.b16 %v1275
        %v1470 = vunpack.c.h.b16 %v1275
        %v1471 = vunpack.c.l.b16 %v1276
        %v1472 = vunpack.c.h.b16 %v1276
        %v1473 = vunpack.c.l.b16 %v1277
        %v1474 = vunpack.c.h.b16 %v1277
        %v1475 = vunpack.c.l.b16 %v1278
        %v1476 = vunpack.c.h.b16 %v1278
        %v1477 = vunpack.c.l.b16 %v1279
        %v1478 = vunpack.c.h.b16 %v1279
        %v1479 = vunpack.c.l.b16 %v1280
        %v1480 = vunpack.c.h.b16 %v1280
        %v1481 = vunpack.c.l.b16 %v1281
        %v1482 = vunpack.c.h.b16 %v1281
        %v1483 = vunpack.c.l.b16 %v1282
        %v1484 = vunpack.c.h.b16 %v1282
        %v1485 = vunpack.c.l.b16 %v1283
        %v1486 = vunpack.c.h.b16 %v1283
        %v1487 = vunpack.c.l.b16 %v1284
        %v1488 = vunpack.c.h.b16 %v1284
        %v1489 = vunpack.c.l.b16 %v1285
        %v1490 = vunpack.c.h.b16 %v1285
        %v1491 = vunpack.c.l.b16 %v1286
        %v1492 = vunpack.c.h.b16 %v1286
        %v1493 = vunpack.c.l.b16 %v1287
        %v1494 = vunpack.c.h.b16 %v1287
        %v1495 = vunpack.c.l.b16 %v1288
        %v1496 = vunpack.c.h.b16 %v1288
        %v1497 = vunpack.c.l.b16 %v1289
        %v1498 = vunpack.c.h.b16 %v1289
        %v1499 = vunpack.c.l.b16 %v1290
        %v1500 = vunpack.c.h.b16 %v1290
        %v1501 = vunpack.c.l.b16 %v1291
        %v1502 = vunpack.c.h.b16 %v1291
        %v1503 = vunpack.c.l.b16 %v1292
        %v1504 = vunpack.c.h.b16 %v1292
        %v1505 = vunpack.c.l.b16 %v1293
        %v1506 = vunpack.c.h.b16 %v1293
        %v1507 = vunpack.c.l.b16 %v1294
        %v1508 = vunpack.c.h.b16 %v1294
        %v1509 = vunpack.c.l.b16 %v1295
        %v1510 = vunpack.c.h.b16 %v1295
        %v1511 = vunpack.c.l.b16 %v1296
        %v1512 = vunpack.c.h.b16 %v1296
        %v1513 = vunpack.c.l.b16 %v1297
        %v1514 = vunpack.c.h.b16 %v1297
        %v1515 = vunpack.c.l.b16 %v1298
        %v1516 = vunpack.c.h.b16 %v1298
        %v1517 = vunpack.c.l.b16 %v1299
        %v1518 = vunpack.c.h.b16 %v1299
        %v1519 = vunpack.c.l.b16 %v1300
        %v1520 = vunpack.c.h.b16 %v1300
        %v1521 = vunpack.c.l.b16 %v1301
        %v1522 = vunpack.c.h.b16 %v1301
        %v1523 = vunpack.c.l.b16 %v1302
        %v1524 = vunpack.c.h.b16 %v1302
        %v1525 = vunpack.c.l.b16 %v1303
        %v1526 = vunpack.c.h.b16 %v1303
        %v1527 = vunpack.c.l.b16 %v1304
        %v1528 = vunpack.c.h.b16 %v1304
        %v1529 = vunpack.c.l.b16 %v1305
        %v1530 = vunpack.c.h.b16 %v1305
        %v1531 = vunpack.c.l.b16 %v1306
        %v1532 = vunpack.c.h.b16 %v1306
        %v1533 = vunpack.c.l.b16 %v1307
        %v1534 = vunpack.c.h.b16 %v1307
        %v1535 = vunpack.c.l.b16 %v1308
        %v1536 = vunpack.c.h.b16 %v1308
        %v1537 = vunpack.c.l.b16 %v1309
        %v1538 = vunpack.c.h.b16 %v1309
        %v1539 = vunpack.c.l.b16 %v1310
        %v1540 = vunpack.c.h.b16 %v1310
        %v1541 = vunpack.c.l.b16 %v1311
        %v1542 = vunpack.c.h.b16 %v1311
        %v1543 = vunpack.c.l.b16 %v1312
        %v1544 = vunpack.c.h.b16 %v1312
        %v1545 = vunpack.c.l.b16 %v1313
        %v1546 = vunpack.c.h.b16 %v1313
        %v1547 = vunpack.c.l.b16 %v1314
        %v1548 = vunpack.c.h.b16 %v1314
        %v1549 = vpack.c.b16 %v1429, %v1421
        %v1550 = vpack.c.b16 %v1430, %v1422
        %v1551 = vpack.c.b16 %v1431, %v1423
        %v1552 = vpack.c.b16 %v1432, %v1424
        %v1553 = vpack.c.b16 %v1433, %v1425
        %v1554 = vpack.c.b16 %v1434, %v1426
        %v1555 = vpack.c.b16 %v1435, %v1427
        %v1556 = vpack.c.b16 %v1436, %v1428
        %v1557 = vpack.c.b16 %v1445, %v1437
        %v1558 = vpack.c.b16 %v1446, %v1438
        %v1559 = vpack.c.b16 %v1447, %v1439
        %v1560 = vpack.c.b16 %v1448, %v1440
        %v1561 = vpack.c.b16 %v1449, %v1441
        %v1562 = vpack.c.b16 %v1450, %v1442
        %v1563 = vpack.c.b16 %v1451, %v1443
        %v1564 = vpack.c.b16 %v1452, %v1444
        %v1565 = vpack.c.b16 %v1461, %v1453
        %v1566 = vpack.c.b16 %v1462, %v1454
        %v1567 = vpack.c.b16 %v1463, %v1455
        %v1568 = vpack.c.b16 %v1464, %v1456
        %v1569 = vpack.c.b16 %v1465, %v1457
        %v1570 = vpack.c.b16 %v1466, %v1458
        %v1571 = vpack.c.b16 %v1467, %v1459
        %v1572 = vpack.c.b16 %v1468, %v1460
        %v1573 = vpack.c.b16 %v1477, %v1469
        %v1574 = vpack.c.b16 %v1478, %v1470
        %v1575 = vpack.c.b16 %v1479, %v1471
        %v1576 = vpack.c.b16 %v1480, %v1472
        %v1577 = vpack.c.b16 %v1481, %v1473
        %v1578 = vpack.c.b16 %v1482, %v1474
        %v1579 = vpack.c.b16 %v1483, %v1475
        %v1580 = vpack.c.b16 %v1484, %v1476
        %v1581 = vpack.c.b16 %v1493, %v1485
        %v1582 = vpack.c.b16 %v1494, %v1486
        %v1583 = vpack.c.b16 %v1495, %v1487
        %v1584 = vpack.c.b16 %v1496, %v1488
        %v1585 = vpack.c.b16 %v1497, %v1489
        %v1586 = vpack.c.b16 %v1498, %v1490
        %v1587 = vpack.c.b16 %v1499, %v1491
        %v1588 = vpack.c.b16 %v1500, %v1492
        %v1589 = vpack.c.b16 %v1509, %v1501
        %v1590 = vpack.c.b16 %v1510, %v1502
        %v1591 = vpack.c.b16 %v1511, %v1503
        %v1592 = vpack.c.b16 %v1512, %v1504
        %v1593 = vpack.c.b16 %v1513, %v1505
        %v1594 = vpack.c.b16 %v1514, %v1506
        %v1595 = vpack.c.b16 %v1515, %v1507
        %v1596 = vpack.c.b16 %v1516, %v1508
        %v1597 = vpack.c.b16 %v1525, %v1517
        %v1598 = vpack.c.b16 %v1526, %v1518
        %v1599 = vpack.c.b16 %v1527, %v1519
        %v1600 = vpack.c.b16 %v1528, %v1520
        %v1601 = vpack.c.b16 %v1529, %v1521
        %v1602 = vpack.c.b16 %v1530, %v1522
        %v1603 = vpack.c.b16 %v1531, %v1523
        %v1604 = vpack.c.b16 %v1532, %v1524
        %v1605 = vpack.c.b16 %v1541, %v1533
        %v1606 = vpack.c.b16 %v1542, %v1534
        %v1607 = vpack.c.b16 %v1543, %v1535
        %v1608 = vpack.c.b16 %v1544, %v1536
        %v1609 = vpack.c.b16 %v1545, %v1537
        %v1610 = vpack.c.b16 %v1546, %v1538
        %v1611 = vpack.c.b16 %v1547, %v1539
        %v1612 = vpack.c.b16 %v1548, %v1540
        %1677 = vmatprep.subr.bf16.mxu0 %v1606
        %1678 = vmatpush1.bf16.msra.mxu0 %v1605
        %1679 = vmatprep.subr.bf16.mxu0 %v1598
        %1680 = vmatpush1.bf16.msra.mxu0 %v1597
        %1681 = vmatprep.subr.bf16.mxu0 %v1590
        %1682 = vmatpush1.bf16.msra.mxu0 %v1589
        %1683 = vmatprep.subr.bf16.mxu0 %v1582
        %1684 = vmatpush1.bf16.msra.mxu0 %v1581
        %1685 = vmatprep.subr.bf16.mxu0 %v1574
        %1686 = vmatpush1.bf16.msra.mxu0 %v1573
        %1687 = vmatprep.subr.bf16.mxu0 %v1566
        %1688 = vmatpush1.bf16.msra.mxu0 %v1565
        %1689 = vmatprep.subr.bf16.mxu0 %v1558
        %1690 = vmatpush1.bf16.msra.mxu0 %v1557
        %1691 = vmatprep.subr.bf16.mxu0 %v1550
        %1692 = vmatpush1.bf16.msra.mxu0 %v1549
        %1693 = vmatprep.subr.bf16.mxu0 0
        %1694 = vmatpush2.bf16.msra.mxu0 0
        %1695 = vmatprep.subr.bf16.mxu0 0
        %1696 = vmatpush2.bf16.msra.mxu0 0
        %1697 = vmatprep.subr.bf16.mxu0 0
        %1698 = vmatpush2.bf16.msra.mxu0 0
        %1699 = vmatprep.subr.bf16.mxu0 0
        %1700 = vmatpush2.bf16.msra.mxu0 0
        %1701 = vmatprep.subr.bf16.mxu0 0
        %1702 = vmatpush2.bf16.msra.mxu0 0
        %1703 = vmatprep.subr.bf16.mxu0 0
        %1704 = vmatpush2.bf16.msra.mxu0 0
        %1705 = vmatprep.subr.bf16.mxu0 0
        %1706 = vmatpush2.bf16.msra.mxu0 0
        %1707 = vmatprep.subr.bf16.mxu0 0
        %1708 = vmatpush2.bf16.msra.mxu0 0
        %1709 = vmatprep.mubr.bf16.mxu0 0
        %1710 = vmatmul.mubr.bf16.gmra.mxu0 %v1250
        %v1711 = vpop.f32.mrf.mxu0
        %v1712 = vadd.f32 %v1320, %v1711
        %v1713 = vpop.f32.mrf.mxu0
        %v1714 = vadd.f32 %v1324, %v1713
        %v1715 = vpop.f32.mrf.mxu0
        %v1716 = vpop.f32.mrf.mxu0
        %1717 = vdwg.mxu0
        %1718 = vmatprep.subr.bf16.mxu0 %v1608
        %1719 = vmatpush1.bf16.msra.mxu0 %v1607
        %1720 = vmatprep.subr.bf16.mxu0 %v1600
        %1721 = vmatpush1.bf16.msra.mxu0 %v1599
        %1722 = vmatprep.subr.bf16.mxu0 %v1592
        %1723 = vmatpush1.bf16.msra.mxu0 %v1591
        %1724 = vmatprep.subr.bf16.mxu0 %v1584
        %1725 = vmatpush1.bf16.msra.mxu0 %v1583
        %1726 = vmatprep.subr.bf16.mxu0 %v1576
        %1727 = vmatpush1.bf16.msra.mxu0 %v1575
        %1728 = vmatprep.subr.bf16.mxu0 %v1568
        %1729 = vmatpush1.bf16.msra.mxu0 %v1567
        %1730 = vmatprep.subr.bf16.mxu0 %v1560
        %1731 = vmatpush1.bf16.msra.mxu0 %v1559
        %1732 = vmatprep.subr.bf16.mxu0 %v1552
        %1733 = vmatpush1.bf16.msra.mxu0 %v1551
        %1734 = vmatprep.subr.bf16.mxu0 0
        %1735 = vmatpush2.bf16.msra.mxu0 0
        %1736 = vmatprep.subr.bf16.mxu0 0
        %1737 = vmatpush2.bf16.msra.mxu0 0
        %1738 = vmatprep.subr.bf16.mxu0 0
        %1739 = vmatpush2.bf16.msra.mxu0 0
        %1740 = vmatprep.subr.bf16.mxu0 0
        %1741 = vmatpush2.bf16.msra.mxu0 0
        %1742 = vmatprep.subr.bf16.mxu0 0
        %1743 = vmatpush2.bf16.msra.mxu0 0
        %1744 = vmatprep.subr.bf16.mxu0 0
        %1745 = vmatpush2.bf16.msra.mxu0 0
        %1746 = vmatprep.subr.bf16.mxu0 0
        %1747 = vmatpush2.bf16.msra.mxu0 0
        %1748 = vmatprep.subr.bf16.mxu0 0
        %1749 = vmatpush2.bf16.msra.mxu0 0
        %1750 = vmatprep.mubr.bf16.mxu0 0
        %1751 = vmatmul.mubr.bf16.gmra.mxu0 %v1250
        %v1752 = vpop.f32.mrf.mxu0
        %v1753 = vadd.f32 %v1328, %v1752
        %v1754 = vpop.f32.mrf.mxu0
        %v1755 = vadd.f32 %v1332, %v1754
        %v1756 = vpop.f32.mrf.mxu0
        %v1757 = vpop.f32.mrf.mxu0
        %1758 = vdwg.mxu0
        %1759 = vmatprep.subr.bf16.mxu0 %v1610
        %1760 = vmatpush1.bf16.msra.mxu0 %v1609
        %1761 = vmatprep.subr.bf16.mxu0 %v1602
        %1762 = vmatpush1.bf16.msra.mxu0 %v1601
        %1763 = vmatprep.subr.bf16.mxu0 %v1594
        %1764 = vmatpush1.bf16.msra.mxu0 %v1593
        %1765 = vmatprep.subr.bf16.mxu0 %v1586
        %1766 = vmatpush1.bf16.msra.mxu0 %v1585
        %1767 = vmatprep.subr.bf16.mxu0 %v1578
        %1768 = vmatpush1.bf16.msra.mxu0 %v1577
        %1769 = vmatprep.subr.bf16.mxu0 %v1570
        %1770 = vmatpush1.bf16.msra.mxu0 %v1569
        %1771 = vmatprep.subr.bf16.mxu0 %v1562
        %1772 = vmatpush1.bf16.msra.mxu0 %v1561
        %1773 = vmatprep.subr.bf16.mxu0 %v1554
        %1774 = vmatpush1.bf16.msra.mxu0 %v1553
        %1775 = vmatprep.subr.bf16.mxu0 0
        %1776 = vmatpush2.bf16.msra.mxu0 0
        %1777 = vmatprep.subr.bf16.mxu0 0
        %1778 = vmatpush2.bf16.msra.mxu0 0
        %1779 = vmatprep.subr.bf16.mxu0 0
        %1780 = vmatpush2.bf16.msra.mxu0 0
        %1781 = vmatprep.subr.bf16.mxu0 0
        %1782 = vmatpush2.bf16.msra.mxu0 0
        %1783 = vmatprep.subr.bf16.mxu0 0
        %1784 = vmatpush2.bf16.msra.mxu0 0
        %1785 = vmatprep.subr.bf16.mxu0 0
        %1786 = vmatpush2.bf16.msra.mxu0 0
        %1787 = vmatprep.subr.bf16.mxu0 0
        %1788 = vmatpush2.bf16.msra.mxu0 0
        %1789 = vmatprep.subr.bf16.mxu0 0
        %1790 = vmatpush2.bf16.msra.mxu0 0
        %1791 = vmatprep.mubr.bf16.mxu0 0
        %1792 = vmatmul.mubr.bf16.gmra.mxu0 %v1250
        %v1793 = vpop.f32.mrf.mxu0
        %v1794 = vadd.f32 %v1336, %v1793
        %v1795 = vpop.f32.mrf.mxu0
        %v1796 = vadd.f32 %v1340, %v1795
        %v1797 = vpop.f32.mrf.mxu0
        %v1798 = vpop.f32.mrf.mxu0
        %1799 = vdwg.mxu0
        %1800 = vmatprep.subr.bf16.mxu0 %v1612
        %1801 = vmatpush1.bf16.msra.mxu0 %v1611
        %1802 = vmatprep.subr.bf16.mxu0 %v1604
        %1803 = vmatpush1.bf16.msra.mxu0 %v1603
        %1804 = vmatprep.subr.bf16.mxu0 %v1596
        %1805 = vmatpush1.bf16.msra.mxu0 %v1595
        %1806 = vmatprep.subr.bf16.mxu0 %v1588
        %1807 = vmatpush1.bf16.msra.mxu0 %v1587
        %1808 = vmatprep.subr.bf16.mxu0 %v1580
        %1809 = vmatpush1.bf16.msra.mxu0 %v1579
        %1810 = vmatprep.subr.bf16.mxu0 %v1572
        %1811 = vmatpush1.bf16.msra.mxu0 %v1571
        %1812 = vmatprep.subr.bf16.mxu0 %v1564
        %1813 = vmatpush1.bf16.msra.mxu0 %v1563
        %1814 = vmatprep.subr.bf16.mxu0 %v1556
        %1815 = vmatpush1.bf16.msra.mxu0 %v1555
        %1816 = vmatprep.subr.bf16.mxu0 0
        %1817 = vmatpush2.bf16.msra.mxu0 0
        %1818 = vmatprep.subr.bf16.mxu0 0
        %1819 = vmatpush2.bf16.msra.mxu0 0
        %1820 = vmatprep.subr.bf16.mxu0 0
        %1821 = vmatpush2.bf16.msra.mxu0 0
        %1822 = vmatprep.subr.bf16.mxu0 0
        %1823 = vmatpush2.bf16.msra.mxu0 0
        %1824 = vmatprep.subr.bf16.mxu0 0
        %1825 = vmatpush2.bf16.msra.mxu0 0
        %1826 = vmatprep.subr.bf16.mxu0 0
        %1827 = vmatpush2.bf16.msra.mxu0 0
        %1828 = vmatprep.subr.bf16.mxu0 0
        %1829 = vmatpush2.bf16.msra.mxu0 0
        %1830 = vmatprep.subr.bf16.mxu0 0
        %1831 = vmatpush2.bf16.msra.mxu0 0
        %1832 = vmatprep.mubr.bf16.mxu0 0
        %1833 = vmatmul.mubr.bf16.gmra.mxu0 %v1250
        %v1834 = vpop.f32.mrf.mxu0
        %v1835 = vadd.f32 %v1344, %v1834
        %v1836 = vpop.f32.mrf.mxu0
        %v1837 = vadd.f32 %v1348, %v1836
        %v1838 = vpop.f32.mrf.mxu0
        %v1839 = vpop.f32.mrf.mxu0
        %1840 = vdwg.mxu0
        %v1841 = vmax.f32 %v1712, 0.0
        %v1842 = vmax.f32 %v1714, 0.0
        %v1843 = vmax.f32 %v1753, 0.0
        %v1844 = vmax.f32 %v1755, 0.0
        %v1845 = vmax.f32 %v1794, 0.0
        %v1846 = vmax.f32 %v1796, 0.0
        %v1847 = vmax.f32 %v1835, 0.0
        %v1848 = vmax.f32 %v1837, 0.0
        %v1849 = vpack.c.bf16 %v1841, %v1841
        %v1850 = vpack.c.bf16 %v1842, %v1842
        %v1851 = vpack.c.bf16 %v1843, %v1843
        %v1852 = vpack.c.bf16 %v1844, %v1844
        %v1853 = vpack.c.bf16 %v1845, %v1845
        %v1854 = vpack.c.bf16 %v1846, %v1846
        %v1855 = vpack.c.bf16 %v1847, %v1847
        %v1856 = vpack.c.bf16 %v1848, %v1848
        %v1857 = vld [vmem:[#allocation11] sm:$0xff]
        %v1858 = vld [vmem:[#allocation11 + $0x8] sm:$0xff]
        %v1859 = vld [vmem:[#allocation11 + $0x10] sm:$0xff]
        %v1860 = vld [vmem:[#allocation11 + $0x18] sm:$0xff]
        %v1861 = vld [vmem:[#allocation11 + $0x20] sm:$0xff]
        %v1862 = vld [vmem:[#allocation11 + $0x28] sm:$0xff]
        %v1863 = vld [vmem:[#allocation11 + $0x30] sm:$0xff]
        %v1864 = vld [vmem:[#allocation11 + $0x38] sm:$0xff]
        %v1865 = vld [vmem:[#allocation11 + $0x40] sm:$0xff]
        %v1866 = vld [vmem:[#allocation11 + $0x48] sm:$0xff]
        %v1867 = vld [vmem:[#allocation11 + $0x50] sm:$0xff]
        %v1868 = vld [vmem:[#allocation11 + $0x58] sm:$0xff]
        %v1869 = vld [vmem:[#allocation11 + $0x60] sm:$0xff]
        %v1870 = vld [vmem:[#allocation11 + $0x68] sm:$0xff]
        %v1871 = vld [vmem:[#allocation11 + $0x70] sm:$0xff]
        %v1872 = vld [vmem:[#allocation11 + $0x78] sm:$0xff]
        %v1873 = vld [vmem:[#allocation11 + $0x80] sm:$0xff]
        %v1874 = vld [vmem:[#allocation11 + $0x88] sm:$0xff]
        %v1875 = vld [vmem:[#allocation11 + $0x90] sm:$0xff]
        %v1876 = vld [vmem:[#allocation11 + $0x98] sm:$0xff]
        %v1877 = vld [vmem:[#allocation11 + $0xa0] sm:$0xff]
        %v1878 = vld [vmem:[#allocation11 + $0xa8] sm:$0xff]
        %v1879 = vld [vmem:[#allocation11 + $0xb0] sm:$0xff]
        %v1880 = vld [vmem:[#allocation11 + $0xb8] sm:$0xff]
        %v1881 = vld [vmem:[#allocation11 + $0xc0] sm:$0xff]
        %v1882 = vld [vmem:[#allocation11 + $0xc8] sm:$0xff]
        %v1883 = vld [vmem:[#allocation11 + $0xd0] sm:$0xff]
        %v1884 = vld [vmem:[#allocation11 + $0xd8] sm:$0xff]
        %v1885 = vld [vmem:[#allocation11 + $0xe0] sm:$0xff]
        %v1886 = vld [vmem:[#allocation11 + $0xe8] sm:$0xff]
        %v1887 = vld [vmem:[#allocation11 + $0xf0] sm:$0xff]
        %v1888 = vld [vmem:[#allocation11 + $0xf8] sm:$0xff]
        %v1889 = vld [vmem:[#allocation11 + $0x100] sm:$0xff]
        %v1890 = vld [vmem:[#allocation11 + $0x108] sm:$0xff]
        %v1891 = vld [vmem:[#allocation11 + $0x110] sm:$0xff]
        %v1892 = vld [vmem:[#allocation11 + $0x118] sm:$0xff]
        %v1893 = vld [vmem:[#allocation11 + $0x120] sm:$0xff]
        %v1894 = vld [vmem:[#allocation11 + $0x128] sm:$0xff]
        %v1895 = vld [vmem:[#allocation11 + $0x130] sm:$0xff]
        %v1896 = vld [vmem:[#allocation11 + $0x138] sm:$0xff]
        %v1897 = vld [vmem:[#allocation11 + $0x140] sm:$0xff]
        %v1898 = vld [vmem:[#allocation11 + $0x148] sm:$0xff]
        %v1899 = vld [vmem:[#allocation11 + $0x150] sm:$0xff]
        %v1900 = vld [vmem:[#allocation11 + $0x158] sm:$0xff]
        %v1901 = vld [vmem:[#allocation11 + $0x160] sm:$0xff]
        %v1902 = vld [vmem:[#allocation11 + $0x168] sm:$0xff]
        %v1903 = vld [vmem:[#allocation11 + $0x170] sm:$0xff]
        %v1904 = vld [vmem:[#allocation11 + $0x178] sm:$0xff]
        %v1905 = vld [vmem:[#allocation11 + $0x180] sm:$0xff]
        %v1906 = vld [vmem:[#allocation11 + $0x188] sm:$0xff]
        %v1907 = vld [vmem:[#allocation11 + $0x190] sm:$0xff]
        %v1908 = vld [vmem:[#allocation11 + $0x198] sm:$0xff]
        %v1909 = vld [vmem:[#allocation11 + $0x1a0] sm:$0xff]
        %v1910 = vld [vmem:[#allocation11 + $0x1a8] sm:$0xff]
        %v1911 = vld [vmem:[#allocation11 + $0x1b0] sm:$0xff]
        %v1912 = vld [vmem:[#allocation11 + $0x1b8] sm:$0xff]
        %v1913 = vld [vmem:[#allocation11 + $0x1c0] sm:$0xff]
        %v1914 = vld [vmem:[#allocation11 + $0x1c8] sm:$0xff]
        %v1915 = vld [vmem:[#allocation11 + $0x1d0] sm:$0xff]
        %v1916 = vld [vmem:[#allocation11 + $0x1d8] sm:$0xff]
        %v1917 = vld [vmem:[#allocation11 + $0x1e0] sm:$0xff]
        %v1918 = vld [vmem:[#allocation11 + $0x1e8] sm:$0xff]
        %v1919 = vld [vmem:[#allocation11 + $0x1f0] sm:$0xff]
        %v1920 = vld [vmem:[#allocation11 + $0x1f8] sm:$0xff]
        %v1921 = vld [vmem:[#allocation11 + $0x200] sm:$0xff]
        %v1922 = vld [vmem:[#allocation11 + $0x208] sm:$0xff]
        %v1923 = vld [vmem:[#allocation11 + $0x210] sm:$0xff]
        %v1924 = vld [vmem:[#allocation11 + $0x218] sm:$0xff]
        %v1925 = vld [vmem:[#allocation11 + $0x220] sm:$0xff]
        %v1926 = vld [vmem:[#allocation11 + $0x228] sm:$0xff]
        %v1927 = vld [vmem:[#allocation11 + $0x230] sm:$0xff]
        %v1928 = vld [vmem:[#allocation11 + $0x238] sm:$0xff]
        %v1929 = vld [vmem:[#allocation11 + $0x240] sm:$0xff]
        %v1930 = vld [vmem:[#allocation11 + $0x248] sm:$0xff]
        %v1931 = vld [vmem:[#allocation11 + $0x250] sm:$0xff]
        %v1932 = vld [vmem:[#allocation11 + $0x258] sm:$0xff]
        %v1933 = vld [vmem:[#allocation11 + $0x260] sm:$0xff]
        %v1934 = vld [vmem:[#allocation11 + $0x268] sm:$0xff]
        %v1935 = vld [vmem:[#allocation11 + $0x270] sm:$0xff]
        %v1936 = vld [vmem:[#allocation11 + $0x278] sm:$0xff]
        %v1937 = vld [vmem:[#allocation11 + $0x280] sm:$0xff]
        %v1938 = vld [vmem:[#allocation11 + $0x288] sm:$0xff]
        %v1939 = vld [vmem:[#allocation11 + $0x290] sm:$0xff]
        %v1940 = vld [vmem:[#allocation11 + $0x298] sm:$0xff]
        %v1941 = vld [vmem:[#allocation11 + $0x2a0] sm:$0xff]
        %v1942 = vld [vmem:[#allocation11 + $0x2a8] sm:$0xff]
        %v1943 = vld [vmem:[#allocation11 + $0x2b0] sm:$0xff]
        %v1944 = vld [vmem:[#allocation11 + $0x2b8] sm:$0xff]
        %v1945 = vld [vmem:[#allocation11 + $0x2c0] sm:$0xff]
        %v1946 = vld [vmem:[#allocation11 + $0x2c8] sm:$0xff]
        %v1947 = vld [vmem:[#allocation11 + $0x2d0] sm:$0xff]
        %v1948 = vld [vmem:[#allocation11 + $0x2d8] sm:$0xff]
        %v1949 = vld [vmem:[#allocation11 + $0x2e0] sm:$0xff]
        %v1950 = vld [vmem:[#allocation11 + $0x2e8] sm:$0xff]
        %v1951 = vld [vmem:[#allocation11 + $0x2f0] sm:$0xff]
        %v1952 = vld [vmem:[#allocation11 + $0x2f8] sm:$0xff]
        %v1953 = vld [vmem:[#allocation11 + $0x300] sm:$0xff]
        %v1954 = vld [vmem:[#allocation11 + $0x308] sm:$0xff]
        %v1955 = vld [vmem:[#allocation11 + $0x310] sm:$0xff]
        %v1956 = vld [vmem:[#allocation11 + $0x318] sm:$0xff]
        %v1957 = vld [vmem:[#allocation11 + $0x320] sm:$0xff]
        %v1958 = vld [vmem:[#allocation11 + $0x328] sm:$0xff]
        %v1959 = vld [vmem:[#allocation11 + $0x330] sm:$0xff]
        %v1960 = vld [vmem:[#allocation11 + $0x338] sm:$0xff]
        %v1961 = vld [vmem:[#allocation11 + $0x340] sm:$0xff]
        %v1962 = vld [vmem:[#allocation11 + $0x348] sm:$0xff]
        %v1963 = vld [vmem:[#allocation11 + $0x350] sm:$0xff]
        %v1964 = vld [vmem:[#allocation11 + $0x358] sm:$0xff]
        %v1965 = vld [vmem:[#allocation11 + $0x360] sm:$0xff]
        %v1966 = vld [vmem:[#allocation11 + $0x368] sm:$0xff]
        %v1967 = vld [vmem:[#allocation11 + $0x370] sm:$0xff]
        %v1968 = vld [vmem:[#allocation11 + $0x378] sm:$0xff]
        %v1969 = vld [vmem:[#allocation11 + $0x380] sm:$0xff]
        %v1970 = vld [vmem:[#allocation11 + $0x388] sm:$0xff]
        %v1971 = vld [vmem:[#allocation11 + $0x390] sm:$0xff]
        %v1972 = vld [vmem:[#allocation11 + $0x398] sm:$0xff]
        %v1973 = vld [vmem:[#allocation11 + $0x3a0] sm:$0xff]
        %v1974 = vld [vmem:[#allocation11 + $0x3a8] sm:$0xff]
        %v1975 = vld [vmem:[#allocation11 + $0x3b0] sm:$0xff]
        %v1976 = vld [vmem:[#allocation11 + $0x3b8] sm:$0xff]
        %v1977 = vld [vmem:[#allocation11 + $0x3c0] sm:$0xff]
        %v1978 = vld [vmem:[#allocation11 + $0x3c8] sm:$0xff]
        %v1979 = vld [vmem:[#allocation11 + $0x3d0] sm:$0xff]
        %v1980 = vld [vmem:[#allocation11 + $0x3d8] sm:$0xff]
        %v1981 = vld [vmem:[#allocation11 + $0x3e0] sm:$0xff]
        %v1982 = vld [vmem:[#allocation11 + $0x3e8] sm:$0xff]
        %v1983 = vld [vmem:[#allocation11 + $0x3f0] sm:$0xff]
        %v1984 = vld [vmem:[#allocation11 + $0x3f8] sm:$0xff]
        %v1985 = vld [vmem:[#allocation11 + $0x400] sm:$0xff]
        %v1986 = vld [vmem:[#allocation11 + $0x408] sm:$0xff]
        %v1987 = vld [vmem:[#allocation11 + $0x410] sm:$0xff]
        %v1988 = vld [vmem:[#allocation11 + $0x418] sm:$0xff]
        %v1989 = vld [vmem:[#allocation11 + $0x420] sm:$0xff]
        %v1990 = vld [vmem:[#allocation11 + $0x428] sm:$0xff]
        %v1991 = vld [vmem:[#allocation11 + $0x430] sm:$0xff]
        %v1992 = vld [vmem:[#allocation11 + $0x438] sm:$0xff]
        %v1993 = vld [vmem:[#allocation11 + $0x440] sm:$0xff]
        %v1994 = vld [vmem:[#allocation11 + $0x448] sm:$0xff]
        %v1995 = vld [vmem:[#allocation11 + $0x450] sm:$0xff]
        %v1996 = vld [vmem:[#allocation11 + $0x458] sm:$0xff]
        %v1997 = vld [vmem:[#allocation11 + $0x460] sm:$0xff]
        %v1998 = vld [vmem:[#allocation11 + $0x468] sm:$0xff]
        %v1999 = vld [vmem:[#allocation11 + $0x470] sm:$0xff]
        %v2000 = vld [vmem:[#allocation11 + $0x478] sm:$0xff]
        %v2001 = vld [vmem:[#allocation11 + $0x480] sm:$0xff]
        %v2002 = vld [vmem:[#allocation11 + $0x488] sm:$0xff]
        %v2003 = vld [vmem:[#allocation11 + $0x490] sm:$0xff]
        %v2004 = vld [vmem:[#allocation11 + $0x498] sm:$0xff]
        %v2005 = vld [vmem:[#allocation11 + $0x4a0] sm:$0xff]
        %v2006 = vld [vmem:[#allocation11 + $0x4a8] sm:$0xff]
        %v2007 = vld [vmem:[#allocation11 + $0x4b0] sm:$0xff]
        %v2008 = vld [vmem:[#allocation11 + $0x4b8] sm:$0xff]
        %v2009 = vld [vmem:[#allocation11 + $0x4c0] sm:$0xff]
        %v2010 = vld [vmem:[#allocation11 + $0x4c8] sm:$0xff]
        %v2011 = vld [vmem:[#allocation11 + $0x4d0] sm:$0xff]
        %v2012 = vld [vmem:[#allocation11 + $0x4d8] sm:$0xff]
        %v2013 = vld [vmem:[#allocation11 + $0x4e0] sm:$0xff]
        %v2014 = vld [vmem:[#allocation11 + $0x4e8] sm:$0xff]
        %v2015 = vld [vmem:[#allocation11 + $0x4f0] sm:$0xff]
        %v2016 = vld [vmem:[#allocation11 + $0x4f8] sm:$0xff]
        %v2017 = vld [vmem:[#allocation11 + $0x500] sm:$0xff]
        %v2018 = vld [vmem:[#allocation11 + $0x508] sm:$0xff]
        %v2019 = vld [vmem:[#allocation11 + $0x510] sm:$0xff]
        %v2020 = vld [vmem:[#allocation11 + $0x518] sm:$0xff]
        %v2021 = vld [vmem:[#allocation11 + $0x520] sm:$0xff]
        %v2022 = vld [vmem:[#allocation11 + $0x528] sm:$0xff]
        %v2023 = vld [vmem:[#allocation11 + $0x530] sm:$0xff]
        %v2024 = vld [vmem:[#allocation11 + $0x538] sm:$0xff]
        %v2025 = vld [vmem:[#allocation11 + $0x540] sm:$0xff]
        %v2026 = vld [vmem:[#allocation11 + $0x548] sm:$0xff]
        %v2027 = vld [vmem:[#allocation11 + $0x550] sm:$0xff]
        %v2028 = vld [vmem:[#allocation11 + $0x558] sm:$0xff]
        %v2029 = vld [vmem:[#allocation11 + $0x560] sm:$0xff]
        %v2030 = vld [vmem:[#allocation11 + $0x568] sm:$0xff]
        %v2031 = vld [vmem:[#allocation11 + $0x570] sm:$0xff]
        %v2032 = vld [vmem:[#allocation11 + $0x578] sm:$0xff]
        %v2033 = vld [vmem:[#allocation11 + $0x580] sm:$0xff]
        %v2034 = vld [vmem:[#allocation11 + $0x588] sm:$0xff]
        %v2035 = vld [vmem:[#allocation11 + $0x590] sm:$0xff]
        %v2036 = vld [vmem:[#allocation11 + $0x598] sm:$0xff]
        %v2037 = vld [vmem:[#allocation11 + $0x5a0] sm:$0xff]
        %v2038 = vld [vmem:[#allocation11 + $0x5a8] sm:$0xff]
        %v2039 = vld [vmem:[#allocation11 + $0x5b0] sm:$0xff]
        %v2040 = vld [vmem:[#allocation11 + $0x5b8] sm:$0xff]
        %v2041 = vld [vmem:[#allocation11 + $0x5c0] sm:$0xff]
        %v2042 = vld [vmem:[#allocation11 + $0x5c8] sm:$0xff]
        %v2043 = vld [vmem:[#allocation11 + $0x5d0] sm:$0xff]
        %v2044 = vld [vmem:[#allocation11 + $0x5d8] sm:$0xff]
        %v2045 = vld [vmem:[#allocation11 + $0x5e0] sm:$0xff]
        %v2046 = vld [vmem:[#allocation11 + $0x5e8] sm:$0xff]
        %v2047 = vld [vmem:[#allocation11 + $0x5f0] sm:$0xff]
        %v2048 = vld [vmem:[#allocation11 + $0x5f8] sm:$0xff]
        %v2049 = vld [vmem:[#allocation11 + $0x600] sm:$0xff]
        %v2050 = vld [vmem:[#allocation11 + $0x608] sm:$0xff]
        %v2051 = vld [vmem:[#allocation11 + $0x610] sm:$0xff]
        %v2052 = vld [vmem:[#allocation11 + $0x618] sm:$0xff]
        %v2053 = vld [vmem:[#allocation11 + $0x620] sm:$0xff]
        %v2054 = vld [vmem:[#allocation11 + $0x628] sm:$0xff]
        %v2055 = vld [vmem:[#allocation11 + $0x630] sm:$0xff]
        %v2056 = vld [vmem:[#allocation11 + $0x638] sm:$0xff]
        %v2057 = vld [vmem:[#allocation11 + $0x640] sm:$0xff]
        %v2058 = vld [vmem:[#allocation11 + $0x648] sm:$0xff]
        %v2059 = vld [vmem:[#allocation11 + $0x650] sm:$0xff]
        %v2060 = vld [vmem:[#allocation11 + $0x658] sm:$0xff]
        %v2061 = vld [vmem:[#allocation11 + $0x660] sm:$0xff]
        %v2062 = vld [vmem:[#allocation11 + $0x668] sm:$0xff]
        %v2063 = vld [vmem:[#allocation11 + $0x670] sm:$0xff]
        %v2064 = vld [vmem:[#allocation11 + $0x678] sm:$0xff]
        %v2065 = vld [vmem:[#allocation11 + $0x680] sm:$0xff]
        %v2066 = vld [vmem:[#allocation11 + $0x688] sm:$0xff]
        %v2067 = vld [vmem:[#allocation11 + $0x690] sm:$0xff]
        %v2068 = vld [vmem:[#allocation11 + $0x698] sm:$0xff]
        %v2069 = vld [vmem:[#allocation11 + $0x6a0] sm:$0xff]
        %v2070 = vld [vmem:[#allocation11 + $0x6a8] sm:$0xff]
        %v2071 = vld [vmem:[#allocation11 + $0x6b0] sm:$0xff]
        %v2072 = vld [vmem:[#allocation11 + $0x6b8] sm:$0xff]
        %v2073 = vld [vmem:[#allocation11 + $0x6c0] sm:$0xff]
        %v2074 = vld [vmem:[#allocation11 + $0x6c8] sm:$0xff]
        %v2075 = vld [vmem:[#allocation11 + $0x6d0] sm:$0xff]
        %v2076 = vld [vmem:[#allocation11 + $0x6d8] sm:$0xff]
        %v2077 = vld [vmem:[#allocation11 + $0x6e0] sm:$0xff]
        %v2078 = vld [vmem:[#allocation11 + $0x6e8] sm:$0xff]
        %v2079 = vld [vmem:[#allocation11 + $0x6f0] sm:$0xff]
        %v2080 = vld [vmem:[#allocation11 + $0x6f8] sm:$0xff]
        %v2081 = vld [vmem:[#allocation11 + $0x700] sm:$0xff]
        %v2082 = vld [vmem:[#allocation11 + $0x708] sm:$0xff]
        %v2083 = vld [vmem:[#allocation11 + $0x710] sm:$0xff]
        %v2084 = vld [vmem:[#allocation11 + $0x718] sm:$0xff]
        %v2085 = vld [vmem:[#allocation11 + $0x720] sm:$0xff]
        %v2086 = vld [vmem:[#allocation11 + $0x728] sm:$0xff]
        %v2087 = vld [vmem:[#allocation11 + $0x730] sm:$0xff]
        %v2088 = vld [vmem:[#allocation11 + $0x738] sm:$0xff]
        %v2089 = vld [vmem:[#allocation11 + $0x740] sm:$0xff]
        %v2090 = vld [vmem:[#allocation11 + $0x748] sm:$0xff]
        %v2091 = vld [vmem:[#allocation11 + $0x750] sm:$0xff]
        %v2092 = vld [vmem:[#allocation11 + $0x758] sm:$0xff]
        %v2093 = vld [vmem:[#allocation11 + $0x760] sm:$0xff]
        %v2094 = vld [vmem:[#allocation11 + $0x768] sm:$0xff]
        %v2095 = vld [vmem:[#allocation11 + $0x770] sm:$0xff]
        %v2096 = vld [vmem:[#allocation11 + $0x778] sm:$0xff]
        %v2097 = vld [vmem:[#allocation11 + $0x780] sm:$0xff]
        %v2098 = vld [vmem:[#allocation11 + $0x788] sm:$0xff]
        %v2099 = vld [vmem:[#allocation11 + $0x790] sm:$0xff]
        %v2100 = vld [vmem:[#allocation11 + $0x798] sm:$0xff]
        %v2101 = vld [vmem:[#allocation11 + $0x7a0] sm:$0xff]
        %v2102 = vld [vmem:[#allocation11 + $0x7a8] sm:$0xff]
        %v2103 = vld [vmem:[#allocation11 + $0x7b0] sm:$0xff]
        %v2104 = vld [vmem:[#allocation11 + $0x7b8] sm:$0xff]
        %v2105 = vld [vmem:[#allocation11 + $0x7c0] sm:$0xff]
        %v2106 = vld [vmem:[#allocation11 + $0x7c8] sm:$0xff]
        %v2107 = vld [vmem:[#allocation11 + $0x7d0] sm:$0xff]
        %v2108 = vld [vmem:[#allocation11 + $0x7d8] sm:$0xff]
        %v2109 = vld [vmem:[#allocation11 + $0x7e0] sm:$0xff]
        %v2110 = vld [vmem:[#allocation11 + $0x7e8] sm:$0xff]
        %v2111 = vld [vmem:[#allocation11 + $0x7f0] sm:$0xff]
        %v2112 = vld [vmem:[#allocation11 + $0x7f8] sm:$0xff]
        %v2113 = vld [vmem:[%s15] sm:$0xf]
        %v2115 = vlaneseq
        %v2116 = vshrl.u32 %v2115, 7
        %v2117 = vsub.s32 0, %v2116
        %v2118 = vrot.slane %v2113, %v2117
        %v2119 = vlaneseq
        %v2120 = vshrl.u32 %v2119, 7
        %v2121 = vsub.s32 1, %v2120
        %v2122 = vrot.slane %v2113, %v2121
        %v2123 = vlaneseq
        %v2124 = vshrl.u32 %v2123, 7
        %v2125 = vsub.s32 2, %v2124
        %v2126 = vrot.slane %v2113, %v2125
        %v2127 = vlaneseq
        %v2128 = vshrl.u32 %v2127, 7
        %v2129 = vsub.s32 3, %v2128
        %v2130 = vrot.slane %v2113, %v2129
        %v2391 = vunpack.c.l.b16 %v1857
        %v2392 = vunpack.c.h.b16 %v1857
        %v2393 = vunpack.c.l.b16 %v1858
        %v2394 = vunpack.c.h.b16 %v1858
        %v2395 = vunpack.c.l.b16 %v1859
        %v2396 = vunpack.c.h.b16 %v1859
        %v2397 = vunpack.c.l.b16 %v1860
        %v2398 = vunpack.c.h.b16 %v1860
        %v2399 = vunpack.c.l.b16 %v1861
        %v2400 = vunpack.c.h.b16 %v1861
        %v2401 = vunpack.c.l.b16 %v1862
        %v2402 = vunpack.c.h.b16 %v1862
        %v2403 = vunpack.c.l.b16 %v1863
        %v2404 = vunpack.c.h.b16 %v1863
        %v2405 = vunpack.c.l.b16 %v1864
        %v2406 = vunpack.c.h.b16 %v1864
        %v2407 = vunpack.c.l.b16 %v1865
        %v2408 = vunpack.c.h.b16 %v1865
        %v2409 = vunpack.c.l.b16 %v1866
        %v2410 = vunpack.c.h.b16 %v1866
        %v2411 = vunpack.c.l.b16 %v1867
        %v2412 = vunpack.c.h.b16 %v1867
        %v2413 = vunpack.c.l.b16 %v1868
        %v2414 = vunpack.c.h.b16 %v1868
        %v2415 = vunpack.c.l.b16 %v1869
        %v2416 = vunpack.c.h.b16 %v1869
        %v2417 = vunpack.c.l.b16 %v1870
        %v2418 = vunpack.c.h.b16 %v1870
        %v2419 = vunpack.c.l.b16 %v1871
        %v2420 = vunpack.c.h.b16 %v1871
        %v2421 = vunpack.c.l.b16 %v1872
        %v2422 = vunpack.c.h.b16 %v1872
        %v2423 = vunpack.c.l.b16 %v1873
        %v2424 = vunpack.c.h.b16 %v1873
        %v2425 = vunpack.c.l.b16 %v1874
        %v2426 = vunpack.c.h.b16 %v1874
        %v2427 = vunpack.c.l.b16 %v1875
        %v2428 = vunpack.c.h.b16 %v1875
        %v2429 = vunpack.c.l.b16 %v1876
        %v2430 = vunpack.c.h.b16 %v1876
        %v2431 = vunpack.c.l.b16 %v1877
        %v2432 = vunpack.c.h.b16 %v1877
        %v2433 = vunpack.c.l.b16 %v1878
        %v2434 = vunpack.c.h.b16 %v1878
        %v2435 = vunpack.c.l.b16 %v1879
        %v2436 = vunpack.c.h.b16 %v1879
        %v2437 = vunpack.c.l.b16 %v1880
        %v2438 = vunpack.c.h.b16 %v1880
        %v2439 = vunpack.c.l.b16 %v1881
        %v2440 = vunpack.c.h.b16 %v1881
        %v2441 = vunpack.c.l.b16 %v1882
        %v2442 = vunpack.c.h.b16 %v1882
        %v2443 = vunpack.c.l.b16 %v1883
        %v2444 = vunpack.c.h.b16 %v1883
        %v2445 = vunpack.c.l.b16 %v1884
        %v2446 = vunpack.c.h.b16 %v1884
        %v2447 = vunpack.c.l.b16 %v1885
        %v2448 = vunpack.c.h.b16 %v1885
        %v2449 = vunpack.c.l.b16 %v1886
        %v2450 = vunpack.c.h.b16 %v1886
        %v2451 = vunpack.c.l.b16 %v1887
        %v2452 = vunpack.c.h.b16 %v1887
        %v2453 = vunpack.c.l.b16 %v1888
        %v2454 = vunpack.c.h.b16 %v1888
        %v2455 = vunpack.c.l.b16 %v1889
        %v2456 = vunpack.c.h.b16 %v1889
        %v2457 = vunpack.c.l.b16 %v1890
        %v2458 = vunpack.c.h.b16 %v1890
        %v2459 = vunpack.c.l.b16 %v1891
        %v2460 = vunpack.c.h.b16 %v1891
        %v2461 = vunpack.c.l.b16 %v1892
        %v2462 = vunpack.c.h.b16 %v1892
        %v2463 = vunpack.c.l.b16 %v1893
        %v2464 = vunpack.c.h.b16 %v1893
        %v2465 = vunpack.c.l.b16 %v1894
        %v2466 = vunpack.c.h.b16 %v1894
        %v2467 = vunpack.c.l.b16 %v1895
        %v2468 = vunpack.c.h.b16 %v1895
        %v2469 = vunpack.c.l.b16 %v1896
        %v2470 = vunpack.c.h.b16 %v1896
        %v2471 = vunpack.c.l.b16 %v1897
        %v2472 = vunpack.c.h.b16 %v1897
        %v2473 = vunpack.c.l.b16 %v1898
        %v2474 = vunpack.c.h.b16 %v1898
        %v2475 = vunpack.c.l.b16 %v1899
        %v2476 = vunpack.c.h.b16 %v1899
        %v2477 = vunpack.c.l.b16 %v1900
        %v2478 = vunpack.c.h.b16 %v1900
        %v2479 = vunpack.c.l.b16 %v1901
        %v2480 = vunpack.c.h.b16 %v1901
        %v2481 = vunpack.c.l.b16 %v1902
        %v2482 = vunpack.c.h.b16 %v1902
        %v2483 = vunpack.c.l.b16 %v1903
        %v2484 = vunpack.c.h.b16 %v1903
        %v2485 = vunpack.c.l.b16 %v1904
        %v2486 = vunpack.c.h.b16 %v1904
        %v2487 = vunpack.c.l.b16 %v1905
        %v2488 = vunpack.c.h.b16 %v1905
        %v2489 = vunpack.c.l.b16 %v1906
        %v2490 = vunpack.c.h.b16 %v1906
        %v2491 = vunpack.c.l.b16 %v1907
        %v2492 = vunpack.c.h.b16 %v1907
        %v2493 = vunpack.c.l.b16 %v1908
        %v2494 = vunpack.c.h.b16 %v1908
        %v2495 = vunpack.c.l.b16 %v1909
        %v2496 = vunpack.c.h.b16 %v1909
        %v2497 = vunpack.c.l.b16 %v1910
        %v2498 = vunpack.c.h.b16 %v1910
        %v2499 = vunpack.c.l.b16 %v1911
        %v2500 = vunpack.c.h.b16 %v1911
        %v2501 = vunpack.c.l.b16 %v1912
        %v2502 = vunpack.c.h.b16 %v1912
        %v2503 = vunpack.c.l.b16 %v1913
        %v2504 = vunpack.c.h.b16 %v1913
        %v2505 = vunpack.c.l.b16 %v1914
        %v2506 = vunpack.c.h.b16 %v1914
        %v2507 = vunpack.c.l.b16 %v1915
        %v2508 = vunpack.c.h.b16 %v1915
        %v2509 = vunpack.c.l.b16 %v1916
        %v2510 = vunpack.c.h.b16 %v1916
        %v2511 = vunpack.c.l.b16 %v1917
        %v2512 = vunpack.c.h.b16 %v1917
        %v2513 = vunpack.c.l.b16 %v1918
        %v2514 = vunpack.c.h.b16 %v1918
        %v2515 = vunpack.c.l.b16 %v1919
        %v2516 = vunpack.c.h.b16 %v1919
        %v2517 = vunpack.c.l.b16 %v1920
        %v2518 = vunpack.c.h.b16 %v1920
        %v2519 = vunpack.c.l.b16 %v1921
        %v2520 = vunpack.c.h.b16 %v1921
        %v2521 = vunpack.c.l.b16 %v1922
        %v2522 = vunpack.c.h.b16 %v1922
        %v2523 = vunpack.c.l.b16 %v1923
        %v2524 = vunpack.c.h.b16 %v1923
        %v2525 = vunpack.c.l.b16 %v1924
        %v2526 = vunpack.c.h.b16 %v1924
        %v2527 = vunpack.c.l.b16 %v1925
        %v2528 = vunpack.c.h.b16 %v1925
        %v2529 = vunpack.c.l.b16 %v1926
        %v2530 = vunpack.c.h.b16 %v1926
        %v2531 = vunpack.c.l.b16 %v1927
        %v2532 = vunpack.c.h.b16 %v1927
        %v2533 = vunpack.c.l.b16 %v1928
        %v2534 = vunpack.c.h.b16 %v1928
        %v2535 = vunpack.c.l.b16 %v1929
        %v2536 = vunpack.c.h.b16 %v1929
        %v2537 = vunpack.c.l.b16 %v1930
        %v2538 = vunpack.c.h.b16 %v1930
        %v2539 = vunpack.c.l.b16 %v1931
        %v2540 = vunpack.c.h.b16 %v1931
        %v2541 = vunpack.c.l.b16 %v1932
        %v2542 = vunpack.c.h.b16 %v1932
        %v2543 = vunpack.c.l.b16 %v1933
        %v2544 = vunpack.c.h.b16 %v1933
        %v2545 = vunpack.c.l.b16 %v1934
        %v2546 = vunpack.c.h.b16 %v1934
        %v2547 = vunpack.c.l.b16 %v1935
        %v2548 = vunpack.c.h.b16 %v1935
        %v2549 = vunpack.c.l.b16 %v1936
        %v2550 = vunpack.c.h.b16 %v1936
        %v2551 = vunpack.c.l.b16 %v1937
        %v2552 = vunpack.c.h.b16 %v1937
        %v2553 = vunpack.c.l.b16 %v1938
        %v2554 = vunpack.c.h.b16 %v1938
        %v2555 = vunpack.c.l.b16 %v1939
        %v2556 = vunpack.c.h.b16 %v1939
        %v2557 = vunpack.c.l.b16 %v1940
        %v2558 = vunpack.c.h.b16 %v1940
        %v2559 = vunpack.c.l.b16 %v1941
        %v2560 = vunpack.c.h.b16 %v1941
        %v2561 = vunpack.c.l.b16 %v1942
        %v2562 = vunpack.c.h.b16 %v1942
        %v2563 = vunpack.c.l.b16 %v1943
        %v2564 = vunpack.c.h.b16 %v1943
        %v2565 = vunpack.c.l.b16 %v1944
        %v2566 = vunpack.c.h.b16 %v1944
        %v2567 = vunpack.c.l.b16 %v1945
        %v2568 = vunpack.c.h.b16 %v1945
        %v2569 = vunpack.c.l.b16 %v1946
        %v2570 = vunpack.c.h.b16 %v1946
        %v2571 = vunpack.c.l.b16 %v1947
        %v2572 = vunpack.c.h.b16 %v1947
        %v2573 = vunpack.c.l.b16 %v1948
        %v2574 = vunpack.c.h.b16 %v1948
        %v2575 = vunpack.c.l.b16 %v1949
        %v2576 = vunpack.c.h.b16 %v1949
        %v2577 = vunpack.c.l.b16 %v1950
        %v2578 = vunpack.c.h.b16 %v1950
        %v2579 = vunpack.c.l.b16 %v1951
        %v2580 = vunpack.c.h.b16 %v1951
        %v2581 = vunpack.c.l.b16 %v1952
        %v2582 = vunpack.c.h.b16 %v1952
        %v2583 = vunpack.c.l.b16 %v1953
        %v2584 = vunpack.c.h.b16 %v1953
        %v2585 = vunpack.c.l.b16 %v1954
        %v2586 = vunpack.c.h.b16 %v1954
        %v2587 = vunpack.c.l.b16 %v1955
        %v2588 = vunpack.c.h.b16 %v1955
        %v2589 = vunpack.c.l.b16 %v1956
        %v2590 = vunpack.c.h.b16 %v1956
        %v2591 = vunpack.c.l.b16 %v1957
        %v2592 = vunpack.c.h.b16 %v1957
        %v2593 = vunpack.c.l.b16 %v1958
        %v2594 = vunpack.c.h.b16 %v1958
        %v2595 = vunpack.c.l.b16 %v1959
        %v2596 = vunpack.c.h.b16 %v1959
        %v2597 = vunpack.c.l.b16 %v1960
        %v2598 = vunpack.c.h.b16 %v1960
        %v2599 = vunpack.c.l.b16 %v1961
        %v2600 = vunpack.c.h.b16 %v1961
        %v2601 = vunpack.c.l.b16 %v1962
        %v2602 = vunpack.c.h.b16 %v1962
        %v2603 = vunpack.c.l.b16 %v1963
        %v2604 = vunpack.c.h.b16 %v1963
        %v2605 = vunpack.c.l.b16 %v1964
        %v2606 = vunpack.c.h.b16 %v1964
        %v2607 = vunpack.c.l.b16 %v1965
        %v2608 = vunpack.c.h.b16 %v1965
        %v2609 = vunpack.c.l.b16 %v1966
        %v2610 = vunpack.c.h.b16 %v1966
        %v2611 = vunpack.c.l.b16 %v1967
        %v2612 = vunpack.c.h.b16 %v1967
        %v2613 = vunpack.c.l.b16 %v1968
        %v2614 = vunpack.c.h.b16 %v1968
        %v2615 = vunpack.c.l.b16 %v1969
        %v2616 = vunpack.c.h.b16 %v1969
        %v2617 = vunpack.c.l.b16 %v1970
        %v2618 = vunpack.c.h.b16 %v1970
        %v2619 = vunpack.c.l.b16 %v1971
        %v2620 = vunpack.c.h.b16 %v1971
        %v2621 = vunpack.c.l.b16 %v1972
        %v2622 = vunpack.c.h.b16 %v1972
        %v2623 = vunpack.c.l.b16 %v1973
        %v2624 = vunpack.c.h.b16 %v1973
        %v2625 = vunpack.c.l.b16 %v1974
        %v2626 = vunpack.c.h.b16 %v1974
        %v2627 = vunpack.c.l.b16 %v1975
        %v2628 = vunpack.c.h.b16 %v1975
        %v2629 = vunpack.c.l.b16 %v1976
        %v2630 = vunpack.c.h.b16 %v1976
        %v2631 = vunpack.c.l.b16 %v1977
        %v2632 = vunpack.c.h.b16 %v1977
        %v2633 = vunpack.c.l.b16 %v1978
        %v2634 = vunpack.c.h.b16 %v1978
        %v2635 = vunpack.c.l.b16 %v1979
        %v2636 = vunpack.c.h.b16 %v1979
        %v2637 = vunpack.c.l.b16 %v1980
        %v2638 = vunpack.c.h.b16 %v1980
        %v2639 = vunpack.c.l.b16 %v1981
        %v2640 = vunpack.c.h.b16 %v1981
        %v2641 = vunpack.c.l.b16 %v1982
        %v2642 = vunpack.c.h.b16 %v1982
        %v2643 = vunpack.c.l.b16 %v1983
        %v2644 = vunpack.c.h.b16 %v1983
        %v2645 = vunpack.c.l.b16 %v1984
        %v2646 = vunpack.c.h.b16 %v1984
        %v2647 = vunpack.c.l.b16 %v1985
        %v2648 = vunpack.c.h.b16 %v1985
        %v2649 = vunpack.c.l.b16 %v1986
        %v2650 = vunpack.c.h.b16 %v1986
        %v2651 = vunpack.c.l.b16 %v1987
        %v2652 = vunpack.c.h.b16 %v1987
        %v2653 = vunpack.c.l.b16 %v1988
        %v2654 = vunpack.c.h.b16 %v1988
        %v2655 = vunpack.c.l.b16 %v1989
        %v2656 = vunpack.c.h.b16 %v1989
        %v2657 = vunpack.c.l.b16 %v1990
        %v2658 = vunpack.c.h.b16 %v1990
        %v2659 = vunpack.c.l.b16 %v1991
        %v2660 = vunpack.c.h.b16 %v1991
        %v2661 = vunpack.c.l.b16 %v1992
        %v2662 = vunpack.c.h.b16 %v1992
        %v2663 = vunpack.c.l.b16 %v1993
        %v2664 = vunpack.c.h.b16 %v1993
        %v2665 = vunpack.c.l.b16 %v1994
        %v2666 = vunpack.c.h.b16 %v1994
        %v2667 = vunpack.c.l.b16 %v1995
        %v2668 = vunpack.c.h.b16 %v1995
        %v2669 = vunpack.c.l.b16 %v1996
        %v2670 = vunpack.c.h.b16 %v1996
        %v2671 = vunpack.c.l.b16 %v1997
        %v2672 = vunpack.c.h.b16 %v1997
        %v2673 = vunpack.c.l.b16 %v1998
        %v2674 = vunpack.c.h.b16 %v1998
        %v2675 = vunpack.c.l.b16 %v1999
        %v2676 = vunpack.c.h.b16 %v1999
        %v2677 = vunpack.c.l.b16 %v2000
        %v2678 = vunpack.c.h.b16 %v2000
        %v2679 = vunpack.c.l.b16 %v2001
        %v2680 = vunpack.c.h.b16 %v2001
        %v2681 = vunpack.c.l.b16 %v2002
        %v2682 = vunpack.c.h.b16 %v2002
        %v2683 = vunpack.c.l.b16 %v2003
        %v2684 = vunpack.c.h.b16 %v2003
        %v2685 = vunpack.c.l.b16 %v2004
        %v2686 = vunpack.c.h.b16 %v2004
        %v2687 = vunpack.c.l.b16 %v2005
        %v2688 = vunpack.c.h.b16 %v2005
        %v2689 = vunpack.c.l.b16 %v2006
        %v2690 = vunpack.c.h.b16 %v2006
        %v2691 = vunpack.c.l.b16 %v2007
        %v2692 = vunpack.c.h.b16 %v2007
        %v2693 = vunpack.c.l.b16 %v2008
        %v2694 = vunpack.c.h.b16 %v2008
        %v2695 = vunpack.c.l.b16 %v2009
        %v2696 = vunpack.c.h.b16 %v2009
        %v2697 = vunpack.c.l.b16 %v2010
        %v2698 = vunpack.c.h.b16 %v2010
        %v2699 = vunpack.c.l.b16 %v2011
        %v2700 = vunpack.c.h.b16 %v2011
        %v2701 = vunpack.c.l.b16 %v2012
        %v2702 = vunpack.c.h.b16 %v2012
        %v2703 = vunpack.c.l.b16 %v2013
        %v2704 = vunpack.c.h.b16 %v2013
        %v2705 = vunpack.c.l.b16 %v2014
        %v2706 = vunpack.c.h.b16 %v2014
        %v2707 = vunpack.c.l.b16 %v2015
        %v2708 = vunpack.c.h.b16 %v2015
        %v2709 = vunpack.c.l.b16 %v2016
        %v2710 = vunpack.c.h.b16 %v2016
        %v2711 = vunpack.c.l.b16 %v2017
        %v2712 = vunpack.c.h.b16 %v2017
        %v2713 = vunpack.c.l.b16 %v2018
        %v2714 = vunpack.c.h.b16 %v2018
        %v2715 = vunpack.c.l.b16 %v2019
        %v2716 = vunpack.c.h.b16 %v2019
        %v2717 = vunpack.c.l.b16 %v2020
        %v2718 = vunpack.c.h.b16 %v2020
        %v2719 = vunpack.c.l.b16 %v2021
        %v2720 = vunpack.c.h.b16 %v2021
        %v2721 = vunpack.c.l.b16 %v2022
        %v2722 = vunpack.c.h.b16 %v2022
        %v2723 = vunpack.c.l.b16 %v2023
        %v2724 = vunpack.c.h.b16 %v2023
        %v2725 = vunpack.c.l.b16 %v2024
        %v2726 = vunpack.c.h.b16 %v2024
        %v2727 = vunpack.c.l.b16 %v2025
        %v2728 = vunpack.c.h.b16 %v2025
        %v2729 = vunpack.c.l.b16 %v2026
        %v2730 = vunpack.c.h.b16 %v2026
        %v2731 = vunpack.c.l.b16 %v2027
        %v2732 = vunpack.c.h.b16 %v2027
        %v2733 = vunpack.c.l.b16 %v2028
        %v2734 = vunpack.c.h.b16 %v2028
        %v2735 = vunpack.c.l.b16 %v2029
        %v2736 = vunpack.c.h.b16 %v2029
        %v2737 = vunpack.c.l.b16 %v2030
        %v2738 = vunpack.c.h.b16 %v2030
        %v2739 = vunpack.c.l.b16 %v2031
        %v2740 = vunpack.c.h.b16 %v2031
        %v2741 = vunpack.c.l.b16 %v2032
        %v2742 = vunpack.c.h.b16 %v2032
        %v2743 = vunpack.c.l.b16 %v2033
        %v2744 = vunpack.c.h.b16 %v2033
        %v2745 = vunpack.c.l.b16 %v2034
        %v2746 = vunpack.c.h.b16 %v2034
        %v2747 = vunpack.c.l.b16 %v2035
        %v2748 = vunpack.c.h.b16 %v2035
        %v2749 = vunpack.c.l.b16 %v2036
        %v2750 = vunpack.c.h.b16 %v2036
        %v2751 = vunpack.c.l.b16 %v2037
        %v2752 = vunpack.c.h.b16 %v2037
        %v2753 = vunpack.c.l.b16 %v2038
        %v2754 = vunpack.c.h.b16 %v2038
        %v2755 = vunpack.c.l.b16 %v2039
        %v2756 = vunpack.c.h.b16 %v2039
        %v2757 = vunpack.c.l.b16 %v2040
        %v2758 = vunpack.c.h.b16 %v2040
        %v2759 = vunpack.c.l.b16 %v2041
        %v2760 = vunpack.c.h.b16 %v2041
        %v2761 = vunpack.c.l.b16 %v2042
        %v2762 = vunpack.c.h.b16 %v2042
        %v2763 = vunpack.c.l.b16 %v2043
        %v2764 = vunpack.c.h.b16 %v2043
        %v2765 = vunpack.c.l.b16 %v2044
        %v2766 = vunpack.c.h.b16 %v2044
        %v2767 = vunpack.c.l.b16 %v2045
        %v2768 = vunpack.c.h.b16 %v2045
        %v2769 = vunpack.c.l.b16 %v2046
        %v2770 = vunpack.c.h.b16 %v2046
        %v2771 = vunpack.c.l.b16 %v2047
        %v2772 = vunpack.c.h.b16 %v2047
        %v2773 = vunpack.c.l.b16 %v2048
        %v2774 = vunpack.c.h.b16 %v2048
        %v2775 = vunpack.c.l.b16 %v2049
        %v2776 = vunpack.c.h.b16 %v2049
        %v2777 = vunpack.c.l.b16 %v2050
        %v2778 = vunpack.c.h.b16 %v2050
        %v2779 = vunpack.c.l.b16 %v2051
        %v2780 = vunpack.c.h.b16 %v2051
        %v2781 = vunpack.c.l.b16 %v2052
        %v2782 = vunpack.c.h.b16 %v2052
        %v2783 = vunpack.c.l.b16 %v2053
        %v2784 = vunpack.c.h.b16 %v2053
        %v2785 = vunpack.c.l.b16 %v2054
        %v2786 = vunpack.c.h.b16 %v2054
        %v2787 = vunpack.c.l.b16 %v2055
        %v2788 = vunpack.c.h.b16 %v2055
        %v2789 = vunpack.c.l.b16 %v2056
        %v2790 = vunpack.c.h.b16 %v2056
        %v2791 = vunpack.c.l.b16 %v2057
        %v2792 = vunpack.c.h.b16 %v2057
        %v2793 = vunpack.c.l.b16 %v2058
        %v2794 = vunpack.c.h.b16 %v2058
        %v2795 = vunpack.c.l.b16 %v2059
        %v2796 = vunpack.c.h.b16 %v2059
        %v2797 = vunpack.c.l.b16 %v2060
        %v2798 = vunpack.c.h.b16 %v2060
        %v2799 = vunpack.c.l.b16 %v2061
        %v2800 = vunpack.c.h.b16 %v2061
        %v2801 = vunpack.c.l.b16 %v2062
        %v2802 = vunpack.c.h.b16 %v2062
        %v2803 = vunpack.c.l.b16 %v2063
        %v2804 = vunpack.c.h.b16 %v2063
        %v2805 = vunpack.c.l.b16 %v2064
        %v2806 = vunpack.c.h.b16 %v2064
        %v2807 = vunpack.c.l.b16 %v2065
        %v2808 = vunpack.c.h.b16 %v2065
        %v2809 = vunpack.c.l.b16 %v2066
        %v2810 = vunpack.c.h.b16 %v2066
        %v2811 = vunpack.c.l.b16 %v2067
        %v2812 = vunpack.c.h.b16 %v2067
        %v2813 = vunpack.c.l.b16 %v2068
        %v2814 = vunpack.c.h.b16 %v2068
        %v2815 = vunpack.c.l.b16 %v2069
        %v2816 = vunpack.c.h.b16 %v2069
        %v2817 = vunpack.c.l.b16 %v2070
        %v2818 = vunpack.c.h.b16 %v2070
        %v2819 = vunpack.c.l.b16 %v2071
        %v2820 = vunpack.c.h.b16 %v2071
        %v2821 = vunpack.c.l.b16 %v2072
        %v2822 = vunpack.c.h.b16 %v2072
        %v2823 = vunpack.c.l.b16 %v2073
        %v2824 = vunpack.c.h.b16 %v2073
        %v2825 = vunpack.c.l.b16 %v2074
        %v2826 = vunpack.c.h.b16 %v2074
        %v2827 = vunpack.c.l.b16 %v2075
        %v2828 = vunpack.c.h.b16 %v2075
        %v2829 = vunpack.c.l.b16 %v2076
        %v2830 = vunpack.c.h.b16 %v2076
        %v2831 = vunpack.c.l.b16 %v2077
        %v2832 = vunpack.c.h.b16 %v2077
        %v2833 = vunpack.c.l.b16 %v2078
        %v2834 = vunpack.c.h.b16 %v2078
        %v2835 = vunpack.c.l.b16 %v2079
        %v2836 = vunpack.c.h.b16 %v2079
        %v2837 = vunpack.c.l.b16 %v2080
        %v2838 = vunpack.c.h.b16 %v2080
        %v2839 = vunpack.c.l.b16 %v2081
        %v2840 = vunpack.c.h.b16 %v2081
        %v2841 = vunpack.c.l.b16 %v2082
        %v2842 = vunpack.c.h.b16 %v2082
        %v2843 = vunpack.c.l.b16 %v2083
        %v2844 = vunpack.c.h.b16 %v2083
        %v2845 = vunpack.c.l.b16 %v2084
        %v2846 = vunpack.c.h.b16 %v2084
        %v2847 = vunpack.c.l.b16 %v2085
        %v2848 = vunpack.c.h.b16 %v2085
        %v2849 = vunpack.c.l.b16 %v2086
        %v2850 = vunpack.c.h.b16 %v2086
        %v2851 = vunpack.c.l.b16 %v2087
        %v2852 = vunpack.c.h.b16 %v2087
        %v2853 = vunpack.c.l.b16 %v2088
        %v2854 = vunpack.c.h.b16 %v2088
        %v2855 = vunpack.c.l.b16 %v2089
        %v2856 = vunpack.c.h.b16 %v2089
        %v2857 = vunpack.c.l.b16 %v2090
        %v2858 = vunpack.c.h.b16 %v2090
        %v2859 = vunpack.c.l.b16 %v2091
        %v2860 = vunpack.c.h.b16 %v2091
        %v2861 = vunpack.c.l.b16 %v2092
        %v2862 = vunpack.c.h.b16 %v2092
        %v2863 = vunpack.c.l.b16 %v2093
        %v2864 = vunpack.c.h.b16 %v2093
        %v2865 = vunpack.c.l.b16 %v2094
        %v2866 = vunpack.c.h.b16 %v2094
        %v2867 = vunpack.c.l.b16 %v2095
        %v2868 = vunpack.c.h.b16 %v2095
        %v2869 = vunpack.c.l.b16 %v2096
        %v2870 = vunpack.c.h.b16 %v2096
        %v2871 = vunpack.c.l.b16 %v2097
        %v2872 = vunpack.c.h.b16 %v2097
        %v2873 = vunpack.c.l.b16 %v2098
        %v2874 = vunpack.c.h.b16 %v2098
        %v2875 = vunpack.c.l.b16 %v2099
        %v2876 = vunpack.c.h.b16 %v2099
        %v2877 = vunpack.c.l.b16 %v2100
        %v2878 = vunpack.c.h.b16 %v2100
        %v2879 = vunpack.c.l.b16 %v2101
        %v2880 = vunpack.c.h.b16 %v2101
        %v2881 = vunpack.c.l.b16 %v2102
        %v2882 = vunpack.c.h.b16 %v2102
        %v2883 = vunpack.c.l.b16 %v2103
        %v2884 = vunpack.c.h.b16 %v2103
        %v2885 = vunpack.c.l.b16 %v2104
        %v2886 = vunpack.c.h.b16 %v2104
        %v2887 = vunpack.c.l.b16 %v2105
        %v2888 = vunpack.c.h.b16 %v2105
        %v2889 = vunpack.c.l.b16 %v2106
        %v2890 = vunpack.c.h.b16 %v2106
        %v2891 = vunpack.c.l.b16 %v2107
        %v2892 = vunpack.c.h.b16 %v2107
        %v2893 = vunpack.c.l.b16 %v2108
        %v2894 = vunpack.c.h.b16 %v2108
        %v2895 = vunpack.c.l.b16 %v2109
        %v2896 = vunpack.c.h.b16 %v2109
        %v2897 = vunpack.c.l.b16 %v2110
        %v2898 = vunpack.c.h.b16 %v2110
        %v2899 = vunpack.c.l.b16 %v2111
        %v2900 = vunpack.c.h.b16 %v2111
        %v2901 = vunpack.c.l.b16 %v2112
        %v2902 = vunpack.c.h.b16 %v2112
        %v2903 = vpack.c.b16 %v2395, %v2391
        %v2904 = vpack.c.b16 %v2396, %v2392
        %v2905 = vpack.c.b16 %v2397, %v2393
        %v2906 = vpack.c.b16 %v2398, %v2394
        %v2907 = vpack.c.b16 %v2403, %v2399
        %v2908 = vpack.c.b16 %v2404, %v2400
        %v2909 = vpack.c.b16 %v2405, %v2401
        %v2910 = vpack.c.b16 %v2406, %v2402
        %v2911 = vpack.c.b16 %v2411, %v2407
        %v2912 = vpack.c.b16 %v2412, %v2408
        %v2913 = vpack.c.b16 %v2413, %v2409
        %v2914 = vpack.c.b16 %v2414, %v2410
        %v2915 = vpack.c.b16 %v2419, %v2415
        %v2916 = vpack.c.b16 %v2420, %v2416
        %v2917 = vpack.c.b16 %v2421, %v2417
        %v2918 = vpack.c.b16 %v2422, %v2418
        %v2919 = vpack.c.b16 %v2427, %v2423
        %v2920 = vpack.c.b16 %v2428, %v2424
        %v2921 = vpack.c.b16 %v2429, %v2425
        %v2922 = vpack.c.b16 %v2430, %v2426
        %v2923 = vpack.c.b16 %v2435, %v2431
        %v2924 = vpack.c.b16 %v2436, %v2432
        %v2925 = vpack.c.b16 %v2437, %v2433
        %v2926 = vpack.c.b16 %v2438, %v2434
        %v2927 = vpack.c.b16 %v2443, %v2439
        %v2928 = vpack.c.b16 %v2444, %v2440
        %v2929 = vpack.c.b16 %v2445, %v2441
        %v2930 = vpack.c.b16 %v2446, %v2442
        %v2931 = vpack.c.b16 %v2451, %v2447
        %v2932 = vpack.c.b16 %v2452, %v2448
        %v2933 = vpack.c.b16 %v2453, %v2449
        %v2934 = vpack.c.b16 %v2454, %v2450
        %v2935 = vpack.c.b16 %v2459, %v2455
        %v2936 = vpack.c.b16 %v2460, %v2456
        %v2937 = vpack.c.b16 %v2461, %v2457
        %v2938 = vpack.c.b16 %v2462, %v2458
        %v2939 = vpack.c.b16 %v2467, %v2463
        %v2940 = vpack.c.b16 %v2468, %v2464
        %v2941 = vpack.c.b16 %v2469, %v2465
        %v2942 = vpack.c.b16 %v2470, %v2466
        %v2943 = vpack.c.b16 %v2475, %v2471
        %v2944 = vpack.c.b16 %v2476, %v2472
        %v2945 = vpack.c.b16 %v2477, %v2473
        %v2946 = vpack.c.b16 %v2478, %v2474
        %v2947 = vpack.c.b16 %v2483, %v2479
        %v2948 = vpack.c.b16 %v2484, %v2480
        %v2949 = vpack.c.b16 %v2485, %v2481
        %v2950 = vpack.c.b16 %v2486, %v2482
        %v2951 = vpack.c.b16 %v2491, %v2487
        %v2952 = vpack.c.b16 %v2492, %v2488
        %v2953 = vpack.c.b16 %v2493, %v2489
        %v2954 = vpack.c.b16 %v2494, %v2490
        %v2955 = vpack.c.b16 %v2499, %v2495
        %v2956 = vpack.c.b16 %v2500, %v2496
        %v2957 = vpack.c.b16 %v2501, %v2497
        %v2958 = vpack.c.b16 %v2502, %v2498
        %v2959 = vpack.c.b16 %v2507, %v2503
        %v2960 = vpack.c.b16 %v2508, %v2504
        %v2961 = vpack.c.b16 %v2509, %v2505
        %v2962 = vpack.c.b16 %v2510, %v2506
        %v2963 = vpack.c.b16 %v2515, %v2511
        %v2964 = vpack.c.b16 %v2516, %v2512
        %v2965 = vpack.c.b16 %v2517, %v2513
        %v2966 = vpack.c.b16 %v2518, %v2514
        %v2967 = vpack.c.b16 %v2523, %v2519
        %v2968 = vpack.c.b16 %v2524, %v2520
        %v2969 = vpack.c.b16 %v2525, %v2521
        %v2970 = vpack.c.b16 %v2526, %v2522
        %v2971 = vpack.c.b16 %v2531, %v2527
        %v2972 = vpack.c.b16 %v2532, %v2528
        %v2973 = vpack.c.b16 %v2533, %v2529
        %v2974 = vpack.c.b16 %v2534, %v2530
        %v2975 = vpack.c.b16 %v2539, %v2535
        %v2976 = vpack.c.b16 %v2540, %v2536
        %v2977 = vpack.c.b16 %v2541, %v2537
        %v2978 = vpack.c.b16 %v2542, %v2538
        %v2979 = vpack.c.b16 %v2547, %v2543
        %v2980 = vpack.c.b16 %v2548, %v2544
        %v2981 = vpack.c.b16 %v2549, %v2545
        %v2982 = vpack.c.b16 %v2550, %v2546
        %v2983 = vpack.c.b16 %v2555, %v2551
        %v2984 = vpack.c.b16 %v2556, %v2552
        %v2985 = vpack.c.b16 %v2557, %v2553
        %v2986 = vpack.c.b16 %v2558, %v2554
        %v2987 = vpack.c.b16 %v2563, %v2559
        %v2988 = vpack.c.b16 %v2564, %v2560
        %v2989 = vpack.c.b16 %v2565, %v2561
        %v2990 = vpack.c.b16 %v2566, %v2562
        %v2991 = vpack.c.b16 %v2571, %v2567
        %v2992 = vpack.c.b16 %v2572, %v2568
        %v2993 = vpack.c.b16 %v2573, %v2569
        %v2994 = vpack.c.b16 %v2574, %v2570
        %v2995 = vpack.c.b16 %v2579, %v2575
        %v2996 = vpack.c.b16 %v2580, %v2576
        %v2997 = vpack.c.b16 %v2581, %v2577
        %v2998 = vpack.c.b16 %v2582, %v2578
        %v2999 = vpack.c.b16 %v2587, %v2583
        %v3000 = vpack.c.b16 %v2588, %v2584
        %v3001 = vpack.c.b16 %v2589, %v2585
        %v3002 = vpack.c.b16 %v2590, %v2586
        %v3003 = vpack.c.b16 %v2595, %v2591
        %v3004 = vpack.c.b16 %v2596, %v2592
        %v3005 = vpack.c.b16 %v2597, %v2593
        %v3006 = vpack.c.b16 %v2598, %v2594
        %v3007 = vpack.c.b16 %v2603, %v2599
        %v3008 = vpack.c.b16 %v2604, %v2600
        %v3009 = vpack.c.b16 %v2605, %v2601
        %v3010 = vpack.c.b16 %v2606, %v2602
        %v3011 = vpack.c.b16 %v2611, %v2607
        %v3012 = vpack.c.b16 %v2612, %v2608
        %v3013 = vpack.c.b16 %v2613, %v2609
        %v3014 = vpack.c.b16 %v2614, %v2610
        %v3015 = vpack.c.b16 %v2619, %v2615
        %v3016 = vpack.c.b16 %v2620, %v2616
        %v3017 = vpack.c.b16 %v2621, %v2617
        %v3018 = vpack.c.b16 %v2622, %v2618
        %v3019 = vpack.c.b16 %v2627, %v2623
        %v3020 = vpack.c.b16 %v2628, %v2624
        %v3021 = vpack.c.b16 %v2629, %v2625
        %v3022 = vpack.c.b16 %v2630, %v2626
        %v3023 = vpack.c.b16 %v2635, %v2631
        %v3024 = vpack.c.b16 %v2636, %v2632
        %v3025 = vpack.c.b16 %v2637, %v2633
        %v3026 = vpack.c.b16 %v2638, %v2634
        %v3027 = vpack.c.b16 %v2643, %v2639
        %v3028 = vpack.c.b16 %v2644, %v2640
        %v3029 = vpack.c.b16 %v2645, %v2641
        %v3030 = vpack.c.b16 %v2646, %v2642
        %v3031 = vpack.c.b16 %v2651, %v2647
        %v3032 = vpack.c.b16 %v2652, %v2648
        %v3033 = vpack.c.b16 %v2653, %v2649
        %v3034 = vpack.c.b16 %v2654, %v2650
        %v3035 = vpack.c.b16 %v2659, %v2655
        %v3036 = vpack.c.b16 %v2660, %v2656
        %v3037 = vpack.c.b16 %v2661, %v2657
        %v3038 = vpack.c.b16 %v2662, %v2658
        %v3039 = vpack.c.b16 %v2667, %v2663
        %v3040 = vpack.c.b16 %v2668, %v2664
        %v3041 = vpack.c.b16 %v2669, %v2665
        %v3042 = vpack.c.b16 %v2670, %v2666
        %v3043 = vpack.c.b16 %v2675, %v2671
        %v3044 = vpack.c.b16 %v2676, %v2672
        %v3045 = vpack.c.b16 %v2677, %v2673
        %v3046 = vpack.c.b16 %v2678, %v2674
        %v3047 = vpack.c.b16 %v2683, %v2679
        %v3048 = vpack.c.b16 %v2684, %v2680
        %v3049 = vpack.c.b16 %v2685, %v2681
        %v3050 = vpack.c.b16 %v2686, %v2682
        %v3051 = vpack.c.b16 %v2691, %v2687
        %v3052 = vpack.c.b16 %v2692, %v2688
        %v3053 = vpack.c.b16 %v2693, %v2689
        %v3054 = vpack.c.b16 %v2694, %v2690
        %v3055 = vpack.c.b16 %v2699, %v2695
        %v3056 = vpack.c.b16 %v2700, %v2696
        %v3057 = vpack.c.b16 %v2701, %v2697
        %v3058 = vpack.c.b16 %v2702, %v2698
        %v3059 = vpack.c.b16 %v2707, %v2703
        %v3060 = vpack.c.b16 %v2708, %v2704
        %v3061 = vpack.c.b16 %v2709, %v2705
        %v3062 = vpack.c.b16 %v2710, %v2706
        %v3063 = vpack.c.b16 %v2715, %v2711
        %v3064 = vpack.c.b16 %v2716, %v2712
        %v3065 = vpack.c.b16 %v2717, %v2713
        %v3066 = vpack.c.b16 %v2718, %v2714
        %v3067 = vpack.c.b16 %v2723, %v2719
        %v3068 = vpack.c.b16 %v2724, %v2720
        %v3069 = vpack.c.b16 %v2725, %v2721
        %v3070 = vpack.c.b16 %v2726, %v2722
        %v3071 = vpack.c.b16 %v2731, %v2727
        %v3072 = vpack.c.b16 %v2732, %v2728
        %v3073 = vpack.c.b16 %v2733, %v2729
        %v3074 = vpack.c.b16 %v2734, %v2730
        %v3075 = vpack.c.b16 %v2739, %v2735
        %v3076 = vpack.c.b16 %v2740, %v2736
        %v3077 = vpack.c.b16 %v2741, %v2737
        %v3078 = vpack.c.b16 %v2742, %v2738
        %v3079 = vpack.c.b16 %v2747, %v2743
        %v3080 = vpack.c.b16 %v2748, %v2744
        %v3081 = vpack.c.b16 %v2749, %v2745
        %v3082 = vpack.c.b16 %v2750, %v2746
        %v3083 = vpack.c.b16 %v2755, %v2751
        %v3084 = vpack.c.b16 %v2756, %v2752
        %v3085 = vpack.c.b16 %v2757, %v2753
        %v3086 = vpack.c.b16 %v2758, %v2754
        %v3087 = vpack.c.b16 %v2763, %v2759
        %v3088 = vpack.c.b16 %v2764, %v2760
        %v3089 = vpack.c.b16 %v2765, %v2761
        %v3090 = vpack.c.b16 %v2766, %v2762
        %v3091 = vpack.c.b16 %v2771, %v2767
        %v3092 = vpack.c.b16 %v2772, %v2768
        %v3093 = vpack.c.b16 %v2773, %v2769
        %v3094 = vpack.c.b16 %v2774, %v2770
        %v3095 = vpack.c.b16 %v2779, %v2775
        %v3096 = vpack.c.b16 %v2780, %v2776
        %v3097 = vpack.c.b16 %v2781, %v2777
        %v3098 = vpack.c.b16 %v2782, %v2778
        %v3099 = vpack.c.b16 %v2787, %v2783
        %v3100 = vpack.c.b16 %v2788, %v2784
        %v3101 = vpack.c.b16 %v2789, %v2785
        %v3102 = vpack.c.b16 %v2790, %v2786
        %v3103 = vpack.c.b16 %v2795, %v2791
        %v3104 = vpack.c.b16 %v2796, %v2792
        %v3105 = vpack.c.b16 %v2797, %v2793
        %v3106 = vpack.c.b16 %v2798, %v2794
        %v3107 = vpack.c.b16 %v2803, %v2799
        %v3108 = vpack.c.b16 %v2804, %v2800
        %v3109 = vpack.c.b16 %v2805, %v2801
        %v3110 = vpack.c.b16 %v2806, %v2802
        %v3111 = vpack.c.b16 %v2811, %v2807
        %v3112 = vpack.c.b16 %v2812, %v2808
        %v3113 = vpack.c.b16 %v2813, %v2809
        %v3114 = vpack.c.b16 %v2814, %v2810
        %v3115 = vpack.c.b16 %v2819, %v2815
        %v3116 = vpack.c.b16 %v2820, %v2816
        %v3117 = vpack.c.b16 %v2821, %v2817
        %v3118 = vpack.c.b16 %v2822, %v2818
        %v3119 = vpack.c.b16 %v2827, %v2823
        %v3120 = vpack.c.b16 %v2828, %v2824
        %v3121 = vpack.c.b16 %v2829, %v2825
        %v3122 = vpack.c.b16 %v2830, %v2826
        %v3123 = vpack.c.b16 %v2835, %v2831
        %v3124 = vpack.c.b16 %v2836, %v2832
        %v3125 = vpack.c.b16 %v2837, %v2833
        %v3126 = vpack.c.b16 %v2838, %v2834
        %v3127 = vpack.c.b16 %v2843, %v2839
        %v3128 = vpack.c.b16 %v2844, %v2840
        %v3129 = vpack.c.b16 %v2845, %v2841
        %v3130 = vpack.c.b16 %v2846, %v2842
        %v3131 = vpack.c.b16 %v2851, %v2847
        %v3132 = vpack.c.b16 %v2852, %v2848
        %v3133 = vpack.c.b16 %v2853, %v2849
        %v3134 = vpack.c.b16 %v2854, %v2850
        %v3135 = vpack.c.b16 %v2859, %v2855
        %v3136 = vpack.c.b16 %v2860, %v2856
        %v3137 = vpack.c.b16 %v2861, %v2857
        %v3138 = vpack.c.b16 %v2862, %v2858
        %v3139 = vpack.c.b16 %v2867, %v2863
        %v3140 = vpack.c.b16 %v2868, %v2864
        %v3141 = vpack.c.b16 %v2869, %v2865
        %v3142 = vpack.c.b16 %v2870, %v2866
        %v3143 = vpack.c.b16 %v2875, %v2871
        %v3144 = vpack.c.b16 %v2876, %v2872
        %v3145 = vpack.c.b16 %v2877, %v2873
        %v3146 = vpack.c.b16 %v2878, %v2874
        %v3147 = vpack.c.b16 %v2883, %v2879
        %v3148 = vpack.c.b16 %v2884, %v2880
        %v3149 = vpack.c.b16 %v2885, %v2881
        %v3150 = vpack.c.b16 %v2886, %v2882
        %v3151 = vpack.c.b16 %v2891, %v2887
        %v3152 = vpack.c.b16 %v2892, %v2888
        %v3153 = vpack.c.b16 %v2893, %v2889
        %v3154 = vpack.c.b16 %v2894, %v2890
        %v3155 = vpack.c.b16 %v2899, %v2895
        %v3156 = vpack.c.b16 %v2900, %v2896
        %v3157 = vpack.c.b16 %v2901, %v2897
        %v3158 = vpack.c.b16 %v2902, %v2898
        %3415 = vmatprep.subr.bf16.mxu0 %v2932
        %3416 = vmatpush1.bf16.msra.mxu0 %v2931
        %3417 = vmatprep.subr.bf16.mxu0 %v2928
        %3418 = vmatpush1.bf16.msra.mxu0 %v2927
        %3419 = vmatprep.subr.bf16.mxu0 %v2924
        %3420 = vmatpush1.bf16.msra.mxu0 %v2923
        %3421 = vmatprep.subr.bf16.mxu0 %v2920
        %3422 = vmatpush1.bf16.msra.mxu0 %v2919
        %3423 = vmatprep.subr.bf16.mxu0 %v2916
        %3424 = vmatpush1.bf16.msra.mxu0 %v2915
        %3425 = vmatprep.subr.bf16.mxu0 %v2912
        %3426 = vmatpush1.bf16.msra.mxu0 %v2911
        %3427 = vmatprep.subr.bf16.mxu0 %v2908
        %3428 = vmatpush1.bf16.msra.mxu0 %v2907
        %3429 = vmatprep.subr.bf16.mxu0 %v2904
        %3430 = vmatpush1.bf16.msra.mxu0 %v2903
        %3431 = vmatprep.subr.bf16.mxu0 %v2964
        %3432 = vmatpush2.bf16.msra.mxu0 %v2963
        %3433 = vmatprep.subr.bf16.mxu0 %v2960
        %3434 = vmatpush2.bf16.msra.mxu0 %v2959
        %3435 = vmatprep.subr.bf16.mxu0 %v2956
        %3436 = vmatpush2.bf16.msra.mxu0 %v2955
        %3437 = vmatprep.subr.bf16.mxu0 %v2952
        %3438 = vmatpush2.bf16.msra.mxu0 %v2951
        %3439 = vmatprep.subr.bf16.mxu0 %v2948
        %3440 = vmatpush2.bf16.msra.mxu0 %v2947
        %3441 = vmatprep.subr.bf16.mxu0 %v2944
        %3442 = vmatpush2.bf16.msra.mxu0 %v2943
        %3443 = vmatprep.subr.bf16.mxu0 %v2940
        %3444 = vmatpush2.bf16.msra.mxu0 %v2939
        %3445 = vmatprep.subr.bf16.mxu0 %v2936
        %3446 = vmatpush2.bf16.msra.mxu0 %v2935
        %3447 = vmatprep.mubr.bf16.mxu0 %v1850
        %3448 = vmatmul.mubr.bf16.gmra.mxu0 %v1849
        %v3449 = vpop.f32.mrf.mxu0
        %v3450 = vadd.f32 %v2118, %v3449
        %v3451 = vpop.f32.mrf.mxu0
        %v3452 = vadd.f32 %v2122, %v3451
        %v3453 = vpop.f32.mrf.mxu0
        %v3454 = vpop.f32.mrf.mxu0
        %3455 = vdwg.mxu0
        %3456 = vmatprep.subr.bf16.mxu0 %v2996
        %3457 = vmatpush1.bf16.msra.mxu0 %v2995
        %3458 = vmatprep.subr.bf16.mxu0 %v2992
        %3459 = vmatpush1.bf16.msra.mxu0 %v2991
        %3460 = vmatprep.subr.bf16.mxu0 %v2988
        %3461 = vmatpush1.bf16.msra.mxu0 %v2987
        %3462 = vmatprep.subr.bf16.mxu0 %v2984
        %3463 = vmatpush1.bf16.msra.mxu0 %v2983
        %3464 = vmatprep.subr.bf16.mxu0 %v2980
        %3465 = vmatpush1.bf16.msra.mxu0 %v2979
        %3466 = vmatprep.subr.bf16.mxu0 %v2976
        %3467 = vmatpush1.bf16.msra.mxu0 %v2975
        %3468 = vmatprep.subr.bf16.mxu0 %v2972
        %3469 = vmatpush1.bf16.msra.mxu0 %v2971
        %3470 = vmatprep.subr.bf16.mxu0 %v2968
        %3471 = vmatpush1.bf16.msra.mxu0 %v2967
        %3472 = vmatprep.subr.bf16.mxu0 %v3028
        %3473 = vmatpush2.bf16.msra.mxu0 %v3027
        %3474 = vmatprep.subr.bf16.mxu0 %v3024
        %3475 = vmatpush2.bf16.msra.mxu0 %v3023
        %3476 = vmatprep.subr.bf16.mxu0 %v3020
        %3477 = vmatpush2.bf16.msra.mxu0 %v3019
        %3478 = vmatprep.subr.bf16.mxu0 %v3016
        %3479 = vmatpush2.bf16.msra.mxu0 %v3015
        %3480 = vmatprep.subr.bf16.mxu0 %v3012
        %3481 = vmatpush2.bf16.msra.mxu0 %v3011
        %3482 = vmatprep.subr.bf16.mxu0 %v3008
        %3483 = vmatpush2.bf16.msra.mxu0 %v3007
        %3484 = vmatprep.subr.bf16.mxu0 %v3004
        %3485 = vmatpush2.bf16.msra.mxu0 %v3003
        %3486 = vmatprep.subr.bf16.mxu0 %v3000
        %3487 = vmatpush2.bf16.msra.mxu0 %v2999
        %3488 = vmatprep.mubr.bf16.mxu0 %v1852
        %3489 = vmatmul.mubr.bf16.gmra.mxu0 %v1851
        %v3490 = vpop.f32.mrf.mxu0
        %v3491 = vadd.f32 %v3450, %v3490
        %v3492 = vpop.f32.mrf.mxu0
        %v3493 = vadd.f32 %v3452, %v3492
        %v3494 = vpop.f32.mrf.mxu0
        %v3495 = vpop.f32.mrf.mxu0
        %3496 = vdwg.mxu0
        %3497 = vmatprep.subr.bf16.mxu0 %v3060
        %3498 = vmatpush1.bf16.msra.mxu0 %v3059
        %3499 = vmatprep.subr.bf16.mxu0 %v3056
        %3500 = vmatpush1.bf16.msra.mxu0 %v3055
        %3501 = vmatprep.subr.bf16.mxu0 %v3052
        %3502 = vmatpush1.bf16.msra.mxu0 %v3051
        %3503 = vmatprep.subr.bf16.mxu0 %v3048
        %3504 = vmatpush1.bf16.msra.mxu0 %v3047
        %3505 = vmatprep.subr.bf16.mxu0 %v3044
        %3506 = vmatpush1.bf16.msra.mxu0 %v3043
        %3507 = vmatprep.subr.bf16.mxu0 %v3040
        %3508 = vmatpush1.bf16.msra.mxu0 %v3039
        %3509 = vmatprep.subr.bf16.mxu0 %v3036
        %3510 = vmatpush1.bf16.msra.mxu0 %v3035
        %3511 = vmatprep.subr.bf16.mxu0 %v3032
        %3512 = vmatpush1.bf16.msra.mxu0 %v3031
        %3513 = vmatprep.subr.bf16.mxu0 %v3092
        %3514 = vmatpush2.bf16.msra.mxu0 %v3091
        %3515 = vmatprep.subr.bf16.mxu0 %v3088
        %3516 = vmatpush2.bf16.msra.mxu0 %v3087
        %3517 = vmatprep.subr.bf16.mxu0 %v3084
        %3518 = vmatpush2.bf16.msra.mxu0 %v3083
        %3519 = vmatprep.subr.bf16.mxu0 %v3080
        %3520 = vmatpush2.bf16.msra.mxu0 %v3079
        %3521 = vmatprep.subr.bf16.mxu0 %v3076
        %3522 = vmatpush2.bf16.msra.mxu0 %v3075
        %3523 = vmatprep.subr.bf16.mxu0 %v3072
        %3524 = vmatpush2.bf16.msra.mxu0 %v3071
        %3525 = vmatprep.subr.bf16.mxu0 %v3068
        %3526 = vmatpush2.bf16.msra.mxu0 %v3067
        %3527 = vmatprep.subr.bf16.mxu0 %v3064
        %3528 = vmatpush2.bf16.msra.mxu0 %v3063
        %3529 = vmatprep.mubr.bf16.mxu0 %v1854
        %3530 = vmatmul.mubr.bf16.gmra.mxu0 %v1853
        %v3531 = vpop.f32.mrf.mxu0
        %v3532 = vadd.f32 %v3491, %v3531
        %v3533 = vpop.f32.mrf.mxu0
        %v3534 = vadd.f32 %v3493, %v3533
        %v3535 = vpop.f32.mrf.mxu0
        %v3536 = vpop.f32.mrf.mxu0
        %3537 = vdwg.mxu0
        %3538 = vmatprep.subr.bf16.mxu0 %v3124
        %3539 = vmatpush1.bf16.msra.mxu0 %v3123
        %3540 = vmatprep.subr.bf16.mxu0 %v3120
        %3541 = vmatpush1.bf16.msra.mxu0 %v3119
        %3542 = vmatprep.subr.bf16.mxu0 %v3116
        %3543 = vmatpush1.bf16.msra.mxu0 %v3115
        %3544 = vmatprep.subr.bf16.mxu0 %v3112
        %3545 = vmatpush1.bf16.msra.mxu0 %v3111
        %3546 = vmatprep.subr.bf16.mxu0 %v3108
        %3547 = vmatpush1.bf16.msra.mxu0 %v3107
        %3548 = vmatprep.subr.bf16.mxu0 %v3104
        %3549 = vmatpush1.bf16.msra.mxu0 %v3103
        %3550 = vmatprep.subr.bf16.mxu0 %v3100
        %3551 = vmatpush1.bf16.msra.mxu0 %v3099
        %3552 = vmatprep.subr.bf16.mxu0 %v3096
        %3553 = vmatpush1.bf16.msra.mxu0 %v3095
        %3554 = vmatprep.subr.bf16.mxu0 %v3156
        %3555 = vmatpush2.bf16.msra.mxu0 %v3155
        %3556 = vmatprep.subr.bf16.mxu0 %v3152
        %3557 = vmatpush2.bf16.msra.mxu0 %v3151
        %3558 = vmatprep.subr.bf16.mxu0 %v3148
        %3559 = vmatpush2.bf16.msra.mxu0 %v3147
        %3560 = vmatprep.subr.bf16.mxu0 %v3144
        %3561 = vmatpush2.bf16.msra.mxu0 %v3143
        %3562 = vmatprep.subr.bf16.mxu0 %v3140
        %3563 = vmatpush2.bf16.msra.mxu0 %v3139
        %3564 = vmatprep.subr.bf16.mxu0 %v3136
        %3565 = vmatpush2.bf16.msra.mxu0 %v3135
        %3566 = vmatprep.subr.bf16.mxu0 %v3132
        %3567 = vmatpush2.bf16.msra.mxu0 %v3131
        %3568 = vmatprep.subr.bf16.mxu0 %v3128
        %3569 = vmatpush2.bf16.msra.mxu0 %v3127
        %3570 = vmatprep.mubr.bf16.mxu0 %v1856
        %3571 = vmatmul.mubr.bf16.gmra.mxu0 %v1855
        %v3572 = vpop.f32.mrf.mxu0
        %v3573 = vadd.f32 %v3532, %v3572
        %v3574 = vpop.f32.mrf.mxu0
        %v3575 = vadd.f32 %v3534, %v3574
        %v3576 = vpop.f32.mrf.mxu0
        %v3577 = vpop.f32.mrf.mxu0
        %3578 = vdwg.mxu0
        %3579 = vmatprep.subr.bf16.mxu0 %v2934
        %3580 = vmatpush1.bf16.msra.mxu0 %v2933
        %3581 = vmatprep.subr.bf16.mxu0 %v2930
        %3582 = vmatpush1.bf16.msra.mxu0 %v2929
        %3583 = vmatprep.subr.bf16.mxu0 %v2926
        %3584 = vmatpush1.bf16.msra.mxu0 %v2925
        %3585 = vmatprep.subr.bf16.mxu0 %v2922
        %3586 = vmatpush1.bf16.msra.mxu0 %v2921
        %3587 = vmatprep.subr.bf16.mxu0 %v2918
        %3588 = vmatpush1.bf16.msra.mxu0 %v2917
        %3589 = vmatprep.subr.bf16.mxu0 %v2914
        %3590 = vmatpush1.bf16.msra.mxu0 %v2913
        %3591 = vmatprep.subr.bf16.mxu0 %v2910
        %3592 = vmatpush1.bf16.msra.mxu0 %v2909
        %3593 = vmatprep.subr.bf16.mxu0 %v2906
        %3594 = vmatpush1.bf16.msra.mxu0 %v2905
        %3595 = vmatprep.subr.bf16.mxu0 %v2966
        %3596 = vmatpush2.bf16.msra.mxu0 %v2965
        %3597 = vmatprep.subr.bf16.mxu0 %v2962
        %3598 = vmatpush2.bf16.msra.mxu0 %v2961
        %3599 = vmatprep.subr.bf16.mxu0 %v2958
        %3600 = vmatpush2.bf16.msra.mxu0 %v2957
        %3601 = vmatprep.subr.bf16.mxu0 %v2954
        %3602 = vmatpush2.bf16.msra.mxu0 %v2953
        %3603 = vmatprep.subr.bf16.mxu0 %v2950
        %3604 = vmatpush2.bf16.msra.mxu0 %v2949
        %3605 = vmatprep.subr.bf16.mxu0 %v2946
        %3606 = vmatpush2.bf16.msra.mxu0 %v2945
        %3607 = vmatprep.subr.bf16.mxu0 %v2942
        %3608 = vmatpush2.bf16.msra.mxu0 %v2941
        %3609 = vmatprep.subr.bf16.mxu0 %v2938
        %3610 = vmatpush2.bf16.msra.mxu0 %v2937
        %3611 = vmatprep.mubr.bf16.mxu0 %v1850
        %3612 = vmatmul.mubr.bf16.gmra.mxu0 %v1849
        %v3613 = vpop.f32.mrf.mxu0
        %v3614 = vadd.f32 %v2126, %v3613
        %v3615 = vpop.f32.mrf.mxu0
        %v3616 = vadd.f32 %v2130, %v3615
        %v3617 = vpop.f32.mrf.mxu0
        %v3618 = vpop.f32.mrf.mxu0
        %3619 = vdwg.mxu0
        %3620 = vmatprep.subr.bf16.mxu0 %v2998
        %3621 = vmatpush1.bf16.msra.mxu0 %v2997
        %3622 = vmatprep.subr.bf16.mxu0 %v2994
        %3623 = vmatpush1.bf16.msra.mxu0 %v2993
        %3624 = vmatprep.subr.bf16.mxu0 %v2990
        %3625 = vmatpush1.bf16.msra.mxu0 %v2989
        %3626 = vmatprep.subr.bf16.mxu0 %v2986
        %3627 = vmatpush1.bf16.msra.mxu0 %v2985
        %3628 = vmatprep.subr.bf16.mxu0 %v2982
        %3629 = vmatpush1.bf16.msra.mxu0 %v2981
        %3630 = vmatprep.subr.bf16.mxu0 %v2978
        %3631 = vmatpush1.bf16.msra.mxu0 %v2977
        %3632 = vmatprep.subr.bf16.mxu0 %v2974
        %3633 = vmatpush1.bf16.msra.mxu0 %v2973
        %3634 = vmatprep.subr.bf16.mxu0 %v2970
        %3635 = vmatpush1.bf16.msra.mxu0 %v2969
        %3636 = vmatprep.subr.bf16.mxu0 %v3030
        %3637 = vmatpush2.bf16.msra.mxu0 %v3029
        %3638 = vmatprep.subr.bf16.mxu0 %v3026
        %3639 = vmatpush2.bf16.msra.mxu0 %v3025
        %3640 = vmatprep.subr.bf16.mxu0 %v3022
        %3641 = vmatpush2.bf16.msra.mxu0 %v3021
        %3642 = vmatprep.subr.bf16.mxu0 %v3018
        %3643 = vmatpush2.bf16.msra.mxu0 %v3017
        %3644 = vmatprep.subr.bf16.mxu0 %v3014
        %3645 = vmatpush2.bf16.msra.mxu0 %v3013
        %3646 = vmatprep.subr.bf16.mxu0 %v3010
        %3647 = vmatpush2.bf16.msra.mxu0 %v3009
        %3648 = vmatprep.subr.bf16.mxu0 %v3006
        %3649 = vmatpush2.bf16.msra.mxu0 %v3005
        %3650 = vmatprep.subr.bf16.mxu0 %v3002
        %3651 = vmatpush2.bf16.msra.mxu0 %v3001
        %3652 = vmatprep.mubr.bf16.mxu0 %v1852
        %3653 = vmatmul.mubr.bf16.gmra.mxu0 %v1851
        %v3654 = vpop.f32.mrf.mxu0
        %v3655 = vadd.f32 %v3614, %v3654
        %v3656 = vpop.f32.mrf.mxu0
        %v3657 = vadd.f32 %v3616, %v3656
        %v3658 = vpop.f32.mrf.mxu0
        %v3659 = vpop.f32.mrf.mxu0
        %3660 = vdwg.mxu0
        %3661 = vmatprep.subr.bf16.mxu0 %v3062
        %3662 = vmatpush1.bf16.msra.mxu0 %v3061
        %3663 = vmatprep.subr.bf16.mxu0 %v3058
        %3664 = vmatpush1.bf16.msra.mxu0 %v3057
        %3665 = vmatprep.subr.bf16.mxu0 %v3054
        %3666 = vmatpush1.bf16.msra.mxu0 %v3053
        %3667 = vmatprep.subr.bf16.mxu0 %v3050
        %3668 = vmatpush1.bf16.msra.mxu0 %v3049
        %3669 = vmatprep.subr.bf16.mxu0 %v3046
        %3670 = vmatpush1.bf16.msra.mxu0 %v3045
        %3671 = vmatprep.subr.bf16.mxu0 %v3042
        %3672 = vmatpush1.bf16.msra.mxu0 %v3041
        %3673 = vmatprep.subr.bf16.mxu0 %v3038
        %3674 = vmatpush1.bf16.msra.mxu0 %v3037
        %3675 = vmatprep.subr.bf16.mxu0 %v3034
        %3676 = vmatpush1.bf16.msra.mxu0 %v3033
        %3677 = vmatprep.subr.bf16.mxu0 %v3094
        %3678 = vmatpush2.bf16.msra.mxu0 %v3093
        %3679 = vmatprep.subr.bf16.mxu0 %v3090
        %3680 = vmatpush2.bf16.msra.mxu0 %v3089
        %3681 = vmatprep.subr.bf16.mxu0 %v3086
        %3682 = vmatpush2.bf16.msra.mxu0 %v3085
        %3683 = vmatprep.subr.bf16.mxu0 %v3082
        %3684 = vmatpush2.bf16.msra.mxu0 %v3081
        %3685 = vmatprep.subr.bf16.mxu0 %v3078
        %3686 = vmatpush2.bf16.msra.mxu0 %v3077
        %3687 = vmatprep.subr.bf16.mxu0 %v3074
        %3688 = vmatpush2.bf16.msra.mxu0 %v3073
        %3689 = vmatprep.subr.bf16.mxu0 %v3070
        %3690 = vmatpush2.bf16.msra.mxu0 %v3069
        %3691 = vmatprep.subr.bf16.mxu0 %v3066
        %3692 = vmatpush2.bf16.msra.mxu0 %v3065
        %3693 = vmatprep.mubr.bf16.mxu0 %v1854
        %3694 = vmatmul.mubr.bf16.gmra.mxu0 %v1853
        %v3695 = vpop.f32.mrf.mxu0
        %v3696 = vadd.f32 %v3655, %v3695
        %v3697 = vpop.f32.mrf.mxu0
        %v3698 = vadd.f32 %v3657, %v3697
        %v3699 = vpop.f32.mrf.mxu0
        %v3700 = vpop.f32.mrf.mxu0
        %3701 = vdwg.mxu0
        %3702 = vmatprep.subr.bf16.mxu0 %v3126
        %3703 = vmatpush1.bf16.msra.mxu0 %v3125
        %3704 = vmatprep.subr.bf16.mxu0 %v3122
        %3705 = vmatpush1.bf16.msra.mxu0 %v3121
        %3706 = vmatprep.subr.bf16.mxu0 %v3118
        %3707 = vmatpush1.bf16.msra.mxu0 %v3117
        %3708 = vmatprep.subr.bf16.mxu0 %v3114
        %3709 = vmatpush1.bf16.msra.mxu0 %v3113
        %3710 = vmatprep.subr.bf16.mxu0 %v3110
        %3711 = vmatpush1.bf16.msra.mxu0 %v3109
        %3712 = vmatprep.subr.bf16.mxu0 %v3106
        %3713 = vmatpush1.bf16.msra.mxu0 %v3105
        %3714 = vmatprep.subr.bf16.mxu0 %v3102
        %3715 = vmatpush1.bf16.msra.mxu0 %v3101
        %3716 = vmatprep.subr.bf16.mxu0 %v3098
        %3717 = vmatpush1.bf16.msra.mxu0 %v3097
        %3718 = vmatprep.subr.bf16.mxu0 %v3158
        %3719 = vmatpush2.bf16.msra.mxu0 %v3157
        %3720 = vmatprep.subr.bf16.mxu0 %v3154
        %3721 = vmatpush2.bf16.msra.mxu0 %v3153
        %3722 = vmatprep.subr.bf16.mxu0 %v3150
        %3723 = vmatpush2.bf16.msra.mxu0 %v3149
        %3724 = vmatprep.subr.bf16.mxu0 %v3146
        %3725 = vmatpush2.bf16.msra.mxu0 %v3145
        %3726 = vmatprep.subr.bf16.mxu0 %v3142
        %3727 = vmatpush2.bf16.msra.mxu0 %v3141
        %3728 = vmatprep.subr.bf16.mxu0 %v3138
        %3729 = vmatpush2.bf16.msra.mxu0 %v3137
        %3730 = vmatprep.subr.bf16.mxu0 %v3134
        %3731 = vmatpush2.bf16.msra.mxu0 %v3133
        %3732 = vmatprep.subr.bf16.mxu0 %v3130
        %3733 = vmatpush2.bf16.msra.mxu0 %v3129
        %3734 = vmatprep.mubr.bf16.mxu0 %v1856
        %3735 = vmatmul.mubr.bf16.gmra.mxu0 %v1855
        %v3736 = vpop.f32.mrf.mxu0
        %v3737 = vadd.f32 %v3696, %v3736
        %v3738 = vpop.f32.mrf.mxu0
        %v3739 = vadd.f32 %v3698, %v3738
        %v3740 = vpop.f32.mrf.mxu0
        %v3741 = vpop.f32.mrf.mxu0
        %3742 = vdwg.mxu0
        %v3743 = vmax.f32 %v3573, 0.0
        %v3744 = vmax.f32 %v3575, 0.0
        %v3745 = vmax.f32 %v3737, 0.0
        %v3746 = vmax.f32 %v3739, 0.0
        %v3747 = vpack.c.bf16 %v3743, %v3743
        %v3748 = vpack.c.bf16 %v3744, %v3744
        %v3749 = vpack.c.bf16 %v3745, %v3745
        %v3750 = vpack.c.bf16 %v3746, %v3746
        %v3751 = vld [vmem:[#allocation12] sm:$0xff]
        %v3752 = vld [vmem:[#allocation12 + $0x8] sm:$0xff]
        %v3753 = vld [vmem:[#allocation12 + $0x10] sm:$0xff]
        %v3754 = vld [vmem:[#allocation12 + $0x18] sm:$0xff]
        %v3755 = vld [vmem:[#allocation12 + $0x20] sm:$0xff]
        %v3756 = vld [vmem:[#allocation12 + $0x28] sm:$0xff]
        %v3757 = vld [vmem:[#allocation12 + $0x30] sm:$0xff]
        %v3758 = vld [vmem:[#allocation12 + $0x38] sm:$0xff]
        %v3759 = vld [vmem:[#allocation12 + $0x40] sm:$0xff]
        %v3760 = vld [vmem:[#allocation12 + $0x48] sm:$0xff]
        %v3761 = vld [vmem:[#allocation12 + $0x50] sm:$0xff]
        %v3762 = vld [vmem:[#allocation12 + $0x58] sm:$0xff]
        %v3763 = vld [vmem:[#allocation12 + $0x60] sm:$0xff]
        %v3764 = vld [vmem:[#allocation12 + $0x68] sm:$0xff]
        %v3765 = vld [vmem:[#allocation12 + $0x70] sm:$0xff]
        %v3766 = vld [vmem:[#allocation12 + $0x78] sm:$0xff]
        %v3767 = vld [vmem:[#allocation12 + $0x80] sm:$0xff]
        %v3768 = vld [vmem:[#allocation12 + $0x88] sm:$0xff]
        %v3769 = vld [vmem:[#allocation12 + $0x90] sm:$0xff]
        %v3770 = vld [vmem:[#allocation12 + $0x98] sm:$0xff]
        %v3771 = vld [vmem:[#allocation12 + $0xa0] sm:$0xff]
        %v3772 = vld [vmem:[#allocation12 + $0xa8] sm:$0xff]
        %v3773 = vld [vmem:[#allocation12 + $0xb0] sm:$0xff]
        %v3774 = vld [vmem:[#allocation12 + $0xb8] sm:$0xff]
        %v3775 = vld [vmem:[#allocation12 + $0xc0] sm:$0xff]
        %v3776 = vld [vmem:[#allocation12 + $0xc8] sm:$0xff]
        %v3777 = vld [vmem:[#allocation12 + $0xd0] sm:$0xff]
        %v3778 = vld [vmem:[#allocation12 + $0xd8] sm:$0xff]
        %v3779 = vld [vmem:[#allocation12 + $0xe0] sm:$0xff]
        %v3780 = vld [vmem:[#allocation12 + $0xe8] sm:$0xff]
        %v3781 = vld [vmem:[#allocation12 + $0xf0] sm:$0xff]
        %v3782 = vld [vmem:[#allocation12 + $0xf8] sm:$0xff]
        %v3783 = vld [vmem:[#allocation12 + $0x100] sm:$0xff]
        %v3784 = vld [vmem:[#allocation12 + $0x108] sm:$0xff]
        %v3785 = vld [vmem:[#allocation12 + $0x110] sm:$0xff]
        %v3786 = vld [vmem:[#allocation12 + $0x118] sm:$0xff]
        %v3787 = vld [vmem:[#allocation12 + $0x120] sm:$0xff]
        %v3788 = vld [vmem:[#allocation12 + $0x128] sm:$0xff]
        %v3789 = vld [vmem:[#allocation12 + $0x130] sm:$0xff]
        %v3790 = vld [vmem:[#allocation12 + $0x138] sm:$0xff]
        %v3791 = vld [vmem:[#allocation12 + $0x140] sm:$0xff]
        %v3792 = vld [vmem:[#allocation12 + $0x148] sm:$0xff]
        %v3793 = vld [vmem:[#allocation12 + $0x150] sm:$0xff]
        %v3794 = vld [vmem:[#allocation12 + $0x158] sm:$0xff]
        %v3795 = vld [vmem:[#allocation12 + $0x160] sm:$0xff]
        %v3796 = vld [vmem:[#allocation12 + $0x168] sm:$0xff]
        %v3797 = vld [vmem:[#allocation12 + $0x170] sm:$0xff]
        %v3798 = vld [vmem:[#allocation12 + $0x178] sm:$0xff]
        %v3799 = vld [vmem:[#allocation12 + $0x180] sm:$0xff]
        %v3800 = vld [vmem:[#allocation12 + $0x188] sm:$0xff]
        %v3801 = vld [vmem:[#allocation12 + $0x190] sm:$0xff]
        %v3802 = vld [vmem:[#allocation12 + $0x198] sm:$0xff]
        %v3803 = vld [vmem:[#allocation12 + $0x1a0] sm:$0xff]
        %v3804 = vld [vmem:[#allocation12 + $0x1a8] sm:$0xff]
        %v3805 = vld [vmem:[#allocation12 + $0x1b0] sm:$0xff]
        %v3806 = vld [vmem:[#allocation12 + $0x1b8] sm:$0xff]
        %v3807 = vld [vmem:[#allocation12 + $0x1c0] sm:$0xff]
        %v3808 = vld [vmem:[#allocation12 + $0x1c8] sm:$0xff]
        %v3809 = vld [vmem:[#allocation12 + $0x1d0] sm:$0xff]
        %v3810 = vld [vmem:[#allocation12 + $0x1d8] sm:$0xff]
        %v3811 = vld [vmem:[#allocation12 + $0x1e0] sm:$0xff]
        %v3812 = vld [vmem:[#allocation12 + $0x1e8] sm:$0xff]
        %v3813 = vld [vmem:[#allocation12 + $0x1f0] sm:$0xff]
        %v3814 = vld [vmem:[#allocation12 + $0x1f8] sm:$0xff]
        %v3815 = vld [vmem:[#allocation14] sm:$0x3]
        %v3817 = vlaneseq
        %v3818 = vshrl.u32 %v3817, 7
        %v3819 = vsub.s32 0, %v3818
        %v3820 = vrot.slane %v3815, %v3819
        %v3821 = vlaneseq
        %v3822 = vshrl.u32 %v3821, 7
        %v3823 = vsub.s32 1, %v3822
        %v3824 = vrot.slane %v3815, %v3823
        %v3891 = vunpack.c.l.b16 %v3751
        %v3892 = vunpack.c.h.b16 %v3751
        %v3893 = vunpack.c.l.b16 %v3752
        %v3894 = vunpack.c.h.b16 %v3752
        %v3895 = vunpack.c.l.b16 %v3753
        %v3896 = vunpack.c.h.b16 %v3753
        %v3897 = vunpack.c.l.b16 %v3754
        %v3898 = vunpack.c.h.b16 %v3754
        %v3899 = vunpack.c.l.b16 %v3755
        %v3900 = vunpack.c.h.b16 %v3755
        %v3901 = vunpack.c.l.b16 %v3756
        %v3902 = vunpack.c.h.b16 %v3756
        %v3903 = vunpack.c.l.b16 %v3757
        %v3904 = vunpack.c.h.b16 %v3757
        %v3905 = vunpack.c.l.b16 %v3758
        %v3906 = vunpack.c.h.b16 %v3758
        %v3907 = vunpack.c.l.b16 %v3759
        %v3908 = vunpack.c.h.b16 %v3759
        %v3909 = vunpack.c.l.b16 %v3760
        %v3910 = vunpack.c.h.b16 %v3760
        %v3911 = vunpack.c.l.b16 %v3761
        %v3912 = vunpack.c.h.b16 %v3761
        %v3913 = vunpack.c.l.b16 %v3762
        %v3914 = vunpack.c.h.b16 %v3762
        %v3915 = vunpack.c.l.b16 %v3763
        %v3916 = vunpack.c.h.b16 %v3763
        %v3917 = vunpack.c.l.b16 %v3764
        %v3918 = vunpack.c.h.b16 %v3764
        %v3919 = vunpack.c.l.b16 %v3765
        %v3920 = vunpack.c.h.b16 %v3765
        %v3921 = vunpack.c.l.b16 %v3766
        %v3922 = vunpack.c.h.b16 %v3766
        %v3923 = vunpack.c.l.b16 %v3767
        %v3924 = vunpack.c.h.b16 %v3767
        %v3925 = vunpack.c.l.b16 %v3768
        %v3926 = vunpack.c.h.b16 %v3768
        %v3927 = vunpack.c.l.b16 %v3769
        %v3928 = vunpack.c.h.b16 %v3769
        %v3929 = vunpack.c.l.b16 %v3770
        %v3930 = vunpack.c.h.b16 %v3770
        %v3931 = vunpack.c.l.b16 %v3771
        %v3932 = vunpack.c.h.b16 %v3771
        %v3933 = vunpack.c.l.b16 %v3772
        %v3934 = vunpack.c.h.b16 %v3772
        %v3935 = vunpack.c.l.b16 %v3773
        %v3936 = vunpack.c.h.b16 %v3773
        %v3937 = vunpack.c.l.b16 %v3774
        %v3938 = vunpack.c.h.b16 %v3774
        %v3939 = vunpack.c.l.b16 %v3775
        %v3940 = vunpack.c.h.b16 %v3775
        %v3941 = vunpack.c.l.b16 %v3776
        %v3942 = vunpack.c.h.b16 %v3776
        %v3943 = vunpack.c.l.b16 %v3777
        %v3944 = vunpack.c.h.b16 %v3777
        %v3945 = vunpack.c.l.b16 %v3778
        %v3946 = vunpack.c.h.b16 %v3778
        %v3947 = vunpack.c.l.b16 %v3779
        %v3948 = vunpack.c.h.b16 %v3779
        %v3949 = vunpack.c.l.b16 %v3780
        %v3950 = vunpack.c.h.b16 %v3780
        %v3951 = vunpack.c.l.b16 %v3781
        %v3952 = vunpack.c.h.b16 %v3781
        %v3953 = vunpack.c.l.b16 %v3782
        %v3954 = vunpack.c.h.b16 %v3782
        %v3955 = vunpack.c.l.b16 %v3783
        %v3956 = vunpack.c.h.b16 %v3783
        %v3957 = vunpack.c.l.b16 %v3784
        %v3958 = vunpack.c.h.b16 %v3784
        %v3959 = vunpack.c.l.b16 %v3785
        %v3960 = vunpack.c.h.b16 %v3785
        %v3961 = vunpack.c.l.b16 %v3786
        %v3962 = vunpack.c.h.b16 %v3786
        %v3963 = vunpack.c.l.b16 %v3787
        %v3964 = vunpack.c.h.b16 %v3787
        %v3965 = vunpack.c.l.b16 %v3788
        %v3966 = vunpack.c.h.b16 %v3788
        %v3967 = vunpack.c.l.b16 %v3789
        %v3968 = vunpack.c.h.b16 %v3789
        %v3969 = vunpack.c.l.b16 %v3790
        %v3970 = vunpack.c.h.b16 %v3790
        %v3971 = vunpack.c.l.b16 %v3791
        %v3972 = vunpack.c.h.b16 %v3791
        %v3973 = vunpack.c.l.b16 %v3792
        %v3974 = vunpack.c.h.b16 %v3792
        %v3975 = vunpack.c.l.b16 %v3793
        %v3976 = vunpack.c.h.b16 %v3793
        %v3977 = vunpack.c.l.b16 %v3794
        %v3978 = vunpack.c.h.b16 %v3794
        %v3979 = vunpack.c.l.b16 %v3795
        %v3980 = vunpack.c.h.b16 %v3795
        %v3981 = vunpack.c.l.b16 %v3796
        %v3982 = vunpack.c.h.b16 %v3796
        %v3983 = vunpack.c.l.b16 %v3797
        %v3984 = vunpack.c.h.b16 %v3797
        %v3985 = vunpack.c.l.b16 %v3798
        %v3986 = vunpack.c.h.b16 %v3798
        %v3987 = vunpack.c.l.b16 %v3799
        %v3988 = vunpack.c.h.b16 %v3799
        %v3989 = vunpack.c.l.b16 %v3800
        %v3990 = vunpack.c.h.b16 %v3800
        %v3991 = vunpack.c.l.b16 %v3801
        %v3992 = vunpack.c.h.b16 %v3801
        %v3993 = vunpack.c.l.b16 %v3802
        %v3994 = vunpack.c.h.b16 %v3802
        %v3995 = vunpack.c.l.b16 %v3803
        %v3996 = vunpack.c.h.b16 %v3803
        %v3997 = vunpack.c.l.b16 %v3804
        %v3998 = vunpack.c.h.b16 %v3804
        %v3999 = vunpack.c.l.b16 %v3805
        %v4000 = vunpack.c.h.b16 %v3805
        %v4001 = vunpack.c.l.b16 %v3806
        %v4002 = vunpack.c.h.b16 %v3806
        %v4003 = vunpack.c.l.b16 %v3807
        %v4004 = vunpack.c.h.b16 %v3807
        %v4005 = vunpack.c.l.b16 %v3808
        %v4006 = vunpack.c.h.b16 %v3808
        %v4007 = vunpack.c.l.b16 %v3809
        %v4008 = vunpack.c.h.b16 %v3809
        %v4009 = vunpack.c.l.b16 %v3810
        %v4010 = vunpack.c.h.b16 %v3810
        %v4011 = vunpack.c.l.b16 %v3811
        %v4012 = vunpack.c.h.b16 %v3811
        %v4013 = vunpack.c.l.b16 %v3812
        %v4014 = vunpack.c.h.b16 %v3812
        %v4015 = vunpack.c.l.b16 %v3813
        %v4016 = vunpack.c.h.b16 %v3813
        %v4017 = vunpack.c.l.b16 %v3814
        %v4018 = vunpack.c.h.b16 %v3814
        %v4019 = vpack.c.b16 %v3893, %v3891
        %v4020 = vpack.c.b16 %v3894, %v3892
        %v4021 = vpack.c.b16 %v3897, %v3895
        %v4022 = vpack.c.b16 %v3898, %v3896
        %v4023 = vpack.c.b16 %v3901, %v3899
        %v4024 = vpack.c.b16 %v3902, %v3900
        %v4025 = vpack.c.b16 %v3905, %v3903
        %v4026 = vpack.c.b16 %v3906, %v3904
        %v4027 = vpack.c.b16 %v3909, %v3907
        %v4028 = vpack.c.b16 %v3910, %v3908
        %v4029 = vpack.c.b16 %v3913, %v3911
        %v4030 = vpack.c.b16 %v3914, %v3912
        %v4031 = vpack.c.b16 %v3917, %v3915
        %v4032 = vpack.c.b16 %v3918, %v3916
        %v4033 = vpack.c.b16 %v3921, %v3919
        %v4034 = vpack.c.b16 %v3922, %v3920
        %v4035 = vpack.c.b16 %v3925, %v3923
        %v4036 = vpack.c.b16 %v3926, %v3924
        %v4037 = vpack.c.b16 %v3929, %v3927
        %v4038 = vpack.c.b16 %v3930, %v3928
        %v4039 = vpack.c.b16 %v3933, %v3931
        %v4040 = vpack.c.b16 %v3934, %v3932
        %v4041 = vpack.c.b16 %v3937, %v3935
        %v4042 = vpack.c.b16 %v3938, %v3936
        %v4043 = vpack.c.b16 %v3941, %v3939
        %v4044 = vpack.c.b16 %v3942, %v3940
        %v4045 = vpack.c.b16 %v3945, %v3943
        %v4046 = vpack.c.b16 %v3946, %v3944
        %v4047 = vpack.c.b16 %v3949, %v3947
        %v4048 = vpack.c.b16 %v3950, %v3948
        %v4049 = vpack.c.b16 %v3953, %v3951
        %v4050 = vpack.c.b16 %v3954, %v3952
        %v4051 = vpack.c.b16 %v3957, %v3955
        %v4052 = vpack.c.b16 %v3958, %v3956
        %v4053 = vpack.c.b16 %v3961, %v3959
        %v4054 = vpack.c.b16 %v3962, %v3960
        %v4055 = vpack.c.b16 %v3965, %v3963
        %v4056 = vpack.c.b16 %v3966, %v3964
        %v4057 = vpack.c.b16 %v3969, %v3967
        %v4058 = vpack.c.b16 %v3970, %v3968
        %v4059 = vpack.c.b16 %v3973, %v3971
        %v4060 = vpack.c.b16 %v3974, %v3972
        %v4061 = vpack.c.b16 %v3977, %v3975
        %v4062 = vpack.c.b16 %v3978, %v3976
        %v4063 = vpack.c.b16 %v3981, %v3979
        %v4064 = vpack.c.b16 %v3982, %v3980
        %v4065 = vpack.c.b16 %v3985, %v3983
        %v4066 = vpack.c.b16 %v3986, %v3984
        %v4067 = vpack.c.b16 %v3989, %v3987
        %v4068 = vpack.c.b16 %v3990, %v3988
        %v4069 = vpack.c.b16 %v3993, %v3991
        %v4070 = vpack.c.b16 %v3994, %v3992
        %v4071 = vpack.c.b16 %v3997, %v3995
        %v4072 = vpack.c.b16 %v3998, %v3996
        %v4073 = vpack.c.b16 %v4001, %v3999
        %v4074 = vpack.c.b16 %v4002, %v4000
        %v4075 = vpack.c.b16 %v4005, %v4003
        %v4076 = vpack.c.b16 %v4006, %v4004
        %v4077 = vpack.c.b16 %v4009, %v4007
        %v4078 = vpack.c.b16 %v4010, %v4008
        %v4079 = vpack.c.b16 %v4013, %v4011
        %v4080 = vpack.c.b16 %v4014, %v4012
        %v4081 = vpack.c.b16 %v4017, %v4015
        %v4082 = vpack.c.b16 %v4018, %v4016
        %4147 = vmatprep.subr.bf16.mxu0 %v4034
        %4148 = vmatpush1.bf16.msra.mxu0 %v4033
        %4149 = vmatprep.subr.bf16.mxu0 %v4032
        %4150 = vmatpush1.bf16.msra.mxu0 %v4031
        %4151 = vmatprep.subr.bf16.mxu0 %v4030
        %4152 = vmatpush1.bf16.msra.mxu0 %v4029
        %4153 = vmatprep.subr.bf16.mxu0 %v4028
        %4154 = vmatpush1.bf16.msra.mxu0 %v4027
        %4155 = vmatprep.subr.bf16.mxu0 %v4026
        %4156 = vmatpush1.bf16.msra.mxu0 %v4025
        %4157 = vmatprep.subr.bf16.mxu0 %v4024
        %4158 = vmatpush1.bf16.msra.mxu0 %v4023
        %4159 = vmatprep.subr.bf16.mxu0 %v4022
        %4160 = vmatpush1.bf16.msra.mxu0 %v4021
        %4161 = vmatprep.subr.bf16.mxu0 %v4020
        %4162 = vmatpush1.bf16.msra.mxu0 %v4019
        %4163 = vmatprep.subr.bf16.mxu0 %v4050
        %4164 = vmatpush2.bf16.msra.mxu0 %v4049
        %4165 = vmatprep.subr.bf16.mxu0 %v4048
        %4166 = vmatpush2.bf16.msra.mxu0 %v4047
        %4167 = vmatprep.subr.bf16.mxu0 %v4046
        %4168 = vmatpush2.bf16.msra.mxu0 %v4045
        %4169 = vmatprep.subr.bf16.mxu0 %v4044
        %4170 = vmatpush2.bf16.msra.mxu0 %v4043
        %4171 = vmatprep.subr.bf16.mxu0 %v4042
        %4172 = vmatpush2.bf16.msra.mxu0 %v4041
        %4173 = vmatprep.subr.bf16.mxu0 %v4040
        %4174 = vmatpush2.bf16.msra.mxu0 %v4039
        %4175 = vmatprep.subr.bf16.mxu0 %v4038
        %4176 = vmatpush2.bf16.msra.mxu0 %v4037
        %4177 = vmatprep.subr.bf16.mxu0 %v4036
        %4178 = vmatpush2.bf16.msra.mxu0 %v4035
        %4179 = vmatprep.mubr.bf16.mxu0 %v3748
        %4180 = vmatmul.mubr.bf16.gmra.mxu0 %v3747
        %v4181 = vpop.f32.mrf.mxu0
        %v4182 = vadd.f32 %v3820, %v4181
        %v4183 = vpop.f32.mrf.mxu0
        %v4184 = vadd.f32 %v3824, %v4183
        %v4185 = vpop.f32.mrf.mxu0
        %v4186 = vpop.f32.mrf.mxu0
        %4187 = vdwg.mxu0
        %4188 = vmatprep.subr.bf16.mxu0 %v4066
        %4189 = vmatpush1.bf16.msra.mxu0 %v4065
        %4190 = vmatprep.subr.bf16.mxu0 %v4064
        %4191 = vmatpush1.bf16.msra.mxu0 %v4063
        %4192 = vmatprep.subr.bf16.mxu0 %v4062
        %4193 = vmatpush1.bf16.msra.mxu0 %v4061
        %4194 = vmatprep.subr.bf16.mxu0 %v4060
        %4195 = vmatpush1.bf16.msra.mxu0 %v4059
        %4196 = vmatprep.subr.bf16.mxu0 %v4058
        %4197 = vmatpush1.bf16.msra.mxu0 %v4057
        %4198 = vmatprep.subr.bf16.mxu0 %v4056
        %4199 = vmatpush1.bf16.msra.mxu0 %v4055
        %4200 = vmatprep.subr.bf16.mxu0 %v4054
        %4201 = vmatpush1.bf16.msra.mxu0 %v4053
        %4202 = vmatprep.subr.bf16.mxu0 %v4052
        %4203 = vmatpush1.bf16.msra.mxu0 %v4051
        %4204 = vmatprep.subr.bf16.mxu0 %v4082
        %4205 = vmatpush2.bf16.msra.mxu0 %v4081
        %4206 = vmatprep.subr.bf16.mxu0 %v4080
        %4207 = vmatpush2.bf16.msra.mxu0 %v4079
        %4208 = vmatprep.subr.bf16.mxu0 %v4078
        %4209 = vmatpush2.bf16.msra.mxu0 %v4077
        %4210 = vmatprep.subr.bf16.mxu0 %v4076
        %4211 = vmatpush2.bf16.msra.mxu0 %v4075
        %4212 = vmatprep.subr.bf16.mxu0 %v4074
        %4213 = vmatpush2.bf16.msra.mxu0 %v4073
        %4214 = vmatprep.subr.bf16.mxu0 %v4072
        %4215 = vmatpush2.bf16.msra.mxu0 %v4071
        %4216 = vmatprep.subr.bf16.mxu0 %v4070
        %4217 = vmatpush2.bf16.msra.mxu0 %v4069
        %4218 = vmatprep.subr.bf16.mxu0 %v4068
        %4219 = vmatpush2.bf16.msra.mxu0 %v4067
        %4220 = vmatprep.mubr.bf16.mxu0 %v3750
        %4221 = vmatmul.mubr.bf16.gmra.mxu0 %v3749
        %v4222 = vpop.f32.mrf.mxu0
        %v4223 = vadd.f32 %v4182, %v4222
        %v4224 = vpop.f32.mrf.mxu0
        %v4225 = vadd.f32 %v4184, %v4224
        %v4226 = vpop.f32.mrf.mxu0
        %v4227 = vpop.f32.mrf.mxu0
        %4228 = vdwg.mxu0
        %v4229 = vmax.f32 %v4223, 0.0
        %v4230 = vmax.f32 %v4225, 0.0
        %v4231 = vpack.c.bf16 %v4229, %v4229
        %v4232 = vpack.c.bf16 %v4230, %v4230
        %v4233 = vld [vmem:[#allocation15] sm:$0xf]
        %v4234 = vld [vmem:[#allocation15 + $0x4] sm:$0xf]
        %v4235 = vld [vmem:[#allocation15 + $0x8] sm:$0xf]
        %v4236 = vld [vmem:[#allocation15 + $0xc] sm:$0xf]
        %v4237 = vld [vmem:[#allocation15 + $0x10] sm:$0xf]
        %v4238 = vld [vmem:[#allocation15 + $0x14] sm:$0xf]
        %v4239 = vld [vmem:[#allocation15 + $0x18] sm:$0xf]
        %v4240 = vld [vmem:[#allocation15 + $0x1c] sm:$0xf]
        %v4241 = vld [vmem:[#allocation15 + $0x20] sm:$0xf]
        %v4242 = vld [vmem:[#allocation15 + $0x24] sm:$0xf]
        %v4243 = vld [vmem:[#allocation15 + $0x28] sm:$0xf]
        %v4244 = vld [vmem:[#allocation15 + $0x2c] sm:$0xf]
        %v4245 = vld [vmem:[#allocation15 + $0x30] sm:$0xf]
        %v4246 = vld [vmem:[#allocation15 + $0x34] sm:$0xf]
        %v4247 = vld [vmem:[#allocation15 + $0x38] sm:$0xf]
        %v4248 = vld [vmem:[#allocation15 + $0x3c] sm:$0xf]
        %v4249 = vld [vmem:[#allocation15 + $0x40] sm:$0xf]
        %v4250 = vld [vmem:[#allocation15 + $0x44] sm:$0xf]
        %v4251 = vld [vmem:[#allocation15 + $0x48] sm:$0xf]
        %v4252 = vld [vmem:[#allocation15 + $0x4c] sm:$0xf]
        %v4253 = vld [vmem:[#allocation15 + $0x50] sm:$0xf]
        %v4254 = vld [vmem:[#allocation15 + $0x54] sm:$0xf]
        %v4255 = vld [vmem:[#allocation15 + $0x58] sm:$0xf]
        %v4256 = vld [vmem:[#allocation15 + $0x5c] sm:$0xf]
        %v4257 = vld [vmem:[#allocation15 + $0x60] sm:$0xf]
        %v4258 = vld [vmem:[#allocation15 + $0x64] sm:$0xf]
        %v4259 = vld [vmem:[#allocation15 + $0x68] sm:$0xf]
        %v4260 = vld [vmem:[#allocation15 + $0x6c] sm:$0xf]
        %v4261 = vld [vmem:[#allocation15 + $0x70] sm:$0xf]
        %v4262 = vld [vmem:[#allocation15 + $0x74] sm:$0xf]
        %v4263 = vld [vmem:[#allocation15 + $0x78] sm:$0xf]
        %v4264 = vld [vmem:[#allocation15 + $0x7c] sm:$0xf]
        %v4265 = vld [vmem:[#allocation17] sm:$0x1]
        %v4267 = vlaneseq
        %v4268 = vshrl.u32 %v4267, 7
        %v4269 = vsub.s32 0, %v4268
        %v4270 = vrot.slane %v4265, %v4269
        %v4304 = vunpack.c.l.b16 %v4233
        %v4305 = vunpack.c.l.b16 %v4234
        %v4306 = vunpack.c.l.b16 %v4235
        %v4307 = vunpack.c.l.b16 %v4236
        %v4308 = vunpack.c.l.b16 %v4237
        %v4309 = vunpack.c.l.b16 %v4238
        %v4310 = vunpack.c.l.b16 %v4239
        %v4311 = vunpack.c.l.b16 %v4240
        %v4312 = vunpack.c.l.b16 %v4241
        %v4313 = vunpack.c.l.b16 %v4242
        %v4314 = vunpack.c.l.b16 %v4243
        %v4315 = vunpack.c.l.b16 %v4244
        %v4316 = vunpack.c.l.b16 %v4245
        %v4317 = vunpack.c.l.b16 %v4246
        %v4318 = vunpack.c.l.b16 %v4247
        %v4319 = vunpack.c.l.b16 %v4248
        %v4320 = vunpack.c.l.b16 %v4249
        %v4321 = vunpack.c.l.b16 %v4250
        %v4322 = vunpack.c.l.b16 %v4251
        %v4323 = vunpack.c.l.b16 %v4252
        %v4324 = vunpack.c.l.b16 %v4253
        %v4325 = vunpack.c.l.b16 %v4254
        %v4326 = vunpack.c.l.b16 %v4255
        %v4327 = vunpack.c.l.b16 %v4256
        %v4328 = vunpack.c.l.b16 %v4257
        %v4329 = vunpack.c.l.b16 %v4258
        %v4330 = vunpack.c.l.b16 %v4259
        %v4331 = vunpack.c.l.b16 %v4260
        %v4332 = vunpack.c.l.b16 %v4261
        %v4333 = vunpack.c.l.b16 %v4262
        %v4334 = vunpack.c.l.b16 %v4263
        %v4335 = vunpack.c.l.b16 %v4264
        %v4336 = vpack.c.b16 %v4305, %v4304
        %v4337 = vpack.c.b16 %v4307, %v4306
        %v4338 = vpack.c.b16 %v4309, %v4308
        %v4339 = vpack.c.b16 %v4311, %v4310
        %v4340 = vpack.c.b16 %v4313, %v4312
        %v4341 = vpack.c.b16 %v4315, %v4314
        %v4342 = vpack.c.b16 %v4317, %v4316
        %v4343 = vpack.c.b16 %v4319, %v4318
        %v4344 = vpack.c.b16 %v4321, %v4320
        %v4345 = vpack.c.b16 %v4323, %v4322
        %v4346 = vpack.c.b16 %v4325, %v4324
        %v4347 = vpack.c.b16 %v4327, %v4326
        %v4348 = vpack.c.b16 %v4329, %v4328
        %v4349 = vpack.c.b16 %v4331, %v4330
        %v4350 = vpack.c.b16 %v4333, %v4332
        %v4351 = vpack.c.b16 %v4335, %v4334
        %4368 = vmatprep.subr.bf16.mxu0 0
        %4369 = vmatpush1.bf16.msra.mxu0 %v4343
        %4370 = vmatprep.subr.bf16.mxu0 0
        %4371 = vmatpush1.bf16.msra.mxu0 %v4342
        %4372 = vmatprep.subr.bf16.mxu0 0
        %4373 = vmatpush1.bf16.msra.mxu0 %v4341
        %4374 = vmatprep.subr.bf16.mxu0 0
        %4375 = vmatpush1.bf16.msra.mxu0 %v4340
        %4376 = vmatprep.subr.bf16.mxu0 0
        %4377 = vmatpush1.bf16.msra.mxu0 %v4339
        %4378 = vmatprep.subr.bf16.mxu0 0
        %4379 = vmatpush1.bf16.msra.mxu0 %v4338
        %4380 = vmatprep.subr.bf16.mxu0 0
        %4381 = vmatpush1.bf16.msra.mxu0 %v4337
        %4382 = vmatprep.subr.bf16.mxu0 0
        %4383 = vmatpush1.bf16.msra.mxu0 %v4336
        %4384 = vmatprep.subr.bf16.mxu0 0
        %4385 = vmatpush2.bf16.msra.mxu0 %v4351
        %4386 = vmatprep.subr.bf16.mxu0 0
        %4387 = vmatpush2.bf16.msra.mxu0 %v4350
        %4388 = vmatprep.subr.bf16.mxu0 0
        %4389 = vmatpush2.bf16.msra.mxu0 %v4349
        %4390 = vmatprep.subr.bf16.mxu0 0
        %4391 = vmatpush2.bf16.msra.mxu0 %v4348
        %4392 = vmatprep.subr.bf16.mxu0 0
        %4393 = vmatpush2.bf16.msra.mxu0 %v4347
        %4394 = vmatprep.subr.bf16.mxu0 0
        %4395 = vmatpush2.bf16.msra.mxu0 %v4346
        %4396 = vmatprep.subr.bf16.mxu0 0
        %4397 = vmatpush2.bf16.msra.mxu0 %v4345
        %4398 = vmatprep.subr.bf16.mxu0 0
        %4399 = vmatpush2.bf16.msra.mxu0 %v4344
        %4400 = vmatprep.mubr.bf16.mxu0 %v4232
        %4401 = vmatmul.mubr.bf16.gmra.mxu0 %v4231
        %v4402 = vpop.f32.mrf.mxu0
        %v4403 = vadd.f32 %v4270, %v4402
        %v4404 = vpop.f32.mrf.mxu0
        %v4405 = vpop.f32.mrf.mxu0
        %v4406 = vpop.f32.mrf.mxu0
        %4407 = vdwg.mxu0
        %v4408 = vmax.f32 %v4403, 0.0
        %v4409 = vpack.c.bf16 %v4408, %v4408
        %v4410 = vld [vmem:[%s25] sm:$0xf]
        %v4411 = vld [vmem:[%s25 + $0x4] sm:$0xf]
        %v4412 = vld [vmem:[%s25 + $0x8] sm:$0xf]
        %v4413 = vld [vmem:[%s25 + $0xc] sm:$0xf]
        %v4414 = vld [vmem:[%s25 + $0x10] sm:$0xf]
        %v4415 = vld [vmem:[%s25 + $0x14] sm:$0xf]
        %v4416 = vld [vmem:[%s25 + $0x18] sm:$0xf]
        %v4417 = vld [vmem:[%s25 + $0x1c] sm:$0xf]
        %v4418 = vld [vmem:[%s25 + $0x20] sm:$0xf]
        %v4419 = vld [vmem:[%s25 + $0x24] sm:$0xf]
        %v4420 = vld [vmem:[%s25 + $0x28] sm:$0xf]
        %v4421 = vld [vmem:[%s25 + $0x2c] sm:$0xf]
        %v4422 = vld [vmem:[%s25 + $0x30] sm:$0xf]
        %v4423 = vld [vmem:[%s25 + $0x34] sm:$0xf]
        %v4424 = vld [vmem:[%s25 + $0x38] sm:$0xf]
        %v4425 = vld [vmem:[%s25 + $0x3c] sm:$0xf]
        %v4426 = vld [vmem:[#allocation18] sm:$0x1]
        %v4428 = vlaneseq
        %v4429 = vshrl.u32 %v4428, 7
        %v4430 = vsub.s32 0, %v4429
        %v4431 = vrot.slane %v4426, %v4430
        %v4449 = vunpack.c.l.b16 %v4410
        %v4450 = vunpack.c.l.b16 %v4411
        %v4451 = vunpack.c.l.b16 %v4412
        %v4452 = vunpack.c.l.b16 %v4413
        %v4453 = vunpack.c.l.b16 %v4414
        %v4454 = vunpack.c.l.b16 %v4415
        %v4455 = vunpack.c.l.b16 %v4416
        %v4456 = vunpack.c.l.b16 %v4417
        %v4457 = vunpack.c.l.b16 %v4418
        %v4458 = vunpack.c.l.b16 %v4419
        %v4459 = vunpack.c.l.b16 %v4420
        %v4460 = vunpack.c.l.b16 %v4421
        %v4461 = vunpack.c.l.b16 %v4422
        %v4462 = vunpack.c.l.b16 %v4423
        %v4463 = vunpack.c.l.b16 %v4424
        %v4464 = vunpack.c.l.b16 %v4425
        %v4465 = vpack.c.b16 %v4450, %v4449
        %v4466 = vpack.c.b16 %v4452, %v4451
        %v4467 = vpack.c.b16 %v4454, %v4453
        %v4468 = vpack.c.b16 %v4456, %v4455
        %v4469 = vpack.c.b16 %v4458, %v4457
        %v4470 = vpack.c.b16 %v4460, %v4459
        %v4471 = vpack.c.b16 %v4462, %v4461
        %v4472 = vpack.c.b16 %v4464, %v4463
        %4481 = vmatprep.subr.bf16.mxu0 0
        %4482 = vmatpush1.bf16.msra.mxu0 %v4472
        %4483 = vmatprep.subr.bf16.mxu0 0
        %4484 = vmatpush1.bf16.msra.mxu0 %v4471
        %4485 = vmatprep.subr.bf16.mxu0 0
        %4486 = vmatpush1.bf16.msra.mxu0 %v4470
        %4487 = vmatprep.subr.bf16.mxu0 0
        %4488 = vmatpush1.bf16.msra.mxu0 %v4469
        %4489 = vmatprep.subr.bf16.mxu0 0
        %4490 = vmatpush1.bf16.msra.mxu0 %v4468
        %4491 = vmatprep.subr.bf16.mxu0 0
        %4492 = vmatpush1.bf16.msra.mxu0 %v4467
        %4493 = vmatprep.subr.bf16.mxu0 0
        %4494 = vmatpush1.bf16.msra.mxu0 %v4466
        %4495 = vmatprep.subr.bf16.mxu0 0
        %4496 = vmatpush1.bf16.msra.mxu0 %v4465
        %4497 = vmatprep.subr.bf16.mxu0 0
        %4498 = vmatpush2.bf16.msra.mxu0 0
        %4499 = vmatprep.subr.bf16.mxu0 0
        %4500 = vmatpush2.bf16.msra.mxu0 0
        %4501 = vmatprep.subr.bf16.mxu0 0
        %4502 = vmatpush2.bf16.msra.mxu0 0
        %4503 = vmatprep.subr.bf16.mxu0 0
        %4504 = vmatpush2.bf16.msra.mxu0 0
        %4505 = vmatprep.subr.bf16.mxu0 0
        %4506 = vmatpush2.bf16.msra.mxu0 0
        %4507 = vmatprep.subr.bf16.mxu0 0
        %4508 = vmatpush2.bf16.msra.mxu0 0
        %4509 = vmatprep.subr.bf16.mxu0 0
        %4510 = vmatpush2.bf16.msra.mxu0 0
        %4511 = vmatprep.subr.bf16.mxu0 0
        %4512 = vmatpush2.bf16.msra.mxu0 0
        %4513 = vmatprep.mubr.bf16.mxu0 0
        %4514 = vmatmul.mubr.bf16.gmra.mxu0 %v4409
        %v4515 = vpop.f32.mrf.mxu0
        %v4516 = vadd.f32 %v4431, %v4515
        %v4517 = vpop.f32.mrf.mxu0
        %v4518 = vpop.f32.mrf.mxu0
        %v4519 = vpop.f32.mrf.mxu0
        %4520 = vdwg.mxu0
        %v4521 = vmax.f32 %v4516, 0.0
        %v4522 = vpack.c.bf16 %v4521, %v4521
        %v4523 = vld [vmem:[%s29] sm:$0xf]
        %v4524 = vld [vmem:[%s29 + $0x4] sm:$0xf]
        %v4525 = vld [vmem:[%s29 + $0x8] sm:$0xf]
        %v4526 = vld [vmem:[%s29 + $0xc] sm:$0xf]
        %v4527 = vld [vmem:[%s29 + $0x10] sm:$0xf]
        %v4528 = vld [vmem:[%s29 + $0x14] sm:$0xf]
        %v4529 = vld [vmem:[%s29 + $0x18] sm:$0xf]
        %v4530 = vld [vmem:[%s29 + $0x1c] sm:$0xf]
        %v4531 = vld [vmem:[#allocation20] sm:$0x1]
        %v4533 = vlaneseq
        %v4534 = vshrl.u32 %v4533, 7
        %v4535 = vsub.s32 0, %v4534
        %v4536 = vrot.slane %v4531, %v4535
        %v4546 = vunpack.c.l.b16 %v4523
        %v4547 = vunpack.c.l.b16 %v4524
        %v4548 = vunpack.c.l.b16 %v4525
        %v4549 = vunpack.c.l.b16 %v4526
        %v4550 = vunpack.c.l.b16 %v4527
        %v4551 = vunpack.c.l.b16 %v4528
        %v4552 = vunpack.c.l.b16 %v4529
        %v4553 = vunpack.c.l.b16 %v4530
        %v4554 = vpack.c.b16 %v4547, %v4546
        %v4555 = vpack.c.b16 %v4549, %v4548
        %v4556 = vpack.c.b16 %v4551, %v4550
        %v4557 = vpack.c.b16 %v4553, %v4552
        %vm4562 = vcmask 523264
        %v4564 = vsel %vm4562, %v4522, 0
        %4566 = vmatprep.subr.bf16.mxu0 0
        %4567 = vmatpush1.bf16.msra.mxu0 0
        %4568 = vmatprep.subr.bf16.mxu0 0
        %4569 = vmatpush1.bf16.msra.mxu0 0
        %4570 = vmatprep.subr.bf16.mxu0 0
        %4571 = vmatpush1.bf16.msra.mxu0 0
        %4572 = vmatprep.subr.bf16.mxu0 0
        %4573 = vmatpush1.bf16.msra.mxu0 0
        %4574 = vmatprep.subr.bf16.mxu0 0
        %4575 = vmatpush1.bf16.msra.mxu0 %v4557
        %4576 = vmatprep.subr.bf16.mxu0 0
        %4577 = vmatpush1.bf16.msra.mxu0 %v4556
        %4578 = vmatprep.subr.bf16.mxu0 0
        %4579 = vmatpush1.bf16.msra.mxu0 %v4555
        %4580 = vmatprep.subr.bf16.mxu0 0
        %4581 = vmatpush1.bf16.msra.mxu0 %v4554
        %4582 = vmatprep.subr.bf16.mxu0 0
        %4583 = vmatpush2.bf16.msra.mxu0 0
        %4584 = vmatprep.subr.bf16.mxu0 0
        %4585 = vmatpush2.bf16.msra.mxu0 0
        %4586 = vmatprep.subr.bf16.mxu0 0
        %4587 = vmatpush2.bf16.msra.mxu0 0
        %4588 = vmatprep.subr.bf16.mxu0 0
        %4589 = vmatpush2.bf16.msra.mxu0 0
        %4590 = vmatprep.subr.bf16.mxu0 0
        %4591 = vmatpush2.bf16.msra.mxu0 0
        %4592 = vmatprep.subr.bf16.mxu0 0
        %4593 = vmatpush2.bf16.msra.mxu0 0
        %4594 = vmatprep.subr.bf16.mxu0 0
        %4595 = vmatpush2.bf16.msra.mxu0 0
        %4596 = vmatprep.subr.bf16.mxu0 0
        %4597 = vmatpush2.bf16.msra.mxu0 0
        %4598 = vmatprep.mubr.bf16.mxu0 0
        %4599 = vmatmul.mubr.bf16.gmra.mxu0 %v4564
        %v4600 = vpop.f32.mrf.mxu0
        %v4601 = vadd.f32 %v4536, %v4600
        %v4602 = vpop.f32.mrf.mxu0
        %v4603 = vpop.f32.mrf.mxu0
        %v4604 = vpop.f32.mrf.mxu0
        %4605 = vdwg.mxu0
        %v4606 = vlaneseq
        %v4607 = vand.u32 %v4606, 127
        %vm4608 = vcmp.lt.s32.totalorder %v4607, 15
        %v4609 = vsel %vm4608, %v4601, -inf
        %4610 = vmax.xlane.f32.xlu0 %v4609
        %v4611 = vpop.xlane.xlu0 %4610
        %vm4612 = vcmp.eq.f32.partialorder %v4609, %v4611
        %v4613 = vsel %vm4612, %v4607, 128
        %v4614 = vand.u32 %v4613, 65535
        %v4615 = vshra.s32 %v4613, 16
        %v4616 = vcvt.s32.f32 %v4614
        %v4617 = vcvt.s32.f32 %v4615
        %4618 = vmin.xlane.f32.xlu0 %v4617
        %v4619 = vpop.xlane.xlu0 %4618
        %vm4620 = vcmp.eq.f32.partialorder %v4617, %v4619
        %v4621 = vsel %vm4620, %v4616, inf
        %4622 = vmin.xlane.f32.xlu0 %v4621
        %v4623 = vpop.xlane.xlu0 %4622
        %v4624 = vcvt.f32.s32 %v4623
        %v4625 = vcvt.f32.s32 %v4619
        %v4626 = vshll.u32 %v4625, 16
        %v4627 = vadd.s32 %v4626, %v4624
        %v4628 = vcvt.s32.f32 %v4627
        %v4629 = vld [vmem:[%s1175] sm:$0xff]
        %v4630 = vpack.c.bf16 %v4629, %v4629
        %v4631 = vld [vmem:[#allocation21] sm:$0xf]
        %v4632 = vpack.c.bf16 %v4628, %v4628
        %v4633 = vld [vmem:[#allocation23] sm:$0x1]
        %vm4634 = vcmask 7168
        %v4636 = vsel %vm4634, %v4632, 0
        %v4638 = vsel 0, 4294967295, 65535
        %v4639 = vsel %vm1202, %v4638, 0
        %v4641 = vand.u32 %v4633, %v4639
        %4643 = vmatprep.subr.bf16.mxu0 0
        %4644 = vmatpush1.bf16.msra.mxu0 0
        %4645 = vmatprep.subr.bf16.mxu0 0
        %4646 = vmatpush1.bf16.msra.mxu0 0
        %4647 = vmatprep.subr.bf16.mxu0 0
        %4648 = vmatpush1.bf16.msra.mxu0 0
        %4649 = vmatprep.subr.bf16.mxu0 0
        %4650 = vmatpush1.bf16.msra.mxu0 0
        %4651 = vmatprep.subr.bf16.mxu0 0
        %4652 = vmatpush1.bf16.msra.mxu0 0
        %4653 = vmatprep.subr.bf16.mxu0 0
        %4654 = vmatpush1.bf16.msra.mxu0 0
        %4655 = vmatprep.subr.bf16.mxu0 0
        %4656 = vmatpush1.bf16.msra.mxu0 0
        %4657 = vmatprep.subr.bf16.mxu0 0
        %4658 = vmatpush1.bf16.msra.mxu0 %v4641
        %4659 = vmatprep.subr.bf16.mxu0 0
        %4660 = vmatpush2.bf16.msra.mxu0 0
        %4661 = vmatprep.subr.bf16.mxu0 0
        %4662 = vmatpush2.bf16.msra.mxu0 0
        %4663 = vmatprep.subr.bf16.mxu0 0
        %4664 = vmatpush2.bf16.msra.mxu0 0
        %4665 = vmatprep.subr.bf16.mxu0 0
        %4666 = vmatpush2.bf16.msra.mxu0 0
        %4667 = vmatprep.subr.bf16.mxu0 0
        %4668 = vmatpush2.bf16.msra.mxu0 0
        %4669 = vmatprep.subr.bf16.mxu0 0
        %4670 = vmatpush2.bf16.msra.mxu0 0
        %4671 = vmatprep.subr.bf16.mxu0 0
        %4672 = vmatpush2.bf16.msra.mxu0 0
        %4673 = vmatprep.subr.bf16.mxu0 0
        %4674 = vmatpush2.bf16.msra.mxu0 0
        %4675 = vmatprep.mubr.bf16.mxu0 0
        %4676 = vmatmul.mubr.bf16.gmra.mxu0 %v4636
        %v4677 = vpop.f32.mrf.mxu0
        %v4678 = vadd.f32 0.0, %v4677
        %v4679 = vpop.f32.mrf.mxu0
        %v4680 = vpop.f32.mrf.mxu0
        %v4681 = vpop.f32.mrf.mxu0
        %4682 = vdwg.mxu0
        %vm4683 = vcmask 56320
        %v4685 = vsel %vm4683, %v4630, 0
        %vm4687 = vcmask 1042432
        %vm4688 = vcmask 1043456
        %v4689 = vsel %vm4687, 4294967295, 65535
        %v4690 = vsel %vm4688, %v4689, 0
        %v4692 = vand.u32 %v4631, %v4690
        %4694 = vmatprep.subr.bf16.mxu0 0
        %4695 = vmatpush1.bf16.msra.mxu0 0
        %4696 = vmatprep.subr.bf16.mxu0 0
        %4697 = vmatpush1.bf16.msra.mxu0 0
        %4698 = vmatprep.subr.bf16.mxu0 0
        %4699 = vmatpush1.bf16.msra.mxu0 0
        %4700 = vmatprep.subr.bf16.mxu0 0
        %4701 = vmatpush1.bf16.msra.mxu0 0
        %4702 = vmatprep.subr.bf16.mxu0 0
        %4703 = vmatpush1.bf16.msra.mxu0 0
        %4704 = vmatprep.subr.bf16.mxu0 0
        %4705 = vmatpush1.bf16.msra.mxu0 0
        %4706 = vmatprep.subr.bf16.mxu0 0
        %4707 = vmatpush1.bf16.msra.mxu0 0
        %4708 = vmatprep.subr.bf16.mxu0 0
        %4709 = vmatpush1.bf16.msra.mxu0 %v4692
        %4710 = vmatprep.subr.bf16.mxu0 0
        %4711 = vmatpush2.bf16.msra.mxu0 0
        %4712 = vmatprep.subr.bf16.mxu0 0
        %4713 = vmatpush2.bf16.msra.mxu0 0
        %4714 = vmatprep.subr.bf16.mxu0 0
        %4715 = vmatpush2.bf16.msra.mxu0 0
        %4716 = vmatprep.subr.bf16.mxu0 0
        %4717 = vmatpush2.bf16.msra.mxu0 0
        %4718 = vmatprep.subr.bf16.mxu0 0
        %4719 = vmatpush2.bf16.msra.mxu0 0
        %4720 = vmatprep.subr.bf16.mxu0 0
        %4721 = vmatpush2.bf16.msra.mxu0 0
        %4722 = vmatprep.subr.bf16.mxu0 0
        %4723 = vmatpush2.bf16.msra.mxu0 0
        %4724 = vmatprep.subr.bf16.mxu0 0
        %4725 = vmatpush2.bf16.msra.mxu0 0
        %4726 = vmatprep.mubr.bf16.mxu0 0
        %4727 = vmatmul.mubr.bf16.gmra.mxu0 %v4685
        %v4728 = vpop.f32.mrf.mxu0
        %v4729 = vadd.f32 %v4678, %v4728
        %v4730 = vpop.f32.mrf.mxu0
        %v4731 = vpop.f32.mrf.mxu0
        %v4732 = vpop.f32.mrf.mxu0
        %4733 = vdwg.mxu0
        %v4734 = vld [vmem:[#allocation24] sm:$0x1]
        %v4736 = vlaneseq
        %v4737 = vshrl.u32 %v4736, 7
        %v4738 = vsub.s32 0, %v4737
        %v4739 = vrot.slane %v4734, %v4738
        %v4741 = vadd.f32 %v4729, %v4739
        %v4742 = vmax.f32 %v4741, 0.0
        %v4743 = vpack.c.bf16 %v4742, %v4742
        %v4744 = vld [vmem:[#allocation26] sm:$0xff]
        %v4745 = vld [vmem:[#allocation26 + $0x8] sm:$0xff]
        %v4746 = vld [vmem:[#allocation26 + $0x10] sm:$0xff]
        %v4747 = vld [vmem:[#allocation26 + $0x18] sm:$0xff]
        %v4748 = vld [vmem:[#allocation26 + $0x20] sm:$0xff]
        %v4749 = vld [vmem:[#allocation26 + $0x28] sm:$0xff]
        %v4750 = vld [vmem:[#allocation26 + $0x30] sm:$0xff]
        %v4751 = vld [vmem:[#allocation26 + $0x38] sm:$0xff]
        %v4752 = vld [vmem:[#allocation26 + $0x40] sm:$0xff]
        %v4753 = vld [vmem:[#allocation26 + $0x48] sm:$0xff]
        %v4754 = vld [vmem:[#allocation26 + $0x50] sm:$0xff]
        %v4755 = vld [vmem:[#allocation26 + $0x58] sm:$0xff]
        %v4756 = vld [vmem:[#allocation26 + $0x60] sm:$0xff]
        %v4757 = vld [vmem:[#allocation26 + $0x68] sm:$0xff]
        %v4758 = vld [vmem:[#allocation26 + $0x70] sm:$0xff]
        %v4759 = vld [vmem:[#allocation26 + $0x78] sm:$0xff]
        %v4760 = vld [vmem:[#allocation26 + $0x80] sm:$0xff]
        %v4761 = vld [vmem:[#allocation26 + $0x88] sm:$0xff]
        %v4762 = vld [vmem:[#allocation26 + $0x90] sm:$0xff]
        %v4763 = vld [vmem:[#allocation26 + $0x98] sm:$0xff]
        %v4764 = vld [vmem:[#allocation26 + $0xa0] sm:$0xff]
        %v4765 = vld [vmem:[#allocation26 + $0xa8] sm:$0xff]
        %v4766 = vld [vmem:[#allocation26 + $0xb0] sm:$0xff]
        %v4767 = vld [vmem:[#allocation26 + $0xb8] sm:$0xff]
        %v4768 = vld [vmem:[#allocation26 + $0xc0] sm:$0xff]
        %v4769 = vld [vmem:[#allocation26 + $0xc8] sm:$0xff]
        %v4770 = vld [vmem:[#allocation26 + $0xd0] sm:$0xff]
        %v4771 = vld [vmem:[#allocation26 + $0xd8] sm:$0xff]
        %v4772 = vld [vmem:[#allocation26 + $0xe0] sm:$0xff]
        %v4773 = vld [vmem:[#allocation26 + $0xe8] sm:$0xff]
        %v4774 = vld [vmem:[#allocation26 + $0xf0] sm:$0xff]
        %v4775 = vld [vmem:[#allocation26 + $0xf8] sm:$0xff]
        %v4776 = vld [vmem:[#allocation26 + $0x100] sm:$0xff]
        %v4777 = vld [vmem:[#allocation26 + $0x108] sm:$0xff]
        %v4778 = vld [vmem:[#allocation26 + $0x110] sm:$0xff]
        %v4779 = vld [vmem:[#allocation26 + $0x118] sm:$0xff]
        %v4780 = vld [vmem:[#allocation26 + $0x120] sm:$0xff]
        %v4781 = vld [vmem:[#allocation26 + $0x128] sm:$0xff]
        %v4782 = vld [vmem:[#allocation26 + $0x130] sm:$0xff]
        %v4783 = vld [vmem:[#allocation26 + $0x138] sm:$0xff]
        %v4784 = vld [vmem:[#allocation26 + $0x140] sm:$0xff]
        %v4785 = vld [vmem:[#allocation26 + $0x148] sm:$0xff]
        %v4786 = vld [vmem:[#allocation26 + $0x150] sm:$0xff]
        %v4787 = vld [vmem:[#allocation26 + $0x158] sm:$0xff]
        %v4788 = vld [vmem:[#allocation26 + $0x160] sm:$0xff]
        %v4789 = vld [vmem:[#allocation26 + $0x168] sm:$0xff]
        %v4790 = vld [vmem:[#allocation26 + $0x170] sm:$0xff]
        %v4791 = vld [vmem:[#allocation26 + $0x178] sm:$0xff]
        %v4792 = vld [vmem:[#allocation26 + $0x180] sm:$0xff]
        %v4793 = vld [vmem:[#allocation26 + $0x188] sm:$0xff]
        %v4794 = vld [vmem:[#allocation26 + $0x190] sm:$0xff]
        %v4795 = vld [vmem:[#allocation26 + $0x198] sm:$0xff]
        %v4796 = vld [vmem:[#allocation26 + $0x1a0] sm:$0xff]
        %v4797 = vld [vmem:[#allocation26 + $0x1a8] sm:$0xff]
        %v4798 = vld [vmem:[#allocation26 + $0x1b0] sm:$0xff]
        %v4799 = vld [vmem:[#allocation26 + $0x1b8] sm:$0xff]
        %v4800 = vld [vmem:[#allocation26 + $0x1c0] sm:$0xff]
        %v4801 = vld [vmem:[#allocation26 + $0x1c8] sm:$0xff]
        %v4802 = vld [vmem:[#allocation26 + $0x1d0] sm:$0xff]
        %v4803 = vld [vmem:[#allocation26 + $0x1d8] sm:$0xff]
        %v4804 = vld [vmem:[#allocation26 + $0x1e0] sm:$0xff]
        %v4805 = vld [vmem:[#allocation26 + $0x1e8] sm:$0xff]
        %v4806 = vld [vmem:[#allocation26 + $0x1f0] sm:$0xff]
        %v4807 = vld [vmem:[#allocation26 + $0x1f8] sm:$0xff]
        %v4808 = vld [vmem:[#allocation27] sm:$0xff]
        %v4810 = vlaneseq
        %v4811 = vshrl.u32 %v4810, 7
        %v4812 = vsub.s32 0, %v4811
        %v4813 = vrot.slane %v4808, %v4812
        %v4814 = vlaneseq
        %v4815 = vshrl.u32 %v4814, 7
        %v4816 = vsub.s32 1, %v4815
        %v4817 = vrot.slane %v4808, %v4816
        %v4818 = vlaneseq
        %v4819 = vshrl.u32 %v4818, 7
        %v4820 = vsub.s32 2, %v4819
        %v4821 = vrot.slane %v4808, %v4820
        %v4822 = vlaneseq
        %v4823 = vshrl.u32 %v4822, 7
        %v4824 = vsub.s32 3, %v4823
        %v4825 = vrot.slane %v4808, %v4824
        %v4826 = vlaneseq
        %v4827 = vshrl.u32 %v4826, 7
        %v4828 = vsub.s32 4, %v4827
        %v4829 = vrot.slane %v4808, %v4828
        %v4830 = vlaneseq
        %v4831 = vshrl.u32 %v4830, 7
        %v4832 = vsub.s32 5, %v4831
        %v4833 = vrot.slane %v4808, %v4832
        %v4834 = vlaneseq
        %v4835 = vshrl.u32 %v4834, 7
        %v4836 = vsub.s32 6, %v4835
        %v4837 = vrot.slane %v4808, %v4836
        %v4838 = vlaneseq
        %v4839 = vshrl.u32 %v4838, 7
        %v4840 = vsub.s32 7, %v4839
        %v4841 = vrot.slane %v4808, %v4840
        %v4914 = vunpack.c.l.b16 %v4744
        %v4915 = vunpack.c.h.b16 %v4744
        %v4916 = vunpack.c.l.b16 %v4745
        %v4917 = vunpack.c.h.b16 %v4745
        %v4918 = vunpack.c.l.b16 %v4746
        %v4919 = vunpack.c.h.b16 %v4746
        %v4920 = vunpack.c.l.b16 %v4747
        %v4921 = vunpack.c.h.b16 %v4747
        %v4922 = vunpack.c.l.b16 %v4748
        %v4923 = vunpack.c.h.b16 %v4748
        %v4924 = vunpack.c.l.b16 %v4749
        %v4925 = vunpack.c.h.b16 %v4749
        %v4926 = vunpack.c.l.b16 %v4750
        %v4927 = vunpack.c.h.b16 %v4750
        %v4928 = vunpack.c.l.b16 %v4751
        %v4929 = vunpack.c.h.b16 %v4751
        %v4930 = vunpack.c.l.b16 %v4752
        %v4931 = vunpack.c.h.b16 %v4752
        %v4932 = vunpack.c.l.b16 %v4753
        %v4933 = vunpack.c.h.b16 %v4753
        %v4934 = vunpack.c.l.b16 %v4754
        %v4935 = vunpack.c.h.b16 %v4754
        %v4936 = vunpack.c.l.b16 %v4755
        %v4937 = vunpack.c.h.b16 %v4755
        %v4938 = vunpack.c.l.b16 %v4756
        %v4939 = vunpack.c.h.b16 %v4756
        %v4940 = vunpack.c.l.b16 %v4757
        %v4941 = vunpack.c.h.b16 %v4757
        %v4942 = vunpack.c.l.b16 %v4758
        %v4943 = vunpack.c.h.b16 %v4758
        %v4944 = vunpack.c.l.b16 %v4759
        %v4945 = vunpack.c.h.b16 %v4759
        %v4946 = vunpack.c.l.b16 %v4760
        %v4947 = vunpack.c.h.b16 %v4760
        %v4948 = vunpack.c.l.b16 %v4761
        %v4949 = vunpack.c.h.b16 %v4761
        %v4950 = vunpack.c.l.b16 %v4762
        %v4951 = vunpack.c.h.b16 %v4762
        %v4952 = vunpack.c.l.b16 %v4763
        %v4953 = vunpack.c.h.b16 %v4763
        %v4954 = vunpack.c.l.b16 %v4764
        %v4955 = vunpack.c.h.b16 %v4764
        %v4956 = vunpack.c.l.b16 %v4765
        %v4957 = vunpack.c.h.b16 %v4765
        %v4958 = vunpack.c.l.b16 %v4766
        %v4959 = vunpack.c.h.b16 %v4766
        %v4960 = vunpack.c.l.b16 %v4767
        %v4961 = vunpack.c.h.b16 %v4767
        %v4962 = vunpack.c.l.b16 %v4768
        %v4963 = vunpack.c.h.b16 %v4768
        %v4964 = vunpack.c.l.b16 %v4769
        %v4965 = vunpack.c.h.b16 %v4769
        %v4966 = vunpack.c.l.b16 %v4770
        %v4967 = vunpack.c.h.b16 %v4770
        %v4968 = vunpack.c.l.b16 %v4771
        %v4969 = vunpack.c.h.b16 %v4771
        %v4970 = vunpack.c.l.b16 %v4772
        %v4971 = vunpack.c.h.b16 %v4772
        %v4972 = vunpack.c.l.b16 %v4773
        %v4973 = vunpack.c.h.b16 %v4773
        %v4974 = vunpack.c.l.b16 %v4774
        %v4975 = vunpack.c.h.b16 %v4774
        %v4976 = vunpack.c.l.b16 %v4775
        %v4977 = vunpack.c.h.b16 %v4775
        %v4978 = vunpack.c.l.b16 %v4776
        %v4979 = vunpack.c.h.b16 %v4776
        %v4980 = vunpack.c.l.b16 %v4777
        %v4981 = vunpack.c.h.b16 %v4777
        %v4982 = vunpack.c.l.b16 %v4778
        %v4983 = vunpack.c.h.b16 %v4778
        %v4984 = vunpack.c.l.b16 %v4779
        %v4985 = vunpack.c.h.b16 %v4779
        %v4986 = vunpack.c.l.b16 %v4780
        %v4987 = vunpack.c.h.b16 %v4780
        %v4988 = vunpack.c.l.b16 %v4781
        %v4989 = vunpack.c.h.b16 %v4781
        %v4990 = vunpack.c.l.b16 %v4782
        %v4991 = vunpack.c.h.b16 %v4782
        %v4992 = vunpack.c.l.b16 %v4783
        %v4993 = vunpack.c.h.b16 %v4783
        %v4994 = vunpack.c.l.b16 %v4784
        %v4995 = vunpack.c.h.b16 %v4784
        %v4996 = vunpack.c.l.b16 %v4785
        %v4997 = vunpack.c.h.b16 %v4785
        %v4998 = vunpack.c.l.b16 %v4786
        %v4999 = vunpack.c.h.b16 %v4786
        %v5000 = vunpack.c.l.b16 %v4787
        %v5001 = vunpack.c.h.b16 %v4787
        %v5002 = vunpack.c.l.b16 %v4788
        %v5003 = vunpack.c.h.b16 %v4788
        %v5004 = vunpack.c.l.b16 %v4789
        %v5005 = vunpack.c.h.b16 %v4789
        %v5006 = vunpack.c.l.b16 %v4790
        %v5007 = vunpack.c.h.b16 %v4790
        %v5008 = vunpack.c.l.b16 %v4791
        %v5009 = vunpack.c.h.b16 %v4791
        %v5010 = vunpack.c.l.b16 %v4792
        %v5011 = vunpack.c.h.b16 %v4792
        %v5012 = vunpack.c.l.b16 %v4793
        %v5013 = vunpack.c.h.b16 %v4793
        %v5014 = vunpack.c.l.b16 %v4794
        %v5015 = vunpack.c.h.b16 %v4794
        %v5016 = vunpack.c.l.b16 %v4795
        %v5017 = vunpack.c.h.b16 %v4795
        %v5018 = vunpack.c.l.b16 %v4796
        %v5019 = vunpack.c.h.b16 %v4796
        %v5020 = vunpack.c.l.b16 %v4797
        %v5021 = vunpack.c.h.b16 %v4797
        %v5022 = vunpack.c.l.b16 %v4798
        %v5023 = vunpack.c.h.b16 %v4798
        %v5024 = vunpack.c.l.b16 %v4799
        %v5025 = vunpack.c.h.b16 %v4799
        %v5026 = vunpack.c.l.b16 %v4800
        %v5027 = vunpack.c.h.b16 %v4800
        %v5028 = vunpack.c.l.b16 %v4801
        %v5029 = vunpack.c.h.b16 %v4801
        %v5030 = vunpack.c.l.b16 %v4802
        %v5031 = vunpack.c.h.b16 %v4802
        %v5032 = vunpack.c.l.b16 %v4803
        %v5033 = vunpack.c.h.b16 %v4803
        %v5034 = vunpack.c.l.b16 %v4804
        %v5035 = vunpack.c.h.b16 %v4804
        %v5036 = vunpack.c.l.b16 %v4805
        %v5037 = vunpack.c.h.b16 %v4805
        %v5038 = vunpack.c.l.b16 %v4806
        %v5039 = vunpack.c.h.b16 %v4806
        %v5040 = vunpack.c.l.b16 %v4807
        %v5041 = vunpack.c.h.b16 %v4807
        %v5042 = vpack.c.b16 %v4922, %v4914
        %v5043 = vpack.c.b16 %v4923, %v4915
        %v5044 = vpack.c.b16 %v4924, %v4916
        %v5045 = vpack.c.b16 %v4925, %v4917
        %v5046 = vpack.c.b16 %v4926, %v4918
        %v5047 = vpack.c.b16 %v4927, %v4919
        %v5048 = vpack.c.b16 %v4928, %v4920
        %v5049 = vpack.c.b16 %v4929, %v4921
        %v5050 = vpack.c.b16 %v4938, %v4930
        %v5051 = vpack.c.b16 %v4939, %v4931
        %v5052 = vpack.c.b16 %v4940, %v4932
        %v5053 = vpack.c.b16 %v4941, %v4933
        %v5054 = vpack.c.b16 %v4942, %v4934
        %v5055 = vpack.c.b16 %v4943, %v4935
        %v5056 = vpack.c.b16 %v4944, %v4936
        %v5057 = vpack.c.b16 %v4945, %v4937
        %v5058 = vpack.c.b16 %v4954, %v4946
        %v5059 = vpack.c.b16 %v4955, %v4947
        %v5060 = vpack.c.b16 %v4956, %v4948
        %v5061 = vpack.c.b16 %v4957, %v4949
        %v5062 = vpack.c.b16 %v4958, %v4950
        %v5063 = vpack.c.b16 %v4959, %v4951
        %v5064 = vpack.c.b16 %v4960, %v4952
        %v5065 = vpack.c.b16 %v4961, %v4953
        %v5066 = vpack.c.b16 %v4970, %v4962
        %v5067 = vpack.c.b16 %v4971, %v4963
        %v5068 = vpack.c.b16 %v4972, %v4964
        %v5069 = vpack.c.b16 %v4973, %v4965
        %v5070 = vpack.c.b16 %v4974, %v4966
        %v5071 = vpack.c.b16 %v4975, %v4967
        %v5072 = vpack.c.b16 %v4976, %v4968
        %v5073 = vpack.c.b16 %v4977, %v4969
        %v5074 = vpack.c.b16 %v4986, %v4978
        %v5075 = vpack.c.b16 %v4987, %v4979
        %v5076 = vpack.c.b16 %v4988, %v4980
        %v5077 = vpack.c.b16 %v4989, %v4981
        %v5078 = vpack.c.b16 %v4990, %v4982
        %v5079 = vpack.c.b16 %v4991, %v4983
        %v5080 = vpack.c.b16 %v4992, %v4984
        %v5081 = vpack.c.b16 %v4993, %v4985
        %v5082 = vpack.c.b16 %v5002, %v4994
        %v5083 = vpack.c.b16 %v5003, %v4995
        %v5084 = vpack.c.b16 %v5004, %v4996
        %v5085 = vpack.c.b16 %v5005, %v4997
        %v5086 = vpack.c.b16 %v5006, %v4998
        %v5087 = vpack.c.b16 %v5007, %v4999
        %v5088 = vpack.c.b16 %v5008, %v5000
        %v5089 = vpack.c.b16 %v5009, %v5001
        %v5090 = vpack.c.b16 %v5018, %v5010
        %v5091 = vpack.c.b16 %v5019, %v5011
        %v5092 = vpack.c.b16 %v5020, %v5012
        %v5093 = vpack.c.b16 %v5021, %v5013
        %v5094 = vpack.c.b16 %v5022, %v5014
        %v5095 = vpack.c.b16 %v5023, %v5015
        %v5096 = vpack.c.b16 %v5024, %v5016
        %v5097 = vpack.c.b16 %v5025, %v5017
        %v5098 = vpack.c.b16 %v5034, %v5026
        %v5099 = vpack.c.b16 %v5035, %v5027
        %v5100 = vpack.c.b16 %v5036, %v5028
        %v5101 = vpack.c.b16 %v5037, %v5029
        %v5102 = vpack.c.b16 %v5038, %v5030
        %v5103 = vpack.c.b16 %v5039, %v5031
        %v5104 = vpack.c.b16 %v5040, %v5032
        %v5105 = vpack.c.b16 %v5041, %v5033
        %5170 = vmatprep.subr.bf16.mxu0 %v5099
        %5171 = vmatpush1.bf16.msra.mxu0 %v5098
        %5172 = vmatprep.subr.bf16.mxu0 %v5091
        %5173 = vmatpush1.bf16.msra.mxu0 %v5090
        %5174 = vmatprep.subr.bf16.mxu0 %v5083
        %5175 = vmatpush1.bf16.msra.mxu0 %v5082
        %5176 = vmatprep.subr.bf16.mxu0 %v5075
        %5177 = vmatpush1.bf16.msra.mxu0 %v5074
        %5178 = vmatprep.subr.bf16.mxu0 %v5067
        %5179 = vmatpush1.bf16.msra.mxu0 %v5066
        %5180 = vmatprep.subr.bf16.mxu0 %v5059
        %5181 = vmatpush1.bf16.msra.mxu0 %v5058
        %5182 = vmatprep.subr.bf16.mxu0 %v5051
        %5183 = vmatpush1.bf16.msra.mxu0 %v5050
        %5184 = vmatprep.subr.bf16.mxu0 %v5043
        %5185 = vmatpush1.bf16.msra.mxu0 %v5042
        %5186 = vmatprep.subr.bf16.mxu0 0
        %5187 = vmatpush2.bf16.msra.mxu0 0
        %5188 = vmatprep.subr.bf16.mxu0 0
        %5189 = vmatpush2.bf16.msra.mxu0 0
        %5190 = vmatprep.subr.bf16.mxu0 0
        %5191 = vmatpush2.bf16.msra.mxu0 0
        %5192 = vmatprep.subr.bf16.mxu0 0
        %5193 = vmatpush2.bf16.msra.mxu0 0
        %5194 = vmatprep.subr.bf16.mxu0 0
        %5195 = vmatpush2.bf16.msra.mxu0 0
        %5196 = vmatprep.subr.bf16.mxu0 0
        %5197 = vmatpush2.bf16.msra.mxu0 0
        %5198 = vmatprep.subr.bf16.mxu0 0
        %5199 = vmatpush2.bf16.msra.mxu0 0
        %5200 = vmatprep.subr.bf16.mxu0 0
        %5201 = vmatpush2.bf16.msra.mxu0 0
        %5202 = vmatprep.mubr.bf16.mxu0 0
        %5203 = vmatmul.mubr.bf16.gmra.mxu0 %v4743
        %v5204 = vpop.f32.mrf.mxu0
        %v5205 = vadd.f32 %v4813, %v5204
        %v5206 = vpop.f32.mrf.mxu0
        %v5207 = vadd.f32 %v4817, %v5206
        %v5208 = vpop.f32.mrf.mxu0
        %v5209 = vpop.f32.mrf.mxu0
        %5210 = vdwg.mxu0
        %5211 = vmatprep.subr.bf16.mxu0 %v5101
        %5212 = vmatpush1.bf16.msra.mxu0 %v5100
        %5213 = vmatprep.subr.bf16.mxu0 %v5093
        %5214 = vmatpush1.bf16.msra.mxu0 %v5092
        %5215 = vmatprep.subr.bf16.mxu0 %v5085
        %5216 = vmatpush1.bf16.msra.mxu0 %v5084
        %5217 = vmatprep.subr.bf16.mxu0 %v5077
        %5218 = vmatpush1.bf16.msra.mxu0 %v5076
        %5219 = vmatprep.subr.bf16.mxu0 %v5069
        %5220 = vmatpush1.bf16.msra.mxu0 %v5068
        %5221 = vmatprep.subr.bf16.mxu0 %v5061
        %5222 = vmatpush1.bf16.msra.mxu0 %v5060
        %5223 = vmatprep.subr.bf16.mxu0 %v5053
        %5224 = vmatpush1.bf16.msra.mxu0 %v5052
        %5225 = vmatprep.subr.bf16.mxu0 %v5045
        %5226 = vmatpush1.bf16.msra.mxu0 %v5044
        %5227 = vmatprep.subr.bf16.mxu0 0
        %5228 = vmatpush2.bf16.msra.mxu0 0
        %5229 = vmatprep.subr.bf16.mxu0 0
        %5230 = vmatpush2.bf16.msra.mxu0 0
        %5231 = vmatprep.subr.bf16.mxu0 0
        %5232 = vmatpush2.bf16.msra.mxu0 0
        %5233 = vmatprep.subr.bf16.mxu0 0
        %5234 = vmatpush2.bf16.msra.mxu0 0
        %5235 = vmatprep.subr.bf16.mxu0 0
        %5236 = vmatpush2.bf16.msra.mxu0 0
        %5237 = vmatprep.subr.bf16.mxu0 0
        %5238 = vmatpush2.bf16.msra.mxu0 0
        %5239 = vmatprep.subr.bf16.mxu0 0
        %5240 = vmatpush2.bf16.msra.mxu0 0
        %5241 = vmatprep.subr.bf16.mxu0 0
        %5242 = vmatpush2.bf16.msra.mxu0 0
        %5243 = vmatprep.mubr.bf16.mxu0 0
        %5244 = vmatmul.mubr.bf16.gmra.mxu0 %v4743
        %v5245 = vpop.f32.mrf.mxu0
        %v5246 = vadd.f32 %v4821, %v5245
        %v5247 = vpop.f32.mrf.mxu0
        %v5248 = vadd.f32 %v4825, %v5247
        %v5249 = vpop.f32.mrf.mxu0
        %v5250 = vpop.f32.mrf.mxu0
        %5251 = vdwg.mxu0
        %5252 = vmatprep.subr.bf16.mxu0 %v5103
        %5253 = vmatpush1.bf16.msra.mxu0 %v5102
        %5254 = vmatprep.subr.bf16.mxu0 %v5095
        %5255 = vmatpush1.bf16.msra.mxu0 %v5094
        %5256 = vmatprep.subr.bf16.mxu0 %v5087
        %5257 = vmatpush1.bf16.msra.mxu0 %v5086
        %5258 = vmatprep.subr.bf16.mxu0 %v5079
        %5259 = vmatpush1.bf16.msra.mxu0 %v5078
        %5260 = vmatprep.subr.bf16.mxu0 %v5071
        %5261 = vmatpush1.bf16.msra.mxu0 %v5070
        %5262 = vmatprep.subr.bf16.mxu0 %v5063
        %5263 = vmatpush1.bf16.msra.mxu0 %v5062
        %5264 = vmatprep.subr.bf16.mxu0 %v5055
        %5265 = vmatpush1.bf16.msra.mxu0 %v5054
        %5266 = vmatprep.subr.bf16.mxu0 %v5047
        %5267 = vmatpush1.bf16.msra.mxu0 %v5046
        %5268 = vmatprep.subr.bf16.mxu0 0
        %5269 = vmatpush2.bf16.msra.mxu0 0
        %5270 = vmatprep.subr.bf16.mxu0 0
        %5271 = vmatpush2.bf16.msra.mxu0 0
        %5272 = vmatprep.subr.bf16.mxu0 0
        %5273 = vmatpush2.bf16.msra.mxu0 0
        %5274 = vmatprep.subr.bf16.mxu0 0
        %5275 = vmatpush2.bf16.msra.mxu0 0
        %5276 = vmatprep.subr.bf16.mxu0 0
        %5277 = vmatpush2.bf16.msra.mxu0 0
        %5278 = vmatprep.subr.bf16.mxu0 0
        %5279 = vmatpush2.bf16.msra.mxu0 0
        %5280 = vmatprep.subr.bf16.mxu0 0
        %5281 = vmatpush2.bf16.msra.mxu0 0
        %5282 = vmatprep.subr.bf16.mxu0 0
        %5283 = vmatpush2.bf16.msra.mxu0 0
        %5284 = vmatprep.mubr.bf16.mxu0 0
        %5285 = vmatmul.mubr.bf16.gmra.mxu0 %v4743
        %v5286 = vpop.f32.mrf.mxu0
        %v5287 = vadd.f32 %v4829, %v5286
        %v5288 = vpop.f32.mrf.mxu0
        %v5289 = vadd.f32 %v4833, %v5288
        %v5290 = vpop.f32.mrf.mxu0
        %v5291 = vpop.f32.mrf.mxu0
        %5292 = vdwg.mxu0
        %5293 = vmatprep.subr.bf16.mxu0 %v5105
        %5294 = vmatpush1.bf16.msra.mxu0 %v5104
        %5295 = vmatprep.subr.bf16.mxu0 %v5097
        %5296 = vmatpush1.bf16.msra.mxu0 %v5096
        %5297 = vmatprep.subr.bf16.mxu0 %v5089
        %5298 = vmatpush1.bf16.msra.mxu0 %v5088
        %5299 = vmatprep.subr.bf16.mxu0 %v5081
        %5300 = vmatpush1.bf16.msra.mxu0 %v5080
        %5301 = vmatprep.subr.bf16.mxu0 %v5073
        %5302 = vmatpush1.bf16.msra.mxu0 %v5072
        %5303 = vmatprep.subr.bf16.mxu0 %v5065
        %5304 = vmatpush1.bf16.msra.mxu0 %v5064
        %5305 = vmatprep.subr.bf16.mxu0 %v5057
        %5306 = vmatpush1.bf16.msra.mxu0 %v5056
        %5307 = vmatprep.subr.bf16.mxu0 %v5049
        %5308 = vmatpush1.bf16.msra.mxu0 %v5048
        %5309 = vmatprep.subr.bf16.mxu0 0
        %5310 = vmatpush2.bf16.msra.mxu0 0
        %5311 = vmatprep.subr.bf16.mxu0 0
        %5312 = vmatpush2.bf16.msra.mxu0 0
        %5313 = vmatprep.subr.bf16.mxu0 0
        %5314 = vmatpush2.bf16.msra.mxu0 0
        %5315 = vmatprep.subr.bf16.mxu0 0
        %5316 = vmatpush2.bf16.msra.mxu0 0
        %5317 = vmatprep.subr.bf16.mxu0 0
        %5318 = vmatpush2.bf16.msra.mxu0 0
        %5319 = vmatprep.subr.bf16.mxu0 0
        %5320 = vmatpush2.bf16.msra.mxu0 0
        %5321 = vmatprep.subr.bf16.mxu0 0
        %5322 = vmatpush2.bf16.msra.mxu0 0
        %5323 = vmatprep.subr.bf16.mxu0 0
        %5324 = vmatpush2.bf16.msra.mxu0 0
        %5325 = vmatprep.mubr.bf16.mxu0 0
        %5326 = vmatmul.mubr.bf16.gmra.mxu0 %v4743
        %v5327 = vpop.f32.mrf.mxu0
        %v5328 = vadd.f32 %v4837, %v5327
        %v5329 = vpop.f32.mrf.mxu0
        %v5330 = vadd.f32 %v4841, %v5329
        %v5331 = vpop.f32.mrf.mxu0
        %v5332 = vpop.f32.mrf.mxu0
        %5333 = vdwg.mxu0
        %v5334 = vmax.f32 %v5205, 0.0
        %v5335 = vmax.f32 %v5207, 0.0
        %v5336 = vmax.f32 %v5246, 0.0
        %v5337 = vmax.f32 %v5248, 0.0
        %v5338 = vmax.f32 %v5287, 0.0
        %v5339 = vmax.f32 %v5289, 0.0
        %v5340 = vmax.f32 %v5328, 0.0
        %v5341 = vmax.f32 %v5330, 0.0
        %v5342 = vpack.c.bf16 %v5334, %v5334
        %v5343 = vpack.c.bf16 %v5335, %v5335
        %v5344 = vpack.c.bf16 %v5336, %v5336
        %v5345 = vpack.c.bf16 %v5337, %v5337
        %v5346 = vpack.c.bf16 %v5338, %v5338
        %v5347 = vpack.c.bf16 %v5339, %v5339
        %v5348 = vpack.c.bf16 %v5340, %v5340
        %v5349 = vpack.c.bf16 %v5341, %v5341
        %v5350 = vld [vmem:[#allocation29] sm:$0xff]
        %v5351 = vld [vmem:[#allocation29 + $0x8] sm:$0xff]
        %v5352 = vld [vmem:[#allocation29 + $0x10] sm:$0xff]
        %v5353 = vld [vmem:[#allocation29 + $0x18] sm:$0xff]
        %v5354 = vld [vmem:[#allocation29 + $0x20] sm:$0xff]
        %v5355 = vld [vmem:[#allocation29 + $0x28] sm:$0xff]
        %v5356 = vld [vmem:[#allocation29 + $0x30] sm:$0xff]
        %v5357 = vld [vmem:[#allocation29 + $0x38] sm:$0xff]
        %v5358 = vld [vmem:[#allocation29 + $0x40] sm:$0xff]
        %v5359 = vld [vmem:[#allocation29 + $0x48] sm:$0xff]
        %v5360 = vld [vmem:[#allocation29 + $0x50] sm:$0xff]
        %v5361 = vld [vmem:[#allocation29 + $0x58] sm:$0xff]
        %v5362 = vld [vmem:[#allocation29 + $0x60] sm:$0xff]
        %v5363 = vld [vmem:[#allocation29 + $0x68] sm:$0xff]
        %v5364 = vld [vmem:[#allocation29 + $0x70] sm:$0xff]
        %v5365 = vld [vmem:[#allocation29 + $0x78] sm:$0xff]
        %v5366 = vld [vmem:[#allocation29 + $0x80] sm:$0xff]
        %v5367 = vld [vmem:[#allocation29 + $0x88] sm:$0xff]
        %v5368 = vld [vmem:[#allocation29 + $0x90] sm:$0xff]
        %v5369 = vld [vmem:[#allocation29 + $0x98] sm:$0xff]
        %v5370 = vld [vmem:[#allocation29 + $0xa0] sm:$0xff]
        %v5371 = vld [vmem:[#allocation29 + $0xa8] sm:$0xff]
        %v5372 = vld [vmem:[#allocation29 + $0xb0] sm:$0xff]
        %v5373 = vld [vmem:[#allocation29 + $0xb8] sm:$0xff]
        %v5374 = vld [vmem:[#allocation29 + $0xc0] sm:$0xff]
        %v5375 = vld [vmem:[#allocation29 + $0xc8] sm:$0xff]
        %v5376 = vld [vmem:[#allocation29 + $0xd0] sm:$0xff]
        %v5377 = vld [vmem:[#allocation29 + $0xd8] sm:$0xff]
        %v5378 = vld [vmem:[#allocation29 + $0xe0] sm:$0xff]
        %v5379 = vld [vmem:[#allocation29 + $0xe8] sm:$0xff]
        %v5380 = vld [vmem:[#allocation29 + $0xf0] sm:$0xff]
        %v5381 = vld [vmem:[#allocation29 + $0xf8] sm:$0xff]
        %v5382 = vld [vmem:[#allocation29 + $0x100] sm:$0xff]
        %v5383 = vld [vmem:[#allocation29 + $0x108] sm:$0xff]
        %v5384 = vld [vmem:[#allocation29 + $0x110] sm:$0xff]
        %v5385 = vld [vmem:[#allocation29 + $0x118] sm:$0xff]
        %v5386 = vld [vmem:[#allocation29 + $0x120] sm:$0xff]
        %v5387 = vld [vmem:[#allocation29 + $0x128] sm:$0xff]
        %v5388 = vld [vmem:[#allocation29 + $0x130] sm:$0xff]
        %v5389 = vld [vmem:[#allocation29 + $0x138] sm:$0xff]
        %v5390 = vld [vmem:[#allocation29 + $0x140] sm:$0xff]
        %v5391 = vld [vmem:[#allocation29 + $0x148] sm:$0xff]
        %v5392 = vld [vmem:[#allocation29 + $0x150] sm:$0xff]
        %v5393 = vld [vmem:[#allocation29 + $0x158] sm:$0xff]
        %v5394 = vld [vmem:[#allocation29 + $0x160] sm:$0xff]
        %v5395 = vld [vmem:[#allocation29 + $0x168] sm:$0xff]
        %v5396 = vld [vmem:[#allocation29 + $0x170] sm:$0xff]
        %v5397 = vld [vmem:[#allocation29 + $0x178] sm:$0xff]
        %v5398 = vld [vmem:[#allocation29 + $0x180] sm:$0xff]
        %v5399 = vld [vmem:[#allocation29 + $0x188] sm:$0xff]
        %v5400 = vld [vmem:[#allocation29 + $0x190] sm:$0xff]
        %v5401 = vld [vmem:[#allocation29 + $0x198] sm:$0xff]
        %v5402 = vld [vmem:[#allocation29 + $0x1a0] sm:$0xff]
        %v5403 = vld [vmem:[#allocation29 + $0x1a8] sm:$0xff]
        %v5404 = vld [vmem:[#allocation29 + $0x1b0] sm:$0xff]
        %v5405 = vld [vmem:[#allocation29 + $0x1b8] sm:$0xff]
        %v5406 = vld [vmem:[#allocation29 + $0x1c0] sm:$0xff]
        %v5407 = vld [vmem:[#allocation29 + $0x1c8] sm:$0xff]
        %v5408 = vld [vmem:[#allocation29 + $0x1d0] sm:$0xff]
        %v5409 = vld [vmem:[#allocation29 + $0x1d8] sm:$0xff]
        %v5410 = vld [vmem:[#allocation29 + $0x1e0] sm:$0xff]
        %v5411 = vld [vmem:[#allocation29 + $0x1e8] sm:$0xff]
        %v5412 = vld [vmem:[#allocation29 + $0x1f0] sm:$0xff]
        %v5413 = vld [vmem:[#allocation29 + $0x1f8] sm:$0xff]
        %v5414 = vld [vmem:[#allocation29 + $0x200] sm:$0xff]
        %v5415 = vld [vmem:[#allocation29 + $0x208] sm:$0xff]
        %v5416 = vld [vmem:[#allocation29 + $0x210] sm:$0xff]
        %v5417 = vld [vmem:[#allocation29 + $0x218] sm:$0xff]
        %v5418 = vld [vmem:[#allocation29 + $0x220] sm:$0xff]
        %v5419 = vld [vmem:[#allocation29 + $0x228] sm:$0xff]
        %v5420 = vld [vmem:[#allocation29 + $0x230] sm:$0xff]
        %v5421 = vld [vmem:[#allocation29 + $0x238] sm:$0xff]
        %v5422 = vld [vmem:[#allocation29 + $0x240] sm:$0xff]
        %v5423 = vld [vmem:[#allocation29 + $0x248] sm:$0xff]
        %v5424 = vld [vmem:[#allocation29 + $0x250] sm:$0xff]
        %v5425 = vld [vmem:[#allocation29 + $0x258] sm:$0xff]
        %v5426 = vld [vmem:[#allocation29 + $0x260] sm:$0xff]
        %v5427 = vld [vmem:[#allocation29 + $0x268] sm:$0xff]
        %v5428 = vld [vmem:[#allocation29 + $0x270] sm:$0xff]
        %v5429 = vld [vmem:[#allocation29 + $0x278] sm:$0xff]
        %v5430 = vld [vmem:[#allocation29 + $0x280] sm:$0xff]
        %v5431 = vld [vmem:[#allocation29 + $0x288] sm:$0xff]
        %v5432 = vld [vmem:[#allocation29 + $0x290] sm:$0xff]
        %v5433 = vld [vmem:[#allocation29 + $0x298] sm:$0xff]
        %v5434 = vld [vmem:[#allocation29 + $0x2a0] sm:$0xff]
        %v5435 = vld [vmem:[#allocation29 + $0x2a8] sm:$0xff]
        %v5436 = vld [vmem:[#allocation29 + $0x2b0] sm:$0xff]
        %v5437 = vld [vmem:[#allocation29 + $0x2b8] sm:$0xff]
        %v5438 = vld [vmem:[#allocation29 + $0x2c0] sm:$0xff]
        %v5439 = vld [vmem:[#allocation29 + $0x2c8] sm:$0xff]
        %v5440 = vld [vmem:[#allocation29 + $0x2d0] sm:$0xff]
        %v5441 = vld [vmem:[#allocation29 + $0x2d8] sm:$0xff]
        %v5442 = vld [vmem:[#allocation29 + $0x2e0] sm:$0xff]
        %v5443 = vld [vmem:[#allocation29 + $0x2e8] sm:$0xff]
        %v5444 = vld [vmem:[#allocation29 + $0x2f0] sm:$0xff]
        %v5445 = vld [vmem:[#allocation29 + $0x2f8] sm:$0xff]
        %v5446 = vld [vmem:[#allocation29 + $0x300] sm:$0xff]
        %v5447 = vld [vmem:[#allocation29 + $0x308] sm:$0xff]
        %v5448 = vld [vmem:[#allocation29 + $0x310] sm:$0xff]
        %v5449 = vld [vmem:[#allocation29 + $0x318] sm:$0xff]
        %v5450 = vld [vmem:[#allocation29 + $0x320] sm:$0xff]
        %v5451 = vld [vmem:[#allocation29 + $0x328] sm:$0xff]
        %v5452 = vld [vmem:[#allocation29 + $0x330] sm:$0xff]
        %v5453 = vld [vmem:[#allocation29 + $0x338] sm:$0xff]
        %v5454 = vld [vmem:[#allocation29 + $0x340] sm:$0xff]
        %v5455 = vld [vmem:[#allocation29 + $0x348] sm:$0xff]
        %v5456 = vld [vmem:[#allocation29 + $0x350] sm:$0xff]
        %v5457 = vld [vmem:[#allocation29 + $0x358] sm:$0xff]
        %v5458 = vld [vmem:[#allocation29 + $0x360] sm:$0xff]
        %v5459 = vld [vmem:[#allocation29 + $0x368] sm:$0xff]
        %v5460 = vld [vmem:[#allocation29 + $0x370] sm:$0xff]
        %v5461 = vld [vmem:[#allocation29 + $0x378] sm:$0xff]
        %v5462 = vld [vmem:[#allocation29 + $0x380] sm:$0xff]
        %v5463 = vld [vmem:[#allocation29 + $0x388] sm:$0xff]
        %v5464 = vld [vmem:[#allocation29 + $0x390] sm:$0xff]
        %v5465 = vld [vmem:[#allocation29 + $0x398] sm:$0xff]
        %v5466 = vld [vmem:[#allocation29 + $0x3a0] sm:$0xff]
        %v5467 = vld [vmem:[#allocation29 + $0x3a8] sm:$0xff]
        %v5468 = vld [vmem:[#allocation29 + $0x3b0] sm:$0xff]
        %v5469 = vld [vmem:[#allocation29 + $0x3b8] sm:$0xff]
        %v5470 = vld [vmem:[#allocation29 + $0x3c0] sm:$0xff]
        %v5471 = vld [vmem:[#allocation29 + $0x3c8] sm:$0xff]
        %v5472 = vld [vmem:[#allocation29 + $0x3d0] sm:$0xff]
        %v5473 = vld [vmem:[#allocation29 + $0x3d8] sm:$0xff]
        %v5474 = vld [vmem:[#allocation29 + $0x3e0] sm:$0xff]
        %v5475 = vld [vmem:[#allocation29 + $0x3e8] sm:$0xff]
        %v5476 = vld [vmem:[#allocation29 + $0x3f0] sm:$0xff]
        %v5477 = vld [vmem:[#allocation29 + $0x3f8] sm:$0xff]
        %v5478 = vld [vmem:[#allocation29 + $0x400] sm:$0xff]
        %v5479 = vld [vmem:[#allocation29 + $0x408] sm:$0xff]
        %v5480 = vld [vmem:[#allocation29 + $0x410] sm:$0xff]
        %v5481 = vld [vmem:[#allocation29 + $0x418] sm:$0xff]
        %v5482 = vld [vmem:[#allocation29 + $0x420] sm:$0xff]
        %v5483 = vld [vmem:[#allocation29 + $0x428] sm:$0xff]
        %v5484 = vld [vmem:[#allocation29 + $0x430] sm:$0xff]
        %v5485 = vld [vmem:[#allocation29 + $0x438] sm:$0xff]
        %v5486 = vld [vmem:[#allocation29 + $0x440] sm:$0xff]
        %v5487 = vld [vmem:[#allocation29 + $0x448] sm:$0xff]
        %v5488 = vld [vmem:[#allocation29 + $0x450] sm:$0xff]
        %v5489 = vld [vmem:[#allocation29 + $0x458] sm:$0xff]
        %v5490 = vld [vmem:[#allocation29 + $0x460] sm:$0xff]
        %v5491 = vld [vmem:[#allocation29 + $0x468] sm:$0xff]
        %v5492 = vld [vmem:[#allocation29 + $0x470] sm:$0xff]
        %v5493 = vld [vmem:[#allocation29 + $0x478] sm:$0xff]
        %v5494 = vld [vmem:[#allocation29 + $0x480] sm:$0xff]
        %v5495 = vld [vmem:[#allocation29 + $0x488] sm:$0xff]
        %v5496 = vld [vmem:[#allocation29 + $0x490] sm:$0xff]
        %v5497 = vld [vmem:[#allocation29 + $0x498] sm:$0xff]
        %v5498 = vld [vmem:[#allocation29 + $0x4a0] sm:$0xff]
        %v5499 = vld [vmem:[#allocation29 + $0x4a8] sm:$0xff]
        %v5500 = vld [vmem:[#allocation29 + $0x4b0] sm:$0xff]
        %v5501 = vld [vmem:[#allocation29 + $0x4b8] sm:$0xff]
        %v5502 = vld [vmem:[#allocation29 + $0x4c0] sm:$0xff]
        %v5503 = vld [vmem:[#allocation29 + $0x4c8] sm:$0xff]
        %v5504 = vld [vmem:[#allocation29 + $0x4d0] sm:$0xff]
        %v5505 = vld [vmem:[#allocation29 + $0x4d8] sm:$0xff]
        %v5506 = vld [vmem:[#allocation29 + $0x4e0] sm:$0xff]
        %v5507 = vld [vmem:[#allocation29 + $0x4e8] sm:$0xff]
        %v5508 = vld [vmem:[#allocation29 + $0x4f0] sm:$0xff]
        %v5509 = vld [vmem:[#allocation29 + $0x4f8] sm:$0xff]
        %v5510 = vld [vmem:[#allocation29 + $0x500] sm:$0xff]
        %v5511 = vld [vmem:[#allocation29 + $0x508] sm:$0xff]
        %v5512 = vld [vmem:[#allocation29 + $0x510] sm:$0xff]
        %v5513 = vld [vmem:[#allocation29 + $0x518] sm:$0xff]
        %v5514 = vld [vmem:[#allocation29 + $0x520] sm:$0xff]
        %v5515 = vld [vmem:[#allocation29 + $0x528] sm:$0xff]
        %v5516 = vld [vmem:[#allocation29 + $0x530] sm:$0xff]
        %v5517 = vld [vmem:[#allocation29 + $0x538] sm:$0xff]
        %v5518 = vld [vmem:[#allocation29 + $0x540] sm:$0xff]
        %v5519 = vld [vmem:[#allocation29 + $0x548] sm:$0xff]
        %v5520 = vld [vmem:[#allocation29 + $0x550] sm:$0xff]
        %v5521 = vld [vmem:[#allocation29 + $0x558] sm:$0xff]
        %v5522 = vld [vmem:[#allocation29 + $0x560] sm:$0xff]
        %v5523 = vld [vmem:[#allocation29 + $0x568] sm:$0xff]
        %v5524 = vld [vmem:[#allocation29 + $0x570] sm:$0xff]
        %v5525 = vld [vmem:[#allocation29 + $0x578] sm:$0xff]
        %v5526 = vld [vmem:[#allocation29 + $0x580] sm:$0xff]
        %v5527 = vld [vmem:[#allocation29 + $0x588] sm:$0xff]
        %v5528 = vld [vmem:[#allocation29 + $0x590] sm:$0xff]
        %v5529 = vld [vmem:[#allocation29 + $0x598] sm:$0xff]
        %v5530 = vld [vmem:[#allocation29 + $0x5a0] sm:$0xff]
        %v5531 = vld [vmem:[#allocation29 + $0x5a8] sm:$0xff]
        %v5532 = vld [vmem:[#allocation29 + $0x5b0] sm:$0xff]
        %v5533 = vld [vmem:[#allocation29 + $0x5b8] sm:$0xff]
        %v5534 = vld [vmem:[#allocation29 + $0x5c0] sm:$0xff]
        %v5535 = vld [vmem:[#allocation29 + $0x5c8] sm:$0xff]
        %v5536 = vld [vmem:[#allocation29 + $0x5d0] sm:$0xff]
        %v5537 = vld [vmem:[#allocation29 + $0x5d8] sm:$0xff]
        %v5538 = vld [vmem:[#allocation29 + $0x5e0] sm:$0xff]
        %v5539 = vld [vmem:[#allocation29 + $0x5e8] sm:$0xff]
        %v5540 = vld [vmem:[#allocation29 + $0x5f0] sm:$0xff]
        %v5541 = vld [vmem:[#allocation29 + $0x5f8] sm:$0xff]
        %v5542 = vld [vmem:[#allocation29 + $0x600] sm:$0xff]
        %v5543 = vld [vmem:[#allocation29 + $0x608] sm:$0xff]
        %v5544 = vld [vmem:[#allocation29 + $0x610] sm:$0xff]
        %v5545 = vld [vmem:[#allocation29 + $0x618] sm:$0xff]
        %v5546 = vld [vmem:[#allocation29 + $0x620] sm:$0xff]
        %v5547 = vld [vmem:[#allocation29 + $0x628] sm:$0xff]
        %v5548 = vld [vmem:[#allocation29 + $0x630] sm:$0xff]
        %v5549 = vld [vmem:[#allocation29 + $0x638] sm:$0xff]
        %v5550 = vld [vmem:[#allocation29 + $0x640] sm:$0xff]
        %v5551 = vld [vmem:[#allocation29 + $0x648] sm:$0xff]
        %v5552 = vld [vmem:[#allocation29 + $0x650] sm:$0xff]
        %v5553 = vld [vmem:[#allocation29 + $0x658] sm:$0xff]
        %v5554 = vld [vmem:[#allocation29 + $0x660] sm:$0xff]
        %v5555 = vld [vmem:[#allocation29 + $0x668] sm:$0xff]
        %v5556 = vld [vmem:[#allocation29 + $0x670] sm:$0xff]
        %v5557 = vld [vmem:[#allocation29 + $0x678] sm:$0xff]
        %v5558 = vld [vmem:[#allocation29 + $0x680] sm:$0xff]
        %v5559 = vld [vmem:[#allocation29 + $0x688] sm:$0xff]
        %v5560 = vld [vmem:[#allocation29 + $0x690] sm:$0xff]
        %v5561 = vld [vmem:[#allocation29 + $0x698] sm:$0xff]
        %v5562 = vld [vmem:[#allocation29 + $0x6a0] sm:$0xff]
        %v5563 = vld [vmem:[#allocation29 + $0x6a8] sm:$0xff]
        %v5564 = vld [vmem:[#allocation29 + $0x6b0] sm:$0xff]
        %v5565 = vld [vmem:[#allocation29 + $0x6b8] sm:$0xff]
        %v5566 = vld [vmem:[#allocation29 + $0x6c0] sm:$0xff]
        %v5567 = vld [vmem:[#allocation29 + $0x6c8] sm:$0xff]
        %v5568 = vld [vmem:[#allocation29 + $0x6d0] sm:$0xff]
        %v5569 = vld [vmem:[#allocation29 + $0x6d8] sm:$0xff]
        %v5570 = vld [vmem:[#allocation29 + $0x6e0] sm:$0xff]
        %v5571 = vld [vmem:[#allocation29 + $0x6e8] sm:$0xff]
        %v5572 = vld [vmem:[#allocation29 + $0x6f0] sm:$0xff]
        %v5573 = vld [vmem:[#allocation29 + $0x6f8] sm:$0xff]
        %v5574 = vld [vmem:[#allocation29 + $0x700] sm:$0xff]
        %v5575 = vld [vmem:[#allocation29 + $0x708] sm:$0xff]
        %v5576 = vld [vmem:[#allocation29 + $0x710] sm:$0xff]
        %v5577 = vld [vmem:[#allocation29 + $0x718] sm:$0xff]
        %v5578 = vld [vmem:[#allocation29 + $0x720] sm:$0xff]
        %v5579 = vld [vmem:[#allocation29 + $0x728] sm:$0xff]
        %v5580 = vld [vmem:[#allocation29 + $0x730] sm:$0xff]
        %v5581 = vld [vmem:[#allocation29 + $0x738] sm:$0xff]
        %v5582 = vld [vmem:[#allocation29 + $0x740] sm:$0xff]
        %v5583 = vld [vmem:[#allocation29 + $0x748] sm:$0xff]
        %v5584 = vld [vmem:[#allocation29 + $0x750] sm:$0xff]
        %v5585 = vld [vmem:[#allocation29 + $0x758] sm:$0xff]
        %v5586 = vld [vmem:[#allocation29 + $0x760] sm:$0xff]
        %v5587 = vld [vmem:[#allocation29 + $0x768] sm:$0xff]
        %v5588 = vld [vmem:[#allocation29 + $0x770] sm:$0xff]
        %v5589 = vld [vmem:[#allocation29 + $0x778] sm:$0xff]
        %v5590 = vld [vmem:[#allocation29 + $0x780] sm:$0xff]
        %v5591 = vld [vmem:[#allocation29 + $0x788] sm:$0xff]
        %v5592 = vld [vmem:[#allocation29 + $0x790] sm:$0xff]
        %v5593 = vld [vmem:[#allocation29 + $0x798] sm:$0xff]
        %v5594 = vld [vmem:[#allocation29 + $0x7a0] sm:$0xff]
        %v5595 = vld [vmem:[#allocation29 + $0x7a8] sm:$0xff]
        %v5596 = vld [vmem:[#allocation29 + $0x7b0] sm:$0xff]
        %v5597 = vld [vmem:[#allocation29 + $0x7b8] sm:$0xff]
        %v5598 = vld [vmem:[#allocation29 + $0x7c0] sm:$0xff]
        %v5599 = vld [vmem:[#allocation29 + $0x7c8] sm:$0xff]
        %v5600 = vld [vmem:[#allocation29 + $0x7d0] sm:$0xff]
        %v5601 = vld [vmem:[#allocation29 + $0x7d8] sm:$0xff]
        %v5602 = vld [vmem:[#allocation29 + $0x7e0] sm:$0xff]
        %v5603 = vld [vmem:[#allocation29 + $0x7e8] sm:$0xff]
        %v5604 = vld [vmem:[#allocation29 + $0x7f0] sm:$0xff]
        %v5605 = vld [vmem:[#allocation29 + $0x7f8] sm:$0xff]
        %v5606 = vld [vmem:[#allocation30] sm:$0xf]
        %v5608 = vlaneseq
        %v5609 = vshrl.u32 %v5608, 7
        %v5610 = vsub.s32 0, %v5609
        %v5611 = vrot.slane %v5606, %v5610
        %v5612 = vlaneseq
        %v5613 = vshrl.u32 %v5612, 7
        %v5614 = vsub.s32 1, %v5613
        %v5615 = vrot.slane %v5606, %v5614
        %v5616 = vlaneseq
        %v5617 = vshrl.u32 %v5616, 7
        %v5618 = vsub.s32 2, %v5617
        %v5619 = vrot.slane %v5606, %v5618
        %v5620 = vlaneseq
        %v5621 = vshrl.u32 %v5620, 7
        %v5622 = vsub.s32 3, %v5621
        %v5623 = vrot.slane %v5606, %v5622
        %v5884 = vunpack.c.l.b16 %v5350
        %v5885 = vunpack.c.h.b16 %v5350
        %v5886 = vunpack.c.l.b16 %v5351
        %v5887 = vunpack.c.h.b16 %v5351
        %v5888 = vunpack.c.l.b16 %v5352
        %v5889 = vunpack.c.h.b16 %v5352
        %v5890 = vunpack.c.l.b16 %v5353
        %v5891 = vunpack.c.h.b16 %v5353
        %v5892 = vunpack.c.l.b16 %v5354
        %v5893 = vunpack.c.h.b16 %v5354
        %v5894 = vunpack.c.l.b16 %v5355
        %v5895 = vunpack.c.h.b16 %v5355
        %v5896 = vunpack.c.l.b16 %v5356
        %v5897 = vunpack.c.h.b16 %v5356
        %v5898 = vunpack.c.l.b16 %v5357
        %v5899 = vunpack.c.h.b16 %v5357
        %v5900 = vunpack.c.l.b16 %v5358
        %v5901 = vunpack.c.h.b16 %v5358
        %v5902 = vunpack.c.l.b16 %v5359
        %v5903 = vunpack.c.h.b16 %v5359
        %v5904 = vunpack.c.l.b16 %v5360
        %v5905 = vunpack.c.h.b16 %v5360
        %v5906 = vunpack.c.l.b16 %v5361
        %v5907 = vunpack.c.h.b16 %v5361
        %v5908 = vunpack.c.l.b16 %v5362
        %v5909 = vunpack.c.h.b16 %v5362
        %v5910 = vunpack.c.l.b16 %v5363
        %v5911 = vunpack.c.h.b16 %v5363
        %v5912 = vunpack.c.l.b16 %v5364
        %v5913 = vunpack.c.h.b16 %v5364
        %v5914 = vunpack.c.l.b16 %v5365
        %v5915 = vunpack.c.h.b16 %v5365
        %v5916 = vunpack.c.l.b16 %v5366
        %v5917 = vunpack.c.h.b16 %v5366
        %v5918 = vunpack.c.l.b16 %v5367
        %v5919 = vunpack.c.h.b16 %v5367
        %v5920 = vunpack.c.l.b16 %v5368
        %v5921 = vunpack.c.h.b16 %v5368
        %v5922 = vunpack.c.l.b16 %v5369
        %v5923 = vunpack.c.h.b16 %v5369
        %v5924 = vunpack.c.l.b16 %v5370
        %v5925 = vunpack.c.h.b16 %v5370
        %v5926 = vunpack.c.l.b16 %v5371
        %v5927 = vunpack.c.h.b16 %v5371
        %v5928 = vunpack.c.l.b16 %v5372
        %v5929 = vunpack.c.h.b16 %v5372
        %v5930 = vunpack.c.l.b16 %v5373
        %v5931 = vunpack.c.h.b16 %v5373
        %v5932 = vunpack.c.l.b16 %v5374
        %v5933 = vunpack.c.h.b16 %v5374
        %v5934 = vunpack.c.l.b16 %v5375
        %v5935 = vunpack.c.h.b16 %v5375
        %v5936 = vunpack.c.l.b16 %v5376
        %v5937 = vunpack.c.h.b16 %v5376
        %v5938 = vunpack.c.l.b16 %v5377
        %v5939 = vunpack.c.h.b16 %v5377
        %v5940 = vunpack.c.l.b16 %v5378
        %v5941 = vunpack.c.h.b16 %v5378
        %v5942 = vunpack.c.l.b16 %v5379
        %v5943 = vunpack.c.h.b16 %v5379
        %v5944 = vunpack.c.l.b16 %v5380
        %v5945 = vunpack.c.h.b16 %v5380
        %v5946 = vunpack.c.l.b16 %v5381
        %v5947 = vunpack.c.h.b16 %v5381
        %v5948 = vunpack.c.l.b16 %v5382
        %v5949 = vunpack.c.h.b16 %v5382
        %v5950 = vunpack.c.l.b16 %v5383
        %v5951 = vunpack.c.h.b16 %v5383
        %v5952 = vunpack.c.l.b16 %v5384
        %v5953 = vunpack.c.h.b16 %v5384
        %v5954 = vunpack.c.l.b16 %v5385
        %v5955 = vunpack.c.h.b16 %v5385
        %v5956 = vunpack.c.l.b16 %v5386
        %v5957 = vunpack.c.h.b16 %v5386
        %v5958 = vunpack.c.l.b16 %v5387
        %v5959 = vunpack.c.h.b16 %v5387
        %v5960 = vunpack.c.l.b16 %v5388
        %v5961 = vunpack.c.h.b16 %v5388
        %v5962 = vunpack.c.l.b16 %v5389
        %v5963 = vunpack.c.h.b16 %v5389
        %v5964 = vunpack.c.l.b16 %v5390
        %v5965 = vunpack.c.h.b16 %v5390
        %v5966 = vunpack.c.l.b16 %v5391
        %v5967 = vunpack.c.h.b16 %v5391
        %v5968 = vunpack.c.l.b16 %v5392
        %v5969 = vunpack.c.h.b16 %v5392
        %v5970 = vunpack.c.l.b16 %v5393
        %v5971 = vunpack.c.h.b16 %v5393
        %v5972 = vunpack.c.l.b16 %v5394
        %v5973 = vunpack.c.h.b16 %v5394
        %v5974 = vunpack.c.l.b16 %v5395
        %v5975 = vunpack.c.h.b16 %v5395
        %v5976 = vunpack.c.l.b16 %v5396
        %v5977 = vunpack.c.h.b16 %v5396
        %v5978 = vunpack.c.l.b16 %v5397
        %v5979 = vunpack.c.h.b16 %v5397
        %v5980 = vunpack.c.l.b16 %v5398
        %v5981 = vunpack.c.h.b16 %v5398
        %v5982 = vunpack.c.l.b16 %v5399
        %v5983 = vunpack.c.h.b16 %v5399
        %v5984 = vunpack.c.l.b16 %v5400
        %v5985 = vunpack.c.h.b16 %v5400
        %v5986 = vunpack.c.l.b16 %v5401
        %v5987 = vunpack.c.h.b16 %v5401
        %v5988 = vunpack.c.l.b16 %v5402
        %v5989 = vunpack.c.h.b16 %v5402
        %v5990 = vunpack.c.l.b16 %v5403
        %v5991 = vunpack.c.h.b16 %v5403
        %v5992 = vunpack.c.l.b16 %v5404
        %v5993 = vunpack.c.h.b16 %v5404
        %v5994 = vunpack.c.l.b16 %v5405
        %v5995 = vunpack.c.h.b16 %v5405
        %v5996 = vunpack.c.l.b16 %v5406
        %v5997 = vunpack.c.h.b16 %v5406
        %v5998 = vunpack.c.l.b16 %v5407
        %v5999 = vunpack.c.h.b16 %v5407
        %v6000 = vunpack.c.l.b16 %v5408
        %v6001 = vunpack.c.h.b16 %v5408
        %v6002 = vunpack.c.l.b16 %v5409
        %v6003 = vunpack.c.h.b16 %v5409
        %v6004 = vunpack.c.l.b16 %v5410
        %v6005 = vunpack.c.h.b16 %v5410
        %v6006 = vunpack.c.l.b16 %v5411
        %v6007 = vunpack.c.h.b16 %v5411
        %v6008 = vunpack.c.l.b16 %v5412
        %v6009 = vunpack.c.h.b16 %v5412
        %v6010 = vunpack.c.l.b16 %v5413
        %v6011 = vunpack.c.h.b16 %v5413
        %v6012 = vunpack.c.l.b16 %v5414
        %v6013 = vunpack.c.h.b16 %v5414
        %v6014 = vunpack.c.l.b16 %v5415
        %v6015 = vunpack.c.h.b16 %v5415
        %v6016 = vunpack.c.l.b16 %v5416
        %v6017 = vunpack.c.h.b16 %v5416
        %v6018 = vunpack.c.l.b16 %v5417
        %v6019 = vunpack.c.h.b16 %v5417
        %v6020 = vunpack.c.l.b16 %v5418
        %v6021 = vunpack.c.h.b16 %v5418
        %v6022 = vunpack.c.l.b16 %v5419
        %v6023 = vunpack.c.h.b16 %v5419
        %v6024 = vunpack.c.l.b16 %v5420
        %v6025 = vunpack.c.h.b16 %v5420
        %v6026 = vunpack.c.l.b16 %v5421
        %v6027 = vunpack.c.h.b16 %v5421
        %v6028 = vunpack.c.l.b16 %v5422
        %v6029 = vunpack.c.h.b16 %v5422
        %v6030 = vunpack.c.l.b16 %v5423
        %v6031 = vunpack.c.h.b16 %v5423
        %v6032 = vunpack.c.l.b16 %v5424
        %v6033 = vunpack.c.h.b16 %v5424
        %v6034 = vunpack.c.l.b16 %v5425
        %v6035 = vunpack.c.h.b16 %v5425
        %v6036 = vunpack.c.l.b16 %v5426
        %v6037 = vunpack.c.h.b16 %v5426
        %v6038 = vunpack.c.l.b16 %v5427
        %v6039 = vunpack.c.h.b16 %v5427
        %v6040 = vunpack.c.l.b16 %v5428
        %v6041 = vunpack.c.h.b16 %v5428
        %v6042 = vunpack.c.l.b16 %v5429
        %v6043 = vunpack.c.h.b16 %v5429
        %v6044 = vunpack.c.l.b16 %v5430
        %v6045 = vunpack.c.h.b16 %v5430
        %v6046 = vunpack.c.l.b16 %v5431
        %v6047 = vunpack.c.h.b16 %v5431
        %v6048 = vunpack.c.l.b16 %v5432
        %v6049 = vunpack.c.h.b16 %v5432
        %v6050 = vunpack.c.l.b16 %v5433
        %v6051 = vunpack.c.h.b16 %v5433
        %v6052 = vunpack.c.l.b16 %v5434
        %v6053 = vunpack.c.h.b16 %v5434
        %v6054 = vunpack.c.l.b16 %v5435
        %v6055 = vunpack.c.h.b16 %v5435
        %v6056 = vunpack.c.l.b16 %v5436
        %v6057 = vunpack.c.h.b16 %v5436
        %v6058 = vunpack.c.l.b16 %v5437
        %v6059 = vunpack.c.h.b16 %v5437
        %v6060 = vunpack.c.l.b16 %v5438
        %v6061 = vunpack.c.h.b16 %v5438
        %v6062 = vunpack.c.l.b16 %v5439
        %v6063 = vunpack.c.h.b16 %v5439
        %v6064 = vunpack.c.l.b16 %v5440
        %v6065 = vunpack.c.h.b16 %v5440
        %v6066 = vunpack.c.l.b16 %v5441
        %v6067 = vunpack.c.h.b16 %v5441
        %v6068 = vunpack.c.l.b16 %v5442
        %v6069 = vunpack.c.h.b16 %v5442
        %v6070 = vunpack.c.l.b16 %v5443
        %v6071 = vunpack.c.h.b16 %v5443
        %v6072 = vunpack.c.l.b16 %v5444
        %v6073 = vunpack.c.h.b16 %v5444
        %v6074 = vunpack.c.l.b16 %v5445
        %v6075 = vunpack.c.h.b16 %v5445
        %v6076 = vunpack.c.l.b16 %v5446
        %v6077 = vunpack.c.h.b16 %v5446
        %v6078 = vunpack.c.l.b16 %v5447
        %v6079 = vunpack.c.h.b16 %v5447
        %v6080 = vunpack.c.l.b16 %v5448
        %v6081 = vunpack.c.h.b16 %v5448
        %v6082 = vunpack.c.l.b16 %v5449
        %v6083 = vunpack.c.h.b16 %v5449
        %v6084 = vunpack.c.l.b16 %v5450
        %v6085 = vunpack.c.h.b16 %v5450
        %v6086 = vunpack.c.l.b16 %v5451
        %v6087 = vunpack.c.h.b16 %v5451
        %v6088 = vunpack.c.l.b16 %v5452
        %v6089 = vunpack.c.h.b16 %v5452
        %v6090 = vunpack.c.l.b16 %v5453
        %v6091 = vunpack.c.h.b16 %v5453
        %v6092 = vunpack.c.l.b16 %v5454
        %v6093 = vunpack.c.h.b16 %v5454
        %v6094 = vunpack.c.l.b16 %v5455
        %v6095 = vunpack.c.h.b16 %v5455
        %v6096 = vunpack.c.l.b16 %v5456
        %v6097 = vunpack.c.h.b16 %v5456
        %v6098 = vunpack.c.l.b16 %v5457
        %v6099 = vunpack.c.h.b16 %v5457
        %v6100 = vunpack.c.l.b16 %v5458
        %v6101 = vunpack.c.h.b16 %v5458
        %v6102 = vunpack.c.l.b16 %v5459
        %v6103 = vunpack.c.h.b16 %v5459
        %v6104 = vunpack.c.l.b16 %v5460
        %v6105 = vunpack.c.h.b16 %v5460
        %v6106 = vunpack.c.l.b16 %v5461
        %v6107 = vunpack.c.h.b16 %v5461
        %v6108 = vunpack.c.l.b16 %v5462
        %v6109 = vunpack.c.h.b16 %v5462
        %v6110 = vunpack.c.l.b16 %v5463
        %v6111 = vunpack.c.h.b16 %v5463
        %v6112 = vunpack.c.l.b16 %v5464
        %v6113 = vunpack.c.h.b16 %v5464
        %v6114 = vunpack.c.l.b16 %v5465
        %v6115 = vunpack.c.h.b16 %v5465
        %v6116 = vunpack.c.l.b16 %v5466
        %v6117 = vunpack.c.h.b16 %v5466
        %v6118 = vunpack.c.l.b16 %v5467
        %v6119 = vunpack.c.h.b16 %v5467
        %v6120 = vunpack.c.l.b16 %v5468
        %v6121 = vunpack.c.h.b16 %v5468
        %v6122 = vunpack.c.l.b16 %v5469
        %v6123 = vunpack.c.h.b16 %v5469
        %v6124 = vunpack.c.l.b16 %v5470
        %v6125 = vunpack.c.h.b16 %v5470
        %v6126 = vunpack.c.l.b16 %v5471
        %v6127 = vunpack.c.h.b16 %v5471
        %v6128 = vunpack.c.l.b16 %v5472
        %v6129 = vunpack.c.h.b16 %v5472
        %v6130 = vunpack.c.l.b16 %v5473
        %v6131 = vunpack.c.h.b16 %v5473
        %v6132 = vunpack.c.l.b16 %v5474
        %v6133 = vunpack.c.h.b16 %v5474
        %v6134 = vunpack.c.l.b16 %v5475
        %v6135 = vunpack.c.h.b16 %v5475
        %v6136 = vunpack.c.l.b16 %v5476
        %v6137 = vunpack.c.h.b16 %v5476
        %v6138 = vunpack.c.l.b16 %v5477
        %v6139 = vunpack.c.h.b16 %v5477
        %v6140 = vunpack.c.l.b16 %v5478
        %v6141 = vunpack.c.h.b16 %v5478
        %v6142 = vunpack.c.l.b16 %v5479
        %v6143 = vunpack.c.h.b16 %v5479
        %v6144 = vunpack.c.l.b16 %v5480
        %v6145 = vunpack.c.h.b16 %v5480
        %v6146 = vunpack.c.l.b16 %v5481
        %v6147 = vunpack.c.h.b16 %v5481
        %v6148 = vunpack.c.l.b16 %v5482
        %v6149 = vunpack.c.h.b16 %v5482
        %v6150 = vunpack.c.l.b16 %v5483
        %v6151 = vunpack.c.h.b16 %v5483
        %v6152 = vunpack.c.l.b16 %v5484
        %v6153 = vunpack.c.h.b16 %v5484
        %v6154 = vunpack.c.l.b16 %v5485
        %v6155 = vunpack.c.h.b16 %v5485
        %v6156 = vunpack.c.l.b16 %v5486
        %v6157 = vunpack.c.h.b16 %v5486
        %v6158 = vunpack.c.l.b16 %v5487
        %v6159 = vunpack.c.h.b16 %v5487
        %v6160 = vunpack.c.l.b16 %v5488
        %v6161 = vunpack.c.h.b16 %v5488
        %v6162 = vunpack.c.l.b16 %v5489
        %v6163 = vunpack.c.h.b16 %v5489
        %v6164 = vunpack.c.l.b16 %v5490
        %v6165 = vunpack.c.h.b16 %v5490
        %v6166 = vunpack.c.l.b16 %v5491
        %v6167 = vunpack.c.h.b16 %v5491
        %v6168 = vunpack.c.l.b16 %v5492
        %v6169 = vunpack.c.h.b16 %v5492
        %v6170 = vunpack.c.l.b16 %v5493
        %v6171 = vunpack.c.h.b16 %v5493
        %v6172 = vunpack.c.l.b16 %v5494
        %v6173 = vunpack.c.h.b16 %v5494
        %v6174 = vunpack.c.l.b16 %v5495
        %v6175 = vunpack.c.h.b16 %v5495
        %v6176 = vunpack.c.l.b16 %v5496
        %v6177 = vunpack.c.h.b16 %v5496
        %v6178 = vunpack.c.l.b16 %v5497
        %v6179 = vunpack.c.h.b16 %v5497
        %v6180 = vunpack.c.l.b16 %v5498
        %v6181 = vunpack.c.h.b16 %v5498
        %v6182 = vunpack.c.l.b16 %v5499
        %v6183 = vunpack.c.h.b16 %v5499
        %v6184 = vunpack.c.l.b16 %v5500
        %v6185 = vunpack.c.h.b16 %v5500
        %v6186 = vunpack.c.l.b16 %v5501
        %v6187 = vunpack.c.h.b16 %v5501
        %v6188 = vunpack.c.l.b16 %v5502
        %v6189 = vunpack.c.h.b16 %v5502
        %v6190 = vunpack.c.l.b16 %v5503
        %v6191 = vunpack.c.h.b16 %v5503
        %v6192 = vunpack.c.l.b16 %v5504
        %v6193 = vunpack.c.h.b16 %v5504
        %v6194 = vunpack.c.l.b16 %v5505
        %v6195 = vunpack.c.h.b16 %v5505
        %v6196 = vunpack.c.l.b16 %v5506
        %v6197 = vunpack.c.h.b16 %v5506
        %v6198 = vunpack.c.l.b16 %v5507
        %v6199 = vunpack.c.h.b16 %v5507
        %v6200 = vunpack.c.l.b16 %v5508
        %v6201 = vunpack.c.h.b16 %v5508
        %v6202 = vunpack.c.l.b16 %v5509
        %v6203 = vunpack.c.h.b16 %v5509
        %v6204 = vunpack.c.l.b16 %v5510
        %v6205 = vunpack.c.h.b16 %v5510
        %v6206 = vunpack.c.l.b16 %v5511
        %v6207 = vunpack.c.h.b16 %v5511
        %v6208 = vunpack.c.l.b16 %v5512
        %v6209 = vunpack.c.h.b16 %v5512
        %v6210 = vunpack.c.l.b16 %v5513
        %v6211 = vunpack.c.h.b16 %v5513
        %v6212 = vunpack.c.l.b16 %v5514
        %v6213 = vunpack.c.h.b16 %v5514
        %v6214 = vunpack.c.l.b16 %v5515
        %v6215 = vunpack.c.h.b16 %v5515
        %v6216 = vunpack.c.l.b16 %v5516
        %v6217 = vunpack.c.h.b16 %v5516
        %v6218 = vunpack.c.l.b16 %v5517
        %v6219 = vunpack.c.h.b16 %v5517
        %v6220 = vunpack.c.l.b16 %v5518
        %v6221 = vunpack.c.h.b16 %v5518
        %v6222 = vunpack.c.l.b16 %v5519
        %v6223 = vunpack.c.h.b16 %v5519
        %v6224 = vunpack.c.l.b16 %v5520
        %v6225 = vunpack.c.h.b16 %v5520
        %v6226 = vunpack.c.l.b16 %v5521
        %v6227 = vunpack.c.h.b16 %v5521
        %v6228 = vunpack.c.l.b16 %v5522
        %v6229 = vunpack.c.h.b16 %v5522
        %v6230 = vunpack.c.l.b16 %v5523
        %v6231 = vunpack.c.h.b16 %v5523
        %v6232 = vunpack.c.l.b16 %v5524
        %v6233 = vunpack.c.h.b16 %v5524
        %v6234 = vunpack.c.l.b16 %v5525
        %v6235 = vunpack.c.h.b16 %v5525
        %v6236 = vunpack.c.l.b16 %v5526
        %v6237 = vunpack.c.h.b16 %v5526
        %v6238 = vunpack.c.l.b16 %v5527
        %v6239 = vunpack.c.h.b16 %v5527
        %v6240 = vunpack.c.l.b16 %v5528
        %v6241 = vunpack.c.h.b16 %v5528
        %v6242 = vunpack.c.l.b16 %v5529
        %v6243 = vunpack.c.h.b16 %v5529
        %v6244 = vunpack.c.l.b16 %v5530
        %v6245 = vunpack.c.h.b16 %v5530
        %v6246 = vunpack.c.l.b16 %v5531
        %v6247 = vunpack.c.h.b16 %v5531
        %v6248 = vunpack.c.l.b16 %v5532
        %v6249 = vunpack.c.h.b16 %v5532
        %v6250 = vunpack.c.l.b16 %v5533
        %v6251 = vunpack.c.h.b16 %v5533
        %v6252 = vunpack.c.l.b16 %v5534
        %v6253 = vunpack.c.h.b16 %v5534
        %v6254 = vunpack.c.l.b16 %v5535
        %v6255 = vunpack.c.h.b16 %v5535
        %v6256 = vunpack.c.l.b16 %v5536
        %v6257 = vunpack.c.h.b16 %v5536
        %v6258 = vunpack.c.l.b16 %v5537
        %v6259 = vunpack.c.h.b16 %v5537
        %v6260 = vunpack.c.l.b16 %v5538
        %v6261 = vunpack.c.h.b16 %v5538
        %v6262 = vunpack.c.l.b16 %v5539
        %v6263 = vunpack.c.h.b16 %v5539
        %v6264 = vunpack.c.l.b16 %v5540
        %v6265 = vunpack.c.h.b16 %v5540
        %v6266 = vunpack.c.l.b16 %v5541
        %v6267 = vunpack.c.h.b16 %v5541
        %v6268 = vunpack.c.l.b16 %v5542
        %v6269 = vunpack.c.h.b16 %v5542
        %v6270 = vunpack.c.l.b16 %v5543
        %v6271 = vunpack.c.h.b16 %v5543
        %v6272 = vunpack.c.l.b16 %v5544
        %v6273 = vunpack.c.h.b16 %v5544
        %v6274 = vunpack.c.l.b16 %v5545
        %v6275 = vunpack.c.h.b16 %v5545
        %v6276 = vunpack.c.l.b16 %v5546
        %v6277 = vunpack.c.h.b16 %v5546
        %v6278 = vunpack.c.l.b16 %v5547
        %v6279 = vunpack.c.h.b16 %v5547
        %v6280 = vunpack.c.l.b16 %v5548
        %v6281 = vunpack.c.h.b16 %v5548
        %v6282 = vunpack.c.l.b16 %v5549
        %v6283 = vunpack.c.h.b16 %v5549
        %v6284 = vunpack.c.l.b16 %v5550
        %v6285 = vunpack.c.h.b16 %v5550
        %v6286 = vunpack.c.l.b16 %v5551
        %v6287 = vunpack.c.h.b16 %v5551
        %v6288 = vunpack.c.l.b16 %v5552
        %v6289 = vunpack.c.h.b16 %v5552
        %v6290 = vunpack.c.l.b16 %v5553
        %v6291 = vunpack.c.h.b16 %v5553
        %v6292 = vunpack.c.l.b16 %v5554
        %v6293 = vunpack.c.h.b16 %v5554
        %v6294 = vunpack.c.l.b16 %v5555
        %v6295 = vunpack.c.h.b16 %v5555
        %v6296 = vunpack.c.l.b16 %v5556
        %v6297 = vunpack.c.h.b16 %v5556
        %v6298 = vunpack.c.l.b16 %v5557
        %v6299 = vunpack.c.h.b16 %v5557
        %v6300 = vunpack.c.l.b16 %v5558
        %v6301 = vunpack.c.h.b16 %v5558
        %v6302 = vunpack.c.l.b16 %v5559
        %v6303 = vunpack.c.h.b16 %v5559
        %v6304 = vunpack.c.l.b16 %v5560
        %v6305 = vunpack.c.h.b16 %v5560
        %v6306 = vunpack.c.l.b16 %v5561
        %v6307 = vunpack.c.h.b16 %v5561
        %v6308 = vunpack.c.l.b16 %v5562
        %v6309 = vunpack.c.h.b16 %v5562
        %v6310 = vunpack.c.l.b16 %v5563
        %v6311 = vunpack.c.h.b16 %v5563
        %v6312 = vunpack.c.l.b16 %v5564
        %v6313 = vunpack.c.h.b16 %v5564
        %v6314 = vunpack.c.l.b16 %v5565
        %v6315 = vunpack.c.h.b16 %v5565
        %v6316 = vunpack.c.l.b16 %v5566
        %v6317 = vunpack.c.h.b16 %v5566
        %v6318 = vunpack.c.l.b16 %v5567
        %v6319 = vunpack.c.h.b16 %v5567
        %v6320 = vunpack.c.l.b16 %v5568
        %v6321 = vunpack.c.h.b16 %v5568
        %v6322 = vunpack.c.l.b16 %v5569
        %v6323 = vunpack.c.h.b16 %v5569
        %v6324 = vunpack.c.l.b16 %v5570
        %v6325 = vunpack.c.h.b16 %v5570
        %v6326 = vunpack.c.l.b16 %v5571
        %v6327 = vunpack.c.h.b16 %v5571
        %v6328 = vunpack.c.l.b16 %v5572
        %v6329 = vunpack.c.h.b16 %v5572
        %v6330 = vunpack.c.l.b16 %v5573
        %v6331 = vunpack.c.h.b16 %v5573
        %v6332 = vunpack.c.l.b16 %v5574
        %v6333 = vunpack.c.h.b16 %v5574
        %v6334 = vunpack.c.l.b16 %v5575
        %v6335 = vunpack.c.h.b16 %v5575
        %v6336 = vunpack.c.l.b16 %v5576
        %v6337 = vunpack.c.h.b16 %v5576
        %v6338 = vunpack.c.l.b16 %v5577
        %v6339 = vunpack.c.h.b16 %v5577
        %v6340 = vunpack.c.l.b16 %v5578
        %v6341 = vunpack.c.h.b16 %v5578
        %v6342 = vunpack.c.l.b16 %v5579
        %v6343 = vunpack.c.h.b16 %v5579
        %v6344 = vunpack.c.l.b16 %v5580
        %v6345 = vunpack.c.h.b16 %v5580
        %v6346 = vunpack.c.l.b16 %v5581
        %v6347 = vunpack.c.h.b16 %v5581
        %v6348 = vunpack.c.l.b16 %v5582
        %v6349 = vunpack.c.h.b16 %v5582
        %v6350 = vunpack.c.l.b16 %v5583
        %v6351 = vunpack.c.h.b16 %v5583
        %v6352 = vunpack.c.l.b16 %v5584
        %v6353 = vunpack.c.h.b16 %v5584
        %v6354 = vunpack.c.l.b16 %v5585
        %v6355 = vunpack.c.h.b16 %v5585
        %v6356 = vunpack.c.l.b16 %v5586
        %v6357 = vunpack.c.h.b16 %v5586
        %v6358 = vunpack.c.l.b16 %v5587
        %v6359 = vunpack.c.h.b16 %v5587
        %v6360 = vunpack.c.l.b16 %v5588
        %v6361 = vunpack.c.h.b16 %v5588
        %v6362 = vunpack.c.l.b16 %v5589
        %v6363 = vunpack.c.h.b16 %v5589
        %v6364 = vunpack.c.l.b16 %v5590
        %v6365 = vunpack.c.h.b16 %v5590
        %v6366 = vunpack.c.l.b16 %v5591
        %v6367 = vunpack.c.h.b16 %v5591
        %v6368 = vunpack.c.l.b16 %v5592
        %v6369 = vunpack.c.h.b16 %v5592
        %v6370 = vunpack.c.l.b16 %v5593
        %v6371 = vunpack.c.h.b16 %v5593
        %v6372 = vunpack.c.l.b16 %v5594
        %v6373 = vunpack.c.h.b16 %v5594
        %v6374 = vunpack.c.l.b16 %v5595
        %v6375 = vunpack.c.h.b16 %v5595
        %v6376 = vunpack.c.l.b16 %v5596
        %v6377 = vunpack.c.h.b16 %v5596
        %v6378 = vunpack.c.l.b16 %v5597
        %v6379 = vunpack.c.h.b16 %v5597
        %v6380 = vunpack.c.l.b16 %v5598
        %v6381 = vunpack.c.h.b16 %v5598
        %v6382 = vunpack.c.l.b16 %v5599
        %v6383 = vunpack.c.h.b16 %v5599
        %v6384 = vunpack.c.l.b16 %v5600
        %v6385 = vunpack.c.h.b16 %v5600
        %v6386 = vunpack.c.l.b16 %v5601
        %v6387 = vunpack.c.h.b16 %v5601
        %v6388 = vunpack.c.l.b16 %v5602
        %v6389 = vunpack.c.h.b16 %v5602
        %v6390 = vunpack.c.l.b16 %v5603
        %v6391 = vunpack.c.h.b16 %v5603
        %v6392 = vunpack.c.l.b16 %v5604
        %v6393 = vunpack.c.h.b16 %v5604
        %v6394 = vunpack.c.l.b16 %v5605
        %v6395 = vunpack.c.h.b16 %v5605
        %v6396 = vpack.c.b16 %v5888, %v5884
        %v6397 = vpack.c.b16 %v5889, %v5885
        %v6398 = vpack.c.b16 %v5890, %v5886
        %v6399 = vpack.c.b16 %v5891, %v5887
        %v6400 = vpack.c.b16 %v5896, %v5892
        %v6401 = vpack.c.b16 %v5897, %v5893
        %v6402 = vpack.c.b16 %v5898, %v5894
        %v6403 = vpack.c.b16 %v5899, %v5895
        %v6404 = vpack.c.b16 %v5904, %v5900
        %v6405 = vpack.c.b16 %v5905, %v5901
        %v6406 = vpack.c.b16 %v5906, %v5902
        %v6407 = vpack.c.b16 %v5907, %v5903
        %v6408 = vpack.c.b16 %v5912, %v5908
        %v6409 = vpack.c.b16 %v5913, %v5909
        %v6410 = vpack.c.b16 %v5914, %v5910
        %v6411 = vpack.c.b16 %v5915, %v5911
        %v6412 = vpack.c.b16 %v5920, %v5916
        %v6413 = vpack.c.b16 %v5921, %v5917
        %v6414 = vpack.c.b16 %v5922, %v5918
        %v6415 = vpack.c.b16 %v5923, %v5919
        %v6416 = vpack.c.b16 %v5928, %v5924
        %v6417 = vpack.c.b16 %v5929, %v5925
        %v6418 = vpack.c.b16 %v5930, %v5926
        %v6419 = vpack.c.b16 %v5931, %v5927
        %v6420 = vpack.c.b16 %v5936, %v5932
        %v6421 = vpack.c.b16 %v5937, %v5933
        %v6422 = vpack.c.b16 %v5938, %v5934
        %v6423 = vpack.c.b16 %v5939, %v5935
        %v6424 = vpack.c.b16 %v5944, %v5940
        %v6425 = vpack.c.b16 %v5945, %v5941
        %v6426 = vpack.c.b16 %v5946, %v5942
        %v6427 = vpack.c.b16 %v5947, %v5943
        %v6428 = vpack.c.b16 %v5952, %v5948
        %v6429 = vpack.c.b16 %v5953, %v5949
        %v6430 = vpack.c.b16 %v5954, %v5950
        %v6431 = vpack.c.b16 %v5955, %v5951
        %v6432 = vpack.c.b16 %v5960, %v5956
        %v6433 = vpack.c.b16 %v5961, %v5957
        %v6434 = vpack.c.b16 %v5962, %v5958
        %v6435 = vpack.c.b16 %v5963, %v5959
        %v6436 = vpack.c.b16 %v5968, %v5964
        %v6437 = vpack.c.b16 %v5969, %v5965
        %v6438 = vpack.c.b16 %v5970, %v5966
        %v6439 = vpack.c.b16 %v5971, %v5967
        %v6440 = vpack.c.b16 %v5976, %v5972
        %v6441 = vpack.c.b16 %v5977, %v5973
        %v6442 = vpack.c.b16 %v5978, %v5974
        %v6443 = vpack.c.b16 %v5979, %v5975
        %v6444 = vpack.c.b16 %v5984, %v5980
        %v6445 = vpack.c.b16 %v5985, %v5981
        %v6446 = vpack.c.b16 %v5986, %v5982
        %v6447 = vpack.c.b16 %v5987, %v5983
        %v6448 = vpack.c.b16 %v5992, %v5988
        %v6449 = vpack.c.b16 %v5993, %v5989
        %v6450 = vpack.c.b16 %v5994, %v5990
        %v6451 = vpack.c.b16 %v5995, %v5991
        %v6452 = vpack.c.b16 %v6000, %v5996
        %v6453 = vpack.c.b16 %v6001, %v5997
        %v6454 = vpack.c.b16 %v6002, %v5998
        %v6455 = vpack.c.b16 %v6003, %v5999
        %v6456 = vpack.c.b16 %v6008, %v6004
        %v6457 = vpack.c.b16 %v6009, %v6005
        %v6458 = vpack.c.b16 %v6010, %v6006
        %v6459 = vpack.c.b16 %v6011, %v6007
        %v6460 = vpack.c.b16 %v6016, %v6012
        %v6461 = vpack.c.b16 %v6017, %v6013
        %v6462 = vpack.c.b16 %v6018, %v6014
        %v6463 = vpack.c.b16 %v6019, %v6015
        %v6464 = vpack.c.b16 %v6024, %v6020
        %v6465 = vpack.c.b16 %v6025, %v6021
        %v6466 = vpack.c.b16 %v6026, %v6022
        %v6467 = vpack.c.b16 %v6027, %v6023
        %v6468 = vpack.c.b16 %v6032, %v6028
        %v6469 = vpack.c.b16 %v6033, %v6029
        %v6470 = vpack.c.b16 %v6034, %v6030
        %v6471 = vpack.c.b16 %v6035, %v6031
        %v6472 = vpack.c.b16 %v6040, %v6036
        %v6473 = vpack.c.b16 %v6041, %v6037
        %v6474 = vpack.c.b16 %v6042, %v6038
        %v6475 = vpack.c.b16 %v6043, %v6039
        %v6476 = vpack.c.b16 %v6048, %v6044
        %v6477 = vpack.c.b16 %v6049, %v6045
        %v6478 = vpack.c.b16 %v6050, %v6046
        %v6479 = vpack.c.b16 %v6051, %v6047
        %v6480 = vpack.c.b16 %v6056, %v6052
        %v6481 = vpack.c.b16 %v6057, %v6053
        %v6482 = vpack.c.b16 %v6058, %v6054
        %v6483 = vpack.c.b16 %v6059, %v6055
        %v6484 = vpack.c.b16 %v6064, %v6060
        %v6485 = vpack.c.b16 %v6065, %v6061
        %v6486 = vpack.c.b16 %v6066, %v6062
        %v6487 = vpack.c.b16 %v6067, %v6063
        %v6488 = vpack.c.b16 %v6072, %v6068
        %v6489 = vpack.c.b16 %v6073, %v6069
        %v6490 = vpack.c.b16 %v6074, %v6070
        %v6491 = vpack.c.b16 %v6075, %v6071
        %v6492 = vpack.c.b16 %v6080, %v6076
        %v6493 = vpack.c.b16 %v6081, %v6077
        %v6494 = vpack.c.b16 %v6082, %v6078
        %v6495 = vpack.c.b16 %v6083, %v6079
        %v6496 = vpack.c.b16 %v6088, %v6084
        %v6497 = vpack.c.b16 %v6089, %v6085
        %v6498 = vpack.c.b16 %v6090, %v6086
        %v6499 = vpack.c.b16 %v6091, %v6087
        %v6500 = vpack.c.b16 %v6096, %v6092
        %v6501 = vpack.c.b16 %v6097, %v6093
        %v6502 = vpack.c.b16 %v6098, %v6094
        %v6503 = vpack.c.b16 %v6099, %v6095
        %v6504 = vpack.c.b16 %v6104, %v6100
        %v6505 = vpack.c.b16 %v6105, %v6101
        %v6506 = vpack.c.b16 %v6106, %v6102
        %v6507 = vpack.c.b16 %v6107, %v6103
        %v6508 = vpack.c.b16 %v6112, %v6108
        %v6509 = vpack.c.b16 %v6113, %v6109
        %v6510 = vpack.c.b16 %v6114, %v6110
        %v6511 = vpack.c.b16 %v6115, %v6111
        %v6512 = vpack.c.b16 %v6120, %v6116
        %v6513 = vpack.c.b16 %v6121, %v6117
        %v6514 = vpack.c.b16 %v6122, %v6118
        %v6515 = vpack.c.b16 %v6123, %v6119
        %v6516 = vpack.c.b16 %v6128, %v6124
        %v6517 = vpack.c.b16 %v6129, %v6125
        %v6518 = vpack.c.b16 %v6130, %v6126
        %v6519 = vpack.c.b16 %v6131, %v6127
        %v6520 = vpack.c.b16 %v6136, %v6132
        %v6521 = vpack.c.b16 %v6137, %v6133
        %v6522 = vpack.c.b16 %v6138, %v6134
        %v6523 = vpack.c.b16 %v6139, %v6135
        %v6524 = vpack.c.b16 %v6144, %v6140
        %v6525 = vpack.c.b16 %v6145, %v6141
        %v6526 = vpack.c.b16 %v6146, %v6142
        %v6527 = vpack.c.b16 %v6147, %v6143
        %v6528 = vpack.c.b16 %v6152, %v6148
        %v6529 = vpack.c.b16 %v6153, %v6149
        %v6530 = vpack.c.b16 %v6154, %v6150
        %v6531 = vpack.c.b16 %v6155, %v6151
        %v6532 = vpack.c.b16 %v6160, %v6156
        %v6533 = vpack.c.b16 %v6161, %v6157
        %v6534 = vpack.c.b16 %v6162, %v6158
        %v6535 = vpack.c.b16 %v6163, %v6159
        %v6536 = vpack.c.b16 %v6168, %v6164
        %v6537 = vpack.c.b16 %v6169, %v6165
        %v6538 = vpack.c.b16 %v6170, %v6166
        %v6539 = vpack.c.b16 %v6171, %v6167
        %v6540 = vpack.c.b16 %v6176, %v6172
        %v6541 = vpack.c.b16 %v6177, %v6173
        %v6542 = vpack.c.b16 %v6178, %v6174
        %v6543 = vpack.c.b16 %v6179, %v6175
        %v6544 = vpack.c.b16 %v6184, %v6180
        %v6545 = vpack.c.b16 %v6185, %v6181
        %v6546 = vpack.c.b16 %v6186, %v6182
        %v6547 = vpack.c.b16 %v6187, %v6183
        %v6548 = vpack.c.b16 %v6192, %v6188
        %v6549 = vpack.c.b16 %v6193, %v6189
        %v6550 = vpack.c.b16 %v6194, %v6190
        %v6551 = vpack.c.b16 %v6195, %v6191
        %v6552 = vpack.c.b16 %v6200, %v6196
        %v6553 = vpack.c.b16 %v6201, %v6197
        %v6554 = vpack.c.b16 %v6202, %v6198
        %v6555 = vpack.c.b16 %v6203, %v6199
        %v6556 = vpack.c.b16 %v6208, %v6204
        %v6557 = vpack.c.b16 %v6209, %v6205
        %v6558 = vpack.c.b16 %v6210, %v6206
        %v6559 = vpack.c.b16 %v6211, %v6207
        %v6560 = vpack.c.b16 %v6216, %v6212
        %v6561 = vpack.c.b16 %v6217, %v6213
        %v6562 = vpack.c.b16 %v6218, %v6214
        %v6563 = vpack.c.b16 %v6219, %v6215
        %v6564 = vpack.c.b16 %v6224, %v6220
        %v6565 = vpack.c.b16 %v6225, %v6221
        %v6566 = vpack.c.b16 %v6226, %v6222
        %v6567 = vpack.c.b16 %v6227, %v6223
        %v6568 = vpack.c.b16 %v6232, %v6228
        %v6569 = vpack.c.b16 %v6233, %v6229
        %v6570 = vpack.c.b16 %v6234, %v6230
        %v6571 = vpack.c.b16 %v6235, %v6231
        %v6572 = vpack.c.b16 %v6240, %v6236
        %v6573 = vpack.c.b16 %v6241, %v6237
        %v6574 = vpack.c.b16 %v6242, %v6238
        %v6575 = vpack.c.b16 %v6243, %v6239
        %v6576 = vpack.c.b16 %v6248, %v6244
        %v6577 = vpack.c.b16 %v6249, %v6245
        %v6578 = vpack.c.b16 %v6250, %v6246
        %v6579 = vpack.c.b16 %v6251, %v6247
        %v6580 = vpack.c.b16 %v6256, %v6252
        %v6581 = vpack.c.b16 %v6257, %v6253
        %v6582 = vpack.c.b16 %v6258, %v6254
        %v6583 = vpack.c.b16 %v6259, %v6255
        %v6584 = vpack.c.b16 %v6264, %v6260
        %v6585 = vpack.c.b16 %v6265, %v6261
        %v6586 = vpack.c.b16 %v6266, %v6262
        %v6587 = vpack.c.b16 %v6267, %v6263
        %v6588 = vpack.c.b16 %v6272, %v6268
        %v6589 = vpack.c.b16 %v6273, %v6269
        %v6590 = vpack.c.b16 %v6274, %v6270
        %v6591 = vpack.c.b16 %v6275, %v6271
        %v6592 = vpack.c.b16 %v6280, %v6276
        %v6593 = vpack.c.b16 %v6281, %v6277
        %v6594 = vpack.c.b16 %v6282, %v6278
        %v6595 = vpack.c.b16 %v6283, %v6279
        %v6596 = vpack.c.b16 %v6288, %v6284
        %v6597 = vpack.c.b16 %v6289, %v6285
        %v6598 = vpack.c.b16 %v6290, %v6286
        %v6599 = vpack.c.b16 %v6291, %v6287
        %v6600 = vpack.c.b16 %v6296, %v6292
        %v6601 = vpack.c.b16 %v6297, %v6293
        %v6602 = vpack.c.b16 %v6298, %v6294
        %v6603 = vpack.c.b16 %v6299, %v6295
        %v6604 = vpack.c.b16 %v6304, %v6300
        %v6605 = vpack.c.b16 %v6305, %v6301
        %v6606 = vpack.c.b16 %v6306, %v6302
        %v6607 = vpack.c.b16 %v6307, %v6303
        %v6608 = vpack.c.b16 %v6312, %v6308
        %v6609 = vpack.c.b16 %v6313, %v6309
        %v6610 = vpack.c.b16 %v6314, %v6310
        %v6611 = vpack.c.b16 %v6315, %v6311
        %v6612 = vpack.c.b16 %v6320, %v6316
        %v6613 = vpack.c.b16 %v6321, %v6317
        %v6614 = vpack.c.b16 %v6322, %v6318
        %v6615 = vpack.c.b16 %v6323, %v6319
        %v6616 = vpack.c.b16 %v6328, %v6324
        %v6617 = vpack.c.b16 %v6329, %v6325
        %v6618 = vpack.c.b16 %v6330, %v6326
        %v6619 = vpack.c.b16 %v6331, %v6327
        %v6620 = vpack.c.b16 %v6336, %v6332
        %v6621 = vpack.c.b16 %v6337, %v6333
        %v6622 = vpack.c.b16 %v6338, %v6334
        %v6623 = vpack.c.b16 %v6339, %v6335
        %v6624 = vpack.c.b16 %v6344, %v6340
        %v6625 = vpack.c.b16 %v6345, %v6341
        %v6626 = vpack.c.b16 %v6346, %v6342
        %v6627 = vpack.c.b16 %v6347, %v6343
        %v6628 = vpack.c.b16 %v6352, %v6348
        %v6629 = vpack.c.b16 %v6353, %v6349
        %v6630 = vpack.c.b16 %v6354, %v6350
        %v6631 = vpack.c.b16 %v6355, %v6351
        %v6632 = vpack.c.b16 %v6360, %v6356
        %v6633 = vpack.c.b16 %v6361, %v6357
        %v6634 = vpack.c.b16 %v6362, %v6358
        %v6635 = vpack.c.b16 %v6363, %v6359
        %v6636 = vpack.c.b16 %v6368, %v6364
        %v6637 = vpack.c.b16 %v6369, %v6365
        %v6638 = vpack.c.b16 %v6370, %v6366
        %v6639 = vpack.c.b16 %v6371, %v6367
        %v6640 = vpack.c.b16 %v6376, %v6372
        %v6641 = vpack.c.b16 %v6377, %v6373
        %v6642 = vpack.c.b16 %v6378, %v6374
        %v6643 = vpack.c.b16 %v6379, %v6375
        %v6644 = vpack.c.b16 %v6384, %v6380
        %v6645 = vpack.c.b16 %v6385, %v6381
        %v6646 = vpack.c.b16 %v6386, %v6382
        %v6647 = vpack.c.b16 %v6387, %v6383
        %v6648 = vpack.c.b16 %v6392, %v6388
        %v6649 = vpack.c.b16 %v6393, %v6389
        %v6650 = vpack.c.b16 %v6394, %v6390
        %v6651 = vpack.c.b16 %v6395, %v6391
        %6908 = vmatprep.subr.bf16.mxu0 %v6425
        %6909 = vmatpush1.bf16.msra.mxu0 %v6424
        %6910 = vmatprep.subr.bf16.mxu0 %v6421
        %6911 = vmatpush1.bf16.msra.mxu0 %v6420
        %6912 = vmatprep.subr.bf16.mxu0 %v6417
        %6913 = vmatpush1.bf16.msra.mxu0 %v6416
        %6914 = vmatprep.subr.bf16.mxu0 %v6413
        %6915 = vmatpush1.bf16.msra.mxu0 %v6412
        %6916 = vmatprep.subr.bf16.mxu0 %v6409
        %6917 = vmatpush1.bf16.msra.mxu0 %v6408
        %6918 = vmatprep.subr.bf16.mxu0 %v6405
        %6919 = vmatpush1.bf16.msra.mxu0 %v6404
        %6920 = vmatprep.subr.bf16.mxu0 %v6401
        %6921 = vmatpush1.bf16.msra.mxu0 %v6400
        %6922 = vmatprep.subr.bf16.mxu0 %v6397
        %6923 = vmatpush1.bf16.msra.mxu0 %v6396
        %6924 = vmatprep.subr.bf16.mxu0 %v6457
        %6925 = vmatpush2.bf16.msra.mxu0 %v6456
        %6926 = vmatprep.subr.bf16.mxu0 %v6453
        %6927 = vmatpush2.bf16.msra.mxu0 %v6452
        %6928 = vmatprep.subr.bf16.mxu0 %v6449
        %6929 = vmatpush2.bf16.msra.mxu0 %v6448
        %6930 = vmatprep.subr.bf16.mxu0 %v6445
        %6931 = vmatpush2.bf16.msra.mxu0 %v6444
        %6932 = vmatprep.subr.bf16.mxu0 %v6441
        %6933 = vmatpush2.bf16.msra.mxu0 %v6440
        %6934 = vmatprep.subr.bf16.mxu0 %v6437
        %6935 = vmatpush2.bf16.msra.mxu0 %v6436
        %6936 = vmatprep.subr.bf16.mxu0 %v6433
        %6937 = vmatpush2.bf16.msra.mxu0 %v6432
        %6938 = vmatprep.subr.bf16.mxu0 %v6429
        %6939 = vmatpush2.bf16.msra.mxu0 %v6428
        %6940 = vmatprep.mubr.bf16.mxu0 %v5343
        %6941 = vmatmul.mubr.bf16.gmra.mxu0 %v5342
        %v6942 = vpop.f32.mrf.mxu0
        %v6943 = vadd.f32 %v5611, %v6942
        %v6944 = vpop.f32.mrf.mxu0
        %v6945 = vadd.f32 %v5615, %v6944
        %v6946 = vpop.f32.mrf.mxu0
        %v6947 = vpop.f32.mrf.mxu0
        %6948 = vdwg.mxu0
        %6949 = vmatprep.subr.bf16.mxu0 %v6489
        %6950 = vmatpush1.bf16.msra.mxu0 %v6488
        %6951 = vmatprep.subr.bf16.mxu0 %v6485
        %6952 = vmatpush1.bf16.msra.mxu0 %v6484
        %6953 = vmatprep.subr.bf16.mxu0 %v6481
        %6954 = vmatpush1.bf16.msra.mxu0 %v6480
        %6955 = vmatprep.subr.bf16.mxu0 %v6477
        %6956 = vmatpush1.bf16.msra.mxu0 %v6476
        %6957 = vmatprep.subr.bf16.mxu0 %v6473
        %6958 = vmatpush1.bf16.msra.mxu0 %v6472
        %6959 = vmatprep.subr.bf16.mxu0 %v6469
        %6960 = vmatpush1.bf16.msra.mxu0 %v6468
        %6961 = vmatprep.subr.bf16.mxu0 %v6465
        %6962 = vmatpush1.bf16.msra.mxu0 %v6464
        %6963 = vmatprep.subr.bf16.mxu0 %v6461
        %6964 = vmatpush1.bf16.msra.mxu0 %v6460
        %6965 = vmatprep.subr.bf16.mxu0 %v6521
        %6966 = vmatpush2.bf16.msra.mxu0 %v6520
        %6967 = vmatprep.subr.bf16.mxu0 %v6517
        %6968 = vmatpush2.bf16.msra.mxu0 %v6516
        %6969 = vmatprep.subr.bf16.mxu0 %v6513
        %6970 = vmatpush2.bf16.msra.mxu0 %v6512
        %6971 = vmatprep.subr.bf16.mxu0 %v6509
        %6972 = vmatpush2.bf16.msra.mxu0 %v6508
        %6973 = vmatprep.subr.bf16.mxu0 %v6505
        %6974 = vmatpush2.bf16.msra.mxu0 %v6504
        %6975 = vmatprep.subr.bf16.mxu0 %v6501
        %6976 = vmatpush2.bf16.msra.mxu0 %v6500
        %6977 = vmatprep.subr.bf16.mxu0 %v6497
        %6978 = vmatpush2.bf16.msra.mxu0 %v6496
        %6979 = vmatprep.subr.bf16.mxu0 %v6493
        %6980 = vmatpush2.bf16.msra.mxu0 %v6492
        %6981 = vmatprep.mubr.bf16.mxu0 %v5345
        %6982 = vmatmul.mubr.bf16.gmra.mxu0 %v5344
        %v6983 = vpop.f32.mrf.mxu0
        %v6984 = vadd.f32 %v6943, %v6983
        %v6985 = vpop.f32.mrf.mxu0
        %v6986 = vadd.f32 %v6945, %v6985
        %v6987 = vpop.f32.mrf.mxu0
        %v6988 = vpop.f32.mrf.mxu0
        %6989 = vdwg.mxu0
        %6990 = vmatprep.subr.bf16.mxu0 %v6553
        %6991 = vmatpush1.bf16.msra.mxu0 %v6552
        %6992 = vmatprep.subr.bf16.mxu0 %v6549
        %6993 = vmatpush1.bf16.msra.mxu0 %v6548
        %6994 = vmatprep.subr.bf16.mxu0 %v6545
        %6995 = vmatpush1.bf16.msra.mxu0 %v6544
        %6996 = vmatprep.subr.bf16.mxu0 %v6541
        %6997 = vmatpush1.bf16.msra.mxu0 %v6540
        %6998 = vmatprep.subr.bf16.mxu0 %v6537
        %6999 = vmatpush1.bf16.msra.mxu0 %v6536
        %7000 = vmatprep.subr.bf16.mxu0 %v6533
        %7001 = vmatpush1.bf16.msra.mxu0 %v6532
        %7002 = vmatprep.subr.bf16.mxu0 %v6529
        %7003 = vmatpush1.bf16.msra.mxu0 %v6528
        %7004 = vmatprep.subr.bf16.mxu0 %v6525
        %7005 = vmatpush1.bf16.msra.mxu0 %v6524
        %7006 = vmatprep.subr.bf16.mxu0 %v6585
        %7007 = vmatpush2.bf16.msra.mxu0 %v6584
        %7008 = vmatprep.subr.bf16.mxu0 %v6581
        %7009 = vmatpush2.bf16.msra.mxu0 %v6580
        %7010 = vmatprep.subr.bf16.mxu0 %v6577
        %7011 = vmatpush2.bf16.msra.mxu0 %v6576
        %7012 = vmatprep.subr.bf16.mxu0 %v6573
        %7013 = vmatpush2.bf16.msra.mxu0 %v6572
        %7014 = vmatprep.subr.bf16.mxu0 %v6569
        %7015 = vmatpush2.bf16.msra.mxu0 %v6568
        %7016 = vmatprep.subr.bf16.mxu0 %v6565
        %7017 = vmatpush2.bf16.msra.mxu0 %v6564
        %7018 = vmatprep.subr.bf16.mxu0 %v6561
        %7019 = vmatpush2.bf16.msra.mxu0 %v6560
        %7020 = vmatprep.subr.bf16.mxu0 %v6557
        %7021 = vmatpush2.bf16.msra.mxu0 %v6556
        %7022 = vmatprep.mubr.bf16.mxu0 %v5347
        %7023 = vmatmul.mubr.bf16.gmra.mxu0 %v5346
        %v7024 = vpop.f32.mrf.mxu0
        %v7025 = vadd.f32 %v6984, %v7024
        %v7026 = vpop.f32.mrf.mxu0
        %v7027 = vadd.f32 %v6986, %v7026
        %v7028 = vpop.f32.mrf.mxu0
        %v7029 = vpop.f32.mrf.mxu0
        %7030 = vdwg.mxu0
        %7031 = vmatprep.subr.bf16.mxu0 %v6617
        %7032 = vmatpush1.bf16.msra.mxu0 %v6616
        %7033 = vmatprep.subr.bf16.mxu0 %v6613
        %7034 = vmatpush1.bf16.msra.mxu0 %v6612
        %7035 = vmatprep.subr.bf16.mxu0 %v6609
        %7036 = vmatpush1.bf16.msra.mxu0 %v6608
        %7037 = vmatprep.subr.bf16.mxu0 %v6605
        %7038 = vmatpush1.bf16.msra.mxu0 %v6604
        %7039 = vmatprep.subr.bf16.mxu0 %v6601
        %7040 = vmatpush1.bf16.msra.mxu0 %v6600
        %7041 = vmatprep.subr.bf16.mxu0 %v6597
        %7042 = vmatpush1.bf16.msra.mxu0 %v6596
        %7043 = vmatprep.subr.bf16.mxu0 %v6593
        %7044 = vmatpush1.bf16.msra.mxu0 %v6592
        %7045 = vmatprep.subr.bf16.mxu0 %v6589
        %7046 = vmatpush1.bf16.msra.mxu0 %v6588
        %7047 = vmatprep.subr.bf16.mxu0 %v6649
        %7048 = vmatpush2.bf16.msra.mxu0 %v6648
        %7049 = vmatprep.subr.bf16.mxu0 %v6645
        %7050 = vmatpush2.bf16.msra.mxu0 %v6644
        %7051 = vmatprep.subr.bf16.mxu0 %v6641
        %7052 = vmatpush2.bf16.msra.mxu0 %v6640
        %7053 = vmatprep.subr.bf16.mxu0 %v6637
        %7054 = vmatpush2.bf16.msra.mxu0 %v6636
        %7055 = vmatprep.subr.bf16.mxu0 %v6633
        %7056 = vmatpush2.bf16.msra.mxu0 %v6632
        %7057 = vmatprep.subr.bf16.mxu0 %v6629
        %7058 = vmatpush2.bf16.msra.mxu0 %v6628
        %7059 = vmatprep.subr.bf16.mxu0 %v6625
        %7060 = vmatpush2.bf16.msra.mxu0 %v6624
        %7061 = vmatprep.subr.bf16.mxu0 %v6621
        %7062 = vmatpush2.bf16.msra.mxu0 %v6620
        %7063 = vmatprep.mubr.bf16.mxu0 %v5349
        %7064 = vmatmul.mubr.bf16.gmra.mxu0 %v5348
        %v7065 = vpop.f32.mrf.mxu0
        %v7066 = vadd.f32 %v7025, %v7065
        %v7067 = vpop.f32.mrf.mxu0
        %v7068 = vadd.f32 %v7027, %v7067
        %v7069 = vpop.f32.mrf.mxu0
        %v7070 = vpop.f32.mrf.mxu0
        %7071 = vdwg.mxu0
        %7072 = vmatprep.subr.bf16.mxu0 %v6427
        %7073 = vmatpush1.bf16.msra.mxu0 %v6426
        %7074 = vmatprep.subr.bf16.mxu0 %v6423
        %7075 = vmatpush1.bf16.msra.mxu0 %v6422
        %7076 = vmatprep.subr.bf16.mxu0 %v6419
        %7077 = vmatpush1.bf16.msra.mxu0 %v6418
        %7078 = vmatprep.subr.bf16.mxu0 %v6415
        %7079 = vmatpush1.bf16.msra.mxu0 %v6414
        %7080 = vmatprep.subr.bf16.mxu0 %v6411
        %7081 = vmatpush1.bf16.msra.mxu0 %v6410
        %7082 = vmatprep.subr.bf16.mxu0 %v6407
        %7083 = vmatpush1.bf16.msra.mxu0 %v6406
        %7084 = vmatprep.subr.bf16.mxu0 %v6403
        %7085 = vmatpush1.bf16.msra.mxu0 %v6402
        %7086 = vmatprep.subr.bf16.mxu0 %v6399
        %7087 = vmatpush1.bf16.msra.mxu0 %v6398
        %7088 = vmatprep.subr.bf16.mxu0 %v6459
        %7089 = vmatpush2.bf16.msra.mxu0 %v6458
        %7090 = vmatprep.subr.bf16.mxu0 %v6455
        %7091 = vmatpush2.bf16.msra.mxu0 %v6454
        %7092 = vmatprep.subr.bf16.mxu0 %v6451
        %7093 = vmatpush2.bf16.msra.mxu0 %v6450
        %7094 = vmatprep.subr.bf16.mxu0 %v6447
        %7095 = vmatpush2.bf16.msra.mxu0 %v6446
        %7096 = vmatprep.subr.bf16.mxu0 %v6443
        %7097 = vmatpush2.bf16.msra.mxu0 %v6442
        %7098 = vmatprep.subr.bf16.mxu0 %v6439
        %7099 = vmatpush2.bf16.msra.mxu0 %v6438
        %7100 = vmatprep.subr.bf16.mxu0 %v6435
        %7101 = vmatpush2.bf16.msra.mxu0 %v6434
        %7102 = vmatprep.subr.bf16.mxu0 %v6431
        %7103 = vmatpush2.bf16.msra.mxu0 %v6430
        %7104 = vmatprep.mubr.bf16.mxu0 %v5343
        %7105 = vmatmul.mubr.bf16.gmra.mxu0 %v5342
        %v7106 = vpop.f32.mrf.mxu0
        %v7107 = vadd.f32 %v5619, %v7106
        %v7108 = vpop.f32.mrf.mxu0
        %v7109 = vadd.f32 %v5623, %v7108
        %v7110 = vpop.f32.mrf.mxu0
        %v7111 = vpop.f32.mrf.mxu0
        %7112 = vdwg.mxu0
        %7113 = vmatprep.subr.bf16.mxu0 %v6491
        %7114 = vmatpush1.bf16.msra.mxu0 %v6490
        %7115 = vmatprep.subr.bf16.mxu0 %v6487
        %7116 = vmatpush1.bf16.msra.mxu0 %v6486
        %7117 = vmatprep.subr.bf16.mxu0 %v6483
        %7118 = vmatpush1.bf16.msra.mxu0 %v6482
        %7119 = vmatprep.subr.bf16.mxu0 %v6479
        %7120 = vmatpush1.bf16.msra.mxu0 %v6478
        %7121 = vmatprep.subr.bf16.mxu0 %v6475
        %7122 = vmatpush1.bf16.msra.mxu0 %v6474
        %7123 = vmatprep.subr.bf16.mxu0 %v6471
        %7124 = vmatpush1.bf16.msra.mxu0 %v6470
        %7125 = vmatprep.subr.bf16.mxu0 %v6467
        %7126 = vmatpush1.bf16.msra.mxu0 %v6466
        %7127 = vmatprep.subr.bf16.mxu0 %v6463
        %7128 = vmatpush1.bf16.msra.mxu0 %v6462
        %7129 = vmatprep.subr.bf16.mxu0 %v6523
        %7130 = vmatpush2.bf16.msra.mxu0 %v6522
        %7131 = vmatprep.subr.bf16.mxu0 %v6519
        %7132 = vmatpush2.bf16.msra.mxu0 %v6518
        %7133 = vmatprep.subr.bf16.mxu0 %v6515
        %7134 = vmatpush2.bf16.msra.mxu0 %v6514
        %7135 = vmatprep.subr.bf16.mxu0 %v6511
        %7136 = vmatpush2.bf16.msra.mxu0 %v6510
        %7137 = vmatprep.subr.bf16.mxu0 %v6507
        %7138 = vmatpush2.bf16.msra.mxu0 %v6506
        %7139 = vmatprep.subr.bf16.mxu0 %v6503
        %7140 = vmatpush2.bf16.msra.mxu0 %v6502
        %7141 = vmatprep.subr.bf16.mxu0 %v6499
        %7142 = vmatpush2.bf16.msra.mxu0 %v6498
        %7143 = vmatprep.subr.bf16.mxu0 %v6495
        %7144 = vmatpush2.bf16.msra.mxu0 %v6494
        %7145 = vmatprep.mubr.bf16.mxu0 %v5345
        %7146 = vmatmul.mubr.bf16.gmra.mxu0 %v5344
        %v7147 = vpop.f32.mrf.mxu0
        %v7148 = vadd.f32 %v7107, %v7147
        %v7149 = vpop.f32.mrf.mxu0
        %v7150 = vadd.f32 %v7109, %v7149
        %v7151 = vpop.f32.mrf.mxu0
        %v7152 = vpop.f32.mrf.mxu0
        %7153 = vdwg.mxu0
        %7154 = vmatprep.subr.bf16.mxu0 %v6555
        %7155 = vmatpush1.bf16.msra.mxu0 %v6554
        %7156 = vmatprep.subr.bf16.mxu0 %v6551
        %7157 = vmatpush1.bf16.msra.mxu0 %v6550
        %7158 = vmatprep.subr.bf16.mxu0 %v6547
        %7159 = vmatpush1.bf16.msra.mxu0 %v6546
        %7160 = vmatprep.subr.bf16.mxu0 %v6543
        %7161 = vmatpush1.bf16.msra.mxu0 %v6542
        %7162 = vmatprep.subr.bf16.mxu0 %v6539
        %7163 = vmatpush1.bf16.msra.mxu0 %v6538
        %7164 = vmatprep.subr.bf16.mxu0 %v6535
        %7165 = vmatpush1.bf16.msra.mxu0 %v6534
        %7166 = vmatprep.subr.bf16.mxu0 %v6531
        %7167 = vmatpush1.bf16.msra.mxu0 %v6530
        %7168 = vmatprep.subr.bf16.mxu0 %v6527
        %7169 = vmatpush1.bf16.msra.mxu0 %v6526
        %7170 = vmatprep.subr.bf16.mxu0 %v6587
        %7171 = vmatpush2.bf16.msra.mxu0 %v6586
        %7172 = vmatprep.subr.bf16.mxu0 %v6583
        %7173 = vmatpush2.bf16.msra.mxu0 %v6582
        %7174 = vmatprep.subr.bf16.mxu0 %v6579
        %7175 = vmatpush2.bf16.msra.mxu0 %v6578
        %7176 = vmatprep.subr.bf16.mxu0 %v6575
        %7177 = vmatpush2.bf16.msra.mxu0 %v6574
        %7178 = vmatprep.subr.bf16.mxu0 %v6571
        %7179 = vmatpush2.bf16.msra.mxu0 %v6570
        %7180 = vmatprep.subr.bf16.mxu0 %v6567
        %7181 = vmatpush2.bf16.msra.mxu0 %v6566
        %7182 = vmatprep.subr.bf16.mxu0 %v6563
        %7183 = vmatpush2.bf16.msra.mxu0 %v6562
        %7184 = vmatprep.subr.bf16.mxu0 %v6559
        %7185 = vmatpush2.bf16.msra.mxu0 %v6558
        %7186 = vmatprep.mubr.bf16.mxu0 %v5347
        %7187 = vmatmul.mubr.bf16.gmra.mxu0 %v5346
        %v7188 = vpop.f32.mrf.mxu0
        %v7189 = vadd.f32 %v7148, %v7188
        %v7190 = vpop.f32.mrf.mxu0
        %v7191 = vadd.f32 %v7150, %v7190
        %v7192 = vpop.f32.mrf.mxu0
        %v7193 = vpop.f32.mrf.mxu0
        %7194 = vdwg.mxu0
        %7195 = vmatprep.subr.bf16.mxu0 %v6619
        %7196 = vmatpush1.bf16.msra.mxu0 %v6618
        %7197 = vmatprep.subr.bf16.mxu0 %v6615
        %7198 = vmatpush1.bf16.msra.mxu0 %v6614
        %7199 = vmatprep.subr.bf16.mxu0 %v6611
        %7200 = vmatpush1.bf16.msra.mxu0 %v6610
        %7201 = vmatprep.subr.bf16.mxu0 %v6607
        %7202 = vmatpush1.bf16.msra.mxu0 %v6606
        %7203 = vmatprep.subr.bf16.mxu0 %v6603
        %7204 = vmatpush1.bf16.msra.mxu0 %v6602
        %7205 = vmatprep.subr.bf16.mxu0 %v6599
        %7206 = vmatpush1.bf16.msra.mxu0 %v6598
        %7207 = vmatprep.subr.bf16.mxu0 %v6595
        %7208 = vmatpush1.bf16.msra.mxu0 %v6594
        %7209 = vmatprep.subr.bf16.mxu0 %v6591
        %7210 = vmatpush1.bf16.msra.mxu0 %v6590
        %7211 = vmatprep.subr.bf16.mxu0 %v6651
        %7212 = vmatpush2.bf16.msra.mxu0 %v6650
        %7213 = vmatprep.subr.bf16.mxu0 %v6647
        %7214 = vmatpush2.bf16.msra.mxu0 %v6646
        %7215 = vmatprep.subr.bf16.mxu0 %v6643
        %7216 = vmatpush2.bf16.msra.mxu0 %v6642
        %7217 = vmatprep.subr.bf16.mxu0 %v6639
        %7218 = vmatpush2.bf16.msra.mxu0 %v6638
        %7219 = vmatprep.subr.bf16.mxu0 %v6635
        %7220 = vmatpush2.bf16.msra.mxu0 %v6634
        %7221 = vmatprep.subr.bf16.mxu0 %v6631
        %7222 = vmatpush2.bf16.msra.mxu0 %v6630
        %7223 = vmatprep.subr.bf16.mxu0 %v6627
        %7224 = vmatpush2.bf16.msra.mxu0 %v6626
        %7225 = vmatprep.subr.bf16.mxu0 %v6623
        %7226 = vmatpush2.bf16.msra.mxu0 %v6622
        %7227 = vmatprep.mubr.bf16.mxu0 %v5349
        %7228 = vmatmul.mubr.bf16.gmra.mxu0 %v5348
        %v7229 = vpop.f32.mrf.mxu0
        %v7230 = vadd.f32 %v7189, %v7229
        %v7231 = vpop.f32.mrf.mxu0
        %v7232 = vadd.f32 %v7191, %v7231
        %v7233 = vpop.f32.mrf.mxu0
        %v7234 = vpop.f32.mrf.mxu0
        %7235 = vdwg.mxu0
        %v7236 = vmax.f32 %v7066, 0.0
        %v7237 = vmax.f32 %v7068, 0.0
        %v7238 = vmax.f32 %v7230, 0.0
        %v7239 = vmax.f32 %v7232, 0.0
        %v7240 = vpack.c.bf16 %v7236, %v7236
        %v7241 = vpack.c.bf16 %v7237, %v7237
        %v7242 = vpack.c.bf16 %v7238, %v7238
        %v7243 = vpack.c.bf16 %v7239, %v7239
        %v7244 = vld [vmem:[%s47] sm:$0xf]
        %v7245 = vld [vmem:[%s47 + $0x4] sm:$0xf]
        %v7246 = vld [vmem:[%s47 + $0x8] sm:$0xf]
        %v7247 = vld [vmem:[%s47 + $0xc] sm:$0xf]
        %v7248 = vld [vmem:[%s47 + $0x10] sm:$0xf]
        %v7249 = vld [vmem:[%s47 + $0x14] sm:$0xf]
        %v7250 = vld [vmem:[%s47 + $0x18] sm:$0xf]
        %v7251 = vld [vmem:[%s47 + $0x1c] sm:$0xf]
        %v7252 = vld [vmem:[%s47 + $0x20] sm:$0xf]
        %v7253 = vld [vmem:[%s47 + $0x24] sm:$0xf]
        %v7254 = vld [vmem:[%s47 + $0x28] sm:$0xf]
        %v7255 = vld [vmem:[%s47 + $0x2c] sm:$0xf]
        %v7256 = vld [vmem:[%s47 + $0x30] sm:$0xf]
        %v7257 = vld [vmem:[%s47 + $0x34] sm:$0xf]
        %v7258 = vld [vmem:[%s47 + $0x38] sm:$0xf]
        %v7259 = vld [vmem:[%s47 + $0x3c] sm:$0xf]
        %v7260 = vld [vmem:[%s47 + $0x40] sm:$0xf]
        %v7261 = vld [vmem:[%s47 + $0x44] sm:$0xf]
        %v7262 = vld [vmem:[%s47 + $0x48] sm:$0xf]
        %v7263 = vld [vmem:[%s47 + $0x4c] sm:$0xf]
        %v7264 = vld [vmem:[%s47 + $0x50] sm:$0xf]
        %v7265 = vld [vmem:[%s47 + $0x54] sm:$0xf]
        %v7266 = vld [vmem:[%s47 + $0x58] sm:$0xf]
        %v7267 = vld [vmem:[%s47 + $0x5c] sm:$0xf]
        %v7268 = vld [vmem:[%s47 + $0x60] sm:$0xf]
        %v7269 = vld [vmem:[%s47 + $0x64] sm:$0xf]
        %v7270 = vld [vmem:[%s47 + $0x68] sm:$0xf]
        %v7271 = vld [vmem:[%s47 + $0x6c] sm:$0xf]
        %v7272 = vld [vmem:[%s47 + $0x70] sm:$0xf]
        %v7273 = vld [vmem:[%s47 + $0x74] sm:$0xf]
        %v7274 = vld [vmem:[%s47 + $0x78] sm:$0xf]
        %v7275 = vld [vmem:[%s47 + $0x7c] sm:$0xf]
        %v7276 = vld [vmem:[%s47 + $0x80] sm:$0xf]
        %v7277 = vld [vmem:[%s47 + $0x84] sm:$0xf]
        %v7278 = vld [vmem:[%s47 + $0x88] sm:$0xf]
        %v7279 = vld [vmem:[%s47 + $0x8c] sm:$0xf]
        %v7280 = vld [vmem:[%s47 + $0x90] sm:$0xf]
        %v7281 = vld [vmem:[%s47 + $0x94] sm:$0xf]
        %v7282 = vld [vmem:[%s47 + $0x98] sm:$0xf]
        %v7283 = vld [vmem:[%s47 + $0x9c] sm:$0xf]
        %v7284 = vld [vmem:[%s47 + $0xa0] sm:$0xf]
        %v7285 = vld [vmem:[%s47 + $0xa4] sm:$0xf]
        %v7286 = vld [vmem:[%s47 + $0xa8] sm:$0xf]
        %v7287 = vld [vmem:[%s47 + $0xac] sm:$0xf]
        %v7288 = vld [vmem:[%s47 + $0xb0] sm:$0xf]
        %v7289 = vld [vmem:[%s47 + $0xb4] sm:$0xf]
        %v7290 = vld [vmem:[%s47 + $0xb8] sm:$0xf]
        %v7291 = vld [vmem:[%s47 + $0xbc] sm:$0xf]
        %v7292 = vld [vmem:[%s47 + $0xc0] sm:$0xf]
        %v7293 = vld [vmem:[%s47 + $0xc4] sm:$0xf]
        %v7294 = vld [vmem:[%s47 + $0xc8] sm:$0xf]
        %v7295 = vld [vmem:[%s47 + $0xcc] sm:$0xf]
        %v7296 = vld [vmem:[%s47 + $0xd0] sm:$0xf]
        %v7297 = vld [vmem:[%s47 + $0xd4] sm:$0xf]
        %v7298 = vld [vmem:[%s47 + $0xd8] sm:$0xf]
        %v7299 = vld [vmem:[%s47 + $0xdc] sm:$0xf]
        %v7300 = vld [vmem:[%s47 + $0xe0] sm:$0xf]
        %v7301 = vld [vmem:[%s47 + $0xe4] sm:$0xf]
        %v7302 = vld [vmem:[%s47 + $0xe8] sm:$0xf]
        %v7303 = vld [vmem:[%s47 + $0xec] sm:$0xf]
        %v7304 = vld [vmem:[%s47 + $0xf0] sm:$0xf]
        %v7305 = vld [vmem:[%s47 + $0xf4] sm:$0xf]
        %v7306 = vld [vmem:[%s47 + $0xf8] sm:$0xf]
        %v7307 = vld [vmem:[%s47 + $0xfc] sm:$0xf]
        %v7308 = vld [vmem:[#allocation32] sm:$0x1]
        %v7310 = vlaneseq
        %v7311 = vshrl.u32 %v7310, 7
        %v7312 = vsub.s32 0, %v7311
        %v7313 = vrot.slane %v7308, %v7312
        %v7379 = vunpack.c.l.b16 %v7244
        %v7380 = vunpack.c.l.b16 %v7245
        %v7381 = vunpack.c.l.b16 %v7246
        %v7382 = vunpack.c.l.b16 %v7247
        %v7383 = vunpack.c.l.b16 %v7248
        %v7384 = vunpack.c.l.b16 %v7249
        %v7385 = vunpack.c.l.b16 %v7250
        %v7386 = vunpack.c.l.b16 %v7251
        %v7387 = vunpack.c.l.b16 %v7252
        %v7388 = vunpack.c.l.b16 %v7253
        %v7389 = vunpack.c.l.b16 %v7254
        %v7390 = vunpack.c.l.b16 %v7255
        %v7391 = vunpack.c.l.b16 %v7256
        %v7392 = vunpack.c.l.b16 %v7257
        %v7393 = vunpack.c.l.b16 %v7258
        %v7394 = vunpack.c.l.b16 %v7259
        %v7395 = vunpack.c.l.b16 %v7260
        %v7396 = vunpack.c.l.b16 %v7261
        %v7397 = vunpack.c.l.b16 %v7262
        %v7398 = vunpack.c.l.b16 %v7263
        %v7399 = vunpack.c.l.b16 %v7264
        %v7400 = vunpack.c.l.b16 %v7265
        %v7401 = vunpack.c.l.b16 %v7266
        %v7402 = vunpack.c.l.b16 %v7267
        %v7403 = vunpack.c.l.b16 %v7268
        %v7404 = vunpack.c.l.b16 %v7269
        %v7405 = vunpack.c.l.b16 %v7270
        %v7406 = vunpack.c.l.b16 %v7271
        %v7407 = vunpack.c.l.b16 %v7272
        %v7408 = vunpack.c.l.b16 %v7273
        %v7409 = vunpack.c.l.b16 %v7274
        %v7410 = vunpack.c.l.b16 %v7275
        %v7411 = vunpack.c.l.b16 %v7276
        %v7412 = vunpack.c.l.b16 %v7277
        %v7413 = vunpack.c.l.b16 %v7278
        %v7414 = vunpack.c.l.b16 %v7279
        %v7415 = vunpack.c.l.b16 %v7280
        %v7416 = vunpack.c.l.b16 %v7281
        %v7417 = vunpack.c.l.b16 %v7282
        %v7418 = vunpack.c.l.b16 %v7283
        %v7419 = vunpack.c.l.b16 %v7284
        %v7420 = vunpack.c.l.b16 %v7285
        %v7421 = vunpack.c.l.b16 %v7286
        %v7422 = vunpack.c.l.b16 %v7287
        %v7423 = vunpack.c.l.b16 %v7288
        %v7424 = vunpack.c.l.b16 %v7289
        %v7425 = vunpack.c.l.b16 %v7290
        %v7426 = vunpack.c.l.b16 %v7291
        %v7427 = vunpack.c.l.b16 %v7292
        %v7428 = vunpack.c.l.b16 %v7293
        %v7429 = vunpack.c.l.b16 %v7294
        %v7430 = vunpack.c.l.b16 %v7295
        %v7431 = vunpack.c.l.b16 %v7296
        %v7432 = vunpack.c.l.b16 %v7297
        %v7433 = vunpack.c.l.b16 %v7298
        %v7434 = vunpack.c.l.b16 %v7299
        %v7435 = vunpack.c.l.b16 %v7300
        %v7436 = vunpack.c.l.b16 %v7301
        %v7437 = vunpack.c.l.b16 %v7302
        %v7438 = vunpack.c.l.b16 %v7303
        %v7439 = vunpack.c.l.b16 %v7304
        %v7440 = vunpack.c.l.b16 %v7305
        %v7441 = vunpack.c.l.b16 %v7306
        %v7442 = vunpack.c.l.b16 %v7307
        %v7443 = vpack.c.b16 %v7380, %v7379
        %v7444 = vpack.c.b16 %v7382, %v7381
        %v7445 = vpack.c.b16 %v7384, %v7383
        %v7446 = vpack.c.b16 %v7386, %v7385
        %v7447 = vpack.c.b16 %v7388, %v7387
        %v7448 = vpack.c.b16 %v7390, %v7389
        %v7449 = vpack.c.b16 %v7392, %v7391
        %v7450 = vpack.c.b16 %v7394, %v7393
        %v7451 = vpack.c.b16 %v7396, %v7395
        %v7452 = vpack.c.b16 %v7398, %v7397
        %v7453 = vpack.c.b16 %v7400, %v7399
        %v7454 = vpack.c.b16 %v7402, %v7401
        %v7455 = vpack.c.b16 %v7404, %v7403
        %v7456 = vpack.c.b16 %v7406, %v7405
        %v7457 = vpack.c.b16 %v7408, %v7407
        %v7458 = vpack.c.b16 %v7410, %v7409
        %v7459 = vpack.c.b16 %v7412, %v7411
        %v7460 = vpack.c.b16 %v7414, %v7413
        %v7461 = vpack.c.b16 %v7416, %v7415
        %v7462 = vpack.c.b16 %v7418, %v7417
        %v7463 = vpack.c.b16 %v7420, %v7419
        %v7464 = vpack.c.b16 %v7422, %v7421
        %v7465 = vpack.c.b16 %v7424, %v7423
        %v7466 = vpack.c.b16 %v7426, %v7425
        %v7467 = vpack.c.b16 %v7428, %v7427
        %v7468 = vpack.c.b16 %v7430, %v7429
        %v7469 = vpack.c.b16 %v7432, %v7431
        %v7470 = vpack.c.b16 %v7434, %v7433
        %v7471 = vpack.c.b16 %v7436, %v7435
        %v7472 = vpack.c.b16 %v7438, %v7437
        %v7473 = vpack.c.b16 %v7440, %v7439
        %v7474 = vpack.c.b16 %v7442, %v7441
        %7507 = vmatprep.subr.bf16.mxu0 0
        %7508 = vmatpush1.bf16.msra.mxu0 %v7450
        %7509 = vmatprep.subr.bf16.mxu0 0
        %7510 = vmatpush1.bf16.msra.mxu0 %v7449
        %7511 = vmatprep.subr.bf16.mxu0 0
        %7512 = vmatpush1.bf16.msra.mxu0 %v7448
        %7513 = vmatprep.subr.bf16.mxu0 0
        %7514 = vmatpush1.bf16.msra.mxu0 %v7447
        %7515 = vmatprep.subr.bf16.mxu0 0
        %7516 = vmatpush1.bf16.msra.mxu0 %v7446
        %7517 = vmatprep.subr.bf16.mxu0 0
        %7518 = vmatpush1.bf16.msra.mxu0 %v7445
        %7519 = vmatprep.subr.bf16.mxu0 0
        %7520 = vmatpush1.bf16.msra.mxu0 %v7444
        %7521 = vmatprep.subr.bf16.mxu0 0
        %7522 = vmatpush1.bf16.msra.mxu0 %v7443
        %7523 = vmatprep.subr.bf16.mxu0 0
        %7524 = vmatpush2.bf16.msra.mxu0 %v7458
        %7525 = vmatprep.subr.bf16.mxu0 0
        %7526 = vmatpush2.bf16.msra.mxu0 %v7457
        %7527 = vmatprep.subr.bf16.mxu0 0
        %7528 = vmatpush2.bf16.msra.mxu0 %v7456
        %7529 = vmatprep.subr.bf16.mxu0 0
        %7530 = vmatpush2.bf16.msra.mxu0 %v7455
        %7531 = vmatprep.subr.bf16.mxu0 0
        %7532 = vmatpush2.bf16.msra.mxu0 %v7454
        %7533 = vmatprep.subr.bf16.mxu0 0
        %7534 = vmatpush2.bf16.msra.mxu0 %v7453
        %7535 = vmatprep.subr.bf16.mxu0 0
        %7536 = vmatpush2.bf16.msra.mxu0 %v7452
        %7537 = vmatprep.subr.bf16.mxu0 0
        %7538 = vmatpush2.bf16.msra.mxu0 %v7451
        %7539 = vmatprep.mubr.bf16.mxu0 %v7241
        %7540 = vmatmul.mubr.bf16.gmra.mxu0 %v7240
        %v7541 = vpop.f32.mrf.mxu0
        %v7542 = vadd.f32 %v7313, %v7541
        %v7543 = vpop.f32.mrf.mxu0
        %v7544 = vpop.f32.mrf.mxu0
        %v7545 = vpop.f32.mrf.mxu0
        %7546 = vdwg.mxu0
        %7547 = vmatprep.subr.bf16.mxu0 0
        %7548 = vmatpush1.bf16.msra.mxu0 %v7466
        %7549 = vmatprep.subr.bf16.mxu0 0
        %7550 = vmatpush1.bf16.msra.mxu0 %v7465
        %7551 = vmatprep.subr.bf16.mxu0 0
        %7552 = vmatpush1.bf16.msra.mxu0 %v7464
        %7553 = vmatprep.subr.bf16.mxu0 0
        %7554 = vmatpush1.bf16.msra.mxu0 %v7463
        %7555 = vmatprep.subr.bf16.mxu0 0
        %7556 = vmatpush1.bf16.msra.mxu0 %v7462
        %7557 = vmatprep.subr.bf16.mxu0 0
        %7558 = vmatpush1.bf16.msra.mxu0 %v7461
        %7559 = vmatprep.subr.bf16.mxu0 0
        %7560 = vmatpush1.bf16.msra.mxu0 %v7460
        %7561 = vmatprep.subr.bf16.mxu0 0
        %7562 = vmatpush1.bf16.msra.mxu0 %v7459
        %7563 = vmatprep.subr.bf16.mxu0 0
        %7564 = vmatpush2.bf16.msra.mxu0 %v7474
        %7565 = vmatprep.subr.bf16.mxu0 0
        %7566 = vmatpush2.bf16.msra.mxu0 %v7473
        %7567 = vmatprep.subr.bf16.mxu0 0
        %7568 = vmatpush2.bf16.msra.mxu0 %v7472
        %7569 = vmatprep.subr.bf16.mxu0 0
        %7570 = vmatpush2.bf16.msra.mxu0 %v7471
        %7571 = vmatprep.subr.bf16.mxu0 0
        %7572 = vmatpush2.bf16.msra.mxu0 %v7470
        %7573 = vmatprep.subr.bf16.mxu0 0
        %7574 = vmatpush2.bf16.msra.mxu0 %v7469
        %7575 = vmatprep.subr.bf16.mxu0 0
        %7576 = vmatpush2.bf16.msra.mxu0 %v7468
        %7577 = vmatprep.subr.bf16.mxu0 0
        %7578 = vmatpush2.bf16.msra.mxu0 %v7467
        %7579 = vmatprep.mubr.bf16.mxu0 %v7243
        %7580 = vmatmul.mubr.bf16.gmra.mxu0 %v7242
        %v7581 = vpop.f32.mrf.mxu0
        %v7582 = vadd.f32 %v7542, %v7581
        %v7583 = vpop.f32.mrf.mxu0
        %v7584 = vpop.f32.mrf.mxu0
        %v7585 = vpop.f32.mrf.mxu0
        %7586 = vdwg.mxu0
        %v7587 = vmax.f32 %v7582, 0.0
        %v7588 = vpack.c.bf16 %v7587, %v7587
        %v7589 = vld [vmem:[%s51] sm:$0xf]
        %v7590 = vld [vmem:[%s51 + $0x4] sm:$0xf]
        %v7591 = vld [vmem:[%s51 + $0x8] sm:$0xf]
        %v7592 = vld [vmem:[%s51 + $0xc] sm:$0xf]
        %v7593 = vld [vmem:[%s51 + $0x10] sm:$0xf]
        %v7594 = vld [vmem:[%s51 + $0x14] sm:$0xf]
        %v7595 = vld [vmem:[%s51 + $0x18] sm:$0xf]
        %v7596 = vld [vmem:[%s51 + $0x1c] sm:$0xf]
        %v7597 = vld [vmem:[%s51 + $0x20] sm:$0xf]
        %v7598 = vld [vmem:[%s51 + $0x24] sm:$0xf]
        %v7599 = vld [vmem:[%s51 + $0x28] sm:$0xf]
        %v7600 = vld [vmem:[%s51 + $0x2c] sm:$0xf]
        %v7601 = vld [vmem:[%s51 + $0x30] sm:$0xf]
        %v7602 = vld [vmem:[%s51 + $0x34] sm:$0xf]
        %v7603 = vld [vmem:[%s51 + $0x38] sm:$0xf]
        %v7604 = vld [vmem:[%s51 + $0x3c] sm:$0xf]
        %v7605 = vld [vmem:[%s53] sm:$0x1]
        %v7607 = vlaneseq
        %v7608 = vshrl.u32 %v7607, 7
        %v7609 = vsub.s32 0, %v7608
        %v7610 = vrot.slane %v7605, %v7609
        %v7628 = vunpack.c.l.b16 %v7589
        %v7629 = vunpack.c.l.b16 %v7590
        %v7630 = vunpack.c.l.b16 %v7591
        %v7631 = vunpack.c.l.b16 %v7592
        %v7632 = vunpack.c.l.b16 %v7593
        %v7633 = vunpack.c.l.b16 %v7594
        %v7634 = vunpack.c.l.b16 %v7595
        %v7635 = vunpack.c.l.b16 %v7596
        %v7636 = vunpack.c.l.b16 %v7597
        %v7637 = vunpack.c.l.b16 %v7598
        %v7638 = vunpack.c.l.b16 %v7599
        %v7639 = vunpack.c.l.b16 %v7600
        %v7640 = vunpack.c.l.b16 %v7601
        %v7641 = vunpack.c.l.b16 %v7602
        %v7642 = vunpack.c.l.b16 %v7603
        %v7643 = vunpack.c.l.b16 %v7604
        %v7644 = vpack.c.b16 %v7629, %v7628
        %v7645 = vpack.c.b16 %v7631, %v7630
        %v7646 = vpack.c.b16 %v7633, %v7632
        %v7647 = vpack.c.b16 %v7635, %v7634
        %v7648 = vpack.c.b16 %v7637, %v7636
        %v7649 = vpack.c.b16 %v7639, %v7638
        %v7650 = vpack.c.b16 %v7641, %v7640
        %v7651 = vpack.c.b16 %v7643, %v7642
        %7660 = vmatprep.subr.bf16.mxu0 0
        %7661 = vmatpush1.bf16.msra.mxu0 %v7651
        %7662 = vmatprep.subr.bf16.mxu0 0
        %7663 = vmatpush1.bf16.msra.mxu0 %v7650
        %7664 = vmatprep.subr.bf16.mxu0 0
        %7665 = vmatpush1.bf16.msra.mxu0 %v7649
        %7666 = vmatprep.subr.bf16.mxu0 0
        %7667 = vmatpush1.bf16.msra.mxu0 %v7648
        %7668 = vmatprep.subr.bf16.mxu0 0
        %7669 = vmatpush1.bf16.msra.mxu0 %v7647
        %7670 = vmatprep.subr.bf16.mxu0 0
        %7671 = vmatpush1.bf16.msra.mxu0 %v7646
        %7672 = vmatprep.subr.bf16.mxu0 0
        %7673 = vmatpush1.bf16.msra.mxu0 %v7645
        %7674 = vmatprep.subr.bf16.mxu0 0
        %7675 = vmatpush1.bf16.msra.mxu0 %v7644
        %7676 = vmatprep.subr.bf16.mxu0 0
        %7677 = vmatpush2.bf16.msra.mxu0 0
        %7678 = vmatprep.subr.bf16.mxu0 0
        %7679 = vmatpush2.bf16.msra.mxu0 0
        %7680 = vmatprep.subr.bf16.mxu0 0
        %7681 = vmatpush2.bf16.msra.mxu0 0
        %7682 = vmatprep.subr.bf16.mxu0 0
        %7683 = vmatpush2.bf16.msra.mxu0 0
        %7684 = vmatprep.subr.bf16.mxu0 0
        %7685 = vmatpush2.bf16.msra.mxu0 0
        %7686 = vmatprep.subr.bf16.mxu0 0
        %7687 = vmatpush2.bf16.msra.mxu0 0
        %7688 = vmatprep.subr.bf16.mxu0 0
        %7689 = vmatpush2.bf16.msra.mxu0 0
        %7690 = vmatprep.subr.bf16.mxu0 0
        %7691 = vmatpush2.bf16.msra.mxu0 0
        %7692 = vmatprep.mubr.bf16.mxu0 0
        %7693 = vmatmul.mubr.bf16.gmra.mxu0 %v7588
        %v7694 = vpop.f32.mrf.mxu0
        %v7695 = vadd.f32 %v7610, %v7694
        %v7696 = vpop.f32.mrf.mxu0
        %v7697 = vpop.f32.mrf.mxu0
        %v7698 = vpop.f32.mrf.mxu0
        %7699 = vdwg.mxu0
        %v7700 = vmax.f32 %v7695, 0.0
        %v7701 = vpack.c.bf16 %v7700, %v7700
        %v7702 = vld [vmem:[%s55] sm:$0xf]
        %v7703 = vld [vmem:[%s55 + $0x4] sm:$0xf]
        %v7704 = vld [vmem:[%s55 + $0x8] sm:$0xf]
        %v7705 = vld [vmem:[%s55 + $0xc] sm:$0xf]
        %v7706 = vld [vmem:[%s55 + $0x10] sm:$0xf]
        %v7707 = vld [vmem:[%s55 + $0x14] sm:$0xf]
        %v7708 = vld [vmem:[%s55 + $0x18] sm:$0xf]
        %v7709 = vld [vmem:[%s55 + $0x1c] sm:$0xf]
        %v7710 = vld [vmem:[#allocation2] sm:$0x1]
        %v7712 = vlaneseq
        %v7713 = vshrl.u32 %v7712, 7
        %v7714 = vsub.s32 0, %v7713
        %v7715 = vrot.slane %v7710, %v7714
        %v7725 = vunpack.c.l.b16 %v7702
        %v7726 = vunpack.c.l.b16 %v7703
        %v7727 = vunpack.c.l.b16 %v7704
        %v7728 = vunpack.c.l.b16 %v7705
        %v7729 = vunpack.c.l.b16 %v7706
        %v7730 = vunpack.c.l.b16 %v7707
        %v7731 = vunpack.c.l.b16 %v7708
        %v7732 = vunpack.c.l.b16 %v7709
        %v7733 = vpack.c.b16 %v7726, %v7725
        %v7734 = vpack.c.b16 %v7728, %v7727
        %v7735 = vpack.c.b16 %v7730, %v7729
        %v7736 = vpack.c.b16 %v7732, %v7731
        %v7742 = vsel %vm4562, %v7701, 0
        %7744 = vmatprep.subr.bf16.mxu0 0
        %7745 = vmatpush1.bf16.msra.mxu0 0
        %7746 = vmatprep.subr.bf16.mxu0 0
        %7747 = vmatpush1.bf16.msra.mxu0 0
        %7748 = vmatprep.subr.bf16.mxu0 0
        %7749 = vmatpush1.bf16.msra.mxu0 0
        %7750 = vmatprep.subr.bf16.mxu0 0
        %7751 = vmatpush1.bf16.msra.mxu0 0
        %7752 = vmatprep.subr.bf16.mxu0 0
        %7753 = vmatpush1.bf16.msra.mxu0 %v7736
        %7754 = vmatprep.subr.bf16.mxu0 0
        %7755 = vmatpush1.bf16.msra.mxu0 %v7735
        %7756 = vmatprep.subr.bf16.mxu0 0
        %7757 = vmatpush1.bf16.msra.mxu0 %v7734
        %7758 = vmatprep.subr.bf16.mxu0 0
        %7759 = vmatpush1.bf16.msra.mxu0 %v7733
        %7760 = vmatprep.subr.bf16.mxu0 0
        %7761 = vmatpush2.bf16.msra.mxu0 0
        %7762 = vmatprep.subr.bf16.mxu0 0
        %7763 = vmatpush2.bf16.msra.mxu0 0
        %7764 = vmatprep.subr.bf16.mxu0 0
        %7765 = vmatpush2.bf16.msra.mxu0 0
        %7766 = vmatprep.subr.bf16.mxu0 0
        %7767 = vmatpush2.bf16.msra.mxu0 0
        %7768 = vmatprep.subr.bf16.mxu0 0
        %7769 = vmatpush2.bf16.msra.mxu0 0
        %7770 = vmatprep.subr.bf16.mxu0 0
        %7771 = vmatpush2.bf16.msra.mxu0 0
        %7772 = vmatprep.subr.bf16.mxu0 0
        %7773 = vmatpush2.bf16.msra.mxu0 0
        %7774 = vmatprep.subr.bf16.mxu0 0
        %7775 = vmatpush2.bf16.msra.mxu0 0
        %7776 = vmatprep.mubr.bf16.mxu0 0
        %7777 = vmatmul.mubr.bf16.gmra.mxu0 %v7742
        %v7778 = vpop.f32.mrf.mxu0
        %v7779 = vadd.f32 %v7715, %v7778
        %v7780 = vpop.f32.mrf.mxu0
        %v7781 = vpop.f32.mrf.mxu0
        %v7782 = vpop.f32.mrf.mxu0
        %7783 = vdwg.mxu0
        %v7784 = vmul.f32 %v7779, 1.442695
        %v7785 = vpow.pop %v7784
        %v7786 = vsel %vm4608, %v4601, 0.0
        %vm7787 = vcmp.eq.s32.totalorder %v4607, 15
        %v7788 = vsel %vm7787, %v4628, %v7786
        %vm7789 = vcmp.eq.s32.totalorder %v4607, 16
        %7791 = vset.pattern.permute.xlu0 0
        %7792 = vperm.xlu0 %7791, %v7785
        %v7793 = vpop.permute.xlu0 %7792
        %v7795 = vsel %vm7789, %v7793, %v7788
        %7796 = vst [vmem:[%s1171] sm:$0xff] %v7795
        %s7797 = sand.u32 %s714, 1
        %s7798 = scalar_lea.sflag [#allocation5], %s7797
        %s7799 = sand.u32 %s714, 1
        %s7800 = smul.addr %s7799, 8
        %s7801 = scalar_lea.vmem [#allocation33], %s7800
        // Predicated region
        $region213: #{tpu_custom_call.1} parent=135 // pred_check
          %p7802 = pneg %p724
        $region214: #{tpu_custom_call.1} parent=135 // pred_check_branch
          %7804 = sbr.rel (%p7802) target = $region216
        $region215: #{tpu_custom_call.1} parent=135 // pred_region
          %s7806 = ssub.s32 128, 128
          %7807 = vsyncadd %s7798, %s7806
          %s7808 = smul.addr %s87, 128
          %s7809 = scalar_lea.hbm %s59, %s7808
          %s7811 = sshll.u32 %s7801, 4
          %s7812 = int_to_ptr.vmem [resolvable:$true] %s7811
          %7814 = dma.vmem_to_hbm [thread:$0]  %s7812, 128, %s7809, %s7798
        $region216: #{tpu_custom_call.1} parent=135 // pred_fallthru
          _
      $region136: #{tpu_custom_call.1} parent=5 // pred_fallthru
        _
      %p7815 = scmp.le.s32.totalorder 2, %s82
      // Predicated region
      $region217: #{tpu_custom_call.1} parent=5 // pred_check
        %p7816 = pneg %p7815
      $region218: #{tpu_custom_call.1} parent=5 // pred_check_branch
        %7818 = sbr.rel (%p7816) target = $region220
      $region219: #{tpu_custom_call.1} parent=5 // pred_region
        %s7819 = ssub.s32 %s82, 2
        // Predicated region
        $region221: #{tpu_custom_call.1} parent=219 // pred_check
          %p7820 = pneg %p730
        $region222: #{tpu_custom_call.1} parent=219 // pred_check_branch
          %7822 = sbr.rel (%p7820) target = $region224
        $region223: #{tpu_custom_call.1} parent=219 // pred_region
          %s7823 = sand.u32 %s715, 1
          %s7824 = scalar_lea.sflag [#allocation5], %s7823
          %s7825 = sand.u32 %s715, 1
          %s7826 = smul.addr %s7825, 8
          %s7827 = scalar_lea.vmem [#allocation33], %s7826
          %7828 = dma.done %s7824, 128
        $region224: #{tpu_custom_call.1} parent=219 // pred_fallthru
          _
      $region220: #{tpu_custom_call.1} parent=5 // pred_fallthru
        _
    $region6: #{tpu_custom_call.1} parent=1 // loop_footer
      %s86 = sadd.s32 1, %s82
    $region7: #{tpu_custom_call.1} parent=1 // loop_footer_branch
      %81 = sbr.rel target = $region3
    $region8: #{tpu_custom_call.1} parent=1 // loop_exit
      _
    %7829 = vsyncpa [#allocation4], 1
    %s7830 = scalar_lea.sflag [#allocation4], 1
    %7831 = vsyncpa %s7830, 1
    %7832 = vsyncpa [#allocation7], 1
    %7833 = vsyncpa [#allocation10], 1
    %7834 = vsyncpa [#allocation13], 1
    %7835 = vsyncpa [#allocation16], 1
    %7836 = vsyncpa [#allocation19], 1
    %7837 = vsyncpa [#allocation22], 1
    %7838 = vsyncpa [#allocation25], 1
    %7839 = vsyncpa [#allocation28], 1
    %7840 = vsyncpa [#allocation31], 1
    %7841 = vsyncpa [#allocation5], 1
    %s7842 = scalar_lea.sflag [#allocation5], 1
    %7843 = vsyncpa %s7842, 1

</llo_original>
